<compile_context>
chip_gen: v7x
topology: tpu7x:2x2x1
jax: 0.10.0
libtpu: 0.0.40
codegen_flags: <defaults>
</compile_context>

<pallas_src>
import math

import jax
import jax.numpy as jnp
from jax import lax
from jax.experimental import pallas as pl
from jax.experimental.pallas import tpu as pltpu


# True PyTorch MLP widths: input_size -> 1024 -> 128 -> 64 -> 16 -> 1
MLP_HIDDEN = (1024, 128, 64, 16, 1)
LANE = 128


def _round_up(x, m):
    return ((x + m - 1) // m) * m


def _gelu_exact(x):
    # nn.GELU() default (exact erf formulation), evaluated in f32.
    return 0.5 * x * (1.0 + lax.erf(x * (1.0 / math.sqrt(2.0))))


def _mlp_reward_kernel(x_ref, w1_ref, b1_ref, w2_ref, b2_ref, wt_ref, bt_ref,
                       o_ref):
    """5-layer MLP reward head for one row tile. Weights are VMEM-resident bf16."""

    def layer(h, w, b, act):
        # bf16 MXU inputs, f32 accumulation; bias add + GELU in f32.
        y = jnp.dot(h.astype(jnp.bfloat16), w,
                    preferred_element_type=jnp.float32) + b
        return act(y) if act is not None else y

    h = x_ref[...]                                                   # bf16 [TM, D]
    h = layer(h, w1_ref[...], b1_ref[...], _gelu_exact)              # [TM, 1024]
    h = layer(h, w2_ref[...], b2_ref[...], _gelu_exact)              # [TM, 128]
    # Packed tail slab: static 128-wide ref slices are free.
    h = layer(h, wt_ref[:, 0:128],   bt_ref[:, 0:128],   _gelu_exact)  # 128->64 (padded)
    h = layer(h, wt_ref[:, 128:256], bt_ref[:, 128:256], _gelu_exact)  # 64->16  (padded)
    h = layer(h, wt_ref[:, 256:384], bt_ref[:, 256:384], None)         # 16->1   (padded)
    o_ref[...] = h   # lane-dense [TM, 128] f32 store; column 0 is the reward.


def _build_in_specs(tm, d, param_shapes, single_buffer_weights):
    in_specs = [pl.BlockSpec((tm, d), lambda i: (i, 0))]
    for shape in param_shapes:
        if single_buffer_weights:
            # Constant block index -> loaded once, resident; no need to double-buffer.
            spec = pl.BlockSpec(shape, lambda i: (0, 0),
                                pipeline_mode=pl.Buffered(1))
        else:
            spec = pl.BlockSpec(shape, lambda i: (0, 0))
        in_specs.append(spec)
    return in_specs


def mlp_reward(x, params):
    """x: [N, D] embeddings -> [N, 1] f32 rewards (MLP head of CycleReward)."""
    n, d = x.shape
    x = x.astype(jnp.bfloat16)   # halve activation DMA; accumulation stays f32

    # Row tile: 512 feeds the MXU / HBM pipeline well at large N; small batches
    # round up to multiples of 16 (bf16 min sublane tile).
    if n >= 512:
        tm = 512
    elif n >= 256:
        tm = 256
    else:
        tm = _round_up(n, 16)
    n_pad = _round_up(n, tm)
    if n_pad != n:
        x = jnp.pad(x, ((0, n_pad - n), (0, 0)))

    flat = list(params)
    param_shapes = [p.shape for p in flat]

    # Cost estimate on TRUE (unpadded) layer widths.
    dims = (d,) + MLP_HIDDEN
    flops = 2 * n_pad * sum(dims[i] * dims[i + 1] for i in range(len(MLP_HIDDEN)))
    transcendentals = n_pad * sum(MLP_HIDDEN[:-1])
    weight_bytes = sum(p.size * p.dtype.itemsize for p in flat)
    bytes_accessed = weight_bytes + n_pad * d * 2 + n_pad * LANE * 4

    def run(single_buffer_weights):
        return pl.pallas_call(
            _mlp_reward_kernel,
            out_shape=jax.ShapeDtypeStruct((n_pad, LANE), jnp.float32),
            grid=(n_pad // tm,),
            in_specs=_build_in_specs(tm, d, param_shapes, single_buffer_weights),
            out_specs=pl.BlockSpec((tm, LANE), lambda i: (i, 0)),
            compiler_params=pltpu.CompilerParams(
                dimension_semantics=("parallel",)),
            cost_estimate=pl.CostEstimate(
                flops=int(flops),
                transcendentals=int(transcendentals),
                bytes_accessed=int(bytes_accessed)),
        )(x, *flat)

    try:
        out = run(True)      # single-buffered resident weights (saves ~2 MiB VMEM)
    except Exception:        # fallback if Buffered(1) is not supported in this jax
        out = run(False)

    # TODO(synk): at large N, let the consumer read column 0 of the slab directly
    # instead of materializing this [N, 1] slice (avoids a second HBM pass).
    return out[:n, :1]


def init_mlp_params(key, input_size):
    """Xavier-uniform weights (true fan-in/out), zero biases — mirrors MLP.init_weights.

    Weights stored [in, out]; the three tail layers are zero-padded to [128, 128]
    (GELU(0)==0, bias padding 0, so padding is exact) and packed into one
    [128, 384] bf16 slab; biases stay f32.
    """
    dims = (input_size,) + MLP_HIDDEN
    ws, bs = [], []
    for i in range(len(MLP_HIDDEN)):
        fan_in, fan_out = dims[i], dims[i + 1]
        key, sub = jax.random.split(key)
        bound = math.sqrt(6.0 / (fan_in + fan_out))
        w = jax.random.uniform(sub, (fan_in, fan_out), jnp.float32, -bound, bound)
        ws.append(w)
        bs.append(jnp.zeros((fan_out,), jnp.float32))

    w1 = ws[0].astype(jnp.bfloat16)                 # [D, 1024]
    b1 = bs[0].reshape(1, -1)                       # [1, 1024] f32
    w2 = ws[1].astype(jnp.bfloat16)                 # [1024, 128]
    b2 = bs[1].reshape(1, -1)                       # [1, 128]  f32

    tails_w, tails_b = [], []
    for w, b in zip(ws[2:], bs[2:]):
        tails_w.append(jnp.pad(w, ((0, LANE - w.shape[0]), (0, LANE - w.shape[1]))))
        tails_b.append(jnp.pad(b, (0, LANE - b.shape[0])))
    w_tail = jnp.concatenate(tails_w, axis=1).astype(jnp.bfloat16)   # [128, 384]
    b_tail = jnp.concatenate(tails_b, axis=0).reshape(1, -1)         # [1, 384] f32

    return (w1, b1, w2, b2, w_tail, b_tail)


class CycleRewardPallas:
    """JAX/Pallas port of CycleReward ('CycleReward-Combo' path).

    The BLIP encoders are upstream feature extractors (see TODO(synk) above);
    the reward computation (MLP head + preferred/rejected concat) runs in a
    single fused Pallas launch per forward.
    """

    def __init__(self, mlp_dim=768, model_type="CycleReward-Combo", key=None):
        if key is None:
            key = jax.random.PRNGKey(0)
        self.model_type = model_type
        self.mlp_dim = mlp_dim
        self.mlp_params = init_mlp_params(key, mlp_dim)

    def _rewards(self, embeds_list):
        """Run the MLP head on a list of [B, D] embedding tensors in ONE launch."""
        b = embeds_list[0].shape[0]
        x = jnp.concatenate([e.astype(jnp.bfloat16) for e in embeds_list], axis=0)
        r = mlp_reward(x, self.mlp_params)          # [len*B, 1]
        return [r[k * b:(k + 1) * b] for k in range(len(embeds_list))]

    def text_reward(self, batch):
        p, q = self._rewards([batch["preferred_embeds"], batch["rejected_embeds"]])
        return jnp.concatenate([p, q], axis=1)

    def image_reward(self, batch):
        p, q = self._rewards([batch["prompt_embeds_image_preferred"],
                              batch["prompt_embeds_image_rejected"]])
        return jnp.concatenate([p, q], axis=1)

    def forward(self, batch):
        if "Combo" in self.model_type:
            # Fused path: all four embedding tensors through one kernel launch.
            pt, rt, pi, ri = self._rewards([
                batch["preferred_embeds"],
                batch["rejected_embeds"],
                batch["prompt_embeds_image_preferred"],
                batch["prompt_embeds_image_rejected"],
            ])
            text_reward = jnp.concatenate([pt, rt], axis=1)    # [B, 2]
            image_reward = jnp.concatenate([pi, ri], axis=1)   # [B, 2]
            return text_reward, image_reward
        elif "I2T" in self.model_type:
            return self.text_reward(batch), None
        elif "T2I" in self.model_type:
            return None, self.image_reward(batch)


def _reference_mlp(x, params):
    """Pure-JAX reference with the same bf16-input / f32-accumulate math."""
    w1, b1, w2, b2, w_tail, b_tail = params

    def layer(h, w, b, act):
        y = jnp.dot(h.astype(jnp.bfloat16), w,
                    preferred_element_type=jnp.float32) + b
        return act(y) if act is not None else y

    h = x.astype(jnp.bfloat16)
    h = layer(h, w1, b1, _gelu_exact)
    h = layer(h, w2, b2, _gelu_exact)
    h = layer(h, w_tail[:, 0:128],   b_tail[:, 0:128],   _gelu_exact)
    h = layer(h, w_tail[:, 128:256], b_tail[:, 128:256], _gelu_exact)
    h = layer(h, w_tail[:, 256:384], b_tail[:, 256:384], None)
    return h[:, :1]


if __name__ == "__main__":
    B = 2          # batch
    D = 768        # mlp_dim (BLIP text-encoder hidden size)

    key = jax.random.PRNGKey(0)
    k_model, k1, k2, k3, k4 = jax.random.split(key, 5)

    model = CycleRewardPallas(mlp_dim=D, model_type="CycleReward-Combo", key=k_model)

    batch = {
        # CLS embeddings produced by the (external) BLIP encoders.
        "preferred_embeds": jax.random.normal(k1, (B, D), jnp.float32),
        "rejected_embeds": jax.random.normal(k2, (B, D), jnp.float32),
        "prompt_embeds_image_preferred": jax.random.normal(k3, (B, D), jnp.float32),
        "prompt_embeds_image_rejected": jax.random.normal(k4, (B, D), jnp.float32),
    }

    text_reward, image_reward = model.forward(batch)
    text_reward = jax.block_until_ready(text_reward)
    image_reward = jax.block_until_ready(image_reward)

    assert text_reward.shape == (B, 2) and image_reward.shape == (B, 2)

    # Correctness check against a pure-JAX reference of the same (bf16) MLP.
    x_all = jnp.concatenate(
        [batch["preferred_embeds"], batch["rejected_embeds"],
         batch["prompt_embeds_image_preferred"],
         batch["prompt_embeds_image_rejected"]], axis=0)
    ref = _reference_mlp(x_all, model.mlp_params)          # [4B, 1]
    ref_text = jnp.concatenate([ref[:B], ref[B:2 * B]], axis=1)
    ref_image = jnp.concatenate([ref[2 * B:3 * B], ref[3 * B:]], axis=1)
    assert jnp.allclose(text_reward, ref_text, atol=2e-2, rtol=2e-2), (
        text_reward, ref_text)
    assert jnp.allclose(image_reward, ref_image, atol=2e-2, rtol=2e-2), (
        image_reward, ref_image)

    print("KERNEL_OK")
</pallas_src>

<mosaic_0001>
module attributes {stable_mosaic.version = 11 : i64} {
  func.func @_mlp_reward_kernel(%arg0: i32, %arg1: memref<16x768xbf16, #tpu.memory_space<vmem>>, %arg2: memref<768x1024xbf16, #tpu.memory_space<vmem>>, %arg3: memref<1x1024xf32, #tpu.memory_space<vmem>>, %arg4: memref<1024x128xbf16, #tpu.memory_space<vmem>>, %arg5: memref<1x128xf32, #tpu.memory_space<vmem>>, %arg6: memref<128x384xbf16, #tpu.memory_space<vmem>>, %arg7: memref<1x384xf32, #tpu.memory_space<vmem>>, %arg8: memref<16x128xf32, #tpu.memory_space<vmem>>) attributes {dimension_semantics = [#tpu.dimension_semantics<parallel>], iteration_bounds = array<i64: 1>, scalar_prefetch = 0 : i64, scratch_operands = 0 : i64, tpu.core_type = #tpu.core_type<tc>, window_params = [{transform_indices = @transform_0, window_bounds = array<i64: 16, 768>}, {pipeline_mode = #tpu.pipeline_mode<synchronous>, transform_indices = @transform_1, window_bounds = array<i64: 768, 1024>}, {pipeline_mode = #tpu.pipeline_mode<synchronous>, transform_indices = @transform_2, window_bounds = array<i64: 1, 1024>}, {pipeline_mode = #tpu.pipeline_mode<synchronous>, transform_indices = @transform_3, window_bounds = array<i64: 1024, 128>}, {pipeline_mode = #tpu.pipeline_mode<synchronous>, transform_indices = @transform_4, window_bounds = array<i64: 1, 128>}, {pipeline_mode = #tpu.pipeline_mode<synchronous>, transform_indices = @transform_5, window_bounds = array<i64: 128, 384>}, {pipeline_mode = #tpu.pipeline_mode<synchronous>, transform_indices = @transform_6, window_bounds = array<i64: 1, 384>}, {transform_indices = @transform_7, window_bounds = array<i64: 16, 128>}]} {
    %c0 = arith.constant 0 : index
    %c0_0 = arith.constant 0 : index
    %0 = vector.load %arg1[%c0, %c0_0] : memref<16x768xbf16, #tpu.memory_space<vmem>>, vector<16x768xbf16>
    %c0_1 = arith.constant 0 : index
    %c0_2 = arith.constant 0 : index
    %1 = vector.load %arg2[%c0_1, %c0_2] : memref<768x1024xbf16, #tpu.memory_space<vmem>>, vector<768x1024xbf16>
    %c0_3 = arith.constant 0 : index
    %c0_4 = arith.constant 0 : index
    %2 = vector.load %arg3[%c0_3, %c0_4] : memref<1x1024xf32, #tpu.memory_space<vmem>>, vector<1x1024xf32>
    %cst = arith.constant dense<0.000000e+00> : vector<16x1024xf32>
    %3 = tpu.matmul %0, %1, %cst {dimension_numbers = #tpu.dot_dimension_numbers<[1], [0], [0], [1], [0, 0, 1, 1], [], []>} : vector<16x768xbf16>, vector<768x1024xbf16>, vector<16x1024xf32> -> vector<16x1024xf32>
    %4 = vector.broadcast %2 : vector<1x1024xf32> to vector<16x1024xf32>
    %5 = arith.addf %3, %4 : vector<16x1024xf32>
    %cst_5 = arith.constant 5.000000e-01 : f32
    %6 = vector.broadcast %cst_5 : f32 to vector<16x1024xf32>
    %7 = arith.mulf %6, %5 : vector<16x1024xf32>
    %cst_6 = arith.constant 0.707106769 : f32
    %8 = vector.broadcast %cst_6 : f32 to vector<16x1024xf32>
    %9 = arith.mulf %5, %8 : vector<16x1024xf32>
    %10 = math.erf %9 : vector<16x1024xf32>
    %cst_7 = arith.constant 1.000000e+00 : f32
    %11 = vector.broadcast %cst_7 : f32 to vector<16x1024xf32>
    %12 = arith.addf %11, %10 : vector<16x1024xf32>
    %13 = arith.mulf %7, %12 : vector<16x1024xf32>
    %c0_8 = arith.constant 0 : index
    %c0_9 = arith.constant 0 : index
    %14 = vector.load %arg4[%c0_8, %c0_9] : memref<1024x128xbf16, #tpu.memory_space<vmem>>, vector<1024x128xbf16>
    %c0_10 = arith.constant 0 : index
    %c0_11 = arith.constant 0 : index
    %15 = vector.load %arg5[%c0_10, %c0_11] : memref<1x128xf32, #tpu.memory_space<vmem>>, vector<1x128xf32>
    %16 = arith.truncf %13 : vector<16x1024xf32> to vector<16x1024xbf16>
    %cst_12 = arith.constant dense<0.000000e+00> : vector<16x128xf32>
    %17 = tpu.matmul %16, %14, %cst_12 {dimension_numbers = #tpu.dot_dimension_numbers<[1], [0], [0], [1], [0, 0, 1, 1], [], []>} : vector<16x1024xbf16>, vector<1024x128xbf16>, vector<16x128xf32> -> vector<16x128xf32>
    %18 = vector.broadcast %15 : vector<1x128xf32> to vector<16x128xf32>
    %19 = arith.addf %17, %18 : vector<16x128xf32>
    %cst_13 = arith.constant 5.000000e-01 : f32
    %20 = vector.broadcast %cst_13 : f32 to vector<16x128xf32>
    %21 = arith.mulf %20, %19 : vector<16x128xf32>
    %cst_14 = arith.constant 0.707106769 : f32
    %22 = vector.broadcast %cst_14 : f32 to vector<16x128xf32>
    %23 = arith.mulf %19, %22 : vector<16x128xf32>
    %24 = math.erf %23 : vector<16x128xf32>
    %cst_15 = arith.constant 1.000000e+00 : f32
    %25 = vector.broadcast %cst_15 : f32 to vector<16x128xf32>
    %26 = arith.addf %25, %24 : vector<16x128xf32>
    %27 = arith.mulf %21, %26 : vector<16x128xf32>
    %c0_16 = arith.constant 0 : index
    %c0_17 = arith.constant 0 : index
    %28 = vector.load %arg6[%c0_16, %c0_17] : memref<128x384xbf16, #tpu.memory_space<vmem>>, vector<128x128xbf16>
    %c0_18 = arith.constant 0 : index
    %c0_19 = arith.constant 0 : index
    %29 = vector.load %arg7[%c0_18, %c0_19] : memref<1x384xf32, #tpu.memory_space<vmem>>, vector<1x128xf32>
    %30 = arith.truncf %27 : vector<16x128xf32> to vector<16x128xbf16>
    %cst_20 = arith.constant dense<0.000000e+00> : vector<16x128xf32>
    %31 = tpu.matmul %30, %28, %cst_20 {dimension_numbers = #tpu.dot_dimension_numbers<[1], [0], [0], [1], [0, 0, 1, 1], [], []>} : vector<16x128xbf16>, vector<128x128xbf16>, vector<16x128xf32> -> vector<16x128xf32>
    %32 = vector.broadcast %29 : vector<1x128xf32> to vector<16x128xf32>
    %33 = arith.addf %31, %32 : vector<16x128xf32>
    %cst_21 = arith.constant 5.000000e-01 : f32
    %34 = vector.broadcast %cst_21 : f32 to vector<16x128xf32>
    %35 = arith.mulf %34, %33 : vector<16x128xf32>
    %cst_22 = arith.constant 0.707106769 : f32
    %36 = vector.broadcast %cst_22 : f32 to vector<16x128xf32>
    %37 = arith.mulf %33, %36 : vector<16x128xf32>
    %38 = math.erf %37 : vector<16x128xf32>
    %cst_23 = arith.constant 1.000000e+00 : f32
    %39 = vector.broadcast %cst_23 : f32 to vector<16x128xf32>
    %40 = arith.addf %39, %38 : vector<16x128xf32>
    %41 = arith.mulf %35, %40 : vector<16x128xf32>
    %c0_24 = arith.constant 0 : index
    %c128 = arith.constant 128 : index
    %42 = vector.load %arg6[%c0_24, %c128] : memref<128x384xbf16, #tpu.memory_space<vmem>>, vector<128x128xbf16>
    %c0_25 = arith.constant 0 : index
    %c128_26 = arith.constant 128 : index
    %43 = vector.load %arg7[%c0_25, %c128_26] : memref<1x384xf32, #tpu.memory_space<vmem>>, vector<1x128xf32>
    %44 = arith.truncf %41 : vector<16x128xf32> to vector<16x128xbf16>
    %cst_27 = arith.constant dense<0.000000e+00> : vector<16x128xf32>
    %45 = tpu.matmul %44, %42, %cst_27 {dimension_numbers = #tpu.dot_dimension_numbers<[1], [0], [0], [1], [0, 0, 1, 1], [], []>} : vector<16x128xbf16>, vector<128x128xbf16>, vector<16x128xf32> -> vector<16x128xf32>
    %46 = vector.broadcast %43 : vector<1x128xf32> to vector<16x128xf32>
    %47 = arith.addf %45, %46 : vector<16x128xf32>
    %cst_28 = arith.constant 5.000000e-01 : f32
    %48 = vector.broadcast %cst_28 : f32 to vector<16x128xf32>
    %49 = arith.mulf %48, %47 : vector<16x128xf32>
    %cst_29 = arith.constant 0.707106769 : f32
    %50 = vector.broadcast %cst_29 : f32 to vector<16x128xf32>
    %51 = arith.mulf %47, %50 : vector<16x128xf32>
    %52 = math.erf %51 : vector<16x128xf32>
    %cst_30 = arith.constant 1.000000e+00 : f32
    %53 = vector.broadcast %cst_30 : f32 to vector<16x128xf32>
    %54 = arith.addf %53, %52 : vector<16x128xf32>
    %55 = arith.mulf %49, %54 : vector<16x128xf32>
    %c0_31 = arith.constant 0 : index
    %c256 = arith.constant 256 : index
    %56 = vector.load %arg6[%c0_31, %c256] : memref<128x384xbf16, #tpu.memory_space<vmem>>, vector<128x128xbf16>
    %c0_32 = arith.constant 0 : index
    %c256_33 = arith.constant 256 : index
    %57 = vector.load %arg7[%c0_32, %c256_33] : memref<1x384xf32, #tpu.memory_space<vmem>>, vector<1x128xf32>
    %58 = arith.truncf %55 : vector<16x128xf32> to vector<16x128xbf16>
    %cst_34 = arith.constant dense<0.000000e+00> : vector<16x128xf32>
    %59 = tpu.matmul %58, %56, %cst_34 {dimension_numbers = #tpu.dot_dimension_numbers<[1], [0], [0], [1], [0, 0, 1, 1], [], []>} : vector<16x128xbf16>, vector<128x128xbf16>, vector<16x128xf32> -> vector<16x128xf32>
    %60 = vector.broadcast %57 : vector<1x128xf32> to vector<16x128xf32>
    %61 = arith.addf %59, %60 : vector<16x128xf32>
    %c0_35 = arith.constant 0 : index
    %c0_36 = arith.constant 0 : index
    %62 = vector.load %arg8[%c0_35, %c0_36] : memref<16x128xf32, #tpu.memory_space<vmem>>, vector<16x128xf32>
    tpu.vector_store %arg8[%c0_35, %c0_36], %61 {strides = array<i32>} : memref<16x128xf32, #tpu.memory_space<vmem>>, vector<16x128xf32>,
    return
  }
  func.func @transform_0(%arg0: i32) -> (i32, i32) {
    %c0_i32 = arith.constant 0 : i32
    %c0_i32_0 = arith.constant 0 : i32
    return %arg0, %c0_i32 : i32, i32
  }
  func.func @transform_1(%arg0: i32) -> (i32, i32) {
    %c0_i32 = arith.constant 0 : i32
    %c0_i32_0 = arith.constant 0 : i32
    %c0_i32_1 = arith.constant 0 : i32
    return %c0_i32, %c0_i32_0 : i32, i32
  }
  func.func @transform_2(%arg0: i32) -> (i32, i32) {
    %c0_i32 = arith.constant 0 : i32
    %c0_i32_0 = arith.constant 0 : i32
    %c0_i32_1 = arith.constant 0 : i32
    return %c0_i32, %c0_i32_0 : i32, i32
  }
  func.func @transform_3(%arg0: i32) -> (i32, i32) {
    %c0_i32 = arith.constant 0 : i32
    %c0_i32_0 = arith.constant 0 : i32
    %c0_i32_1 = arith.constant 0 : i32
    return %c0_i32, %c0_i32_0 : i32, i32
  }
  func.func @transform_4(%arg0: i32) -> (i32, i32) {
    %c0_i32 = arith.constant 0 : i32
    %c0_i32_0 = arith.constant 0 : i32
    %c0_i32_1 = arith.constant 0 : i32
    return %c0_i32, %c0_i32_0 : i32, i32
  }
  func.func @transform_5(%arg0: i32) -> (i32, i32) {
    %c0_i32 = arith.constant 0 : i32
    %c0_i32_0 = arith.constant 0 : i32
    %c0_i32_1 = arith.constant 0 : i32
    return %c0_i32, %c0_i32_0 : i32, i32
  }
  func.func @transform_6(%arg0: i32) -> (i32, i32) {
    %c0_i32 = arith.constant 0 : i32
    %c0_i32_0 = arith.constant 0 : i32
    %c0_i32_1 = arith.constant 0 : i32
    return %c0_i32, %c0_i32_0 : i32, i32
  }
  func.func @transform_7(%arg0: i32) -> (i32, i32) {
    %c0_i32 = arith.constant 0 : i32
    %c0_i32_0 = arith.constant 0 : i32
    return %arg0, %c0_i32 : i32, i32
  }
}

module attributes {stable_mosaic.version = 11 : i64} {
  func.func @_mlp_reward_kernel(%arg0: i32, %arg1: memref<16x768xbf16, #tpu.memory_space<vmem>>, %arg2: memref<768x1024xbf16, #tpu.memory_space<vmem>>, %arg3: memref<1x1024xf32, #tpu.memory_space<vmem>>, %arg4: memref<1024x128xbf16, #tpu.memory_space<vmem>>, %arg5: memref<1x128xf32, #tpu.memory_space<vmem>>, %arg6: memref<128x384xbf16, #tpu.memory_space<vmem>>, %arg7: memref<1x384xf32, #tpu.memory_space<vmem>>, %arg8: memref<16x128xf32, #tpu.memory_space<vmem>>) attributes {dimension_semantics = [#tpu.dimension_semantics<parallel>], iteration_bounds = array<i64: 1>, scalar_prefetch = 0 : i64, scratch_operands = 0 : i64, tpu.core_type = #tpu.core_type<tc>, window_params = [{transform_indices = @transform_0, window_bounds = array<i64: 16, 768>}, {pipeline_mode = #tpu.pipeline_mode<synchronous>, transform_indices = @transform_1, window_bounds = array<i64: 768, 1024>}, {pipeline_mode = #tpu.pipeline_mode<synchronous>, transform_indices = @transform_2, window_bounds = array<i64: 1, 1024>}, {pipeline_mode = #tpu.pipeline_mode<synchronous>, transform_indices = @transform_3, window_bounds = array<i64: 1024, 128>}, {pipeline_mode = #tpu.pipeline_mode<synchronous>, transform_indices = @transform_4, window_bounds = array<i64: 1, 128>}, {pipeline_mode = #tpu.pipeline_mode<synchronous>, transform_indices = @transform_5, window_bounds = array<i64: 128, 384>}, {pipeline_mode = #tpu.pipeline_mode<synchronous>, transform_indices = @transform_6, window_bounds = array<i64: 1, 384>}, {transform_indices = @transform_7, window_bounds = array<i64: 16, 128>}]} {
    %c0 = arith.constant 0 : index
    %c0_0 = arith.constant 0 : index
    %0 = vector.load %arg1[%c0, %c0_0] : memref<16x768xbf16, #tpu.memory_space<vmem>>, vector<16x768xbf16>
    %c0_1 = arith.constant 0 : index
    %c0_2 = arith.constant 0 : index
    %1 = vector.load %arg2[%c0_1, %c0_2] : memref<768x1024xbf16, #tpu.memory_space<vmem>>, vector<768x1024xbf16>
    %c0_3 = arith.constant 0 : index
    %c0_4 = arith.constant 0 : index
    %2 = vector.load %arg3[%c0_3, %c0_4] : memref<1x1024xf32, #tpu.memory_space<vmem>>, vector<1x1024xf32>
    %cst = arith.constant dense<0.000000e+00> : vector<16x1024xf32>
    %3 = tpu.matmul %0, %1, %cst {dimension_numbers = #tpu.dot_dimension_numbers<[1], [0], [0], [1], [0, 0, 1, 1], [], []>} : vector<16x768xbf16>, vector<768x1024xbf16>, vector<16x1024xf32> -> vector<16x1024xf32>
    %4 = vector.broadcast %2 : vector<1x1024xf32> to vector<16x1024xf32>
    %5 = arith.addf %3, %4 : vector<16x1024xf32>
    %cst_5 = arith.constant 5.000000e-01 : f32
    %6 = vector.broadcast %cst_5 : f32 to vector<16x1024xf32>
    %7 = arith.mulf %6, %5 : vector<16x1024xf32>
    %cst_6 = arith.constant 0.707106769 : f32
    %8 = vector.broadcast %cst_6 : f32 to vector<16x1024xf32>
    %9 = arith.mulf %5, %8 : vector<16x1024xf32>
    %10 = math.erf %9 : vector<16x1024xf32>
    %cst_7 = arith.constant 1.000000e+00 : f32
    %11 = vector.broadcast %cst_7 : f32 to vector<16x1024xf32>
    %12 = arith.addf %11, %10 : vector<16x1024xf32>
    %13 = arith.mulf %7, %12 : vector<16x1024xf32>
    %c0_8 = arith.constant 0 : index
    %c0_9 = arith.constant 0 : index
    %14 = vector.load %arg4[%c0_8, %c0_9] : memref<1024x128xbf16, #tpu.memory_space<vmem>>, vector<1024x128xbf16>
    %c0_10 = arith.constant 0 : index
    %c0_11 = arith.constant 0 : index
    %15 = vector.load %arg5[%c0_10, %c0_11] : memref<1x128xf32, #tpu.memory_space<vmem>>, vector<1x128xf32>
    %16 = arith.truncf %13 : vector<16x1024xf32> to vector<16x1024xbf16>
    %cst_12 = arith.constant dense<0.000000e+00> : vector<16x128xf32>
    %17 = tpu.matmul %16, %14, %cst_12 {dimension_numbers = #tpu.dot_dimension_numbers<[1], [0], [0], [1], [0, 0, 1, 1], [], []>} : vector<16x1024xbf16>, vector<1024x128xbf16>, vector<16x128xf32> -> vector<16x128xf32>
    %18 = vector.broadcast %15 : vector<1x128xf32> to vector<16x128xf32>
    %19 = arith.addf %17, %18 : vector<16x128xf32>
    %cst_13 = arith.constant 5.000000e-01 : f32
    %20 = vector.broadcast %cst_13 : f32 to vector<16x128xf32>
    %21 = arith.mulf %20, %19 : vector<16x128xf32>
    %cst_14 = arith.constant 0.707106769 : f32
    %22 = vector.broadcast %cst_14 : f32 to vector<16x128xf32>
    %23 = arith.mulf %19, %22 : vector<16x128xf32>
    %24 = math.erf %23 : vector<16x128xf32>
    %cst_15 = arith.constant 1.000000e+00 : f32
    %25 = vector.broadcast %cst_15 : f32 to vector<16x128xf32>
    %26 = arith.addf %25, %24 : vector<16x128xf32>
    %27 = arith.mulf %21, %26 : vector<16x128xf32>
    %c0_16 = arith.constant 0 : index
    %c0_17 = arith.constant 0 : index
    %28 = vector.load %arg6[%c0_16, %c0_17] : memref<128x384xbf16, #tpu.memory_space<vmem>>, vector<128x128xbf16>
    %c0_18 = arith.constant 0 : index
    %c0_19 = arith.constant 0 : index
    %29 = vector.load %arg7[%c0_18, %c0_19] : memref<1x384xf32, #tpu.memory_space<vmem>>, vector<1x128xf32>
    %30 = arith.truncf %27 : vector<16x128xf32> to vector<16x128xbf16>
    %cst_20 = arith.constant dense<0.000000e+00> : vector<16x128xf32>
    %31 = tpu.matmul %30, %28, %cst_20 {dimension_numbers = #tpu.dot_dimension_numbers<[1], [0], [0], [1], [0, 0, 1, 1], [], []>} : vector<16x128xbf16>, vector<128x128xbf16>, vector<16x128xf32> -> vector<16x128xf32>
    %32 = vector.broadcast %29 : vector<1x128xf32> to vector<16x128xf32>
    %33 = arith.addf %31, %32 : vector<16x128xf32>
    %cst_21 = arith.constant 5.000000e-01 : f32
    %34 = vector.broadcast %cst_21 : f32 to vector<16x128xf32>
    %35 = arith.mulf %34, %33 : vector<16x128xf32>
    %cst_22 = arith.constant 0.707106769 : f32
    %36 = vector.broadcast %cst_22 : f32 to vector<16x128xf32>
    %37 = arith.mulf %33, %36 : vector<16x128xf32>
    %38 = math.erf %37 : vector<16x128xf32>
    %cst_23 = arith.constant 1.000000e+00 : f32
    %39 = vector.broadcast %cst_23 : f32 to vector<16x128xf32>
    %40 = arith.addf %39, %38 : vector<16x128xf32>
    %41 = arith.mulf %35, %40 : vector<16x128xf32>
    %c0_24 = arith.constant 0 : index
    %c128 = arith.constant 128 : index
    %42 = vector.load %arg6[%c0_24, %c128] : memref<128x384xbf16, #tpu.memory_space<vmem>>, vector<128x128xbf16>
    %c0_25 = arith.constant 0 : index
    %c128_26 = arith.constant 128 : index
    %43 = vector.load %arg7[%c0_25, %c128_26] : memref<1x384xf32, #tpu.memory_space<vmem>>, vector<1x128xf32>
    %44 = arith.truncf %41 : vector<16x128xf32> to vector<16x128xbf16>
    %cst_27 = arith.constant dense<0.000000e+00> : vector<16x128xf32>
    %45 = tpu.matmul %44, %42, %cst_27 {dimension_numbers = #tpu.dot_dimension_numbers<[1], [0], [0], [1], [0, 0, 1, 1], [], []>} : vector<16x128xbf16>, vector<128x128xbf16>, vector<16x128xf32> -> vector<16x128xf32>
    %46 = vector.broadcast %43 : vector<1x128xf32> to vector<16x128xf32>
    %47 = arith.addf %45, %46 : vector<16x128xf32>
    %cst_28 = arith.constant 5.000000e-01 : f32
    %48 = vector.broadcast %cst_28 : f32 to vector<16x128xf32>
    %49 = arith.mulf %48, %47 : vector<16x128xf32>
    %cst_29 = arith.constant 0.707106769 : f32
    %50 = vector.broadcast %cst_29 : f32 to vector<16x128xf32>
    %51 = arith.mulf %47, %50 : vector<16x128xf32>
    %52 = math.erf %51 : vector<16x128xf32>
    %cst_30 = arith.constant 1.000000e+00 : f32
    %53 = vector.broadcast %cst_30 : f32 to vector<16x128xf32>
    %54 = arith.addf %53, %52 : vector<16x128xf32>
    %55 = arith.mulf %49, %54 : vector<16x128xf32>
    %c0_31 = arith.constant 0 : index
    %c256 = arith.constant 256 : index
    %56 = vector.load %arg6[%c0_31, %c256] : memref<128x384xbf16, #tpu.memory_space<vmem>>, vector<128x128xbf16>
    %c0_32 = arith.constant 0 : index
    %c256_33 = arith.constant 256 : index
    %57 = vector.load %arg7[%c0_32, %c256_33] : memref<1x384xf32, #tpu.memory_space<vmem>>, vector<1x128xf32>
    %58 = arith.truncf %55 : vector<16x128xf32> to vector<16x128xbf16>
    %cst_34 = arith.constant dense<0.000000e+00> : vector<16x128xf32>
    %59 = tpu.matmul %58, %56, %cst_34 {dimension_numbers = #tpu.dot_dimension_numbers<[1], [0], [0], [1], [0, 0, 1, 1], [], []>} : vector<16x128xbf16>, vector<128x128xbf16>, vector<16x128xf32> -> vector<16x128xf32>
    %60 = vector.broadcast %57 : vector<1x128xf32> to vector<16x128xf32>
    %61 = arith.addf %59, %60 : vector<16x128xf32>
    %c0_35 = arith.constant 0 : index
    %c0_36 = arith.constant 0 : index
    %62 = vector.load %arg8[%c0_35, %c0_36] : memref<16x128xf32, #tpu.memory_space<vmem>>, vector<16x128xf32>
    tpu.vector_store %arg8[%c0_35, %c0_36], %61 {strides = array<i32>} : memref<16x128xf32, #tpu.memory_space<vmem>>, vector<16x128xf32>,
    return
  }
  func.func @transform_0(%arg0: i32) -> (i32, i32) {
    %c0_i32 = arith.constant 0 : i32
    %c0_i32_0 = arith.constant 0 : i32
    return %arg0, %c0_i32 : i32, i32
  }
  func.func @transform_1(%arg0: i32) -> (i32, i32) {
    %c0_i32 = arith.constant 0 : i32
    %c0_i32_0 = arith.constant 0 : i32
    %c0_i32_1 = arith.constant 0 : i32
    return %c0_i32, %c0_i32_0 : i32, i32
  }
  func.func @transform_2(%arg0: i32) -> (i32, i32) {
    %c0_i32 = arith.constant 0 : i32
    %c0_i32_0 = arith.constant 0 : i32
    %c0_i32_1 = arith.constant 0 : i32
    return %c0_i32, %c0_i32_0 : i32, i32
  }
  func.func @transform_3(%arg0: i32) -> (i32, i32) {
    %c0_i32 = arith.constant 0 : i32
    %c0_i32_0 = arith.constant 0 : i32
    %c0_i32_1 = arith.constant 0 : i32
    return %c0_i32, %c0_i32_0 : i32, i32
  }
  func.func @transform_4(%arg0: i32) -> (i32, i32) {
    %c0_i32 = arith.constant 0 : i32
    %c0_i32_0 = arith.constant 0 : i32
    %c0_i32_1 = arith.constant 0 : i32
    return %c0_i32, %c0_i32_0 : i32, i32
  }
  func.func @transform_5(%arg0: i32) -> (i32, i32) {
    %c0_i32 = arith.constant 0 : i32
    %c0_i32_0 = arith.constant 0 : i32
    %c0_i32_1 = arith.constant 0 : i32
    return %c0_i32, %c0_i32_0 : i32, i32
  }
  func.func @transform_6(%arg0: i32) -> (i32, i32) {
    %c0_i32 = arith.constant 0 : i32
    %c0_i32_0 = arith.constant 0 : i32
    %c0_i32_1 = arith.constant 0 : i32
    return %c0_i32, %c0_i32_0 : i32, i32
  }
  func.func @transform_7(%arg0: i32) -> (i32, i32) {
    %c0_i32 = arith.constant 0 : i32
    %c0_i32_0 = arith.constant 0 : i32
    return %arg0, %c0_i32 : i32, i32
  }
}

</mosaic_0001>

<llo_original>
// kernel: tpu_custom_call.1
$region0: #{tpu_custom_call.1}
  #allocation0 [shape = 'u32[]', space=smem, size = 0x4, offset = 0x4, fixed_abs, tag = 'smem constant byte address 0x4 - core index']
  #allocation1 [shape = 'u32[144,128]{1,0:T(1,128)}', space=vmem, size = 0x12000, scoped, tag = 'internal scratch']
  %s0 = inlined_call_operand.hbm [shape: bf16[16,768], index: 0, kind: input, shape index: {}]
  %s1 = inlined_call_operand.hbm [shape: bf16[768,1024], index: 1, kind: input, shape index: {}]
  %s2 = inlined_call_operand.hbm [shape: f32[1,1024], index: 2, kind: input, shape index: {}]
  %s3 = inlined_call_operand.hbm [shape: bf16[1024,128], index: 3, kind: input, shape index: {}]
  %s4 = inlined_call_operand.hbm [shape: f32[1,128], index: 4, kind: input, shape index: {}]
  %s5 = inlined_call_operand.hbm [shape: bf16[128,384], index: 5, kind: input, shape index: {}]
  %s6 = inlined_call_operand.hbm [shape: f32[1,384], index: 6, kind: input, shape index: {}]
  %s7 = inlined_call_operand.hbm [shape: f32[16,128], index: 7, kind: output, shape index: {}]
  %s8 = sld [smem:[#allocation0]]
  $region66: #{tpu_custom_call.1} parent=0
    _
  %s10 = ssub.s32 1, %s8
  %s11 = scalar_select 0, %s10, %s8
  $region1: #{tpu_custom_call.1} parent=0
    #allocation2 [shape = 'u8[24576]{0}', space=vmem, size = 0x6000, scoped, tag = 'input window, operand 0, single buffered']
    #allocation3 [shape = 's32[1]{0}', space=sflag, size = 0x4, scoped, tag = 'scoped memory for tpu_custom_call.1']
    #allocation4 [shape = 's32[1]{0}', space=sflag, size = 0x4, scoped, tag = 'scoped memory for tpu_custom_call.1']
    #allocation5 [shape = 'u8[1572864]{0}', space=vmem, size = 0x180000, scoped, tag = 'input window, operand 1, single buffered']
    #allocation6 [shape = 's32[1]{0}', space=sflag, size = 0x4, scoped, tag = 'scoped memory for tpu_custom_call.1']
    #allocation7 [shape = 'u8[4096]{0}', space=vmem, size = 0x1000, scoped, tag = 'input window, operand 2, single buffered']
    #allocation8 [shape = 'u8[262144]{0}', space=vmem, size = 0x40000, scoped, tag = 'input window, operand 3, single buffered']
    #allocation9 [shape = 's32[1]{0}', space=sflag, size = 0x4, scoped, tag = 'scoped memory for tpu_custom_call.1']
    #allocation10 [shape = 'u8[512]{0}', space=vmem, size = 0x400, scoped, tag = 'input window, operand 4, single buffered']
    #allocation11 [shape = 'u8[98304]{0}', space=vmem, size = 0x18000, scoped, tag = 'input window, operand 5, single buffered']
    #allocation12 [shape = 's32[1]{0}', space=sflag, size = 0x4, scoped, tag = 'scoped memory for tpu_custom_call.1']
    #allocation13 [shape = 'u8[1536]{0}', space=vmem, size = 0x800, scoped, tag = 'input window, operand 6, single buffered']
    #allocation14 [shape = 'u8[8192]{0}', space=vmem, size = 0x2000, scoped, tag = 'output window, operand 0, single buffered']
    %12 = vsyncpa [#allocation3], 0
    %13 = vsyncpa [#allocation6], 0
    %14 = vsyncpa [#allocation9], 0
    %15 = vsyncpa [#allocation12], 0
    %16 = vsyncpa [#allocation4], 0
    // Predicated region
    $region2: #{tpu_custom_call.1} parent=1 // pred_check
      _
    $region3: #{tpu_custom_call.1} parent=1 // pred_check_branch
      %18 = sbr.rel (0) target = $region5
    $region4: #{tpu_custom_call.1} parent=1 // pred_region
      %s20 = ssub.s32 768, 768
      %21 = vsyncadd [#allocation3], %s20
      %s22 = sshll.u32 [#allocation2], 4
      %s23 = int_to_ptr.vmem [resolvable:$true] %s22
      %28 = dma.hbm_to_vmem [thread:$0]  %s0, 768, %s23, [#allocation3], 384, 384, 24
    $region5: #{tpu_custom_call.1} parent=1 // pred_fallthru
      _
    // Predicated region
    $region6: #{tpu_custom_call.1} parent=1 // pred_check
      _
    $region7: #{tpu_custom_call.1} parent=1 // pred_check_branch
      %30 = sbr.rel (0) target = $region9
    $region8: #{tpu_custom_call.1} parent=1 // pred_region
      %s32 = ssub.s32 49152, 49152
      %33 = vsyncadd [#allocation6], %s32
      %s34 = sshll.u32 [#allocation5], 4
      %s35 = int_to_ptr.vmem [resolvable:$true] %s34
      %40 = dma.hbm_to_vmem [thread:$0]  %s1, 49152, %s35, [#allocation6], 512, 512, 32
    $region9: #{tpu_custom_call.1} parent=1 // pred_fallthru
      _
    // Predicated region
    $region10: #{tpu_custom_call.1} parent=1 // pred_check
      _
    $region11: #{tpu_custom_call.1} parent=1 // pred_check_branch
      %42 = sbr.rel (0) target = $region13
    $region12: #{tpu_custom_call.1} parent=1 // pred_region
      %s44 = ssub.s32 128, 128
      %45 = vsyncadd [#allocation6], %s44
      %s47 = sshll.u32 [#allocation7], 4
      %s48 = int_to_ptr.vmem [resolvable:$true] %s47
      %50 = dma.hbm_to_vmem [thread:$0]  %s2, 128, %s48, [#allocation6]
    $region13: #{tpu_custom_call.1} parent=1 // pred_fallthru
      _
    // Predicated region
    $region14: #{tpu_custom_call.1} parent=1 // pred_check
      _
    $region15: #{tpu_custom_call.1} parent=1 // pred_check_branch
      %52 = sbr.rel (0) target = $region17
    $region16: #{tpu_custom_call.1} parent=1 // pred_region
      %s54 = ssub.s32 8192, 8192
      %55 = vsyncadd [#allocation9], %s54
      %s56 = sshll.u32 [#allocation8], 4
      %s57 = int_to_ptr.vmem [resolvable:$true] %s56
      %62 = dma.hbm_to_vmem [thread:$0]  %s3, 8192, %s57, [#allocation9], 64, 64, 4
    $region17: #{tpu_custom_call.1} parent=1 // pred_fallthru
      _
    // Predicated region
    $region18: #{tpu_custom_call.1} parent=1 // pred_check
      _
    $region19: #{tpu_custom_call.1} parent=1 // pred_check_branch
      %64 = sbr.rel (0) target = $region21
    $region20: #{tpu_custom_call.1} parent=1 // pred_region
      %s66 = ssub.s32 16, 16
      %67 = vsyncadd [#allocation9], %s66
      %s69 = sshll.u32 [#allocation10], 4
      %s70 = int_to_ptr.vmem [resolvable:$true] %s69
      %72 = dma.hbm_to_vmem [thread:$0]  %s4, 16, %s70, [#allocation9]
    $region21: #{tpu_custom_call.1} parent=1 // pred_fallthru
      _
    // Predicated region
    $region22: #{tpu_custom_call.1} parent=1 // pred_check
      _
    $region23: #{tpu_custom_call.1} parent=1 // pred_check_branch
      %74 = sbr.rel (0) target = $region25
    $region24: #{tpu_custom_call.1} parent=1 // pred_region
      %s76 = ssub.s32 3072, 3072
      %77 = vsyncadd [#allocation12], %s76
      %s78 = sshll.u32 [#allocation11], 4
      %s79 = int_to_ptr.vmem [resolvable:$true] %s78
      %84 = dma.hbm_to_vmem [thread:$0]  %s5, 3072, %s79, [#allocation12], 192, 192, 12
    $region25: #{tpu_custom_call.1} parent=1 // pred_fallthru
      _
    // Predicated region
    $region26: #{tpu_custom_call.1} parent=1 // pred_check
      _
    $region27: #{tpu_custom_call.1} parent=1 // pred_check_branch
      %86 = sbr.rel (0) target = $region29
    $region28: #{tpu_custom_call.1} parent=1 // pred_region
      %s88 = ssub.s32 48, 48
      %89 = vsyncadd [#allocation12], %s88
      %s91 = sshll.u32 [#allocation13], 4
      %s92 = int_to_ptr.vmem [resolvable:$true] %s91
      %94 = dma.hbm_to_vmem [thread:$0]  %s6, 48, %s92, [#allocation12]
    $region29: #{tpu_custom_call.1} parent=1 // pred_fallthru
      _
    // Predicated region
    $region30: #{tpu_custom_call.1} parent=1 // pred_check
      _
    $region31: #{tpu_custom_call.1} parent=1 // pred_check_branch
      %96 = sbr.rel (0) target = $region33
    $region32: #{tpu_custom_call.1} parent=1 // pred_region
      %97 = dma.done [#allocation3], 768
    $region33: #{tpu_custom_call.1} parent=1 // pred_fallthru
      _
    // Predicated region
    $region34: #{tpu_custom_call.1} parent=1 // pred_check
      _
    $region35: #{tpu_custom_call.1} parent=1 // pred_check_branch
      %99 = sbr.rel (0) target = $region37
    $region36: #{tpu_custom_call.1} parent=1 // pred_region
      %100 = dma.done [#allocation6], 49152
    $region37: #{tpu_custom_call.1} parent=1 // pred_fallthru
      _
    // Predicated region
    $region38: #{tpu_custom_call.1} parent=1 // pred_check
      _
    $region39: #{tpu_custom_call.1} parent=1 // pred_check_branch
      %102 = sbr.rel (0) target = $region41
    $region40: #{tpu_custom_call.1} parent=1 // pred_region
      %103 = dma.done [#allocation6], 128
    $region41: #{tpu_custom_call.1} parent=1 // pred_fallthru
      _
    // Predicated region
    $region42: #{tpu_custom_call.1} parent=1 // pred_check
      _
    $region43: #{tpu_custom_call.1} parent=1 // pred_check_branch
      %105 = sbr.rel (0) target = $region45
    $region44: #{tpu_custom_call.1} parent=1 // pred_region
      %106 = dma.done [#allocation9], 8192
    $region45: #{tpu_custom_call.1} parent=1 // pred_fallthru
      _
    // Predicated region
    $region46: #{tpu_custom_call.1} parent=1 // pred_check
      _
    $region47: #{tpu_custom_call.1} parent=1 // pred_check_branch
      %108 = sbr.rel (0) target = $region49
    $region48: #{tpu_custom_call.1} parent=1 // pred_region
      %109 = dma.done [#allocation9], 16
    $region49: #{tpu_custom_call.1} parent=1 // pred_fallthru
      _
    // Predicated region
    $region50: #{tpu_custom_call.1} parent=1 // pred_check
      _
    $region51: #{tpu_custom_call.1} parent=1 // pred_check_branch
      %111 = sbr.rel (0) target = $region53
    $region52: #{tpu_custom_call.1} parent=1 // pred_region
      %112 = dma.done [#allocation12], 3072
    $region53: #{tpu_custom_call.1} parent=1 // pred_fallthru
      _
    // Predicated region
    $region54: #{tpu_custom_call.1} parent=1 // pred_check
      _
    $region55: #{tpu_custom_call.1} parent=1 // pred_check_branch
      %114 = sbr.rel (0) target = $region57
    $region56: #{tpu_custom_call.1} parent=1 // pred_region
      %115 = dma.done [#allocation12], 48
    $region57: #{tpu_custom_call.1} parent=1 // pred_fallthru
      _
    %v117 = vld [vmem:[#allocation2] sm:$0xff]
    %v118 = vld [vmem:[#allocation2 + $0x8] sm:$0xff]
    %v119 = vld [vmem:[#allocation2 + $0x10] sm:$0xff]
    %v120 = vld [vmem:[#allocation2 + $0x18] sm:$0xff]
    %v121 = vld [vmem:[#allocation2 + $0x20] sm:$0xff]
    %v122 = vld [vmem:[#allocation2 + $0x28] sm:$0xff]
    %v123 = vld [vmem:[#allocation5] sm:$0xff]
    %v124 = vld [vmem:[#allocation5 + $0x8] sm:$0xff]
    %v125 = vld [vmem:[#allocation5 + $0x10] sm:$0xff]
    %v126 = vld [vmem:[#allocation5 + $0x18] sm:$0xff]
    %v127 = vld [vmem:[#allocation5 + $0x20] sm:$0xff]
    %v128 = vld [vmem:[#allocation5 + $0x28] sm:$0xff]
    %v129 = vld [vmem:[#allocation5 + $0x30] sm:$0xff]
    %v130 = vld [vmem:[#allocation5 + $0x38] sm:$0xff]
    %v131 = vld [vmem:[#allocation5 + $0x40] sm:$0xff]
    %v132 = vld [vmem:[#allocation5 + $0x48] sm:$0xff]
    %v133 = vld [vmem:[#allocation5 + $0x50] sm:$0xff]
    %v134 = vld [vmem:[#allocation5 + $0x58] sm:$0xff]
    %v135 = vld [vmem:[#allocation5 + $0x60] sm:$0xff]
    %v136 = vld [vmem:[#allocation5 + $0x68] sm:$0xff]
    %v137 = vld [vmem:[#allocation5 + $0x70] sm:$0xff]
    %v138 = vld [vmem:[#allocation5 + $0x78] sm:$0xff]
    %v139 = vld [vmem:[#allocation5 + $0x80] sm:$0xff]
    %v140 = vld [vmem:[#allocation5 + $0x88] sm:$0xff]
    %v141 = vld [vmem:[#allocation5 + $0x90] sm:$0xff]
    %v142 = vld [vmem:[#allocation5 + $0x98] sm:$0xff]
    %v143 = vld [vmem:[#allocation5 + $0xa0] sm:$0xff]
    %v144 = vld [vmem:[#allocation5 + $0xa8] sm:$0xff]
    %v145 = vld [vmem:[#allocation5 + $0xb0] sm:$0xff]
    %v146 = vld [vmem:[#allocation5 + $0xb8] sm:$0xff]
    %v147 = vld [vmem:[#allocation5 + $0xc0] sm:$0xff]
    %v148 = vld [vmem:[#allocation5 + $0xc8] sm:$0xff]
    %v149 = vld [vmem:[#allocation5 + $0xd0] sm:$0xff]
    %v150 = vld [vmem:[#allocation5 + $0xd8] sm:$0xff]
    %v151 = vld [vmem:[#allocation5 + $0xe0] sm:$0xff]
    %v152 = vld [vmem:[#allocation5 + $0xe8] sm:$0xff]
    %v153 = vld [vmem:[#allocation5 + $0xf0] sm:$0xff]
    %v154 = vld [vmem:[#allocation5 + $0xf8] sm:$0xff]
    %v155 = vld [vmem:[#allocation5 + $0x100] sm:$0xff]
    %v156 = vld [vmem:[#allocation5 + $0x108] sm:$0xff]
    %v157 = vld [vmem:[#allocation5 + $0x110] sm:$0xff]
    %v158 = vld [vmem:[#allocation5 + $0x118] sm:$0xff]
    %v159 = vld [vmem:[#allocation5 + $0x120] sm:$0xff]
    %v160 = vld [vmem:[#allocation5 + $0x128] sm:$0xff]
    %v161 = vld [vmem:[#allocation5 + $0x130] sm:$0xff]
    %v162 = vld [vmem:[#allocation5 + $0x138] sm:$0xff]
    %v163 = vld [vmem:[#allocation5 + $0x140] sm:$0xff]
    %v164 = vld [vmem:[#allocation5 + $0x148] sm:$0xff]
    %v165 = vld [vmem:[#allocation5 + $0x150] sm:$0xff]
    %v166 = vld [vmem:[#allocation5 + $0x158] sm:$0xff]
    %v167 = vld [vmem:[#allocation5 + $0x160] sm:$0xff]
    %v168 = vld [vmem:[#allocation5 + $0x168] sm:$0xff]
    %v169 = vld [vmem:[#allocation5 + $0x170] sm:$0xff]
    %v170 = vld [vmem:[#allocation5 + $0x178] sm:$0xff]
    %v171 = vld [vmem:[#allocation5 + $0x180] sm:$0xff]
    %v172 = vld [vmem:[#allocation5 + $0x188] sm:$0xff]
    %v173 = vld [vmem:[#allocation5 + $0x190] sm:$0xff]
    %v174 = vld [vmem:[#allocation5 + $0x198] sm:$0xff]
    %v175 = vld [vmem:[#allocation5 + $0x1a0] sm:$0xff]
    %v176 = vld [vmem:[#allocation5 + $0x1a8] sm:$0xff]
    %v177 = vld [vmem:[#allocation5 + $0x1b0] sm:$0xff]
    %v178 = vld [vmem:[#allocation5 + $0x1b8] sm:$0xff]
    %v179 = vld [vmem:[#allocation5 + $0x1c0] sm:$0xff]
    %v180 = vld [vmem:[#allocation5 + $0x1c8] sm:$0xff]
    %v181 = vld [vmem:[#allocation5 + $0x1d0] sm:$0xff]
    %v182 = vld [vmem:[#allocation5 + $0x1d8] sm:$0xff]
    %v183 = vld [vmem:[#allocation5 + $0x1e0] sm:$0xff]
    %v184 = vld [vmem:[#allocation5 + $0x1e8] sm:$0xff]
    %v185 = vld [vmem:[#allocation5 + $0x1f0] sm:$0xff]
    %v186 = vld [vmem:[#allocation5 + $0x1f8] sm:$0xff]
    %v187 = vld [vmem:[#allocation5 + $0x200] sm:$0xff]
    %v188 = vld [vmem:[#allocation5 + $0x208] sm:$0xff]
    %v189 = vld [vmem:[#allocation5 + $0x210] sm:$0xff]
    %v190 = vld [vmem:[#allocation5 + $0x218] sm:$0xff]
    %v191 = vld [vmem:[#allocation5 + $0x220] sm:$0xff]
    %v192 = vld [vmem:[#allocation5 + $0x228] sm:$0xff]
    %v193 = vld [vmem:[#allocation5 + $0x230] sm:$0xff]
    %v194 = vld [vmem:[#allocation5 + $0x238] sm:$0xff]
    %v195 = vld [vmem:[#allocation5 + $0x240] sm:$0xff]
    %v196 = vld [vmem:[#allocation5 + $0x248] sm:$0xff]
    %v197 = vld [vmem:[#allocation5 + $0x250] sm:$0xff]
    %v198 = vld [vmem:[#allocation5 + $0x258] sm:$0xff]
    %v199 = vld [vmem:[#allocation5 + $0x260] sm:$0xff]
    %v200 = vld [vmem:[#allocation5 + $0x268] sm:$0xff]
    %v201 = vld [vmem:[#allocation5 + $0x270] sm:$0xff]
    %v202 = vld [vmem:[#allocation5 + $0x278] sm:$0xff]
    %v203 = vld [vmem:[#allocation5 + $0x280] sm:$0xff]
    %v204 = vld [vmem:[#allocation5 + $0x288] sm:$0xff]
    %v205 = vld [vmem:[#allocation5 + $0x290] sm:$0xff]
    %v206 = vld [vmem:[#allocation5 + $0x298] sm:$0xff]
    %v207 = vld [vmem:[#allocation5 + $0x2a0] sm:$0xff]
    %v208 = vld [vmem:[#allocation5 + $0x2a8] sm:$0xff]
    %v209 = vld [vmem:[#allocation5 + $0x2b0] sm:$0xff]
    %v210 = vld [vmem:[#allocation5 + $0x2b8] sm:$0xff]
    %v211 = vld [vmem:[#allocation5 + $0x2c0] sm:$0xff]
    %v212 = vld [vmem:[#allocation5 + $0x2c8] sm:$0xff]
    %v213 = vld [vmem:[#allocation5 + $0x2d0] sm:$0xff]
    %v214 = vld [vmem:[#allocation5 + $0x2d8] sm:$0xff]
    %v215 = vld [vmem:[#allocation5 + $0x2e0] sm:$0xff]
    %v216 = vld [vmem:[#allocation5 + $0x2e8] sm:$0xff]
    %v217 = vld [vmem:[#allocation5 + $0x2f0] sm:$0xff]
    %v218 = vld [vmem:[#allocation5 + $0x2f8] sm:$0xff]
    %v219 = vld [vmem:[#allocation5 + $0x300] sm:$0xff]
    %v220 = vld [vmem:[#allocation5 + $0x308] sm:$0xff]
    %v221 = vld [vmem:[#allocation5 + $0x310] sm:$0xff]
    %v222 = vld [vmem:[#allocation5 + $0x318] sm:$0xff]
    %v223 = vld [vmem:[#allocation5 + $0x320] sm:$0xff]
    %v224 = vld [vmem:[#allocation5 + $0x328] sm:$0xff]
    %v225 = vld [vmem:[#allocation5 + $0x330] sm:$0xff]
    %v226 = vld [vmem:[#allocation5 + $0x338] sm:$0xff]
    %v227 = vld [vmem:[#allocation5 + $0x340] sm:$0xff]
    %v228 = vld [vmem:[#allocation5 + $0x348] sm:$0xff]
    %v229 = vld [vmem:[#allocation5 + $0x350] sm:$0xff]
    %v230 = vld [vmem:[#allocation5 + $0x358] sm:$0xff]
    %v231 = vld [vmem:[#allocation5 + $0x360] sm:$0xff]
    %v232 = vld [vmem:[#allocation5 + $0x368] sm:$0xff]
    %v233 = vld [vmem:[#allocation5 + $0x370] sm:$0xff]
    %v234 = vld [vmem:[#allocation5 + $0x378] sm:$0xff]
    %v235 = vld [vmem:[#allocation5 + $0x380] sm:$0xff]
    %v236 = vld [vmem:[#allocation5 + $0x388] sm:$0xff]
    %v237 = vld [vmem:[#allocation5 + $0x390] sm:$0xff]
    %v238 = vld [vmem:[#allocation5 + $0x398] sm:$0xff]
    %v239 = vld [vmem:[#allocation5 + $0x3a0] sm:$0xff]
    %v240 = vld [vmem:[#allocation5 + $0x3a8] sm:$0xff]
    %v241 = vld [vmem:[#allocation5 + $0x3b0] sm:$0xff]
    %v242 = vld [vmem:[#allocation5 + $0x3b8] sm:$0xff]
    %v243 = vld [vmem:[#allocation5 + $0x3c0] sm:$0xff]
    %v244 = vld [vmem:[#allocation5 + $0x3c8] sm:$0xff]
    %v245 = vld [vmem:[#allocation5 + $0x3d0] sm:$0xff]
    %v246 = vld [vmem:[#allocation5 + $0x3d8] sm:$0xff]
    %v247 = vld [vmem:[#allocation5 + $0x3e0] sm:$0xff]
    %v248 = vld [vmem:[#allocation5 + $0x3e8] sm:$0xff]
    %v249 = vld [vmem:[#allocation5 + $0x3f0] sm:$0xff]
    %v250 = vld [vmem:[#allocation5 + $0x3f8] sm:$0xff]
    %v251 = vld [vmem:[#allocation5 + $0x400] sm:$0xff]
    %v252 = vld [vmem:[#allocation5 + $0x408] sm:$0xff]
    %v253 = vld [vmem:[#allocation5 + $0x410] sm:$0xff]
    %v254 = vld [vmem:[#allocation5 + $0x418] sm:$0xff]
    %v255 = vld [vmem:[#allocation5 + $0x420] sm:$0xff]
    %v256 = vld [vmem:[#allocation5 + $0x428] sm:$0xff]
    %v257 = vld [vmem:[#allocation5 + $0x430] sm:$0xff]
    %v258 = vld [vmem:[#allocation5 + $0x438] sm:$0xff]
    %v259 = vld [vmem:[#allocation5 + $0x440] sm:$0xff]
    %v260 = vld [vmem:[#allocation5 + $0x448] sm:$0xff]
    %v261 = vld [vmem:[#allocation5 + $0x450] sm:$0xff]
    %v262 = vld [vmem:[#allocation5 + $0x458] sm:$0xff]
    %v263 = vld [vmem:[#allocation5 + $0x460] sm:$0xff]
    %v264 = vld [vmem:[#allocation5 + $0x468] sm:$0xff]
    %v265 = vld [vmem:[#allocation5 + $0x470] sm:$0xff]
    %v266 = vld [vmem:[#allocation5 + $0x478] sm:$0xff]
    %v267 = vld [vmem:[#allocation5 + $0x480] sm:$0xff]
    %v268 = vld [vmem:[#allocation5 + $0x488] sm:$0xff]
    %v269 = vld [vmem:[#allocation5 + $0x490] sm:$0xff]
    %v270 = vld [vmem:[#allocation5 + $0x498] sm:$0xff]
    %v271 = vld [vmem:[#allocation5 + $0x4a0] sm:$0xff]
    %v272 = vld [vmem:[#allocation5 + $0x4a8] sm:$0xff]
    %v273 = vld [vmem:[#allocation5 + $0x4b0] sm:$0xff]
    %v274 = vld [vmem:[#allocation5 + $0x4b8] sm:$0xff]
    %v275 = vld [vmem:[#allocation5 + $0x4c0] sm:$0xff]
    %v276 = vld [vmem:[#allocation5 + $0x4c8] sm:$0xff]
    %v277 = vld [vmem:[#allocation5 + $0x4d0] sm:$0xff]
    %v278 = vld [vmem:[#allocation5 + $0x4d8] sm:$0xff]
    %v279 = vld [vmem:[#allocation5 + $0x4e0] sm:$0xff]
    %v280 = vld [vmem:[#allocation5 + $0x4e8] sm:$0xff]
    %v281 = vld [vmem:[#allocation5 + $0x4f0] sm:$0xff]
    %v282 = vld [vmem:[#allocation5 + $0x4f8] sm:$0xff]
    %v283 = vld [vmem:[#allocation5 + $0x500] sm:$0xff]
    %v284 = vld [vmem:[#allocation5 + $0x508] sm:$0xff]
    %v285 = vld [vmem:[#allocation5 + $0x510] sm:$0xff]
    %v286 = vld [vmem:[#allocation5 + $0x518] sm:$0xff]
    %v287 = vld [vmem:[#allocation5 + $0x520] sm:$0xff]
    %v288 = vld [vmem:[#allocation5 + $0x528] sm:$0xff]
    %v289 = vld [vmem:[#allocation5 + $0x530] sm:$0xff]
    %v290 = vld [vmem:[#allocation5 + $0x538] sm:$0xff]
    %v291 = vld [vmem:[#allocation5 + $0x540] sm:$0xff]
    %v292 = vld [vmem:[#allocation5 + $0x548] sm:$0xff]
    %v293 = vld [vmem:[#allocation5 + $0x550] sm:$0xff]
    %v294 = vld [vmem:[#allocation5 + $0x558] sm:$0xff]
    %v295 = vld [vmem:[#allocation5 + $0x560] sm:$0xff]
    %v296 = vld [vmem:[#allocation5 + $0x568] sm:$0xff]
    %v297 = vld [vmem:[#allocation5 + $0x570] sm:$0xff]
    %v298 = vld [vmem:[#allocation5 + $0x578] sm:$0xff]
    %v299 = vld [vmem:[#allocation5 + $0x580] sm:$0xff]
    %v300 = vld [vmem:[#allocation5 + $0x588] sm:$0xff]
    %v301 = vld [vmem:[#allocation5 + $0x590] sm:$0xff]
    %v302 = vld [vmem:[#allocation5 + $0x598] sm:$0xff]
    %v303 = vld [vmem:[#allocation5 + $0x5a0] sm:$0xff]
    %v304 = vld [vmem:[#allocation5 + $0x5a8] sm:$0xff]
    %v305 = vld [vmem:[#allocation5 + $0x5b0] sm:$0xff]
    %v306 = vld [vmem:[#allocation5 + $0x5b8] sm:$0xff]
    %v307 = vld [vmem:[#allocation5 + $0x5c0] sm:$0xff]
    %v308 = vld [vmem:[#allocation5 + $0x5c8] sm:$0xff]
    %v309 = vld [vmem:[#allocation5 + $0x5d0] sm:$0xff]
    %v310 = vld [vmem:[#allocation5 + $0x5d8] sm:$0xff]
    %v311 = vld [vmem:[#allocation5 + $0x5e0] sm:$0xff]
    %v312 = vld [vmem:[#allocation5 + $0x5e8] sm:$0xff]
    %v313 = vld [vmem:[#allocation5 + $0x5f0] sm:$0xff]
    %v314 = vld [vmem:[#allocation5 + $0x5f8] sm:$0xff]
    %v315 = vld [vmem:[#allocation5 + $0x600] sm:$0xff]
    %v316 = vld [vmem:[#allocation5 + $0x608] sm:$0xff]
    %v317 = vld [vmem:[#allocation5 + $0x610] sm:$0xff]
    %v318 = vld [vmem:[#allocation5 + $0x618] sm:$0xff]
    %v319 = vld [vmem:[#allocation5 + $0x620] sm:$0xff]
    %v320 = vld [vmem:[#allocation5 + $0x628] sm:$0xff]
    %v321 = vld [vmem:[#allocation5 + $0x630] sm:$0xff]
    %v322 = vld [vmem:[#allocation5 + $0x638] sm:$0xff]
    %v323 = vld [vmem:[#allocation5 + $0x640] sm:$0xff]
    %v324 = vld [vmem:[#allocation5 + $0x648] sm:$0xff]
    %v325 = vld [vmem:[#allocation5 + $0x650] sm:$0xff]
    %v326 = vld [vmem:[#allocation5 + $0x658] sm:$0xff]
    %v327 = vld [vmem:[#allocation5 + $0x660] sm:$0xff]
    %v328 = vld [vmem:[#allocation5 + $0x668] sm:$0xff]
    %v329 = vld [vmem:[#allocation5 + $0x670] sm:$0xff]
    %v330 = vld [vmem:[#allocation5 + $0x678] sm:$0xff]
    %v331 = vld [vmem:[#allocation5 + $0x680] sm:$0xff]
    %v332 = vld [vmem:[#allocation5 + $0x688] sm:$0xff]
    %v333 = vld [vmem:[#allocation5 + $0x690] sm:$0xff]
    %v334 = vld [vmem:[#allocation5 + $0x698] sm:$0xff]
    %v335 = vld [vmem:[#allocation5 + $0x6a0] sm:$0xff]
    %v336 = vld [vmem:[#allocation5 + $0x6a8] sm:$0xff]
    %v337 = vld [vmem:[#allocation5 + $0x6b0] sm:$0xff]
    %v338 = vld [vmem:[#allocation5 + $0x6b8] sm:$0xff]
    %v339 = vld [vmem:[#allocation5 + $0x6c0] sm:$0xff]
    %v340 = vld [vmem:[#allocation5 + $0x6c8] sm:$0xff]
    %v341 = vld [vmem:[#allocation5 + $0x6d0] sm:$0xff]
    %v342 = vld [vmem:[#allocation5 + $0x6d8] sm:$0xff]
    %v343 = vld [vmem:[#allocation5 + $0x6e0] sm:$0xff]
    %v344 = vld [vmem:[#allocation5 + $0x6e8] sm:$0xff]
    %v345 = vld [vmem:[#allocation5 + $0x6f0] sm:$0xff]
    %v346 = vld [vmem:[#allocation5 + $0x6f8] sm:$0xff]
    %v347 = vld [vmem:[#allocation5 + $0x700] sm:$0xff]
    %v348 = vld [vmem:[#allocation5 + $0x708] sm:$0xff]
    %v349 = vld [vmem:[#allocation5 + $0x710] sm:$0xff]
    %v350 = vld [vmem:[#allocation5 + $0x718] sm:$0xff]
    %v351 = vld [vmem:[#allocation5 + $0x720] sm:$0xff]
    %v352 = vld [vmem:[#allocation5 + $0x728] sm:$0xff]
    %v353 = vld [vmem:[#allocation5 + $0x730] sm:$0xff]
    %v354 = vld [vmem:[#allocation5 + $0x738] sm:$0xff]
    %v355 = vld [vmem:[#allocation5 + $0x740] sm:$0xff]
    %v356 = vld [vmem:[#allocation5 + $0x748] sm:$0xff]
    %v357 = vld [vmem:[#allocation5 + $0x750] sm:$0xff]
    %v358 = vld [vmem:[#allocation5 + $0x758] sm:$0xff]
    %v359 = vld [vmem:[#allocation5 + $0x760] sm:$0xff]
    %v360 = vld [vmem:[#allocation5 + $0x768] sm:$0xff]
    %v361 = vld [vmem:[#allocation5 + $0x770] sm:$0xff]
    %v362 = vld [vmem:[#allocation5 + $0x778] sm:$0xff]
    %v363 = vld [vmem:[#allocation5 + $0x780] sm:$0xff]
    %v364 = vld [vmem:[#allocation5 + $0x788] sm:$0xff]
    %v365 = vld [vmem:[#allocation5 + $0x790] sm:$0xff]
    %v366 = vld [vmem:[#allocation5 + $0x798] sm:$0xff]
    %v367 = vld [vmem:[#allocation5 + $0x7a0] sm:$0xff]
    %v368 = vld [vmem:[#allocation5 + $0x7a8] sm:$0xff]
    %v369 = vld [vmem:[#allocation5 + $0x7b0] sm:$0xff]
    %v370 = vld [vmem:[#allocation5 + $0x7b8] sm:$0xff]
    %v371 = vld [vmem:[#allocation5 + $0x7c0] sm:$0xff]
    %v372 = vld [vmem:[#allocation5 + $0x7c8] sm:$0xff]
    %v373 = vld [vmem:[#allocation5 + $0x7d0] sm:$0xff]
    %v374 = vld [vmem:[#allocation5 + $0x7d8] sm:$0xff]
    %v375 = vld [vmem:[#allocation5 + $0x7e0] sm:$0xff]
    %v376 = vld [vmem:[#allocation5 + $0x7e8] sm:$0xff]
    %v377 = vld [vmem:[#allocation5 + $0x7f0] sm:$0xff]
    %v378 = vld [vmem:[#allocation5 + $0x7f8] sm:$0xff]
    %v379 = vld [vmem:[#allocation5 + $0x800] sm:$0xff]
    %v380 = vld [vmem:[#allocation5 + $0x808] sm:$0xff]
    %v381 = vld [vmem:[#allocation5 + $0x810] sm:$0xff]
    %v382 = vld [vmem:[#allocation5 + $0x818] sm:$0xff]
    %v383 = vld [vmem:[#allocation5 + $0x820] sm:$0xff]
    %v384 = vld [vmem:[#allocation5 + $0x828] sm:$0xff]
    %v385 = vld [vmem:[#allocation5 + $0x830] sm:$0xff]
    %v386 = vld [vmem:[#allocation5 + $0x838] sm:$0xff]
    %v387 = vld [vmem:[#allocation5 + $0x840] sm:$0xff]
    %v388 = vld [vmem:[#allocation5 + $0x848] sm:$0xff]
    %v389 = vld [vmem:[#allocation5 + $0x850] sm:$0xff]
    %v390 = vld [vmem:[#allocation5 + $0x858] sm:$0xff]
    %v391 = vld [vmem:[#allocation5 + $0x860] sm:$0xff]
    %v392 = vld [vmem:[#allocation5 + $0x868] sm:$0xff]
    %v393 = vld [vmem:[#allocation5 + $0x870] sm:$0xff]
    %v394 = vld [vmem:[#allocation5 + $0x878] sm:$0xff]
    %v395 = vld [vmem:[#allocation5 + $0x880] sm:$0xff]
    %v396 = vld [vmem:[#allocation5 + $0x888] sm:$0xff]
    %v397 = vld [vmem:[#allocation5 + $0x890] sm:$0xff]
    %v398 = vld [vmem:[#allocation5 + $0x898] sm:$0xff]
    %v399 = vld [vmem:[#allocation5 + $0x8a0] sm:$0xff]
    %v400 = vld [vmem:[#allocation5 + $0x8a8] sm:$0xff]
    %v401 = vld [vmem:[#allocation5 + $0x8b0] sm:$0xff]
    %v402 = vld [vmem:[#allocation5 + $0x8b8] sm:$0xff]
    %v403 = vld [vmem:[#allocation5 + $0x8c0] sm:$0xff]
    %v404 = vld [vmem:[#allocation5 + $0x8c8] sm:$0xff]
    %v405 = vld [vmem:[#allocation5 + $0x8d0] sm:$0xff]
    %v406 = vld [vmem:[#allocation5 + $0x8d8] sm:$0xff]
    %v407 = vld [vmem:[#allocation5 + $0x8e0] sm:$0xff]
    %v408 = vld [vmem:[#allocation5 + $0x8e8] sm:$0xff]
    %v409 = vld [vmem:[#allocation5 + $0x8f0] sm:$0xff]
    %v410 = vld [vmem:[#allocation5 + $0x8f8] sm:$0xff]
    %v411 = vld [vmem:[#allocation5 + $0x900] sm:$0xff]
    %v412 = vld [vmem:[#allocation5 + $0x908] sm:$0xff]
    %v413 = vld [vmem:[#allocation5 + $0x910] sm:$0xff]
    %v414 = vld [vmem:[#allocation5 + $0x918] sm:$0xff]
    %v415 = vld [vmem:[#allocation5 + $0x920] sm:$0xff]
    %v416 = vld [vmem:[#allocation5 + $0x928] sm:$0xff]
    %v417 = vld [vmem:[#allocation5 + $0x930] sm:$0xff]
    %v418 = vld [vmem:[#allocation5 + $0x938] sm:$0xff]
    %v419 = vld [vmem:[#allocation5 + $0x940] sm:$0xff]
    %v420 = vld [vmem:[#allocation5 + $0x948] sm:$0xff]
    %v421 = vld [vmem:[#allocation5 + $0x950] sm:$0xff]
    %v422 = vld [vmem:[#allocation5 + $0x958] sm:$0xff]
    %v423 = vld [vmem:[#allocation5 + $0x960] sm:$0xff]
    %v424 = vld [vmem:[#allocation5 + $0x968] sm:$0xff]
    %v425 = vld [vmem:[#allocation5 + $0x970] sm:$0xff]
    %v426 = vld [vmem:[#allocation5 + $0x978] sm:$0xff]
    %v427 = vld [vmem:[#allocation5 + $0x980] sm:$0xff]
    %v428 = vld [vmem:[#allocation5 + $0x988] sm:$0xff]
    %v429 = vld [vmem:[#allocation5 + $0x990] sm:$0xff]
    %v430 = vld [vmem:[#allocation5 + $0x998] sm:$0xff]
    %v431 = vld [vmem:[#allocation5 + $0x9a0] sm:$0xff]
    %v432 = vld [vmem:[#allocation5 + $0x9a8] sm:$0xff]
    %v433 = vld [vmem:[#allocation5 + $0x9b0] sm:$0xff]
    %v434 = vld [vmem:[#allocation5 + $0x9b8] sm:$0xff]
    %v435 = vld [vmem:[#allocation5 + $0x9c0] sm:$0xff]
    %v436 = vld [vmem:[#allocation5 + $0x9c8] sm:$0xff]
    %v437 = vld [vmem:[#allocation5 + $0x9d0] sm:$0xff]
    %v438 = vld [vmem:[#allocation5 + $0x9d8] sm:$0xff]
    %v439 = vld [vmem:[#allocation5 + $0x9e0] sm:$0xff]
    %v440 = vld [vmem:[#allocation5 + $0x9e8] sm:$0xff]
    %v441 = vld [vmem:[#allocation5 + $0x9f0] sm:$0xff]
    %v442 = vld [vmem:[#allocation5 + $0x9f8] sm:$0xff]
    %v443 = vld [vmem:[#allocation5 + $0xa00] sm:$0xff]
    %v444 = vld [vmem:[#allocation5 + $0xa08] sm:$0xff]
    %v445 = vld [vmem:[#allocation5 + $0xa10] sm:$0xff]
    %v446 = vld [vmem:[#allocation5 + $0xa18] sm:$0xff]
    %v447 = vld [vmem:[#allocation5 + $0xa20] sm:$0xff]
    %v448 = vld [vmem:[#allocation5 + $0xa28] sm:$0xff]
    %v449 = vld [vmem:[#allocation5 + $0xa30] sm:$0xff]
    %v450 = vld [vmem:[#allocation5 + $0xa38] sm:$0xff]
    %v451 = vld [vmem:[#allocation5 + $0xa40] sm:$0xff]
    %v452 = vld [vmem:[#allocation5 + $0xa48] sm:$0xff]
    %v453 = vld [vmem:[#allocation5 + $0xa50] sm:$0xff]
    %v454 = vld [vmem:[#allocation5 + $0xa58] sm:$0xff]
    %v455 = vld [vmem:[#allocation5 + $0xa60] sm:$0xff]
    %v456 = vld [vmem:[#allocation5 + $0xa68] sm:$0xff]
    %v457 = vld [vmem:[#allocation5 + $0xa70] sm:$0xff]
    %v458 = vld [vmem:[#allocation5 + $0xa78] sm:$0xff]
    %v459 = vld [vmem:[#allocation5 + $0xa80] sm:$0xff]
    %v460 = vld [vmem:[#allocation5 + $0xa88] sm:$0xff]
    %v461 = vld [vmem:[#allocation5 + $0xa90] sm:$0xff]
    %v462 = vld [vmem:[#allocation5 + $0xa98] sm:$0xff]
    %v463 = vld [vmem:[#allocation5 + $0xaa0] sm:$0xff]
    %v464 = vld [vmem:[#allocation5 + $0xaa8] sm:$0xff]
    %v465 = vld [vmem:[#allocation5 + $0xab0] sm:$0xff]
    %v466 = vld [vmem:[#allocation5 + $0xab8] sm:$0xff]
    %v467 = vld [vmem:[#allocation5 + $0xac0] sm:$0xff]
    %v468 = vld [vmem:[#allocation5 + $0xac8] sm:$0xff]
    %v469 = vld [vmem:[#allocation5 + $0xad0] sm:$0xff]
    %v470 = vld [vmem:[#allocation5 + $0xad8] sm:$0xff]
    %v471 = vld [vmem:[#allocation5 + $0xae0] sm:$0xff]
    %v472 = vld [vmem:[#allocation5 + $0xae8] sm:$0xff]
    %v473 = vld [vmem:[#allocation5 + $0xaf0] sm:$0xff]
    %v474 = vld [vmem:[#allocation5 + $0xaf8] sm:$0xff]
    %v475 = vld [vmem:[#allocation5 + $0xb00] sm:$0xff]
    %v476 = vld [vmem:[#allocation5 + $0xb08] sm:$0xff]
    %v477 = vld [vmem:[#allocation5 + $0xb10] sm:$0xff]
    %v478 = vld [vmem:[#allocation5 + $0xb18] sm:$0xff]
    %v479 = vld [vmem:[#allocation5 + $0xb20] sm:$0xff]
    %v480 = vld [vmem:[#allocation5 + $0xb28] sm:$0xff]
    %v481 = vld [vmem:[#allocation5 + $0xb30] sm:$0xff]
    %v482 = vld [vmem:[#allocation5 + $0xb38] sm:$0xff]
    %v483 = vld [vmem:[#allocation5 + $0xb40] sm:$0xff]
    %v484 = vld [vmem:[#allocation5 + $0xb48] sm:$0xff]
    %v485 = vld [vmem:[#allocation5 + $0xb50] sm:$0xff]
    %v486 = vld [vmem:[#allocation5 + $0xb58] sm:$0xff]
    %v487 = vld [vmem:[#allocation5 + $0xb60] sm:$0xff]
    %v488 = vld [vmem:[#allocation5 + $0xb68] sm:$0xff]
    %v489 = vld [vmem:[#allocation5 + $0xb70] sm:$0xff]
    %v490 = vld [vmem:[#allocation5 + $0xb78] sm:$0xff]
    %v491 = vld [vmem:[#allocation5 + $0xb80] sm:$0xff]
    %v492 = vld [vmem:[#allocation5 + $0xb88] sm:$0xff]
    %v493 = vld [vmem:[#allocation5 + $0xb90] sm:$0xff]
    %v494 = vld [vmem:[#allocation5 + $0xb98] sm:$0xff]
    %v495 = vld [vmem:[#allocation5 + $0xba0] sm:$0xff]
    %v496 = vld [vmem:[#allocation5 + $0xba8] sm:$0xff]
    %v497 = vld [vmem:[#allocation5 + $0xbb0] sm:$0xff]
    %v498 = vld [vmem:[#allocation5 + $0xbb8] sm:$0xff]
    %v499 = vld [vmem:[#allocation5 + $0xbc0] sm:$0xff]
    %v500 = vld [vmem:[#allocation5 + $0xbc8] sm:$0xff]
    %v501 = vld [vmem:[#allocation5 + $0xbd0] sm:$0xff]
    %v502 = vld [vmem:[#allocation5 + $0xbd8] sm:$0xff]
    %v503 = vld [vmem:[#allocation5 + $0xbe0] sm:$0xff]
    %v504 = vld [vmem:[#allocation5 + $0xbe8] sm:$0xff]
    %v505 = vld [vmem:[#allocation5 + $0xbf0] sm:$0xff]
    %v506 = vld [vmem:[#allocation5 + $0xbf8] sm:$0xff]
    %v507 = vld [vmem:[#allocation7] sm:$0xff]
    %v509 = vlaneseq
    %v510 = vshrl.u32 %v509, 7
    %v511 = vsub.s32 0, %v510
    %v512 = vrot.slane %v507, %v511
    %v513 = vlaneseq
    %v514 = vshrl.u32 %v513, 7
    %v515 = vsub.s32 1, %v514
    %v516 = vrot.slane %v507, %v515
    %v517 = vlaneseq
    %v518 = vshrl.u32 %v517, 7
    %v519 = vsub.s32 2, %v518
    %v520 = vrot.slane %v507, %v519
    %v521 = vlaneseq
    %v522 = vshrl.u32 %v521, 7
    %v523 = vsub.s32 3, %v522
    %v524 = vrot.slane %v507, %v523
    %v525 = vlaneseq
    %v526 = vshrl.u32 %v525, 7
    %v527 = vsub.s32 4, %v526
    %v528 = vrot.slane %v507, %v527
    %v529 = vlaneseq
    %v530 = vshrl.u32 %v529, 7
    %v531 = vsub.s32 5, %v530
    %v532 = vrot.slane %v507, %v531
    %v533 = vlaneseq
    %v534 = vshrl.u32 %v533, 7
    %v535 = vsub.s32 6, %v534
    %v536 = vrot.slane %v507, %v535
    %v537 = vlaneseq
    %v538 = vshrl.u32 %v537, 7
    %v539 = vsub.s32 7, %v538
    %v540 = vrot.slane %v507, %v539
    %v555 = vunpack.c.l.b16 %v117
    %v556 = vunpack.c.h.b16 %v117
    %v557 = vunpack.c.l.b16 %v118
    %v558 = vunpack.c.h.b16 %v118
    %v559 = vunpack.c.l.b16 %v119
    %v560 = vunpack.c.h.b16 %v119
    %v561 = vunpack.c.l.b16 %v120
    %v562 = vunpack.c.h.b16 %v120
    %v563 = vunpack.c.l.b16 %v121
    %v564 = vunpack.c.h.b16 %v121
    %v565 = vunpack.c.l.b16 %v122
    %v566 = vunpack.c.h.b16 %v122
    %v567 = vpack.c.b16 %v561, %v555
    %v568 = vpack.c.b16 %v562, %v556
    %v569 = vpack.c.b16 %v563, %v557
    %v570 = vpack.c.b16 %v564, %v558
    %v571 = vpack.c.b16 %v565, %v559
    %v572 = vpack.c.b16 %v566, %v560
    %v963 = vunpack.c.l.b16 %v123
    %v964 = vunpack.c.h.b16 %v123
    %v965 = vunpack.c.l.b16 %v124
    %v966 = vunpack.c.h.b16 %v124
    %v967 = vunpack.c.l.b16 %v125
    %v968 = vunpack.c.h.b16 %v125
    %v969 = vunpack.c.l.b16 %v126
    %v970 = vunpack.c.h.b16 %v126
    %v971 = vunpack.c.l.b16 %v127
    %v972 = vunpack.c.h.b16 %v127
    %v973 = vunpack.c.l.b16 %v128
    %v974 = vunpack.c.h.b16 %v128
    %v975 = vunpack.c.l.b16 %v129
    %v976 = vunpack.c.h.b16 %v129
    %v977 = vunpack.c.l.b16 %v130
    %v978 = vunpack.c.h.b16 %v130
    %v979 = vunpack.c.l.b16 %v131
    %v980 = vunpack.c.h.b16 %v131
    %v981 = vunpack.c.l.b16 %v132
    %v982 = vunpack.c.h.b16 %v132
    %v983 = vunpack.c.l.b16 %v133
    %v984 = vunpack.c.h.b16 %v133
    %v985 = vunpack.c.l.b16 %v134
    %v986 = vunpack.c.h.b16 %v134
    %v987 = vunpack.c.l.b16 %v135
    %v988 = vunpack.c.h.b16 %v135
    %v989 = vunpack.c.l.b16 %v136
    %v990 = vunpack.c.h.b16 %v136
    %v991 = vunpack.c.l.b16 %v137
    %v992 = vunpack.c.h.b16 %v137
    %v993 = vunpack.c.l.b16 %v138
    %v994 = vunpack.c.h.b16 %v138
    %v995 = vunpack.c.l.b16 %v139
    %v996 = vunpack.c.h.b16 %v139
    %v997 = vunpack.c.l.b16 %v140
    %v998 = vunpack.c.h.b16 %v140
    %v999 = vunpack.c.l.b16 %v141
    %v1000 = vunpack.c.h.b16 %v141
    %v1001 = vunpack.c.l.b16 %v142
    %v1002 = vunpack.c.h.b16 %v142
    %v1003 = vunpack.c.l.b16 %v143
    %v1004 = vunpack.c.h.b16 %v143
    %v1005 = vunpack.c.l.b16 %v144
    %v1006 = vunpack.c.h.b16 %v144
    %v1007 = vunpack.c.l.b16 %v145
    %v1008 = vunpack.c.h.b16 %v145
    %v1009 = vunpack.c.l.b16 %v146
    %v1010 = vunpack.c.h.b16 %v146
    %v1011 = vunpack.c.l.b16 %v147
    %v1012 = vunpack.c.h.b16 %v147
    %v1013 = vunpack.c.l.b16 %v148
    %v1014 = vunpack.c.h.b16 %v148
    %v1015 = vunpack.c.l.b16 %v149
    %v1016 = vunpack.c.h.b16 %v149
    %v1017 = vunpack.c.l.b16 %v150
    %v1018 = vunpack.c.h.b16 %v150
    %v1019 = vunpack.c.l.b16 %v151
    %v1020 = vunpack.c.h.b16 %v151
    %v1021 = vunpack.c.l.b16 %v152
    %v1022 = vunpack.c.h.b16 %v152
    %v1023 = vunpack.c.l.b16 %v153
    %v1024 = vunpack.c.h.b16 %v153
    %v1025 = vunpack.c.l.b16 %v154
    %v1026 = vunpack.c.h.b16 %v154
    %v1027 = vunpack.c.l.b16 %v155
    %v1028 = vunpack.c.h.b16 %v155
    %v1029 = vunpack.c.l.b16 %v156
    %v1030 = vunpack.c.h.b16 %v156
    %v1031 = vunpack.c.l.b16 %v157
    %v1032 = vunpack.c.h.b16 %v157
    %v1033 = vunpack.c.l.b16 %v158
    %v1034 = vunpack.c.h.b16 %v158
    %v1035 = vunpack.c.l.b16 %v159
    %v1036 = vunpack.c.h.b16 %v159
    %v1037 = vunpack.c.l.b16 %v160
    %v1038 = vunpack.c.h.b16 %v160
    %v1039 = vunpack.c.l.b16 %v161
    %v1040 = vunpack.c.h.b16 %v161
    %v1041 = vunpack.c.l.b16 %v162
    %v1042 = vunpack.c.h.b16 %v162
    %v1043 = vunpack.c.l.b16 %v163
    %v1044 = vunpack.c.h.b16 %v163
    %v1045 = vunpack.c.l.b16 %v164
    %v1046 = vunpack.c.h.b16 %v164
    %v1047 = vunpack.c.l.b16 %v165
    %v1048 = vunpack.c.h.b16 %v165
    %v1049 = vunpack.c.l.b16 %v166
    %v1050 = vunpack.c.h.b16 %v166
    %v1051 = vunpack.c.l.b16 %v167
    %v1052 = vunpack.c.h.b16 %v167
    %v1053 = vunpack.c.l.b16 %v168
    %v1054 = vunpack.c.h.b16 %v168
    %v1055 = vunpack.c.l.b16 %v169
    %v1056 = vunpack.c.h.b16 %v169
    %v1057 = vunpack.c.l.b16 %v170
    %v1058 = vunpack.c.h.b16 %v170
    %v1059 = vunpack.c.l.b16 %v171
    %v1060 = vunpack.c.h.b16 %v171
    %v1061 = vunpack.c.l.b16 %v172
    %v1062 = vunpack.c.h.b16 %v172
    %v1063 = vunpack.c.l.b16 %v173
    %v1064 = vunpack.c.h.b16 %v173
    %v1065 = vunpack.c.l.b16 %v174
    %v1066 = vunpack.c.h.b16 %v174
    %v1067 = vunpack.c.l.b16 %v175
    %v1068 = vunpack.c.h.b16 %v175
    %v1069 = vunpack.c.l.b16 %v176
    %v1070 = vunpack.c.h.b16 %v176
    %v1071 = vunpack.c.l.b16 %v177
    %v1072 = vunpack.c.h.b16 %v177
    %v1073 = vunpack.c.l.b16 %v178
    %v1074 = vunpack.c.h.b16 %v178
    %v1075 = vunpack.c.l.b16 %v179
    %v1076 = vunpack.c.h.b16 %v179
    %v1077 = vunpack.c.l.b16 %v180
    %v1078 = vunpack.c.h.b16 %v180
    %v1079 = vunpack.c.l.b16 %v181
    %v1080 = vunpack.c.h.b16 %v181
    %v1081 = vunpack.c.l.b16 %v182
    %v1082 = vunpack.c.h.b16 %v182
    %v1083 = vunpack.c.l.b16 %v183
    %v1084 = vunpack.c.h.b16 %v183
    %v1085 = vunpack.c.l.b16 %v184
    %v1086 = vunpack.c.h.b16 %v184
    %v1087 = vunpack.c.l.b16 %v185
    %v1088 = vunpack.c.h.b16 %v185
    %v1089 = vunpack.c.l.b16 %v186
    %v1090 = vunpack.c.h.b16 %v186
    %v1091 = vunpack.c.l.b16 %v187
    %v1092 = vunpack.c.h.b16 %v187
    %v1093 = vunpack.c.l.b16 %v188
    %v1094 = vunpack.c.h.b16 %v188
    %v1095 = vunpack.c.l.b16 %v189
    %v1096 = vunpack.c.h.b16 %v189
    %v1097 = vunpack.c.l.b16 %v190
    %v1098 = vunpack.c.h.b16 %v190
    %v1099 = vunpack.c.l.b16 %v191
    %v1100 = vunpack.c.h.b16 %v191
    %v1101 = vunpack.c.l.b16 %v192
    %v1102 = vunpack.c.h.b16 %v192
    %v1103 = vunpack.c.l.b16 %v193
    %v1104 = vunpack.c.h.b16 %v193
    %v1105 = vunpack.c.l.b16 %v194
    %v1106 = vunpack.c.h.b16 %v194
    %v1107 = vunpack.c.l.b16 %v195
    %v1108 = vunpack.c.h.b16 %v195
    %v1109 = vunpack.c.l.b16 %v196
    %v1110 = vunpack.c.h.b16 %v196
    %v1111 = vunpack.c.l.b16 %v197
    %v1112 = vunpack.c.h.b16 %v197
    %v1113 = vunpack.c.l.b16 %v198
    %v1114 = vunpack.c.h.b16 %v198
    %v1115 = vunpack.c.l.b16 %v199
    %v1116 = vunpack.c.h.b16 %v199
    %v1117 = vunpack.c.l.b16 %v200
    %v1118 = vunpack.c.h.b16 %v200
    %v1119 = vunpack.c.l.b16 %v201
    %v1120 = vunpack.c.h.b16 %v201
    %v1121 = vunpack.c.l.b16 %v202
    %v1122 = vunpack.c.h.b16 %v202
    %v1123 = vunpack.c.l.b16 %v203
    %v1124 = vunpack.c.h.b16 %v203
    %v1125 = vunpack.c.l.b16 %v204
    %v1126 = vunpack.c.h.b16 %v204
    %v1127 = vunpack.c.l.b16 %v205
    %v1128 = vunpack.c.h.b16 %v205
    %v1129 = vunpack.c.l.b16 %v206
    %v1130 = vunpack.c.h.b16 %v206
    %v1131 = vunpack.c.l.b16 %v207
    %v1132 = vunpack.c.h.b16 %v207
    %v1133 = vunpack.c.l.b16 %v208
    %v1134 = vunpack.c.h.b16 %v208
    %v1135 = vunpack.c.l.b16 %v209
    %v1136 = vunpack.c.h.b16 %v209
    %v1137 = vunpack.c.l.b16 %v210
    %v1138 = vunpack.c.h.b16 %v210
    %v1139 = vunpack.c.l.b16 %v211
    %v1140 = vunpack.c.h.b16 %v211
    %v1141 = vunpack.c.l.b16 %v212
    %v1142 = vunpack.c.h.b16 %v212
    %v1143 = vunpack.c.l.b16 %v213
    %v1144 = vunpack.c.h.b16 %v213
    %v1145 = vunpack.c.l.b16 %v214
    %v1146 = vunpack.c.h.b16 %v214
    %v1147 = vunpack.c.l.b16 %v215
    %v1148 = vunpack.c.h.b16 %v215
    %v1149 = vunpack.c.l.b16 %v216
    %v1150 = vunpack.c.h.b16 %v216
    %v1151 = vunpack.c.l.b16 %v217
    %v1152 = vunpack.c.h.b16 %v217
    %v1153 = vunpack.c.l.b16 %v218
    %v1154 = vunpack.c.h.b16 %v218
    %v1155 = vunpack.c.l.b16 %v219
    %v1156 = vunpack.c.h.b16 %v219
    %v1157 = vunpack.c.l.b16 %v220
    %v1158 = vunpack.c.h.b16 %v220
    %v1159 = vunpack.c.l.b16 %v221
    %v1160 = vunpack.c.h.b16 %v221
    %v1161 = vunpack.c.l.b16 %v222
    %v1162 = vunpack.c.h.b16 %v222
    %v1163 = vunpack.c.l.b16 %v223
    %v1164 = vunpack.c.h.b16 %v223
    %v1165 = vunpack.c.l.b16 %v224
    %v1166 = vunpack.c.h.b16 %v224
    %v1167 = vunpack.c.l.b16 %v225
    %v1168 = vunpack.c.h.b16 %v225
    %v1169 = vunpack.c.l.b16 %v226
    %v1170 = vunpack.c.h.b16 %v226
    %v1171 = vunpack.c.l.b16 %v227
    %v1172 = vunpack.c.h.b16 %v227
    %v1173 = vunpack.c.l.b16 %v228
    %v1174 = vunpack.c.h.b16 %v228
    %v1175 = vunpack.c.l.b16 %v229
    %v1176 = vunpack.c.h.b16 %v229
    %v1177 = vunpack.c.l.b16 %v230
    %v1178 = vunpack.c.h.b16 %v230
    %v1179 = vunpack.c.l.b16 %v231
    %v1180 = vunpack.c.h.b16 %v231
    %v1181 = vunpack.c.l.b16 %v232
    %v1182 = vunpack.c.h.b16 %v232
    %v1183 = vunpack.c.l.b16 %v233
    %v1184 = vunpack.c.h.b16 %v233
    %v1185 = vunpack.c.l.b16 %v234
    %v1186 = vunpack.c.h.b16 %v234
    %v1187 = vunpack.c.l.b16 %v235
    %v1188 = vunpack.c.h.b16 %v235
    %v1189 = vunpack.c.l.b16 %v236
    %v1190 = vunpack.c.h.b16 %v236
    %v1191 = vunpack.c.l.b16 %v237
    %v1192 = vunpack.c.h.b16 %v237
    %v1193 = vunpack.c.l.b16 %v238
    %v1194 = vunpack.c.h.b16 %v238
    %v1195 = vunpack.c.l.b16 %v239
    %v1196 = vunpack.c.h.b16 %v239
    %v1197 = vunpack.c.l.b16 %v240
    %v1198 = vunpack.c.h.b16 %v240
    %v1199 = vunpack.c.l.b16 %v241
    %v1200 = vunpack.c.h.b16 %v241
    %v1201 = vunpack.c.l.b16 %v242
    %v1202 = vunpack.c.h.b16 %v242
    %v1203 = vunpack.c.l.b16 %v243
    %v1204 = vunpack.c.h.b16 %v243
    %v1205 = vunpack.c.l.b16 %v244
    %v1206 = vunpack.c.h.b16 %v244
    %v1207 = vunpack.c.l.b16 %v245
    %v1208 = vunpack.c.h.b16 %v245
    %v1209 = vunpack.c.l.b16 %v246
    %v1210 = vunpack.c.h.b16 %v246
    %v1211 = vunpack.c.l.b16 %v247
    %v1212 = vunpack.c.h.b16 %v247
    %v1213 = vunpack.c.l.b16 %v248
    %v1214 = vunpack.c.h.b16 %v248
    %v1215 = vunpack.c.l.b16 %v249
    %v1216 = vunpack.c.h.b16 %v249
    %v1217 = vunpack.c.l.b16 %v250
    %v1218 = vunpack.c.h.b16 %v250
    %v1219 = vunpack.c.l.b16 %v251
    %v1220 = vunpack.c.h.b16 %v251
    %v1221 = vunpack.c.l.b16 %v252
    %v1222 = vunpack.c.h.b16 %v252
    %v1223 = vunpack.c.l.b16 %v253
    %v1224 = vunpack.c.h.b16 %v253
    %v1225 = vunpack.c.l.b16 %v254
    %v1226 = vunpack.c.h.b16 %v254
    %v1227 = vunpack.c.l.b16 %v255
    %v1228 = vunpack.c.h.b16 %v255
    %v1229 = vunpack.c.l.b16 %v256
    %v1230 = vunpack.c.h.b16 %v256
    %v1231 = vunpack.c.l.b16 %v257
    %v1232 = vunpack.c.h.b16 %v257
    %v1233 = vunpack.c.l.b16 %v258
    %v1234 = vunpack.c.h.b16 %v258
    %v1235 = vunpack.c.l.b16 %v259
    %v1236 = vunpack.c.h.b16 %v259
    %v1237 = vunpack.c.l.b16 %v260
    %v1238 = vunpack.c.h.b16 %v260
    %v1239 = vunpack.c.l.b16 %v261
    %v1240 = vunpack.c.h.b16 %v261
    %v1241 = vunpack.c.l.b16 %v262
    %v1242 = vunpack.c.h.b16 %v262
    %v1243 = vunpack.c.l.b16 %v263
    %v1244 = vunpack.c.h.b16 %v263
    %v1245 = vunpack.c.l.b16 %v264
    %v1246 = vunpack.c.h.b16 %v264
    %v1247 = vunpack.c.l.b16 %v265
    %v1248 = vunpack.c.h.b16 %v265
    %v1249 = vunpack.c.l.b16 %v266
    %v1250 = vunpack.c.h.b16 %v266
    %v1251 = vunpack.c.l.b16 %v267
    %v1252 = vunpack.c.h.b16 %v267
    %v1253 = vunpack.c.l.b16 %v268
    %v1254 = vunpack.c.h.b16 %v268
    %v1255 = vunpack.c.l.b16 %v269
    %v1256 = vunpack.c.h.b16 %v269
    %v1257 = vunpack.c.l.b16 %v270
    %v1258 = vunpack.c.h.b16 %v270
    %v1259 = vunpack.c.l.b16 %v271
    %v1260 = vunpack.c.h.b16 %v271
    %v1261 = vunpack.c.l.b16 %v272
    %v1262 = vunpack.c.h.b16 %v272
    %v1263 = vunpack.c.l.b16 %v273
    %v1264 = vunpack.c.h.b16 %v273
    %v1265 = vunpack.c.l.b16 %v274
    %v1266 = vunpack.c.h.b16 %v274
    %v1267 = vunpack.c.l.b16 %v275
    %v1268 = vunpack.c.h.b16 %v275
    %v1269 = vunpack.c.l.b16 %v276
    %v1270 = vunpack.c.h.b16 %v276
    %v1271 = vunpack.c.l.b16 %v277
    %v1272 = vunpack.c.h.b16 %v277
    %v1273 = vunpack.c.l.b16 %v278
    %v1274 = vunpack.c.h.b16 %v278
    %v1275 = vunpack.c.l.b16 %v279
    %v1276 = vunpack.c.h.b16 %v279
    %v1277 = vunpack.c.l.b16 %v280
    %v1278 = vunpack.c.h.b16 %v280
    %v1279 = vunpack.c.l.b16 %v281
    %v1280 = vunpack.c.h.b16 %v281
    %v1281 = vunpack.c.l.b16 %v282
    %v1282 = vunpack.c.h.b16 %v282
    %v1283 = vunpack.c.l.b16 %v283
    %v1284 = vunpack.c.h.b16 %v283
    %v1285 = vunpack.c.l.b16 %v284
    %v1286 = vunpack.c.h.b16 %v284
    %v1287 = vunpack.c.l.b16 %v285
    %v1288 = vunpack.c.h.b16 %v285
    %v1289 = vunpack.c.l.b16 %v286
    %v1290 = vunpack.c.h.b16 %v286
    %v1291 = vunpack.c.l.b16 %v287
    %v1292 = vunpack.c.h.b16 %v287
    %v1293 = vunpack.c.l.b16 %v288
    %v1294 = vunpack.c.h.b16 %v288
    %v1295 = vunpack.c.l.b16 %v289
    %v1296 = vunpack.c.h.b16 %v289
    %v1297 = vunpack.c.l.b16 %v290
    %v1298 = vunpack.c.h.b16 %v290
    %v1299 = vunpack.c.l.b16 %v291
    %v1300 = vunpack.c.h.b16 %v291
    %v1301 = vunpack.c.l.b16 %v292
    %v1302 = vunpack.c.h.b16 %v292
    %v1303 = vunpack.c.l.b16 %v293
    %v1304 = vunpack.c.h.b16 %v293
    %v1305 = vunpack.c.l.b16 %v294
    %v1306 = vunpack.c.h.b16 %v294
    %v1307 = vunpack.c.l.b16 %v295
    %v1308 = vunpack.c.h.b16 %v295
    %v1309 = vunpack.c.l.b16 %v296
    %v1310 = vunpack.c.h.b16 %v296
    %v1311 = vunpack.c.l.b16 %v297
    %v1312 = vunpack.c.h.b16 %v297
    %v1313 = vunpack.c.l.b16 %v298
    %v1314 = vunpack.c.h.b16 %v298
    %v1315 = vunpack.c.l.b16 %v299
    %v1316 = vunpack.c.h.b16 %v299
    %v1317 = vunpack.c.l.b16 %v300
    %v1318 = vunpack.c.h.b16 %v300
    %v1319 = vunpack.c.l.b16 %v301
    %v1320 = vunpack.c.h.b16 %v301
    %v1321 = vunpack.c.l.b16 %v302
    %v1322 = vunpack.c.h.b16 %v302
    %v1323 = vunpack.c.l.b16 %v303
    %v1324 = vunpack.c.h.b16 %v303
    %v1325 = vunpack.c.l.b16 %v304
    %v1326 = vunpack.c.h.b16 %v304
    %v1327 = vunpack.c.l.b16 %v305
    %v1328 = vunpack.c.h.b16 %v305
    %v1329 = vunpack.c.l.b16 %v306
    %v1330 = vunpack.c.h.b16 %v306
    %v1331 = vunpack.c.l.b16 %v307
    %v1332 = vunpack.c.h.b16 %v307
    %v1333 = vunpack.c.l.b16 %v308
    %v1334 = vunpack.c.h.b16 %v308
    %v1335 = vunpack.c.l.b16 %v309
    %v1336 = vunpack.c.h.b16 %v309
    %v1337 = vunpack.c.l.b16 %v310
    %v1338 = vunpack.c.h.b16 %v310
    %v1339 = vunpack.c.l.b16 %v311
    %v1340 = vunpack.c.h.b16 %v311
    %v1341 = vunpack.c.l.b16 %v312
    %v1342 = vunpack.c.h.b16 %v312
    %v1343 = vunpack.c.l.b16 %v313
    %v1344 = vunpack.c.h.b16 %v313
    %v1345 = vunpack.c.l.b16 %v314
    %v1346 = vunpack.c.h.b16 %v314
    %v1347 = vunpack.c.l.b16 %v315
    %v1348 = vunpack.c.h.b16 %v315
    %v1349 = vunpack.c.l.b16 %v316
    %v1350 = vunpack.c.h.b16 %v316
    %v1351 = vunpack.c.l.b16 %v317
    %v1352 = vunpack.c.h.b16 %v317
    %v1353 = vunpack.c.l.b16 %v318
    %v1354 = vunpack.c.h.b16 %v318
    %v1355 = vunpack.c.l.b16 %v319
    %v1356 = vunpack.c.h.b16 %v319
    %v1357 = vunpack.c.l.b16 %v320
    %v1358 = vunpack.c.h.b16 %v320
    %v1359 = vunpack.c.l.b16 %v321
    %v1360 = vunpack.c.h.b16 %v321
    %v1361 = vunpack.c.l.b16 %v322
    %v1362 = vunpack.c.h.b16 %v322
    %v1363 = vunpack.c.l.b16 %v323
    %v1364 = vunpack.c.h.b16 %v323
    %v1365 = vunpack.c.l.b16 %v324
    %v1366 = vunpack.c.h.b16 %v324
    %v1367 = vunpack.c.l.b16 %v325
    %v1368 = vunpack.c.h.b16 %v325
    %v1369 = vunpack.c.l.b16 %v326
    %v1370 = vunpack.c.h.b16 %v326
    %v1371 = vunpack.c.l.b16 %v327
    %v1372 = vunpack.c.h.b16 %v327
    %v1373 = vunpack.c.l.b16 %v328
    %v1374 = vunpack.c.h.b16 %v328
    %v1375 = vunpack.c.l.b16 %v329
    %v1376 = vunpack.c.h.b16 %v329
    %v1377 = vunpack.c.l.b16 %v330
    %v1378 = vunpack.c.h.b16 %v330
    %v1379 = vunpack.c.l.b16 %v331
    %v1380 = vunpack.c.h.b16 %v331
    %v1381 = vunpack.c.l.b16 %v332
    %v1382 = vunpack.c.h.b16 %v332
    %v1383 = vunpack.c.l.b16 %v333
    %v1384 = vunpack.c.h.b16 %v333
    %v1385 = vunpack.c.l.b16 %v334
    %v1386 = vunpack.c.h.b16 %v334
    %v1387 = vunpack.c.l.b16 %v335
    %v1388 = vunpack.c.h.b16 %v335
    %v1389 = vunpack.c.l.b16 %v336
    %v1390 = vunpack.c.h.b16 %v336
    %v1391 = vunpack.c.l.b16 %v337
    %v1392 = vunpack.c.h.b16 %v337
    %v1393 = vunpack.c.l.b16 %v338
    %v1394 = vunpack.c.h.b16 %v338
    %v1395 = vunpack.c.l.b16 %v339
    %v1396 = vunpack.c.h.b16 %v339
    %v1397 = vunpack.c.l.b16 %v340
    %v1398 = vunpack.c.h.b16 %v340
    %v1399 = vunpack.c.l.b16 %v341
    %v1400 = vunpack.c.h.b16 %v341
    %v1401 = vunpack.c.l.b16 %v342
    %v1402 = vunpack.c.h.b16 %v342
    %v1403 = vunpack.c.l.b16 %v343
    %v1404 = vunpack.c.h.b16 %v343
    %v1405 = vunpack.c.l.b16 %v344
    %v1406 = vunpack.c.h.b16 %v344
    %v1407 = vunpack.c.l.b16 %v345
    %v1408 = vunpack.c.h.b16 %v345
    %v1409 = vunpack.c.l.b16 %v346
    %v1410 = vunpack.c.h.b16 %v346
    %v1411 = vunpack.c.l.b16 %v347
    %v1412 = vunpack.c.h.b16 %v347
    %v1413 = vunpack.c.l.b16 %v348
    %v1414 = vunpack.c.h.b16 %v348
    %v1415 = vunpack.c.l.b16 %v349
    %v1416 = vunpack.c.h.b16 %v349
    %v1417 = vunpack.c.l.b16 %v350
    %v1418 = vunpack.c.h.b16 %v350
    %v1419 = vunpack.c.l.b16 %v351
    %v1420 = vunpack.c.h.b16 %v351
    %v1421 = vunpack.c.l.b16 %v352
    %v1422 = vunpack.c.h.b16 %v352
    %v1423 = vunpack.c.l.b16 %v353
    %v1424 = vunpack.c.h.b16 %v353
    %v1425 = vunpack.c.l.b16 %v354
    %v1426 = vunpack.c.h.b16 %v354
    %v1427 = vunpack.c.l.b16 %v355
    %v1428 = vunpack.c.h.b16 %v355
    %v1429 = vunpack.c.l.b16 %v356
    %v1430 = vunpack.c.h.b16 %v356
    %v1431 = vunpack.c.l.b16 %v357
    %v1432 = vunpack.c.h.b16 %v357
    %v1433 = vunpack.c.l.b16 %v358
    %v1434 = vunpack.c.h.b16 %v358
    %v1435 = vunpack.c.l.b16 %v359
    %v1436 = vunpack.c.h.b16 %v359
    %v1437 = vunpack.c.l.b16 %v360
    %v1438 = vunpack.c.h.b16 %v360
    %v1439 = vunpack.c.l.b16 %v361
    %v1440 = vunpack.c.h.b16 %v361
    %v1441 = vunpack.c.l.b16 %v362
    %v1442 = vunpack.c.h.b16 %v362
    %v1443 = vunpack.c.l.b16 %v363
    %v1444 = vunpack.c.h.b16 %v363
    %v1445 = vunpack.c.l.b16 %v364
    %v1446 = vunpack.c.h.b16 %v364
    %v1447 = vunpack.c.l.b16 %v365
    %v1448 = vunpack.c.h.b16 %v365
    %v1449 = vunpack.c.l.b16 %v366
    %v1450 = vunpack.c.h.b16 %v366
    %v1451 = vunpack.c.l.b16 %v367
    %v1452 = vunpack.c.h.b16 %v367
    %v1453 = vunpack.c.l.b16 %v368
    %v1454 = vunpack.c.h.b16 %v368
    %v1455 = vunpack.c.l.b16 %v369
    %v1456 = vunpack.c.h.b16 %v369
    %v1457 = vunpack.c.l.b16 %v370
    %v1458 = vunpack.c.h.b16 %v370
    %v1459 = vunpack.c.l.b16 %v371
    %v1460 = vunpack.c.h.b16 %v371
    %v1461 = vunpack.c.l.b16 %v372
    %v1462 = vunpack.c.h.b16 %v372
    %v1463 = vunpack.c.l.b16 %v373
    %v1464 = vunpack.c.h.b16 %v373
    %v1465 = vunpack.c.l.b16 %v374
    %v1466 = vunpack.c.h.b16 %v374
    %v1467 = vunpack.c.l.b16 %v375
    %v1468 = vunpack.c.h.b16 %v375
    %v1469 = vunpack.c.l.b16 %v376
    %v1470 = vunpack.c.h.b16 %v376
    %v1471 = vunpack.c.l.b16 %v377
    %v1472 = vunpack.c.h.b16 %v377
    %v1473 = vunpack.c.l.b16 %v378
    %v1474 = vunpack.c.h.b16 %v378
    %v1475 = vunpack.c.l.b16 %v379
    %v1476 = vunpack.c.h.b16 %v379
    %v1477 = vunpack.c.l.b16 %v380
    %v1478 = vunpack.c.h.b16 %v380
    %v1479 = vunpack.c.l.b16 %v381
    %v1480 = vunpack.c.h.b16 %v381
    %v1481 = vunpack.c.l.b16 %v382
    %v1482 = vunpack.c.h.b16 %v382
    %v1483 = vunpack.c.l.b16 %v383
    %v1484 = vunpack.c.h.b16 %v383
    %v1485 = vunpack.c.l.b16 %v384
    %v1486 = vunpack.c.h.b16 %v384
    %v1487 = vunpack.c.l.b16 %v385
    %v1488 = vunpack.c.h.b16 %v385
    %v1489 = vunpack.c.l.b16 %v386
    %v1490 = vunpack.c.h.b16 %v386
    %v1491 = vunpack.c.l.b16 %v387
    %v1492 = vunpack.c.h.b16 %v387
    %v1493 = vunpack.c.l.b16 %v388
    %v1494 = vunpack.c.h.b16 %v388
    %v1495 = vunpack.c.l.b16 %v389
    %v1496 = vunpack.c.h.b16 %v389
    %v1497 = vunpack.c.l.b16 %v390
    %v1498 = vunpack.c.h.b16 %v390
    %v1499 = vunpack.c.l.b16 %v391
    %v1500 = vunpack.c.h.b16 %v391
    %v1501 = vunpack.c.l.b16 %v392
    %v1502 = vunpack.c.h.b16 %v392
    %v1503 = vunpack.c.l.b16 %v393
    %v1504 = vunpack.c.h.b16 %v393
    %v1505 = vunpack.c.l.b16 %v394
    %v1506 = vunpack.c.h.b16 %v394
    %v1507 = vunpack.c.l.b16 %v395
    %v1508 = vunpack.c.h.b16 %v395
    %v1509 = vunpack.c.l.b16 %v396
    %v1510 = vunpack.c.h.b16 %v396
    %v1511 = vunpack.c.l.b16 %v397
    %v1512 = vunpack.c.h.b16 %v397
    %v1513 = vunpack.c.l.b16 %v398
    %v1514 = vunpack.c.h.b16 %v398
    %v1515 = vunpack.c.l.b16 %v399
    %v1516 = vunpack.c.h.b16 %v399
    %v1517 = vunpack.c.l.b16 %v400
    %v1518 = vunpack.c.h.b16 %v400
    %v1519 = vunpack.c.l.b16 %v401
    %v1520 = vunpack.c.h.b16 %v401
    %v1521 = vunpack.c.l.b16 %v402
    %v1522 = vunpack.c.h.b16 %v402
    %v1523 = vunpack.c.l.b16 %v403
    %v1524 = vunpack.c.h.b16 %v403
    %v1525 = vunpack.c.l.b16 %v404
    %v1526 = vunpack.c.h.b16 %v404
    %v1527 = vunpack.c.l.b16 %v405
    %v1528 = vunpack.c.h.b16 %v405
    %v1529 = vunpack.c.l.b16 %v406
    %v1530 = vunpack.c.h.b16 %v406
    %v1531 = vunpack.c.l.b16 %v407
    %v1532 = vunpack.c.h.b16 %v407
    %v1533 = vunpack.c.l.b16 %v408
    %v1534 = vunpack.c.h.b16 %v408
    %v1535 = vunpack.c.l.b16 %v409
    %v1536 = vunpack.c.h.b16 %v409
    %v1537 = vunpack.c.l.b16 %v410
    %v1538 = vunpack.c.h.b16 %v410
    %v1539 = vunpack.c.l.b16 %v411
    %v1540 = vunpack.c.h.b16 %v411
    %v1541 = vunpack.c.l.b16 %v412
    %v1542 = vunpack.c.h.b16 %v412
    %v1543 = vunpack.c.l.b16 %v413
    %v1544 = vunpack.c.h.b16 %v413
    %v1545 = vunpack.c.l.b16 %v414
    %v1546 = vunpack.c.h.b16 %v414
    %v1547 = vunpack.c.l.b16 %v415
    %v1548 = vunpack.c.h.b16 %v415
    %v1549 = vunpack.c.l.b16 %v416
    %v1550 = vunpack.c.h.b16 %v416
    %v1551 = vunpack.c.l.b16 %v417
    %v1552 = vunpack.c.h.b16 %v417
    %v1553 = vunpack.c.l.b16 %v418
    %v1554 = vunpack.c.h.b16 %v418
    %v1555 = vunpack.c.l.b16 %v419
    %v1556 = vunpack.c.h.b16 %v419
    %v1557 = vunpack.c.l.b16 %v420
    %v1558 = vunpack.c.h.b16 %v420
    %v1559 = vunpack.c.l.b16 %v421
    %v1560 = vunpack.c.h.b16 %v421
    %v1561 = vunpack.c.l.b16 %v422
    %v1562 = vunpack.c.h.b16 %v422
    %v1563 = vunpack.c.l.b16 %v423
    %v1564 = vunpack.c.h.b16 %v423
    %v1565 = vunpack.c.l.b16 %v424
    %v1566 = vunpack.c.h.b16 %v424
    %v1567 = vunpack.c.l.b16 %v425
    %v1568 = vunpack.c.h.b16 %v425
    %v1569 = vunpack.c.l.b16 %v426
    %v1570 = vunpack.c.h.b16 %v426
    %v1571 = vunpack.c.l.b16 %v427
    %v1572 = vunpack.c.h.b16 %v427
    %v1573 = vunpack.c.l.b16 %v428
    %v1574 = vunpack.c.h.b16 %v428
    %v1575 = vunpack.c.l.b16 %v429
    %v1576 = vunpack.c.h.b16 %v429
    %v1577 = vunpack.c.l.b16 %v430
    %v1578 = vunpack.c.h.b16 %v430
    %v1579 = vunpack.c.l.b16 %v431
    %v1580 = vunpack.c.h.b16 %v431
    %v1581 = vunpack.c.l.b16 %v432
    %v1582 = vunpack.c.h.b16 %v432
    %v1583 = vunpack.c.l.b16 %v433
    %v1584 = vunpack.c.h.b16 %v433
    %v1585 = vunpack.c.l.b16 %v434
    %v1586 = vunpack.c.h.b16 %v434
    %v1587 = vunpack.c.l.b16 %v435
    %v1588 = vunpack.c.h.b16 %v435
    %v1589 = vunpack.c.l.b16 %v436
    %v1590 = vunpack.c.h.b16 %v436
    %v1591 = vunpack.c.l.b16 %v437
    %v1592 = vunpack.c.h.b16 %v437
    %v1593 = vunpack.c.l.b16 %v438
    %v1594 = vunpack.c.h.b16 %v438
    %v1595 = vunpack.c.l.b16 %v439
    %v1596 = vunpack.c.h.b16 %v439
    %v1597 = vunpack.c.l.b16 %v440
    %v1598 = vunpack.c.h.b16 %v440
    %v1599 = vunpack.c.l.b16 %v441
    %v1600 = vunpack.c.h.b16 %v441
    %v1601 = vunpack.c.l.b16 %v442
    %v1602 = vunpack.c.h.b16 %v442
    %v1603 = vunpack.c.l.b16 %v443
    %v1604 = vunpack.c.h.b16 %v443
    %v1605 = vunpack.c.l.b16 %v444
    %v1606 = vunpack.c.h.b16 %v444
    %v1607 = vunpack.c.l.b16 %v445
    %v1608 = vunpack.c.h.b16 %v445
    %v1609 = vunpack.c.l.b16 %v446
    %v1610 = vunpack.c.h.b16 %v446
    %v1611 = vunpack.c.l.b16 %v447
    %v1612 = vunpack.c.h.b16 %v447
    %v1613 = vunpack.c.l.b16 %v448
    %v1614 = vunpack.c.h.b16 %v448
    %v1615 = vunpack.c.l.b16 %v449
    %v1616 = vunpack.c.h.b16 %v449
    %v1617 = vunpack.c.l.b16 %v450
    %v1618 = vunpack.c.h.b16 %v450
    %v1619 = vunpack.c.l.b16 %v451
    %v1620 = vunpack.c.h.b16 %v451
    %v1621 = vunpack.c.l.b16 %v452
    %v1622 = vunpack.c.h.b16 %v452
    %v1623 = vunpack.c.l.b16 %v453
    %v1624 = vunpack.c.h.b16 %v453
    %v1625 = vunpack.c.l.b16 %v454
    %v1626 = vunpack.c.h.b16 %v454
    %v1627 = vunpack.c.l.b16 %v455
    %v1628 = vunpack.c.h.b16 %v455
    %v1629 = vunpack.c.l.b16 %v456
    %v1630 = vunpack.c.h.b16 %v456
    %v1631 = vunpack.c.l.b16 %v457
    %v1632 = vunpack.c.h.b16 %v457
    %v1633 = vunpack.c.l.b16 %v458
    %v1634 = vunpack.c.h.b16 %v458
    %v1635 = vunpack.c.l.b16 %v459
    %v1636 = vunpack.c.h.b16 %v459
    %v1637 = vunpack.c.l.b16 %v460
    %v1638 = vunpack.c.h.b16 %v460
    %v1639 = vunpack.c.l.b16 %v461
    %v1640 = vunpack.c.h.b16 %v461
    %v1641 = vunpack.c.l.b16 %v462
    %v1642 = vunpack.c.h.b16 %v462
    %v1643 = vunpack.c.l.b16 %v463
    %v1644 = vunpack.c.h.b16 %v463
    %v1645 = vunpack.c.l.b16 %v464
    %v1646 = vunpack.c.h.b16 %v464
    %v1647 = vunpack.c.l.b16 %v465
    %v1648 = vunpack.c.h.b16 %v465
    %v1649 = vunpack.c.l.b16 %v466
    %v1650 = vunpack.c.h.b16 %v466
    %v1651 = vunpack.c.l.b16 %v467
    %v1652 = vunpack.c.h.b16 %v467
    %v1653 = vunpack.c.l.b16 %v468
    %v1654 = vunpack.c.h.b16 %v468
    %v1655 = vunpack.c.l.b16 %v469
    %v1656 = vunpack.c.h.b16 %v469
    %v1657 = vunpack.c.l.b16 %v470
    %v1658 = vunpack.c.h.b16 %v470
    %v1659 = vunpack.c.l.b16 %v471
    %v1660 = vunpack.c.h.b16 %v471
    %v1661 = vunpack.c.l.b16 %v472
    %v1662 = vunpack.c.h.b16 %v472
    %v1663 = vunpack.c.l.b16 %v473
    %v1664 = vunpack.c.h.b16 %v473
    %v1665 = vunpack.c.l.b16 %v474
    %v1666 = vunpack.c.h.b16 %v474
    %v1667 = vunpack.c.l.b16 %v475
    %v1668 = vunpack.c.h.b16 %v475
    %v1669 = vunpack.c.l.b16 %v476
    %v1670 = vunpack.c.h.b16 %v476
    %v1671 = vunpack.c.l.b16 %v477
    %v1672 = vunpack.c.h.b16 %v477
    %v1673 = vunpack.c.l.b16 %v478
    %v1674 = vunpack.c.h.b16 %v478
    %v1675 = vunpack.c.l.b16 %v479
    %v1676 = vunpack.c.h.b16 %v479
    %v1677 = vunpack.c.l.b16 %v480
    %v1678 = vunpack.c.h.b16 %v480
    %v1679 = vunpack.c.l.b16 %v481
    %v1680 = vunpack.c.h.b16 %v481
    %v1681 = vunpack.c.l.b16 %v482
    %v1682 = vunpack.c.h.b16 %v482
    %v1683 = vunpack.c.l.b16 %v483
    %v1684 = vunpack.c.h.b16 %v483
    %v1685 = vunpack.c.l.b16 %v484
    %v1686 = vunpack.c.h.b16 %v484
    %v1687 = vunpack.c.l.b16 %v485
    %v1688 = vunpack.c.h.b16 %v485
    %v1689 = vunpack.c.l.b16 %v486
    %v1690 = vunpack.c.h.b16 %v486
    %v1691 = vunpack.c.l.b16 %v487
    %v1692 = vunpack.c.h.b16 %v487
    %v1693 = vunpack.c.l.b16 %v488
    %v1694 = vunpack.c.h.b16 %v488
    %v1695 = vunpack.c.l.b16 %v489
    %v1696 = vunpack.c.h.b16 %v489
    %v1697 = vunpack.c.l.b16 %v490
    %v1698 = vunpack.c.h.b16 %v490
    %v1699 = vunpack.c.l.b16 %v491
    %v1700 = vunpack.c.h.b16 %v491
    %v1701 = vunpack.c.l.b16 %v492
    %v1702 = vunpack.c.h.b16 %v492
    %v1703 = vunpack.c.l.b16 %v493
    %v1704 = vunpack.c.h.b16 %v493
    %v1705 = vunpack.c.l.b16 %v494
    %v1706 = vunpack.c.h.b16 %v494
    %v1707 = vunpack.c.l.b16 %v495
    %v1708 = vunpack.c.h.b16 %v495
    %v1709 = vunpack.c.l.b16 %v496
    %v1710 = vunpack.c.h.b16 %v496
    %v1711 = vunpack.c.l.b16 %v497
    %v1712 = vunpack.c.h.b16 %v497
    %v1713 = vunpack.c.l.b16 %v498
    %v1714 = vunpack.c.h.b16 %v498
    %v1715 = vunpack.c.l.b16 %v499
    %v1716 = vunpack.c.h.b16 %v499
    %v1717 = vunpack.c.l.b16 %v500
    %v1718 = vunpack.c.h.b16 %v500
    %v1719 = vunpack.c.l.b16 %v501
    %v1720 = vunpack.c.h.b16 %v501
    %v1721 = vunpack.c.l.b16 %v502
    %v1722 = vunpack.c.h.b16 %v502
    %v1723 = vunpack.c.l.b16 %v503
    %v1724 = vunpack.c.h.b16 %v503
    %v1725 = vunpack.c.l.b16 %v504
    %v1726 = vunpack.c.h.b16 %v504
    %v1727 = vunpack.c.l.b16 %v505
    %v1728 = vunpack.c.h.b16 %v505
    %v1729 = vunpack.c.l.b16 %v506
    %v1730 = vunpack.c.h.b16 %v506
    %v1731 = vpack.c.b16 %v971, %v963
    %v1732 = vpack.c.b16 %v972, %v964
    %v1733 = vpack.c.b16 %v973, %v965
    %v1734 = vpack.c.b16 %v974, %v966
    %v1735 = vpack.c.b16 %v975, %v967
    %v1736 = vpack.c.b16 %v976, %v968
    %v1737 = vpack.c.b16 %v977, %v969
    %v1738 = vpack.c.b16 %v978, %v970
    %v1739 = vpack.c.b16 %v987, %v979
    %v1740 = vpack.c.b16 %v988, %v980
    %v1741 = vpack.c.b16 %v989, %v981
    %v1742 = vpack.c.b16 %v990, %v982
    %v1743 = vpack.c.b16 %v991, %v983
    %v1744 = vpack.c.b16 %v992, %v984
    %v1745 = vpack.c.b16 %v993, %v985
    %v1746 = vpack.c.b16 %v994, %v986
    %v1747 = vpack.c.b16 %v1003, %v995
    %v1748 = vpack.c.b16 %v1004, %v996
    %v1749 = vpack.c.b16 %v1005, %v997
    %v1750 = vpack.c.b16 %v1006, %v998
    %v1751 = vpack.c.b16 %v1007, %v999
    %v1752 = vpack.c.b16 %v1008, %v1000
    %v1753 = vpack.c.b16 %v1009, %v1001
    %v1754 = vpack.c.b16 %v1010, %v1002
    %v1755 = vpack.c.b16 %v1019, %v1011
    %v1756 = vpack.c.b16 %v1020, %v1012
    %v1757 = vpack.c.b16 %v1021, %v1013
    %v1758 = vpack.c.b16 %v1022, %v1014
    %v1759 = vpack.c.b16 %v1023, %v1015
    %v1760 = vpack.c.b16 %v1024, %v1016
    %v1761 = vpack.c.b16 %v1025, %v1017
    %v1762 = vpack.c.b16 %v1026, %v1018
    %v1763 = vpack.c.b16 %v1035, %v1027
    %v1764 = vpack.c.b16 %v1036, %v1028
    %v1765 = vpack.c.b16 %v1037, %v1029
    %v1766 = vpack.c.b16 %v1038, %v1030
    %v1767 = vpack.c.b16 %v1039, %v1031
    %v1768 = vpack.c.b16 %v1040, %v1032
    %v1769 = vpack.c.b16 %v1041, %v1033
    %v1770 = vpack.c.b16 %v1042, %v1034
    %v1771 = vpack.c.b16 %v1051, %v1043
    %v1772 = vpack.c.b16 %v1052, %v1044
    %v1773 = vpack.c.b16 %v1053, %v1045
    %v1774 = vpack.c.b16 %v1054, %v1046
    %v1775 = vpack.c.b16 %v1055, %v1047
    %v1776 = vpack.c.b16 %v1056, %v1048
    %v1777 = vpack.c.b16 %v1057, %v1049
    %v1778 = vpack.c.b16 %v1058, %v1050
    %v1779 = vpack.c.b16 %v1067, %v1059
    %v1780 = vpack.c.b16 %v1068, %v1060
    %v1781 = vpack.c.b16 %v1069, %v1061
    %v1782 = vpack.c.b16 %v1070, %v1062
    %v1783 = vpack.c.b16 %v1071, %v1063
    %v1784 = vpack.c.b16 %v1072, %v1064
    %v1785 = vpack.c.b16 %v1073, %v1065
    %v1786 = vpack.c.b16 %v1074, %v1066
    %v1787 = vpack.c.b16 %v1083, %v1075
    %v1788 = vpack.c.b16 %v1084, %v1076
    %v1789 = vpack.c.b16 %v1085, %v1077
    %v1790 = vpack.c.b16 %v1086, %v1078
    %v1791 = vpack.c.b16 %v1087, %v1079
    %v1792 = vpack.c.b16 %v1088, %v1080
    %v1793 = vpack.c.b16 %v1089, %v1081
    %v1794 = vpack.c.b16 %v1090, %v1082
    %v1795 = vpack.c.b16 %v1099, %v1091
    %v1796 = vpack.c.b16 %v1100, %v1092
    %v1797 = vpack.c.b16 %v1101, %v1093
    %v1798 = vpack.c.b16 %v1102, %v1094
    %v1799 = vpack.c.b16 %v1103, %v1095
    %v1800 = vpack.c.b16 %v1104, %v1096
    %v1801 = vpack.c.b16 %v1105, %v1097
    %v1802 = vpack.c.b16 %v1106, %v1098
    %v1803 = vpack.c.b16 %v1115, %v1107
    %v1804 = vpack.c.b16 %v1116, %v1108
    %v1805 = vpack.c.b16 %v1117, %v1109
    %v1806 = vpack.c.b16 %v1118, %v1110
    %v1807 = vpack.c.b16 %v1119, %v1111
    %v1808 = vpack.c.b16 %v1120, %v1112
    %v1809 = vpack.c.b16 %v1121, %v1113
    %v1810 = vpack.c.b16 %v1122, %v1114
    %v1811 = vpack.c.b16 %v1131, %v1123
    %v1812 = vpack.c.b16 %v1132, %v1124
    %v1813 = vpack.c.b16 %v1133, %v1125
    %v1814 = vpack.c.b16 %v1134, %v1126
    %v1815 = vpack.c.b16 %v1135, %v1127
    %v1816 = vpack.c.b16 %v1136, %v1128
    %v1817 = vpack.c.b16 %v1137, %v1129
    %v1818 = vpack.c.b16 %v1138, %v1130
    %v1819 = vpack.c.b16 %v1147, %v1139
    %v1820 = vpack.c.b16 %v1148, %v1140
    %v1821 = vpack.c.b16 %v1149, %v1141
    %v1822 = vpack.c.b16 %v1150, %v1142
    %v1823 = vpack.c.b16 %v1151, %v1143
    %v1824 = vpack.c.b16 %v1152, %v1144
    %v1825 = vpack.c.b16 %v1153, %v1145
    %v1826 = vpack.c.b16 %v1154, %v1146
    %v1827 = vpack.c.b16 %v1163, %v1155
    %v1828 = vpack.c.b16 %v1164, %v1156
    %v1829 = vpack.c.b16 %v1165, %v1157
    %v1830 = vpack.c.b16 %v1166, %v1158
    %v1831 = vpack.c.b16 %v1167, %v1159
    %v1832 = vpack.c.b16 %v1168, %v1160
    %v1833 = vpack.c.b16 %v1169, %v1161
    %v1834 = vpack.c.b16 %v1170, %v1162
    %v1835 = vpack.c.b16 %v1179, %v1171
    %v1836 = vpack.c.b16 %v1180, %v1172
    %v1837 = vpack.c.b16 %v1181, %v1173
    %v1838 = vpack.c.b16 %v1182, %v1174
    %v1839 = vpack.c.b16 %v1183, %v1175
    %v1840 = vpack.c.b16 %v1184, %v1176
    %v1841 = vpack.c.b16 %v1185, %v1177
    %v1842 = vpack.c.b16 %v1186, %v1178
    %v1843 = vpack.c.b16 %v1195, %v1187
    %v1844 = vpack.c.b16 %v1196, %v1188
    %v1845 = vpack.c.b16 %v1197, %v1189
    %v1846 = vpack.c.b16 %v1198, %v1190
    %v1847 = vpack.c.b16 %v1199, %v1191
    %v1848 = vpack.c.b16 %v1200, %v1192
    %v1849 = vpack.c.b16 %v1201, %v1193
    %v1850 = vpack.c.b16 %v1202, %v1194
    %v1851 = vpack.c.b16 %v1211, %v1203
    %v1852 = vpack.c.b16 %v1212, %v1204
    %v1853 = vpack.c.b16 %v1213, %v1205
    %v1854 = vpack.c.b16 %v1214, %v1206
    %v1855 = vpack.c.b16 %v1215, %v1207
    %v1856 = vpack.c.b16 %v1216, %v1208
    %v1857 = vpack.c.b16 %v1217, %v1209
    %v1858 = vpack.c.b16 %v1218, %v1210
    %v1859 = vpack.c.b16 %v1227, %v1219
    %v1860 = vpack.c.b16 %v1228, %v1220
    %v1861 = vpack.c.b16 %v1229, %v1221
    %v1862 = vpack.c.b16 %v1230, %v1222
    %v1863 = vpack.c.b16 %v1231, %v1223
    %v1864 = vpack.c.b16 %v1232, %v1224
    %v1865 = vpack.c.b16 %v1233, %v1225
    %v1866 = vpack.c.b16 %v1234, %v1226
    %v1867 = vpack.c.b16 %v1243, %v1235
    %v1868 = vpack.c.b16 %v1244, %v1236
    %v1869 = vpack.c.b16 %v1245, %v1237
    %v1870 = vpack.c.b16 %v1246, %v1238
    %v1871 = vpack.c.b16 %v1247, %v1239
    %v1872 = vpack.c.b16 %v1248, %v1240
    %v1873 = vpack.c.b16 %v1249, %v1241
    %v1874 = vpack.c.b16 %v1250, %v1242
    %v1875 = vpack.c.b16 %v1259, %v1251
    %v1876 = vpack.c.b16 %v1260, %v1252
    %v1877 = vpack.c.b16 %v1261, %v1253
    %v1878 = vpack.c.b16 %v1262, %v1254
    %v1879 = vpack.c.b16 %v1263, %v1255
    %v1880 = vpack.c.b16 %v1264, %v1256
    %v1881 = vpack.c.b16 %v1265, %v1257
    %v1882 = vpack.c.b16 %v1266, %v1258
    %v1883 = vpack.c.b16 %v1275, %v1267
    %v1884 = vpack.c.b16 %v1276, %v1268
    %v1885 = vpack.c.b16 %v1277, %v1269
    %v1886 = vpack.c.b16 %v1278, %v1270
    %v1887 = vpack.c.b16 %v1279, %v1271
    %v1888 = vpack.c.b16 %v1280, %v1272
    %v1889 = vpack.c.b16 %v1281, %v1273
    %v1890 = vpack.c.b16 %v1282, %v1274
    %v1891 = vpack.c.b16 %v1291, %v1283
    %v1892 = vpack.c.b16 %v1292, %v1284
    %v1893 = vpack.c.b16 %v1293, %v1285
    %v1894 = vpack.c.b16 %v1294, %v1286
    %v1895 = vpack.c.b16 %v1295, %v1287
    %v1896 = vpack.c.b16 %v1296, %v1288
    %v1897 = vpack.c.b16 %v1297, %v1289
    %v1898 = vpack.c.b16 %v1298, %v1290
    %v1899 = vpack.c.b16 %v1307, %v1299
    %v1900 = vpack.c.b16 %v1308, %v1300
    %v1901 = vpack.c.b16 %v1309, %v1301
    %v1902 = vpack.c.b16 %v1310, %v1302
    %v1903 = vpack.c.b16 %v1311, %v1303
    %v1904 = vpack.c.b16 %v1312, %v1304
    %v1905 = vpack.c.b16 %v1313, %v1305
    %v1906 = vpack.c.b16 %v1314, %v1306
    %v1907 = vpack.c.b16 %v1323, %v1315
    %v1908 = vpack.c.b16 %v1324, %v1316
    %v1909 = vpack.c.b16 %v1325, %v1317
    %v1910 = vpack.c.b16 %v1326, %v1318
    %v1911 = vpack.c.b16 %v1327, %v1319
    %v1912 = vpack.c.b16 %v1328, %v1320
    %v1913 = vpack.c.b16 %v1329, %v1321
    %v1914 = vpack.c.b16 %v1330, %v1322
    %v1915 = vpack.c.b16 %v1339, %v1331
    %v1916 = vpack.c.b16 %v1340, %v1332
    %v1917 = vpack.c.b16 %v1341, %v1333
    %v1918 = vpack.c.b16 %v1342, %v1334
    %v1919 = vpack.c.b16 %v1343, %v1335
    %v1920 = vpack.c.b16 %v1344, %v1336
    %v1921 = vpack.c.b16 %v1345, %v1337
    %v1922 = vpack.c.b16 %v1346, %v1338
    %v1923 = vpack.c.b16 %v1355, %v1347
    %v1924 = vpack.c.b16 %v1356, %v1348
    %v1925 = vpack.c.b16 %v1357, %v1349
    %v1926 = vpack.c.b16 %v1358, %v1350
    %v1927 = vpack.c.b16 %v1359, %v1351
    %v1928 = vpack.c.b16 %v1360, %v1352
    %v1929 = vpack.c.b16 %v1361, %v1353
    %v1930 = vpack.c.b16 %v1362, %v1354
    %v1931 = vpack.c.b16 %v1371, %v1363
    %v1932 = vpack.c.b16 %v1372, %v1364
    %v1933 = vpack.c.b16 %v1373, %v1365
    %v1934 = vpack.c.b16 %v1374, %v1366
    %v1935 = vpack.c.b16 %v1375, %v1367
    %v1936 = vpack.c.b16 %v1376, %v1368
    %v1937 = vpack.c.b16 %v1377, %v1369
    %v1938 = vpack.c.b16 %v1378, %v1370
    %v1939 = vpack.c.b16 %v1387, %v1379
    %v1940 = vpack.c.b16 %v1388, %v1380
    %v1941 = vpack.c.b16 %v1389, %v1381
    %v1942 = vpack.c.b16 %v1390, %v1382
    %v1943 = vpack.c.b16 %v1391, %v1383
    %v1944 = vpack.c.b16 %v1392, %v1384
    %v1945 = vpack.c.b16 %v1393, %v1385
    %v1946 = vpack.c.b16 %v1394, %v1386
    %v1947 = vpack.c.b16 %v1403, %v1395
    %v1948 = vpack.c.b16 %v1404, %v1396
    %v1949 = vpack.c.b16 %v1405, %v1397
    %v1950 = vpack.c.b16 %v1406, %v1398
    %v1951 = vpack.c.b16 %v1407, %v1399
    %v1952 = vpack.c.b16 %v1408, %v1400
    %v1953 = vpack.c.b16 %v1409, %v1401
    %v1954 = vpack.c.b16 %v1410, %v1402
    %v1955 = vpack.c.b16 %v1419, %v1411
    %v1956 = vpack.c.b16 %v1420, %v1412
    %v1957 = vpack.c.b16 %v1421, %v1413
    %v1958 = vpack.c.b16 %v1422, %v1414
    %v1959 = vpack.c.b16 %v1423, %v1415
    %v1960 = vpack.c.b16 %v1424, %v1416
    %v1961 = vpack.c.b16 %v1425, %v1417
    %v1962 = vpack.c.b16 %v1426, %v1418
    %v1963 = vpack.c.b16 %v1435, %v1427
    %v1964 = vpack.c.b16 %v1436, %v1428
    %v1965 = vpack.c.b16 %v1437, %v1429
    %v1966 = vpack.c.b16 %v1438, %v1430
    %v1967 = vpack.c.b16 %v1439, %v1431
    %v1968 = vpack.c.b16 %v1440, %v1432
    %v1969 = vpack.c.b16 %v1441, %v1433
    %v1970 = vpack.c.b16 %v1442, %v1434
    %v1971 = vpack.c.b16 %v1451, %v1443
    %v1972 = vpack.c.b16 %v1452, %v1444
    %v1973 = vpack.c.b16 %v1453, %v1445
    %v1974 = vpack.c.b16 %v1454, %v1446
    %v1975 = vpack.c.b16 %v1455, %v1447
    %v1976 = vpack.c.b16 %v1456, %v1448
    %v1977 = vpack.c.b16 %v1457, %v1449
    %v1978 = vpack.c.b16 %v1458, %v1450
    %v1979 = vpack.c.b16 %v1467, %v1459
    %v1980 = vpack.c.b16 %v1468, %v1460
    %v1981 = vpack.c.b16 %v1469, %v1461
    %v1982 = vpack.c.b16 %v1470, %v1462
    %v1983 = vpack.c.b16 %v1471, %v1463
    %v1984 = vpack.c.b16 %v1472, %v1464
    %v1985 = vpack.c.b16 %v1473, %v1465
    %v1986 = vpack.c.b16 %v1474, %v1466
    %v1987 = vpack.c.b16 %v1483, %v1475
    %v1988 = vpack.c.b16 %v1484, %v1476
    %v1989 = vpack.c.b16 %v1485, %v1477
    %v1990 = vpack.c.b16 %v1486, %v1478
    %v1991 = vpack.c.b16 %v1487, %v1479
    %v1992 = vpack.c.b16 %v1488, %v1480
    %v1993 = vpack.c.b16 %v1489, %v1481
    %v1994 = vpack.c.b16 %v1490, %v1482
    %v1995 = vpack.c.b16 %v1499, %v1491
    %v1996 = vpack.c.b16 %v1500, %v1492
    %v1997 = vpack.c.b16 %v1501, %v1493
    %v1998 = vpack.c.b16 %v1502, %v1494
    %v1999 = vpack.c.b16 %v1503, %v1495
    %v2000 = vpack.c.b16 %v1504, %v1496
    %v2001 = vpack.c.b16 %v1505, %v1497
    %v2002 = vpack.c.b16 %v1506, %v1498
    %v2003 = vpack.c.b16 %v1515, %v1507
    %v2004 = vpack.c.b16 %v1516, %v1508
    %v2005 = vpack.c.b16 %v1517, %v1509
    %v2006 = vpack.c.b16 %v1518, %v1510
    %v2007 = vpack.c.b16 %v1519, %v1511
    %v2008 = vpack.c.b16 %v1520, %v1512
    %v2009 = vpack.c.b16 %v1521, %v1513
    %v2010 = vpack.c.b16 %v1522, %v1514
    %v2011 = vpack.c.b16 %v1531, %v1523
    %v2012 = vpack.c.b16 %v1532, %v1524
    %v2013 = vpack.c.b16 %v1533, %v1525
    %v2014 = vpack.c.b16 %v1534, %v1526
    %v2015 = vpack.c.b16 %v1535, %v1527
    %v2016 = vpack.c.b16 %v1536, %v1528
    %v2017 = vpack.c.b16 %v1537, %v1529
    %v2018 = vpack.c.b16 %v1538, %v1530
    %v2019 = vpack.c.b16 %v1547, %v1539
    %v2020 = vpack.c.b16 %v1548, %v1540
    %v2021 = vpack.c.b16 %v1549, %v1541
    %v2022 = vpack.c.b16 %v1550, %v1542
    %v2023 = vpack.c.b16 %v1551, %v1543
    %v2024 = vpack.c.b16 %v1552, %v1544
    %v2025 = vpack.c.b16 %v1553, %v1545
    %v2026 = vpack.c.b16 %v1554, %v1546
    %v2027 = vpack.c.b16 %v1563, %v1555
    %v2028 = vpack.c.b16 %v1564, %v1556
    %v2029 = vpack.c.b16 %v1565, %v1557
    %v2030 = vpack.c.b16 %v1566, %v1558
    %v2031 = vpack.c.b16 %v1567, %v1559
    %v2032 = vpack.c.b16 %v1568, %v1560
    %v2033 = vpack.c.b16 %v1569, %v1561
    %v2034 = vpack.c.b16 %v1570, %v1562
    %v2035 = vpack.c.b16 %v1579, %v1571
    %v2036 = vpack.c.b16 %v1580, %v1572
    %v2037 = vpack.c.b16 %v1581, %v1573
    %v2038 = vpack.c.b16 %v1582, %v1574
    %v2039 = vpack.c.b16 %v1583, %v1575
    %v2040 = vpack.c.b16 %v1584, %v1576
    %v2041 = vpack.c.b16 %v1585, %v1577
    %v2042 = vpack.c.b16 %v1586, %v1578
    %v2043 = vpack.c.b16 %v1595, %v1587
    %v2044 = vpack.c.b16 %v1596, %v1588
    %v2045 = vpack.c.b16 %v1597, %v1589
    %v2046 = vpack.c.b16 %v1598, %v1590
    %v2047 = vpack.c.b16 %v1599, %v1591
    %v2048 = vpack.c.b16 %v1600, %v1592
    %v2049 = vpack.c.b16 %v1601, %v1593
    %v2050 = vpack.c.b16 %v1602, %v1594
    %v2051 = vpack.c.b16 %v1611, %v1603
    %v2052 = vpack.c.b16 %v1612, %v1604
    %v2053 = vpack.c.b16 %v1613, %v1605
    %v2054 = vpack.c.b16 %v1614, %v1606
    %v2055 = vpack.c.b16 %v1615, %v1607
    %v2056 = vpack.c.b16 %v1616, %v1608
    %v2057 = vpack.c.b16 %v1617, %v1609
    %v2058 = vpack.c.b16 %v1618, %v1610
    %v2059 = vpack.c.b16 %v1627, %v1619
    %v2060 = vpack.c.b16 %v1628, %v1620
    %v2061 = vpack.c.b16 %v1629, %v1621
    %v2062 = vpack.c.b16 %v1630, %v1622
    %v2063 = vpack.c.b16 %v1631, %v1623
    %v2064 = vpack.c.b16 %v1632, %v1624
    %v2065 = vpack.c.b16 %v1633, %v1625
    %v2066 = vpack.c.b16 %v1634, %v1626
    %v2067 = vpack.c.b16 %v1643, %v1635
    %v2068 = vpack.c.b16 %v1644, %v1636
    %v2069 = vpack.c.b16 %v1645, %v1637
    %v2070 = vpack.c.b16 %v1646, %v1638
    %v2071 = vpack.c.b16 %v1647, %v1639
    %v2072 = vpack.c.b16 %v1648, %v1640
    %v2073 = vpack.c.b16 %v1649, %v1641
    %v2074 = vpack.c.b16 %v1650, %v1642
    %v2075 = vpack.c.b16 %v1659, %v1651
    %v2076 = vpack.c.b16 %v1660, %v1652
    %v2077 = vpack.c.b16 %v1661, %v1653
    %v2078 = vpack.c.b16 %v1662, %v1654
    %v2079 = vpack.c.b16 %v1663, %v1655
    %v2080 = vpack.c.b16 %v1664, %v1656
    %v2081 = vpack.c.b16 %v1665, %v1657
    %v2082 = vpack.c.b16 %v1666, %v1658
    %v2083 = vpack.c.b16 %v1675, %v1667
    %v2084 = vpack.c.b16 %v1676, %v1668
    %v2085 = vpack.c.b16 %v1677, %v1669
    %v2086 = vpack.c.b16 %v1678, %v1670
    %v2087 = vpack.c.b16 %v1679, %v1671
    %v2088 = vpack.c.b16 %v1680, %v1672
    %v2089 = vpack.c.b16 %v1681, %v1673
    %v2090 = vpack.c.b16 %v1682, %v1674
    %v2091 = vpack.c.b16 %v1691, %v1683
    %v2092 = vpack.c.b16 %v1692, %v1684
    %v2093 = vpack.c.b16 %v1693, %v1685
    %v2094 = vpack.c.b16 %v1694, %v1686
    %v2095 = vpack.c.b16 %v1695, %v1687
    %v2096 = vpack.c.b16 %v1696, %v1688
    %v2097 = vpack.c.b16 %v1697, %v1689
    %v2098 = vpack.c.b16 %v1698, %v1690
    %v2099 = vpack.c.b16 %v1707, %v1699
    %v2100 = vpack.c.b16 %v1708, %v1700
    %v2101 = vpack.c.b16 %v1709, %v1701
    %v2102 = vpack.c.b16 %v1710, %v1702
    %v2103 = vpack.c.b16 %v1711, %v1703
    %v2104 = vpack.c.b16 %v1712, %v1704
    %v2105 = vpack.c.b16 %v1713, %v1705
    %v2106 = vpack.c.b16 %v1714, %v1706
    %v2107 = vpack.c.b16 %v1723, %v1715
    %v2108 = vpack.c.b16 %v1724, %v1716
    %v2109 = vpack.c.b16 %v1725, %v1717
    %v2110 = vpack.c.b16 %v1726, %v1718
    %v2111 = vpack.c.b16 %v1727, %v1719
    %v2112 = vpack.c.b16 %v1728, %v1720
    %v2113 = vpack.c.b16 %v1729, %v1721
    %v2114 = vpack.c.b16 %v1730, %v1722
    %2499 = vmatprep.subr.bf16.mxu0 %v1732
    %2500 = vmatpush1.bf16.msra.mxu0 %v1731
    %2501 = vmatprep.subr.bf16.mxu0 %v1740
    %2502 = vmatpush1.bf16.msra.mxu0 %v1739
    %2503 = vmatprep.subr.bf16.mxu0 %v1748
    %2504 = vmatpush1.bf16.msra.mxu0 %v1747
    %2505 = vmatprep.subr.bf16.mxu0 %v1756
    %2506 = vmatpush1.bf16.msra.mxu0 %v1755
    %2507 = vmatprep.subr.bf16.mxu0 %v1764
    %2508 = vmatpush1.bf16.msra.mxu0 %v1763
    %2509 = vmatprep.subr.bf16.mxu0 %v1772
    %2510 = vmatpush1.bf16.msra.mxu0 %v1771
    %2511 = vmatprep.subr.bf16.mxu0 %v1780
    %2512 = vmatpush1.bf16.msra.mxu0 %v1779
    %2513 = vmatprep.subr.bf16.mxu0 %v1788
    %2514 = vmatpush1.bf16.msra.mxu0 %v1787
    %2515 = vmatprep.subr.bf16.mxu0 %v1796
    %2516 = vmatpush1.bf16.msra.mxu0 %v1795
    %2517 = vmatprep.subr.bf16.mxu0 %v1804
    %2518 = vmatpush1.bf16.msra.mxu0 %v1803
    %2519 = vmatprep.subr.bf16.mxu0 %v1812
    %2520 = vmatpush1.bf16.msra.mxu0 %v1811
    %2521 = vmatprep.subr.bf16.mxu0 %v1820
    %2522 = vmatpush1.bf16.msra.mxu0 %v1819
    %2523 = vmatprep.subr.bf16.mxu0 %v1828
    %2524 = vmatpush1.bf16.msra.mxu0 %v1827
    %2525 = vmatprep.subr.bf16.mxu0 %v1836
    %2526 = vmatpush1.bf16.msra.mxu0 %v1835
    %2527 = vmatprep.subr.bf16.mxu0 %v1844
    %2528 = vmatpush1.bf16.msra.mxu0 %v1843
    %2529 = vmatprep.subr.bf16.mxu0 %v1852
    %2530 = vmatpush1.bf16.msra.mxu0 %v1851
    %2531 = vmatprep.mubr.bf16.mxu0 %v568
    %2532 = vmatmul.mubr.bf16.gmra.mrb[0].mxu0 %v567
    %v2533 = vpop.f32.mrb[0].mxu0
    %v2534 = vadd.f32 %v512, %v2533
    %v2535 = vpop.f32.mrb[0].mxu0
    %v2536 = vadd.f32 %v516, %v2535
    %v2537 = vpop.f32.mrb[0].mxu0
    %v2538 = vadd.f32 %v512, %v2537
    %v2539 = vpop.f32.mrb[0].mxu0
    %v2540 = vadd.f32 %v516, %v2539
    %2541 = vdwg.mxu0
    %2542 = vmatprep.subr.bf16.mxu0 %v1860
    %2543 = vmatpush1.bf16.msra.mxu0 %v1859
    %2544 = vmatprep.subr.bf16.mxu0 %v1868
    %2545 = vmatpush1.bf16.msra.mxu0 %v1867
    %2546 = vmatprep.subr.bf16.mxu0 %v1876
    %2547 = vmatpush1.bf16.msra.mxu0 %v1875
    %2548 = vmatprep.subr.bf16.mxu0 %v1884
    %2549 = vmatpush1.bf16.msra.mxu0 %v1883
    %2550 = vmatprep.subr.bf16.mxu0 %v1892
    %2551 = vmatpush1.bf16.msra.mxu0 %v1891
    %2552 = vmatprep.subr.bf16.mxu0 %v1900
    %2553 = vmatpush1.bf16.msra.mxu0 %v1899
    %2554 = vmatprep.subr.bf16.mxu0 %v1908
    %2555 = vmatpush1.bf16.msra.mxu0 %v1907
    %2556 = vmatprep.subr.bf16.mxu0 %v1916
    %2557 = vmatpush1.bf16.msra.mxu0 %v1915
    %2558 = vmatprep.subr.bf16.mxu0 %v1924
    %2559 = vmatpush1.bf16.msra.mxu0 %v1923
    %2560 = vmatprep.subr.bf16.mxu0 %v1932
    %2561 = vmatpush1.bf16.msra.mxu0 %v1931
    %2562 = vmatprep.subr.bf16.mxu0 %v1940
    %2563 = vmatpush1.bf16.msra.mxu0 %v1939
    %2564 = vmatprep.subr.bf16.mxu0 %v1948
    %2565 = vmatpush1.bf16.msra.mxu0 %v1947
    %2566 = vmatprep.subr.bf16.mxu0 %v1956
    %2567 = vmatpush1.bf16.msra.mxu0 %v1955
    %2568 = vmatprep.subr.bf16.mxu0 %v1964
    %2569 = vmatpush1.bf16.msra.mxu0 %v1963
    %2570 = vmatprep.subr.bf16.mxu0 %v1972
    %2571 = vmatpush1.bf16.msra.mxu0 %v1971
    %2572 = vmatprep.subr.bf16.mxu0 %v1980
    %2573 = vmatpush1.bf16.msra.mxu0 %v1979
    %2574 = vmatprep.mubr.bf16.mxu0 %v570
    %2575 = vmatmul.mubr.bf16.gmra.mrb[0].mxu0 %v569
    %v2576 = vpop.f32.mrb[0].mxu0
    %v2577 = vadd.f32 %v2534, %v2576
    %v2578 = vpop.f32.mrb[0].mxu0
    %v2579 = vadd.f32 %v2536, %v2578
    %v2580 = vpop.f32.mrb[0].mxu0
    %v2581 = vadd.f32 %v2538, %v2580
    %v2582 = vpop.f32.mrb[0].mxu0
    %v2583 = vadd.f32 %v2540, %v2582
    %2584 = vdwg.mxu0
    %2585 = vmatprep.subr.bf16.mxu0 %v1988
    %2586 = vmatpush1.bf16.msra.mxu0 %v1987
    %2587 = vmatprep.subr.bf16.mxu0 %v1996
    %2588 = vmatpush1.bf16.msra.mxu0 %v1995
    %2589 = vmatprep.subr.bf16.mxu0 %v2004
    %2590 = vmatpush1.bf16.msra.mxu0 %v2003
    %2591 = vmatprep.subr.bf16.mxu0 %v2012
    %2592 = vmatpush1.bf16.msra.mxu0 %v2011
    %2593 = vmatprep.subr.bf16.mxu0 %v2020
    %2594 = vmatpush1.bf16.msra.mxu0 %v2019
    %2595 = vmatprep.subr.bf16.mxu0 %v2028
    %2596 = vmatpush1.bf16.msra.mxu0 %v2027
    %2597 = vmatprep.subr.bf16.mxu0 %v2036
    %2598 = vmatpush1.bf16.msra.mxu0 %v2035
    %2599 = vmatprep.subr.bf16.mxu0 %v2044
    %2600 = vmatpush1.bf16.msra.mxu0 %v2043
    %2601 = vmatprep.subr.bf16.mxu0 %v2052
    %2602 = vmatpush1.bf16.msra.mxu0 %v2051
    %2603 = vmatprep.subr.bf16.mxu0 %v2060
    %2604 = vmatpush1.bf16.msra.mxu0 %v2059
    %2605 = vmatprep.subr.bf16.mxu0 %v2068
    %2606 = vmatpush1.bf16.msra.mxu0 %v2067
    %2607 = vmatprep.subr.bf16.mxu0 %v2076
    %2608 = vmatpush1.bf16.msra.mxu0 %v2075
    %2609 = vmatprep.subr.bf16.mxu0 %v2084
    %2610 = vmatpush1.bf16.msra.mxu0 %v2083
    %2611 = vmatprep.subr.bf16.mxu0 %v2092
    %2612 = vmatpush1.bf16.msra.mxu0 %v2091
    %2613 = vmatprep.subr.bf16.mxu0 %v2100
    %2614 = vmatpush1.bf16.msra.mxu0 %v2099
    %2615 = vmatprep.subr.bf16.mxu0 %v2108
    %2616 = vmatpush1.bf16.msra.mxu0 %v2107
    %2617 = vmatprep.mubr.bf16.mxu0 %v572
    %2618 = vmatmul.mubr.bf16.gmra.mrb[0].mxu0 %v571
    %v2619 = vpop.f32.mrb[0].mxu0
    %v2620 = vadd.f32 %v2577, %v2619
    %v2621 = vpop.f32.mrb[0].mxu0
    %v2622 = vadd.f32 %v2579, %v2621
    %v2623 = vpop.f32.mrb[0].mxu0
    %v2624 = vadd.f32 %v2581, %v2623
    %v2625 = vpop.f32.mrb[0].mxu0
    %v2626 = vadd.f32 %v2583, %v2625
    %2627 = vdwg.mxu0
    %2628 = vmatprep.subr.bf16.mxu0 %v1734
    %2629 = vmatpush1.bf16.msra.mxu0 %v1733
    %2630 = vmatprep.subr.bf16.mxu0 %v1742
    %2631 = vmatpush1.bf16.msra.mxu0 %v1741
    %2632 = vmatprep.subr.bf16.mxu0 %v1750
    %2633 = vmatpush1.bf16.msra.mxu0 %v1749
    %2634 = vmatprep.subr.bf16.mxu0 %v1758
    %2635 = vmatpush1.bf16.msra.mxu0 %v1757
    %2636 = vmatprep.subr.bf16.mxu0 %v1766
    %2637 = vmatpush1.bf16.msra.mxu0 %v1765
    %2638 = vmatprep.subr.bf16.mxu0 %v1774
    %2639 = vmatpush1.bf16.msra.mxu0 %v1773
    %2640 = vmatprep.subr.bf16.mxu0 %v1782
    %2641 = vmatpush1.bf16.msra.mxu0 %v1781
    %2642 = vmatprep.subr.bf16.mxu0 %v1790
    %2643 = vmatpush1.bf16.msra.mxu0 %v1789
    %2644 = vmatprep.subr.bf16.mxu0 %v1798
    %2645 = vmatpush1.bf16.msra.mxu0 %v1797
    %2646 = vmatprep.subr.bf16.mxu0 %v1806
    %2647 = vmatpush1.bf16.msra.mxu0 %v1805
    %2648 = vmatprep.subr.bf16.mxu0 %v1814
    %2649 = vmatpush1.bf16.msra.mxu0 %v1813
    %2650 = vmatprep.subr.bf16.mxu0 %v1822
    %2651 = vmatpush1.bf16.msra.mxu0 %v1821
    %2652 = vmatprep.subr.bf16.mxu0 %v1830
    %2653 = vmatpush1.bf16.msra.mxu0 %v1829
    %2654 = vmatprep.subr.bf16.mxu0 %v1838
    %2655 = vmatpush1.bf16.msra.mxu0 %v1837
    %2656 = vmatprep.subr.bf16.mxu0 %v1846
    %2657 = vmatpush1.bf16.msra.mxu0 %v1845
    %2658 = vmatprep.subr.bf16.mxu0 %v1854
    %2659 = vmatpush1.bf16.msra.mxu0 %v1853
    %2660 = vmatprep.mubr.bf16.mxu0 %v568
    %2661 = vmatmul.mubr.bf16.gmra.mrb[0].mxu0 %v567
    %v2662 = vpop.f32.mrb[0].mxu0
    %v2663 = vadd.f32 %v520, %v2662
    %v2664 = vpop.f32.mrb[0].mxu0
    %v2665 = vadd.f32 %v524, %v2664
    %v2666 = vpop.f32.mrb[0].mxu0
    %v2667 = vadd.f32 %v520, %v2666
    %v2668 = vpop.f32.mrb[0].mxu0
    %v2669 = vadd.f32 %v524, %v2668
    %2670 = vdwg.mxu0
    %2671 = vmatprep.subr.bf16.mxu0 %v1862
    %2672 = vmatpush1.bf16.msra.mxu0 %v1861
    %2673 = vmatprep.subr.bf16.mxu0 %v1870
    %2674 = vmatpush1.bf16.msra.mxu0 %v1869
    %2675 = vmatprep.subr.bf16.mxu0 %v1878
    %2676 = vmatpush1.bf16.msra.mxu0 %v1877
    %2677 = vmatprep.subr.bf16.mxu0 %v1886
    %2678 = vmatpush1.bf16.msra.mxu0 %v1885
    %2679 = vmatprep.subr.bf16.mxu0 %v1894
    %2680 = vmatpush1.bf16.msra.mxu0 %v1893
    %2681 = vmatprep.subr.bf16.mxu0 %v1902
    %2682 = vmatpush1.bf16.msra.mxu0 %v1901
    %2683 = vmatprep.subr.bf16.mxu0 %v1910
    %2684 = vmatpush1.bf16.msra.mxu0 %v1909
    %2685 = vmatprep.subr.bf16.mxu0 %v1918
    %2686 = vmatpush1.bf16.msra.mxu0 %v1917
    %2687 = vmatprep.subr.bf16.mxu0 %v1926
    %2688 = vmatpush1.bf16.msra.mxu0 %v1925
    %2689 = vmatprep.subr.bf16.mxu0 %v1934
    %2690 = vmatpush1.bf16.msra.mxu0 %v1933
    %2691 = vmatprep.subr.bf16.mxu0 %v1942
    %2692 = vmatpush1.bf16.msra.mxu0 %v1941
    %2693 = vmatprep.subr.bf16.mxu0 %v1950
    %2694 = vmatpush1.bf16.msra.mxu0 %v1949
    %2695 = vmatprep.subr.bf16.mxu0 %v1958
    %2696 = vmatpush1.bf16.msra.mxu0 %v1957
    %2697 = vmatprep.subr.bf16.mxu0 %v1966
    %2698 = vmatpush1.bf16.msra.mxu0 %v1965
    %2699 = vmatprep.subr.bf16.mxu0 %v1974
    %2700 = vmatpush1.bf16.msra.mxu0 %v1973
    %2701 = vmatprep.subr.bf16.mxu0 %v1982
    %2702 = vmatpush1.bf16.msra.mxu0 %v1981
    %2703 = vmatprep.mubr.bf16.mxu0 %v570
    %2704 = vmatmul.mubr.bf16.gmra.mrb[0].mxu0 %v569
    %v2705 = vpop.f32.mrb[0].mxu0
    %v2706 = vadd.f32 %v2663, %v2705
    %v2707 = vpop.f32.mrb[0].mxu0
    %v2708 = vadd.f32 %v2665, %v2707
    %v2709 = vpop.f32.mrb[0].mxu0
    %v2710 = vadd.f32 %v2667, %v2709
    %v2711 = vpop.f32.mrb[0].mxu0
    %v2712 = vadd.f32 %v2669, %v2711
    %2713 = vdwg.mxu0
    %2714 = vmatprep.subr.bf16.mxu0 %v1990
    %2715 = vmatpush1.bf16.msra.mxu0 %v1989
    %2716 = vmatprep.subr.bf16.mxu0 %v1998
    %2717 = vmatpush1.bf16.msra.mxu0 %v1997
    %2718 = vmatprep.subr.bf16.mxu0 %v2006
    %2719 = vmatpush1.bf16.msra.mxu0 %v2005
    %2720 = vmatprep.subr.bf16.mxu0 %v2014
    %2721 = vmatpush1.bf16.msra.mxu0 %v2013
    %2722 = vmatprep.subr.bf16.mxu0 %v2022
    %2723 = vmatpush1.bf16.msra.mxu0 %v2021
    %2724 = vmatprep.subr.bf16.mxu0 %v2030
    %2725 = vmatpush1.bf16.msra.mxu0 %v2029
    %2726 = vmatprep.subr.bf16.mxu0 %v2038
    %2727 = vmatpush1.bf16.msra.mxu0 %v2037
    %2728 = vmatprep.subr.bf16.mxu0 %v2046
    %2729 = vmatpush1.bf16.msra.mxu0 %v2045
    %2730 = vmatprep.subr.bf16.mxu0 %v2054
    %2731 = vmatpush1.bf16.msra.mxu0 %v2053
    %2732 = vmatprep.subr.bf16.mxu0 %v2062
    %2733 = vmatpush1.bf16.msra.mxu0 %v2061
    %2734 = vmatprep.subr.bf16.mxu0 %v2070
    %2735 = vmatpush1.bf16.msra.mxu0 %v2069
    %2736 = vmatprep.subr.bf16.mxu0 %v2078
    %2737 = vmatpush1.bf16.msra.mxu0 %v2077
    %2738 = vmatprep.subr.bf16.mxu0 %v2086
    %2739 = vmatpush1.bf16.msra.mxu0 %v2085
    %2740 = vmatprep.subr.bf16.mxu0 %v2094
    %2741 = vmatpush1.bf16.msra.mxu0 %v2093
    %2742 = vmatprep.subr.bf16.mxu0 %v2102
    %2743 = vmatpush1.bf16.msra.mxu0 %v2101
    %2744 = vmatprep.subr.bf16.mxu0 %v2110
    %2745 = vmatpush1.bf16.msra.mxu0 %v2109
    %2746 = vmatprep.mubr.bf16.mxu0 %v572
    %2747 = vmatmul.mubr.bf16.gmra.mrb[0].mxu0 %v571
    %v2748 = vpop.f32.mrb[0].mxu0
    %v2749 = vadd.f32 %v2706, %v2748
    %v2750 = vpop.f32.mrb[0].mxu0
    %v2751 = vadd.f32 %v2708, %v2750
    %v2752 = vpop.f32.mrb[0].mxu0
    %v2753 = vadd.f32 %v2710, %v2752
    %v2754 = vpop.f32.mrb[0].mxu0
    %v2755 = vadd.f32 %v2712, %v2754
    %2756 = vdwg.mxu0
    %2757 = vmatprep.subr.bf16.mxu0 %v1736
    %2758 = vmatpush1.bf16.msra.mxu0 %v1735
    %2759 = vmatprep.subr.bf16.mxu0 %v1744
    %2760 = vmatpush1.bf16.msra.mxu0 %v1743
    %2761 = vmatprep.subr.bf16.mxu0 %v1752
    %2762 = vmatpush1.bf16.msra.mxu0 %v1751
    %2763 = vmatprep.subr.bf16.mxu0 %v1760
    %2764 = vmatpush1.bf16.msra.mxu0 %v1759
    %2765 = vmatprep.subr.bf16.mxu0 %v1768
    %2766 = vmatpush1.bf16.msra.mxu0 %v1767
    %2767 = vmatprep.subr.bf16.mxu0 %v1776
    %2768 = vmatpush1.bf16.msra.mxu0 %v1775
    %2769 = vmatprep.subr.bf16.mxu0 %v1784
    %2770 = vmatpush1.bf16.msra.mxu0 %v1783
    %2771 = vmatprep.subr.bf16.mxu0 %v1792
    %2772 = vmatpush1.bf16.msra.mxu0 %v1791
    %2773 = vmatprep.subr.bf16.mxu0 %v1800
    %2774 = vmatpush1.bf16.msra.mxu0 %v1799
    %2775 = vmatprep.subr.bf16.mxu0 %v1808
    %2776 = vmatpush1.bf16.msra.mxu0 %v1807
    %2777 = vmatprep.subr.bf16.mxu0 %v1816
    %2778 = vmatpush1.bf16.msra.mxu0 %v1815
    %2779 = vmatprep.subr.bf16.mxu0 %v1824
    %2780 = vmatpush1.bf16.msra.mxu0 %v1823
    %2781 = vmatprep.subr.bf16.mxu0 %v1832
    %2782 = vmatpush1.bf16.msra.mxu0 %v1831
    %2783 = vmatprep.subr.bf16.mxu0 %v1840
    %2784 = vmatpush1.bf16.msra.mxu0 %v1839
    %2785 = vmatprep.subr.bf16.mxu0 %v1848
    %2786 = vmatpush1.bf16.msra.mxu0 %v1847
    %2787 = vmatprep.subr.bf16.mxu0 %v1856
    %2788 = vmatpush1.bf16.msra.mxu0 %v1855
    %2789 = vmatprep.mubr.bf16.mxu0 %v568
    %2790 = vmatmul.mubr.bf16.gmra.mrb[0].mxu0 %v567
    %v2791 = vpop.f32.mrb[0].mxu0
    %v2792 = vadd.f32 %v528, %v2791
    %v2793 = vpop.f32.mrb[0].mxu0
    %v2794 = vadd.f32 %v532, %v2793
    %v2795 = vpop.f32.mrb[0].mxu0
    %v2796 = vadd.f32 %v528, %v2795
    %v2797 = vpop.f32.mrb[0].mxu0
    %v2798 = vadd.f32 %v532, %v2797
    %2799 = vdwg.mxu0
    %2800 = vmatprep.subr.bf16.mxu0 %v1864
    %2801 = vmatpush1.bf16.msra.mxu0 %v1863
    %2802 = vmatprep.subr.bf16.mxu0 %v1872
    %2803 = vmatpush1.bf16.msra.mxu0 %v1871
    %2804 = vmatprep.subr.bf16.mxu0 %v1880
    %2805 = vmatpush1.bf16.msra.mxu0 %v1879
    %2806 = vmatprep.subr.bf16.mxu0 %v1888
    %2807 = vmatpush1.bf16.msra.mxu0 %v1887
    %2808 = vmatprep.subr.bf16.mxu0 %v1896
    %2809 = vmatpush1.bf16.msra.mxu0 %v1895
    %2810 = vmatprep.subr.bf16.mxu0 %v1904
    %2811 = vmatpush1.bf16.msra.mxu0 %v1903
    %2812 = vmatprep.subr.bf16.mxu0 %v1912
    %2813 = vmatpush1.bf16.msra.mxu0 %v1911
    %2814 = vmatprep.subr.bf16.mxu0 %v1920
    %2815 = vmatpush1.bf16.msra.mxu0 %v1919
    %2816 = vmatprep.subr.bf16.mxu0 %v1928
    %2817 = vmatpush1.bf16.msra.mxu0 %v1927
    %2818 = vmatprep.subr.bf16.mxu0 %v1936
    %2819 = vmatpush1.bf16.msra.mxu0 %v1935
    %2820 = vmatprep.subr.bf16.mxu0 %v1944
    %2821 = vmatpush1.bf16.msra.mxu0 %v1943
    %2822 = vmatprep.subr.bf16.mxu0 %v1952
    %2823 = vmatpush1.bf16.msra.mxu0 %v1951
    %2824 = vmatprep.subr.bf16.mxu0 %v1960
    %2825 = vmatpush1.bf16.msra.mxu0 %v1959
    %2826 = vmatprep.subr.bf16.mxu0 %v1968
    %2827 = vmatpush1.bf16.msra.mxu0 %v1967
    %2828 = vmatprep.subr.bf16.mxu0 %v1976
    %2829 = vmatpush1.bf16.msra.mxu0 %v1975
    %2830 = vmatprep.subr.bf16.mxu0 %v1984
    %2831 = vmatpush1.bf16.msra.mxu0 %v1983
    %2832 = vmatprep.mubr.bf16.mxu0 %v570
    %2833 = vmatmul.mubr.bf16.gmra.mrb[0].mxu0 %v569
    %v2834 = vpop.f32.mrb[0].mxu0
    %v2835 = vadd.f32 %v2792, %v2834
    %v2836 = vpop.f32.mrb[0].mxu0
    %v2837 = vadd.f32 %v2794, %v2836
    %v2838 = vpop.f32.mrb[0].mxu0
    %v2839 = vadd.f32 %v2796, %v2838
    %v2840 = vpop.f32.mrb[0].mxu0
    %v2841 = vadd.f32 %v2798, %v2840
    %2842 = vdwg.mxu0
    %2843 = vmatprep.subr.bf16.mxu0 %v1992
    %2844 = vmatpush1.bf16.msra.mxu0 %v1991
    %2845 = vmatprep.subr.bf16.mxu0 %v2000
    %2846 = vmatpush1.bf16.msra.mxu0 %v1999
    %2847 = vmatprep.subr.bf16.mxu0 %v2008
    %2848 = vmatpush1.bf16.msra.mxu0 %v2007
    %2849 = vmatprep.subr.bf16.mxu0 %v2016
    %2850 = vmatpush1.bf16.msra.mxu0 %v2015
    %2851 = vmatprep.subr.bf16.mxu0 %v2024
    %2852 = vmatpush1.bf16.msra.mxu0 %v2023
    %2853 = vmatprep.subr.bf16.mxu0 %v2032
    %2854 = vmatpush1.bf16.msra.mxu0 %v2031
    %2855 = vmatprep.subr.bf16.mxu0 %v2040
    %2856 = vmatpush1.bf16.msra.mxu0 %v2039
    %2857 = vmatprep.subr.bf16.mxu0 %v2048
    %2858 = vmatpush1.bf16.msra.mxu0 %v2047
    %2859 = vmatprep.subr.bf16.mxu0 %v2056
    %2860 = vmatpush1.bf16.msra.mxu0 %v2055
    %2861 = vmatprep.subr.bf16.mxu0 %v2064
    %2862 = vmatpush1.bf16.msra.mxu0 %v2063
    %2863 = vmatprep.subr.bf16.mxu0 %v2072
    %2864 = vmatpush1.bf16.msra.mxu0 %v2071
    %2865 = vmatprep.subr.bf16.mxu0 %v2080
    %2866 = vmatpush1.bf16.msra.mxu0 %v2079
    %2867 = vmatprep.subr.bf16.mxu0 %v2088
    %2868 = vmatpush1.bf16.msra.mxu0 %v2087
    %2869 = vmatprep.subr.bf16.mxu0 %v2096
    %2870 = vmatpush1.bf16.msra.mxu0 %v2095
    %2871 = vmatprep.subr.bf16.mxu0 %v2104
    %2872 = vmatpush1.bf16.msra.mxu0 %v2103
    %2873 = vmatprep.subr.bf16.mxu0 %v2112
    %2874 = vmatpush1.bf16.msra.mxu0 %v2111
    %2875 = vmatprep.mubr.bf16.mxu0 %v572
    %2876 = vmatmul.mubr.bf16.gmra.mrb[0].mxu0 %v571
    %v2877 = vpop.f32.mrb[0].mxu0
    %v2878 = vadd.f32 %v2835, %v2877
    %v2879 = vpop.f32.mrb[0].mxu0
    %v2880 = vadd.f32 %v2837, %v2879
    %v2881 = vpop.f32.mrb[0].mxu0
    %v2882 = vadd.f32 %v2839, %v2881
    %v2883 = vpop.f32.mrb[0].mxu0
    %v2884 = vadd.f32 %v2841, %v2883
    %2885 = vdwg.mxu0
    %2886 = vmatprep.subr.bf16.mxu0 %v1738
    %2887 = vmatpush1.bf16.msra.mxu0 %v1737
    %2888 = vmatprep.subr.bf16.mxu0 %v1746
    %2889 = vmatpush1.bf16.msra.mxu0 %v1745
    %2890 = vmatprep.subr.bf16.mxu0 %v1754
    %2891 = vmatpush1.bf16.msra.mxu0 %v1753
    %2892 = vmatprep.subr.bf16.mxu0 %v1762
    %2893 = vmatpush1.bf16.msra.mxu0 %v1761
    %2894 = vmatprep.subr.bf16.mxu0 %v1770
    %2895 = vmatpush1.bf16.msra.mxu0 %v1769
    %2896 = vmatprep.subr.bf16.mxu0 %v1778
    %2897 = vmatpush1.bf16.msra.mxu0 %v1777
    %2898 = vmatprep.subr.bf16.mxu0 %v1786
    %2899 = vmatpush1.bf16.msra.mxu0 %v1785
    %2900 = vmatprep.subr.bf16.mxu0 %v1794
    %2901 = vmatpush1.bf16.msra.mxu0 %v1793
    %2902 = vmatprep.subr.bf16.mxu0 %v1802
    %2903 = vmatpush1.bf16.msra.mxu0 %v1801
    %2904 = vmatprep.subr.bf16.mxu0 %v1810
    %2905 = vmatpush1.bf16.msra.mxu0 %v1809
    %2906 = vmatprep.subr.bf16.mxu0 %v1818
    %2907 = vmatpush1.bf16.msra.mxu0 %v1817
    %2908 = vmatprep.subr.bf16.mxu0 %v1826
    %2909 = vmatpush1.bf16.msra.mxu0 %v1825
    %2910 = vmatprep.subr.bf16.mxu0 %v1834
    %2911 = vmatpush1.bf16.msra.mxu0 %v1833
    %2912 = vmatprep.subr.bf16.mxu0 %v1842
    %2913 = vmatpush1.bf16.msra.mxu0 %v1841
    %2914 = vmatprep.subr.bf16.mxu0 %v1850
    %2915 = vmatpush1.bf16.msra.mxu0 %v1849
    %2916 = vmatprep.subr.bf16.mxu0 %v1858
    %2917 = vmatpush1.bf16.msra.mxu0 %v1857
    %2918 = vmatprep.mubr.bf16.mxu0 %v568
    %2919 = vmatmul.mubr.bf16.gmra.mrb[0].mxu0 %v567
    %v2920 = vpop.f32.mrb[0].mxu0
    %v2921 = vadd.f32 %v536, %v2920
    %v2922 = vpop.f32.mrb[0].mxu0
    %v2923 = vadd.f32 %v540, %v2922
    %v2924 = vpop.f32.mrb[0].mxu0
    %v2925 = vadd.f32 %v536, %v2924
    %v2926 = vpop.f32.mrb[0].mxu0
    %v2927 = vadd.f32 %v540, %v2926
    %2928 = vdwg.mxu0
    %2929 = vmatprep.subr.bf16.mxu0 %v1866
    %2930 = vmatpush1.bf16.msra.mxu0 %v1865
    %2931 = vmatprep.subr.bf16.mxu0 %v1874
    %2932 = vmatpush1.bf16.msra.mxu0 %v1873
    %2933 = vmatprep.subr.bf16.mxu0 %v1882
    %2934 = vmatpush1.bf16.msra.mxu0 %v1881
    %2935 = vmatprep.subr.bf16.mxu0 %v1890
    %2936 = vmatpush1.bf16.msra.mxu0 %v1889
    %2937 = vmatprep.subr.bf16.mxu0 %v1898
    %2938 = vmatpush1.bf16.msra.mxu0 %v1897
    %2939 = vmatprep.subr.bf16.mxu0 %v1906
    %2940 = vmatpush1.bf16.msra.mxu0 %v1905
    %2941 = vmatprep.subr.bf16.mxu0 %v1914
    %2942 = vmatpush1.bf16.msra.mxu0 %v1913
    %2943 = vmatprep.subr.bf16.mxu0 %v1922
    %2944 = vmatpush1.bf16.msra.mxu0 %v1921
    %2945 = vmatprep.subr.bf16.mxu0 %v1930
    %2946 = vmatpush1.bf16.msra.mxu0 %v1929
    %2947 = vmatprep.subr.bf16.mxu0 %v1938
    %2948 = vmatpush1.bf16.msra.mxu0 %v1937
    %2949 = vmatprep.subr.bf16.mxu0 %v1946
    %2950 = vmatpush1.bf16.msra.mxu0 %v1945
    %2951 = vmatprep.subr.bf16.mxu0 %v1954
    %2952 = vmatpush1.bf16.msra.mxu0 %v1953
    %2953 = vmatprep.subr.bf16.mxu0 %v1962
    %2954 = vmatpush1.bf16.msra.mxu0 %v1961
    %2955 = vmatprep.subr.bf16.mxu0 %v1970
    %2956 = vmatpush1.bf16.msra.mxu0 %v1969
    %2957 = vmatprep.subr.bf16.mxu0 %v1978
    %2958 = vmatpush1.bf16.msra.mxu0 %v1977
    %2959 = vmatprep.subr.bf16.mxu0 %v1986
    %2960 = vmatpush1.bf16.msra.mxu0 %v1985
    %2961 = vmatprep.mubr.bf16.mxu0 %v570
    %2962 = vmatmul.mubr.bf16.gmra.mrb[0].mxu0 %v569
    %v2963 = vpop.f32.mrb[0].mxu0
    %v2964 = vadd.f32 %v2921, %v2963
    %v2965 = vpop.f32.mrb[0].mxu0
    %v2966 = vadd.f32 %v2923, %v2965
    %v2967 = vpop.f32.mrb[0].mxu0
    %v2968 = vadd.f32 %v2925, %v2967
    %v2969 = vpop.f32.mrb[0].mxu0
    %v2970 = vadd.f32 %v2927, %v2969
    %2971 = vdwg.mxu0
    %2972 = vmatprep.subr.bf16.mxu0 %v1994
    %2973 = vmatpush1.bf16.msra.mxu0 %v1993
    %2974 = vmatprep.subr.bf16.mxu0 %v2002
    %2975 = vmatpush1.bf16.msra.mxu0 %v2001
    %2976 = vmatprep.subr.bf16.mxu0 %v2010
    %2977 = vmatpush1.bf16.msra.mxu0 %v2009
    %2978 = vmatprep.subr.bf16.mxu0 %v2018
    %2979 = vmatpush1.bf16.msra.mxu0 %v2017
    %2980 = vmatprep.subr.bf16.mxu0 %v2026
    %2981 = vmatpush1.bf16.msra.mxu0 %v2025
    %2982 = vmatprep.subr.bf16.mxu0 %v2034
    %2983 = vmatpush1.bf16.msra.mxu0 %v2033
    %2984 = vmatprep.subr.bf16.mxu0 %v2042
    %2985 = vmatpush1.bf16.msra.mxu0 %v2041
    %2986 = vmatprep.subr.bf16.mxu0 %v2050
    %2987 = vmatpush1.bf16.msra.mxu0 %v2049
    %2988 = vmatprep.subr.bf16.mxu0 %v2058
    %2989 = vmatpush1.bf16.msra.mxu0 %v2057
    %2990 = vmatprep.subr.bf16.mxu0 %v2066
    %2991 = vmatpush1.bf16.msra.mxu0 %v2065
    %2992 = vmatprep.subr.bf16.mxu0 %v2074
    %2993 = vmatpush1.bf16.msra.mxu0 %v2073
    %2994 = vmatprep.subr.bf16.mxu0 %v2082
    %2995 = vmatpush1.bf16.msra.mxu0 %v2081
    %2996 = vmatprep.subr.bf16.mxu0 %v2090
    %2997 = vmatpush1.bf16.msra.mxu0 %v2089
    %2998 = vmatprep.subr.bf16.mxu0 %v2098
    %2999 = vmatpush1.bf16.msra.mxu0 %v2097
    %3000 = vmatprep.subr.bf16.mxu0 %v2106
    %3001 = vmatpush1.bf16.msra.mxu0 %v2105
    %3002 = vmatprep.subr.bf16.mxu0 %v2114
    %3003 = vmatpush1.bf16.msra.mxu0 %v2113
    %3004 = vmatprep.mubr.bf16.mxu0 %v572
    %3005 = vmatmul.mubr.bf16.gmra.mrb[0].mxu0 %v571
    %v3006 = vpop.f32.mrb[0].mxu0
    %v3007 = vadd.f32 %v2964, %v3006
    %v3008 = vpop.f32.mrb[0].mxu0
    %v3009 = vadd.f32 %v2966, %v3008
    %v3010 = vpop.f32.mrb[0].mxu0
    %v3011 = vadd.f32 %v2968, %v3010
    %v3012 = vpop.f32.mrb[0].mxu0
    %v3013 = vadd.f32 %v2970, %v3012
    %3014 = vdwg.mxu0
    %v3015 = vmul.f32 %v2620, 0.5
    %v3016 = vmul.f32 %v2622, 0.5
    %v3017 = vmul.f32 %v2749, 0.5
    %v3018 = vmul.f32 %v2751, 0.5
    %v3019 = vmul.f32 %v2878, 0.5
    %v3020 = vmul.f32 %v2880, 0.5
    %v3021 = vmul.f32 %v3007, 0.5
    %v3022 = vmul.f32 %v3009, 0.5
    %v3023 = vmul.f32 %v2624, 0.5
    %v3024 = vmul.f32 %v2626, 0.5
    %v3025 = vmul.f32 %v2753, 0.5
    %v3026 = vmul.f32 %v2755, 0.5
    %v3027 = vmul.f32 %v2882, 0.5
    %v3028 = vmul.f32 %v2884, 0.5
    %v3029 = vmul.f32 %v3011, 0.5
    %v3030 = vmul.f32 %v3013, 0.5
    %v3031 = vmul.f32 %v2620, 0.70710677
    %v3032 = vmul.f32 %v2622, 0.70710677
    %v3033 = vmul.f32 %v2749, 0.70710677
    %v3034 = vmul.f32 %v2751, 0.70710677
    %v3035 = vmul.f32 %v2878, 0.70710677
    %v3036 = vmul.f32 %v2880, 0.70710677
    %v3037 = vmul.f32 %v3007, 0.70710677
    %v3038 = vmul.f32 %v3009, 0.70710677
    %v3039 = vmul.f32 %v2624, 0.70710677
    %v3040 = vmul.f32 %v2626, 0.70710677
    %v3041 = vmul.f32 %v2753, 0.70710677
    %v3042 = vmul.f32 %v2755, 0.70710677
    %v3043 = vmul.f32 %v2882, 0.70710677
    %v3044 = vmul.f32 %v2884, 0.70710677
    %v3045 = vmul.f32 %v3011, 0.70710677
    %v3046 = vmul.f32 %v3013, 0.70710677
    %v3047 = verf.f32.pop %v3031
    %v3048 = verf.f32.pop %v3032
    %v3049 = verf.f32.pop %v3033
    %v3050 = verf.f32.pop %v3034
    %v3051 = verf.f32.pop %v3035
    %v3052 = verf.f32.pop %v3036
    %v3053 = verf.f32.pop %v3037
    %v3054 = verf.f32.pop %v3038
    %v3055 = verf.f32.pop %v3039
    %v3056 = verf.f32.pop %v3040
    %v3057 = verf.f32.pop %v3041
    %v3058 = verf.f32.pop %v3042
    %v3059 = verf.f32.pop %v3043
    %v3060 = verf.f32.pop %v3044
    %v3061 = verf.f32.pop %v3045
    %v3062 = verf.f32.pop %v3046
    %v3063 = vadd.f32 %v3047, 1.0
    %v3064 = vadd.f32 %v3048, 1.0
    %v3065 = vadd.f32 %v3049, 1.0
    %v3066 = vadd.f32 %v3050, 1.0
    %v3067 = vadd.f32 %v3051, 1.0
    %v3068 = vadd.f32 %v3052, 1.0
    %v3069 = vadd.f32 %v3053, 1.0
    %v3070 = vadd.f32 %v3054, 1.0
    %v3071 = vadd.f32 %v3055, 1.0
    %v3072 = vadd.f32 %v3056, 1.0
    %v3073 = vadd.f32 %v3057, 1.0
    %v3074 = vadd.f32 %v3058, 1.0
    %v3075 = vadd.f32 %v3059, 1.0
    %v3076 = vadd.f32 %v3060, 1.0
    %v3077 = vadd.f32 %v3061, 1.0
    %v3078 = vadd.f32 %v3062, 1.0
    %v3079 = vmul.f32 %v3015, %v3063
    %v3080 = vmul.f32 %v3016, %v3064
    %v3081 = vmul.f32 %v3017, %v3065
    %v3082 = vmul.f32 %v3018, %v3066
    %v3083 = vmul.f32 %v3019, %v3067
    %v3084 = vmul.f32 %v3020, %v3068
    %v3085 = vmul.f32 %v3021, %v3069
    %v3086 = vmul.f32 %v3022, %v3070
    %v3087 = vmul.f32 %v3023, %v3071
    %v3088 = vmul.f32 %v3024, %v3072
    %v3089 = vmul.f32 %v3025, %v3073
    %v3090 = vmul.f32 %v3026, %v3074
    %v3091 = vmul.f32 %v3027, %v3075
    %v3092 = vmul.f32 %v3028, %v3076
    %v3093 = vmul.f32 %v3029, %v3077
    %v3094 = vmul.f32 %v3030, %v3078
    %v3095 = vld [vmem:[#allocation8] sm:$0xf]
    %v3096 = vld [vmem:[#allocation8 + $0x4] sm:$0xf]
    %v3097 = vld [vmem:[#allocation8 + $0x8] sm:$0xf]
    %v3098 = vld [vmem:[#allocation8 + $0xc] sm:$0xf]
    %v3099 = vld [vmem:[#allocation8 + $0x10] sm:$0xf]
    %v3100 = vld [vmem:[#allocation8 + $0x14] sm:$0xf]
    %v3101 = vld [vmem:[#allocation8 + $0x18] sm:$0xf]
    %v3102 = vld [vmem:[#allocation8 + $0x1c] sm:$0xf]
    %v3103 = vld [vmem:[#allocation8 + $0x20] sm:$0xf]
    %v3104 = vld [vmem:[#allocation8 + $0x24] sm:$0xf]
    %v3105 = vld [vmem:[#allocation8 + $0x28] sm:$0xf]
    %v3106 = vld [vmem:[#allocation8 + $0x2c] sm:$0xf]
    %v3107 = vld [vmem:[#allocation8 + $0x30] sm:$0xf]
    %v3108 = vld [vmem:[#allocation8 + $0x34] sm:$0xf]
    %v3109 = vld [vmem:[#allocation8 + $0x38] sm:$0xf]
    %v3110 = vld [vmem:[#allocation8 + $0x3c] sm:$0xf]
    %v3111 = vld [vmem:[#allocation8 + $0x40] sm:$0xf]
    %v3112 = vld [vmem:[#allocation8 + $0x44] sm:$0xf]
    %v3113 = vld [vmem:[#allocation8 + $0x48] sm:$0xf]
    %v3114 = vld [vmem:[#allocation8 + $0x4c] sm:$0xf]
    %v3115 = vld [vmem:[#allocation8 + $0x50] sm:$0xf]
    %v3116 = vld [vmem:[#allocation8 + $0x54] sm:$0xf]
    %v3117 = vld [vmem:[#allocation8 + $0x58] sm:$0xf]
    %v3118 = vld [vmem:[#allocation8 + $0x5c] sm:$0xf]
    %v3119 = vld [vmem:[#allocation8 + $0x60] sm:$0xf]
    %v3120 = vld [vmem:[#allocation8 + $0x64] sm:$0xf]
    %v3121 = vld [vmem:[#allocation8 + $0x68] sm:$0xf]
    %v3122 = vld [vmem:[#allocation8 + $0x6c] sm:$0xf]
    %v3123 = vld [vmem:[#allocation8 + $0x70] sm:$0xf]
    %v3124 = vld [vmem:[#allocation8 + $0x74] sm:$0xf]
    %v3125 = vld [vmem:[#allocation8 + $0x78] sm:$0xf]
    %v3126 = vld [vmem:[#allocation8 + $0x7c] sm:$0xf]
    %v3127 = vld [vmem:[#allocation8 + $0x80] sm:$0xf]
    %v3128 = vld [vmem:[#allocation8 + $0x84] sm:$0xf]
    %v3129 = vld [vmem:[#allocation8 + $0x88] sm:$0xf]
    %v3130 = vld [vmem:[#allocation8 + $0x8c] sm:$0xf]
    %v3131 = vld [vmem:[#allocation8 + $0x90] sm:$0xf]
    %v3132 = vld [vmem:[#allocation8 + $0x94] sm:$0xf]
    %v3133 = vld [vmem:[#allocation8 + $0x98] sm:$0xf]
    %v3134 = vld [vmem:[#allocation8 + $0x9c] sm:$0xf]
    %v3135 = vld [vmem:[#allocation8 + $0xa0] sm:$0xf]
    %v3136 = vld [vmem:[#allocation8 + $0xa4] sm:$0xf]
    %v3137 = vld [vmem:[#allocation8 + $0xa8] sm:$0xf]
    %v3138 = vld [vmem:[#allocation8 + $0xac] sm:$0xf]
    %v3139 = vld [vmem:[#allocation8 + $0xb0] sm:$0xf]
    %v3140 = vld [vmem:[#allocation8 + $0xb4] sm:$0xf]
    %v3141 = vld [vmem:[#allocation8 + $0xb8] sm:$0xf]
    %v3142 = vld [vmem:[#allocation8 + $0xbc] sm:$0xf]
    %v3143 = vld [vmem:[#allocation8 + $0xc0] sm:$0xf]
    %v3144 = vld [vmem:[#allocation8 + $0xc4] sm:$0xf]
    %v3145 = vld [vmem:[#allocation8 + $0xc8] sm:$0xf]
    %v3146 = vld [vmem:[#allocation8 + $0xcc] sm:$0xf]
    %v3147 = vld [vmem:[#allocation8 + $0xd0] sm:$0xf]
    %v3148 = vld [vmem:[#allocation8 + $0xd4] sm:$0xf]
    %v3149 = vld [vmem:[#allocation8 + $0xd8] sm:$0xf]
    %v3150 = vld [vmem:[#allocation8 + $0xdc] sm:$0xf]
    %v3151 = vld [vmem:[#allocation8 + $0xe0] sm:$0xf]
    %v3152 = vld [vmem:[#allocation8 + $0xe4] sm:$0xf]
    %v3153 = vld [vmem:[#allocation8 + $0xe8] sm:$0xf]
    %v3154 = vld [vmem:[#allocation8 + $0xec] sm:$0xf]
    %v3155 = vld [vmem:[#allocation8 + $0xf0] sm:$0xf]
    %v3156 = vld [vmem:[#allocation8 + $0xf4] sm:$0xf]
    %v3157 = vld [vmem:[#allocation8 + $0xf8] sm:$0xf]
    %v3158 = vld [vmem:[#allocation8 + $0xfc] sm:$0xf]
    %v3159 = vld [vmem:[#allocation8 + $0x100] sm:$0xf]
    %v3160 = vld [vmem:[#allocation8 + $0x104] sm:$0xf]
    %v3161 = vld [vmem:[#allocation8 + $0x108] sm:$0xf]
    %v3162 = vld [vmem:[#allocation8 + $0x10c] sm:$0xf]
    %v3163 = vld [vmem:[#allocation8 + $0x110] sm:$0xf]
    %v3164 = vld [vmem:[#allocation8 + $0x114] sm:$0xf]
    %v3165 = vld [vmem:[#allocation8 + $0x118] sm:$0xf]
    %v3166 = vld [vmem:[#allocation8 + $0x11c] sm:$0xf]
    %v3167 = vld [vmem:[#allocation8 + $0x120] sm:$0xf]
    %v3168 = vld [vmem:[#allocation8 + $0x124] sm:$0xf]
    %v3169 = vld [vmem:[#allocation8 + $0x128] sm:$0xf]
    %v3170 = vld [vmem:[#allocation8 + $0x12c] sm:$0xf]
    %v3171 = vld [vmem:[#allocation8 + $0x130] sm:$0xf]
    %v3172 = vld [vmem:[#allocation8 + $0x134] sm:$0xf]
    %v3173 = vld [vmem:[#allocation8 + $0x138] sm:$0xf]
    %v3174 = vld [vmem:[#allocation8 + $0x13c] sm:$0xf]
    %v3175 = vld [vmem:[#allocation8 + $0x140] sm:$0xf]
    %v3176 = vld [vmem:[#allocation8 + $0x144] sm:$0xf]
    %v3177 = vld [vmem:[#allocation8 + $0x148] sm:$0xf]
    %v3178 = vld [vmem:[#allocation8 + $0x14c] sm:$0xf]
    %v3179 = vld [vmem:[#allocation8 + $0x150] sm:$0xf]
    %v3180 = vld [vmem:[#allocation8 + $0x154] sm:$0xf]
    %v3181 = vld [vmem:[#allocation8 + $0x158] sm:$0xf]
    %v3182 = vld [vmem:[#allocation8 + $0x15c] sm:$0xf]
    %v3183 = vld [vmem:[#allocation8 + $0x160] sm:$0xf]
    %v3184 = vld [vmem:[#allocation8 + $0x164] sm:$0xf]
    %v3185 = vld [vmem:[#allocation8 + $0x168] sm:$0xf]
    %v3186 = vld [vmem:[#allocation8 + $0x16c] sm:$0xf]
    %v3187 = vld [vmem:[#allocation8 + $0x170] sm:$0xf]
    %v3188 = vld [vmem:[#allocation8 + $0x174] sm:$0xf]
    %v3189 = vld [vmem:[#allocation8 + $0x178] sm:$0xf]
    %v3190 = vld [vmem:[#allocation8 + $0x17c] sm:$0xf]
    %v3191 = vld [vmem:[#allocation8 + $0x180] sm:$0xf]
    %v3192 = vld [vmem:[#allocation8 + $0x184] sm:$0xf]
    %v3193 = vld [vmem:[#allocation8 + $0x188] sm:$0xf]
    %v3194 = vld [vmem:[#allocation8 + $0x18c] sm:$0xf]
    %v3195 = vld [vmem:[#allocation8 + $0x190] sm:$0xf]
    %v3196 = vld [vmem:[#allocation8 + $0x194] sm:$0xf]
    %v3197 = vld [vmem:[#allocation8 + $0x198] sm:$0xf]
    %v3198 = vld [vmem:[#allocation8 + $0x19c] sm:$0xf]
    %v3199 = vld [vmem:[#allocation8 + $0x1a0] sm:$0xf]
    %v3200 = vld [vmem:[#allocation8 + $0x1a4] sm:$0xf]
    %v3201 = vld [vmem:[#allocation8 + $0x1a8] sm:$0xf]
    %v3202 = vld [vmem:[#allocation8 + $0x1ac] sm:$0xf]
    %v3203 = vld [vmem:[#allocation8 + $0x1b0] sm:$0xf]
    %v3204 = vld [vmem:[#allocation8 + $0x1b4] sm:$0xf]
    %v3205 = vld [vmem:[#allocation8 + $0x1b8] sm:$0xf]
    %v3206 = vld [vmem:[#allocation8 + $0x1bc] sm:$0xf]
    %v3207 = vld [vmem:[#allocation8 + $0x1c0] sm:$0xf]
    %v3208 = vld [vmem:[#allocation8 + $0x1c4] sm:$0xf]
    %v3209 = vld [vmem:[#allocation8 + $0x1c8] sm:$0xf]
    %v3210 = vld [vmem:[#allocation8 + $0x1cc] sm:$0xf]
    %v3211 = vld [vmem:[#allocation8 + $0x1d0] sm:$0xf]
    %v3212 = vld [vmem:[#allocation8 + $0x1d4] sm:$0xf]
    %v3213 = vld [vmem:[#allocation8 + $0x1d8] sm:$0xf]
    %v3214 = vld [vmem:[#allocation8 + $0x1dc] sm:$0xf]
    %v3215 = vld [vmem:[#allocation8 + $0x1e0] sm:$0xf]
    %v3216 = vld [vmem:[#allocation8 + $0x1e4] sm:$0xf]
    %v3217 = vld [vmem:[#allocation8 + $0x1e8] sm:$0xf]
    %v3218 = vld [vmem:[#allocation8 + $0x1ec] sm:$0xf]
    %v3219 = vld [vmem:[#allocation8 + $0x1f0] sm:$0xf]
    %v3220 = vld [vmem:[#allocation8 + $0x1f4] sm:$0xf]
    %v3221 = vld [vmem:[#allocation8 + $0x1f8] sm:$0xf]
    %v3222 = vld [vmem:[#allocation8 + $0x1fc] sm:$0xf]
    %v3223 = vld [vmem:[#allocation10] sm:$0x1]
    %v3224 = vpack.c.bf16 %v3087, %v3079
    %v3225 = vpack.c.bf16 %v3088, %v3080
    %v3226 = vpack.c.bf16 %v3089, %v3081
    %v3227 = vpack.c.bf16 %v3090, %v3082
    %v3228 = vpack.c.bf16 %v3091, %v3083
    %v3229 = vpack.c.bf16 %v3092, %v3084
    %v3230 = vpack.c.bf16 %v3093, %v3085
    %v3231 = vpack.c.bf16 %v3094, %v3086
    %v3233 = vlaneseq
    %v3234 = vshrl.u32 %v3233, 7
    %v3235 = vsub.s32 0, %v3234
    %v3236 = vrot.slane %v3223, %v3235
    %v3366 = vunpack.c.l.b16 %v3095
    %v3367 = vunpack.c.l.b16 %v3096
    %v3368 = vunpack.c.l.b16 %v3097
    %v3369 = vunpack.c.l.b16 %v3098
    %v3370 = vunpack.c.l.b16 %v3099
    %v3371 = vunpack.c.l.b16 %v3100
    %v3372 = vunpack.c.l.b16 %v3101
    %v3373 = vunpack.c.l.b16 %v3102
    %v3374 = vunpack.c.l.b16 %v3103
    %v3375 = vunpack.c.l.b16 %v3104
    %v3376 = vunpack.c.l.b16 %v3105
    %v3377 = vunpack.c.l.b16 %v3106
    %v3378 = vunpack.c.l.b16 %v3107
    %v3379 = vunpack.c.l.b16 %v3108
    %v3380 = vunpack.c.l.b16 %v3109
    %v3381 = vunpack.c.l.b16 %v3110
    %v3382 = vunpack.c.l.b16 %v3111
    %v3383 = vunpack.c.l.b16 %v3112
    %v3384 = vunpack.c.l.b16 %v3113
    %v3385 = vunpack.c.l.b16 %v3114
    %v3386 = vunpack.c.l.b16 %v3115
    %v3387 = vunpack.c.l.b16 %v3116
    %v3388 = vunpack.c.l.b16 %v3117
    %v3389 = vunpack.c.l.b16 %v3118
    %v3390 = vunpack.c.l.b16 %v3119
    %v3391 = vunpack.c.l.b16 %v3120
    %v3392 = vunpack.c.l.b16 %v3121
    %v3393 = vunpack.c.l.b16 %v3122
    %v3394 = vunpack.c.l.b16 %v3123
    %v3395 = vunpack.c.l.b16 %v3124
    %v3396 = vunpack.c.l.b16 %v3125
    %v3397 = vunpack.c.l.b16 %v3126
    %v3398 = vunpack.c.l.b16 %v3127
    %v3399 = vunpack.c.l.b16 %v3128
    %v3400 = vunpack.c.l.b16 %v3129
    %v3401 = vunpack.c.l.b16 %v3130
    %v3402 = vunpack.c.l.b16 %v3131
    %v3403 = vunpack.c.l.b16 %v3132
    %v3404 = vunpack.c.l.b16 %v3133
    %v3405 = vunpack.c.l.b16 %v3134
    %v3406 = vunpack.c.l.b16 %v3135
    %v3407 = vunpack.c.l.b16 %v3136
    %v3408 = vunpack.c.l.b16 %v3137
    %v3409 = vunpack.c.l.b16 %v3138
    %v3410 = vunpack.c.l.b16 %v3139
    %v3411 = vunpack.c.l.b16 %v3140
    %v3412 = vunpack.c.l.b16 %v3141
    %v3413 = vunpack.c.l.b16 %v3142
    %v3414 = vunpack.c.l.b16 %v3143
    %v3415 = vunpack.c.l.b16 %v3144
    %v3416 = vunpack.c.l.b16 %v3145
    %v3417 = vunpack.c.l.b16 %v3146
    %v3418 = vunpack.c.l.b16 %v3147
    %v3419 = vunpack.c.l.b16 %v3148
    %v3420 = vunpack.c.l.b16 %v3149
    %v3421 = vunpack.c.l.b16 %v3150
    %v3422 = vunpack.c.l.b16 %v3151
    %v3423 = vunpack.c.l.b16 %v3152
    %v3424 = vunpack.c.l.b16 %v3153
    %v3425 = vunpack.c.l.b16 %v3154
    %v3426 = vunpack.c.l.b16 %v3155
    %v3427 = vunpack.c.l.b16 %v3156
    %v3428 = vunpack.c.l.b16 %v3157
    %v3429 = vunpack.c.l.b16 %v3158
    %v3430 = vunpack.c.l.b16 %v3159
    %v3431 = vunpack.c.l.b16 %v3160
    %v3432 = vunpack.c.l.b16 %v3161
    %v3433 = vunpack.c.l.b16 %v3162
    %v3434 = vunpack.c.l.b16 %v3163
    %v3435 = vunpack.c.l.b16 %v3164
    %v3436 = vunpack.c.l.b16 %v3165
    %v3437 = vunpack.c.l.b16 %v3166
    %v3438 = vunpack.c.l.b16 %v3167
    %v3439 = vunpack.c.l.b16 %v3168
    %v3440 = vunpack.c.l.b16 %v3169
    %v3441 = vunpack.c.l.b16 %v3170
    %v3442 = vunpack.c.l.b16 %v3171
    %v3443 = vunpack.c.l.b16 %v3172
    %v3444 = vunpack.c.l.b16 %v3173
    %v3445 = vunpack.c.l.b16 %v3174
    %v3446 = vunpack.c.l.b16 %v3175
    %v3447 = vunpack.c.l.b16 %v3176
    %v3448 = vunpack.c.l.b16 %v3177
    %v3449 = vunpack.c.l.b16 %v3178
    %v3450 = vunpack.c.l.b16 %v3179
    %v3451 = vunpack.c.l.b16 %v3180
    %v3452 = vunpack.c.l.b16 %v3181
    %v3453 = vunpack.c.l.b16 %v3182
    %v3454 = vunpack.c.l.b16 %v3183
    %v3455 = vunpack.c.l.b16 %v3184
    %v3456 = vunpack.c.l.b16 %v3185
    %v3457 = vunpack.c.l.b16 %v3186
    %v3458 = vunpack.c.l.b16 %v3187
    %v3459 = vunpack.c.l.b16 %v3188
    %v3460 = vunpack.c.l.b16 %v3189
    %v3461 = vunpack.c.l.b16 %v3190
    %v3462 = vunpack.c.l.b16 %v3191
    %v3463 = vunpack.c.l.b16 %v3192
    %v3464 = vunpack.c.l.b16 %v3193
    %v3465 = vunpack.c.l.b16 %v3194
    %v3466 = vunpack.c.l.b16 %v3195
    %v3467 = vunpack.c.l.b16 %v3196
    %v3468 = vunpack.c.l.b16 %v3197
    %v3469 = vunpack.c.l.b16 %v3198
    %v3470 = vunpack.c.l.b16 %v3199
    %v3471 = vunpack.c.l.b16 %v3200
    %v3472 = vunpack.c.l.b16 %v3201
    %v3473 = vunpack.c.l.b16 %v3202
    %v3474 = vunpack.c.l.b16 %v3203
    %v3475 = vunpack.c.l.b16 %v3204
    %v3476 = vunpack.c.l.b16 %v3205
    %v3477 = vunpack.c.l.b16 %v3206
    %v3478 = vunpack.c.l.b16 %v3207
    %v3479 = vunpack.c.l.b16 %v3208
    %v3480 = vunpack.c.l.b16 %v3209
    %v3481 = vunpack.c.l.b16 %v3210
    %v3482 = vunpack.c.l.b16 %v3211
    %v3483 = vunpack.c.l.b16 %v3212
    %v3484 = vunpack.c.l.b16 %v3213
    %v3485 = vunpack.c.l.b16 %v3214
    %v3486 = vunpack.c.l.b16 %v3215
    %v3487 = vunpack.c.l.b16 %v3216
    %v3488 = vunpack.c.l.b16 %v3217
    %v3489 = vunpack.c.l.b16 %v3218
    %v3490 = vunpack.c.l.b16 %v3219
    %v3491 = vunpack.c.l.b16 %v3220
    %v3492 = vunpack.c.l.b16 %v3221
    %v3493 = vunpack.c.l.b16 %v3222
    %v3494 = vpack.c.b16 %v3367, %v3366
    %v3495 = vpack.c.b16 %v3369, %v3368
    %v3496 = vpack.c.b16 %v3371, %v3370
    %v3497 = vpack.c.b16 %v3373, %v3372
    %v3498 = vpack.c.b16 %v3375, %v3374
    %v3499 = vpack.c.b16 %v3377, %v3376
    %v3500 = vpack.c.b16 %v3379, %v3378
    %v3501 = vpack.c.b16 %v3381, %v3380
    %v3502 = vpack.c.b16 %v3383, %v3382
    %v3503 = vpack.c.b16 %v3385, %v3384
    %v3504 = vpack.c.b16 %v3387, %v3386
    %v3505 = vpack.c.b16 %v3389, %v3388
    %v3506 = vpack.c.b16 %v3391, %v3390
    %v3507 = vpack.c.b16 %v3393, %v3392
    %v3508 = vpack.c.b16 %v3395, %v3394
    %v3509 = vpack.c.b16 %v3397, %v3396
    %v3510 = vpack.c.b16 %v3399, %v3398
    %v3511 = vpack.c.b16 %v3401, %v3400
    %v3512 = vpack.c.b16 %v3403, %v3402
    %v3513 = vpack.c.b16 %v3405, %v3404
    %v3514 = vpack.c.b16 %v3407, %v3406
    %v3515 = vpack.c.b16 %v3409, %v3408
    %v3516 = vpack.c.b16 %v3411, %v3410
    %v3517 = vpack.c.b16 %v3413, %v3412
    %v3518 = vpack.c.b16 %v3415, %v3414
    %v3519 = vpack.c.b16 %v3417, %v3416
    %v3520 = vpack.c.b16 %v3419, %v3418
    %v3521 = vpack.c.b16 %v3421, %v3420
    %v3522 = vpack.c.b16 %v3423, %v3422
    %v3523 = vpack.c.b16 %v3425, %v3424
    %v3524 = vpack.c.b16 %v3427, %v3426
    %v3525 = vpack.c.b16 %v3429, %v3428
    %v3526 = vpack.c.b16 %v3431, %v3430
    %v3527 = vpack.c.b16 %v3433, %v3432
    %v3528 = vpack.c.b16 %v3435, %v3434
    %v3529 = vpack.c.b16 %v3437, %v3436
    %v3530 = vpack.c.b16 %v3439, %v3438
    %v3531 = vpack.c.b16 %v3441, %v3440
    %v3532 = vpack.c.b16 %v3443, %v3442
    %v3533 = vpack.c.b16 %v3445, %v3444
    %v3534 = vpack.c.b16 %v3447, %v3446
    %v3535 = vpack.c.b16 %v3449, %v3448
    %v3536 = vpack.c.b16 %v3451, %v3450
    %v3537 = vpack.c.b16 %v3453, %v3452
    %v3538 = vpack.c.b16 %v3455, %v3454
    %v3539 = vpack.c.b16 %v3457, %v3456
    %v3540 = vpack.c.b16 %v3459, %v3458
    %v3541 = vpack.c.b16 %v3461, %v3460
    %v3542 = vpack.c.b16 %v3463, %v3462
    %v3543 = vpack.c.b16 %v3465, %v3464
    %v3544 = vpack.c.b16 %v3467, %v3466
    %v3545 = vpack.c.b16 %v3469, %v3468
    %v3546 = vpack.c.b16 %v3471, %v3470
    %v3547 = vpack.c.b16 %v3473, %v3472
    %v3548 = vpack.c.b16 %v3475, %v3474
    %v3549 = vpack.c.b16 %v3477, %v3476
    %v3550 = vpack.c.b16 %v3479, %v3478
    %v3551 = vpack.c.b16 %v3481, %v3480
    %v3552 = vpack.c.b16 %v3483, %v3482
    %v3553 = vpack.c.b16 %v3485, %v3484
    %v3554 = vpack.c.b16 %v3487, %v3486
    %v3555 = vpack.c.b16 %v3489, %v3488
    %v3556 = vpack.c.b16 %v3491, %v3490
    %v3557 = vpack.c.b16 %v3493, %v3492
    %3622 = vmatprep.subr.bf16.mxu0 0
    %3623 = vmatpush1.bf16.msra.mxu0 %v3494
    %3624 = vmatprep.subr.bf16.mxu0 0
    %3625 = vmatpush1.bf16.msra.mxu0 %v3495
    %3626 = vmatprep.subr.bf16.mxu0 0
    %3627 = vmatpush1.bf16.msra.mxu0 %v3496
    %3628 = vmatprep.subr.bf16.mxu0 0
    %3629 = vmatpush1.bf16.msra.mxu0 %v3497
    %3630 = vmatprep.subr.bf16.mxu0 0
    %3631 = vmatpush1.bf16.msra.mxu0 %v3498
    %3632 = vmatprep.subr.bf16.mxu0 0
    %3633 = vmatpush1.bf16.msra.mxu0 %v3499
    %3634 = vmatprep.subr.bf16.mxu0 0
    %3635 = vmatpush1.bf16.msra.mxu0 %v3500
    %3636 = vmatprep.subr.bf16.mxu0 0
    %3637 = vmatpush1.bf16.msra.mxu0 %v3501
    %3638 = vmatprep.subr.bf16.mxu0 0
    %3639 = vmatpush1.bf16.msra.mxu0 %v3502
    %3640 = vmatprep.subr.bf16.mxu0 0
    %3641 = vmatpush1.bf16.msra.mxu0 %v3503
    %3642 = vmatprep.subr.bf16.mxu0 0
    %3643 = vmatpush1.bf16.msra.mxu0 %v3504
    %3644 = vmatprep.subr.bf16.mxu0 0
    %3645 = vmatpush1.bf16.msra.mxu0 %v3505
    %3646 = vmatprep.subr.bf16.mxu0 0
    %3647 = vmatpush1.bf16.msra.mxu0 %v3506
    %3648 = vmatprep.subr.bf16.mxu0 0
    %3649 = vmatpush1.bf16.msra.mxu0 %v3507
    %3650 = vmatprep.subr.bf16.mxu0 0
    %3651 = vmatpush1.bf16.msra.mxu0 %v3508
    %3652 = vmatprep.subr.bf16.mxu0 0
    %3653 = vmatpush1.bf16.msra.mxu0 %v3509
    %3654 = vmatprep.mubr.bf16.mxu0 %v3225
    %3655 = vmatmul.mubr.bf16.gmra.mrb[0].mxu0 %v3224
    %v3656 = vpop.f32.mrb[0].mxu0
    %v3657 = vadd.f32 %v3236, %v3656
    %v3658 = vpop.f32.mrb[0].mxu0
    %v3659 = vpop.f32.mrb[0].mxu0
    %v3660 = vadd.f32 %v3236, %v3659
    %v3661 = vpop.f32.mrb[0].mxu0
    %3662 = vdwg.mxu0
    %3663 = vmatprep.subr.bf16.mxu0 0
    %3664 = vmatpush1.bf16.msra.mxu0 %v3510
    %3665 = vmatprep.subr.bf16.mxu0 0
    %3666 = vmatpush1.bf16.msra.mxu0 %v3511
    %3667 = vmatprep.subr.bf16.mxu0 0
    %3668 = vmatpush1.bf16.msra.mxu0 %v3512
    %3669 = vmatprep.subr.bf16.mxu0 0
    %3670 = vmatpush1.bf16.msra.mxu0 %v3513
    %3671 = vmatprep.subr.bf16.mxu0 0
    %3672 = vmatpush1.bf16.msra.mxu0 %v3514
    %3673 = vmatprep.subr.bf16.mxu0 0
    %3674 = vmatpush1.bf16.msra.mxu0 %v3515
    %3675 = vmatprep.subr.bf16.mxu0 0
    %3676 = vmatpush1.bf16.msra.mxu0 %v3516
    %3677 = vmatprep.subr.bf16.mxu0 0
    %3678 = vmatpush1.bf16.msra.mxu0 %v3517
    %3679 = vmatprep.subr.bf16.mxu0 0
    %3680 = vmatpush1.bf16.msra.mxu0 %v3518
    %3681 = vmatprep.subr.bf16.mxu0 0
    %3682 = vmatpush1.bf16.msra.mxu0 %v3519
    %3683 = vmatprep.subr.bf16.mxu0 0
    %3684 = vmatpush1.bf16.msra.mxu0 %v3520
    %3685 = vmatprep.subr.bf16.mxu0 0
    %3686 = vmatpush1.bf16.msra.mxu0 %v3521
    %3687 = vmatprep.subr.bf16.mxu0 0
    %3688 = vmatpush1.bf16.msra.mxu0 %v3522
    %3689 = vmatprep.subr.bf16.mxu0 0
    %3690 = vmatpush1.bf16.msra.mxu0 %v3523
    %3691 = vmatprep.subr.bf16.mxu0 0
    %3692 = vmatpush1.bf16.msra.mxu0 %v3524
    %3693 = vmatprep.subr.bf16.mxu0 0
    %3694 = vmatpush1.bf16.msra.mxu0 %v3525
    %3695 = vmatprep.mubr.bf16.mxu0 %v3227
    %3696 = vmatmul.mubr.bf16.gmra.mrb[0].mxu0 %v3226
    %v3697 = vpop.f32.mrb[0].mxu0
    %v3698 = vadd.f32 %v3657, %v3697
    %v3699 = vpop.f32.mrb[0].mxu0
    %v3700 = vpop.f32.mrb[0].mxu0
    %v3701 = vadd.f32 %v3660, %v3700
    %v3702 = vpop.f32.mrb[0].mxu0
    %3703 = vdwg.mxu0
    %3704 = vmatprep.subr.bf16.mxu0 0
    %3705 = vmatpush1.bf16.msra.mxu0 %v3526
    %3706 = vmatprep.subr.bf16.mxu0 0
    %3707 = vmatpush1.bf16.msra.mxu0 %v3527
    %3708 = vmatprep.subr.bf16.mxu0 0
    %3709 = vmatpush1.bf16.msra.mxu0 %v3528
    %3710 = vmatprep.subr.bf16.mxu0 0
    %3711 = vmatpush1.bf16.msra.mxu0 %v3529
    %3712 = vmatprep.subr.bf16.mxu0 0
    %3713 = vmatpush1.bf16.msra.mxu0 %v3530
    %3714 = vmatprep.subr.bf16.mxu0 0
    %3715 = vmatpush1.bf16.msra.mxu0 %v3531
    %3716 = vmatprep.subr.bf16.mxu0 0
    %3717 = vmatpush1.bf16.msra.mxu0 %v3532
    %3718 = vmatprep.subr.bf16.mxu0 0
    %3719 = vmatpush1.bf16.msra.mxu0 %v3533
    %3720 = vmatprep.subr.bf16.mxu0 0
    %3721 = vmatpush1.bf16.msra.mxu0 %v3534
    %3722 = vmatprep.subr.bf16.mxu0 0
    %3723 = vmatpush1.bf16.msra.mxu0 %v3535
    %3724 = vmatprep.subr.bf16.mxu0 0
    %3725 = vmatpush1.bf16.msra.mxu0 %v3536
    %3726 = vmatprep.subr.bf16.mxu0 0
    %3727 = vmatpush1.bf16.msra.mxu0 %v3537
    %3728 = vmatprep.subr.bf16.mxu0 0
    %3729 = vmatpush1.bf16.msra.mxu0 %v3538
    %3730 = vmatprep.subr.bf16.mxu0 0
    %3731 = vmatpush1.bf16.msra.mxu0 %v3539
    %3732 = vmatprep.subr.bf16.mxu0 0
    %3733 = vmatpush1.bf16.msra.mxu0 %v3540
    %3734 = vmatprep.subr.bf16.mxu0 0
    %3735 = vmatpush1.bf16.msra.mxu0 %v3541
    %3736 = vmatprep.mubr.bf16.mxu0 %v3229
    %3737 = vmatmul.mubr.bf16.gmra.mrb[0].mxu0 %v3228
    %v3738 = vpop.f32.mrb[0].mxu0
    %v3739 = vadd.f32 %v3698, %v3738
    %v3740 = vpop.f32.mrb[0].mxu0
    %v3741 = vpop.f32.mrb[0].mxu0
    %v3742 = vadd.f32 %v3701, %v3741
    %v3743 = vpop.f32.mrb[0].mxu0
    %3744 = vdwg.mxu0
    %3745 = vmatprep.subr.bf16.mxu0 0
    %3746 = vmatpush1.bf16.msra.mxu0 %v3542
    %3747 = vmatprep.subr.bf16.mxu0 0
    %3748 = vmatpush1.bf16.msra.mxu0 %v3543
    %3749 = vmatprep.subr.bf16.mxu0 0
    %3750 = vmatpush1.bf16.msra.mxu0 %v3544
    %3751 = vmatprep.subr.bf16.mxu0 0
    %3752 = vmatpush1.bf16.msra.mxu0 %v3545
    %3753 = vmatprep.subr.bf16.mxu0 0
    %3754 = vmatpush1.bf16.msra.mxu0 %v3546
    %3755 = vmatprep.subr.bf16.mxu0 0
    %3756 = vmatpush1.bf16.msra.mxu0 %v3547
    %3757 = vmatprep.subr.bf16.mxu0 0
    %3758 = vmatpush1.bf16.msra.mxu0 %v3548
    %3759 = vmatprep.subr.bf16.mxu0 0
    %3760 = vmatpush1.bf16.msra.mxu0 %v3549
    %3761 = vmatprep.subr.bf16.mxu0 0
    %3762 = vmatpush1.bf16.msra.mxu0 %v3550
    %3763 = vmatprep.subr.bf16.mxu0 0
    %3764 = vmatpush1.bf16.msra.mxu0 %v3551
    %3765 = vmatprep.subr.bf16.mxu0 0
    %3766 = vmatpush1.bf16.msra.mxu0 %v3552
    %3767 = vmatprep.subr.bf16.mxu0 0
    %3768 = vmatpush1.bf16.msra.mxu0 %v3553
    %3769 = vmatprep.subr.bf16.mxu0 0
    %3770 = vmatpush1.bf16.msra.mxu0 %v3554
    %3771 = vmatprep.subr.bf16.mxu0 0
    %3772 = vmatpush1.bf16.msra.mxu0 %v3555
    %3773 = vmatprep.subr.bf16.mxu0 0
    %3774 = vmatpush1.bf16.msra.mxu0 %v3556
    %3775 = vmatprep.subr.bf16.mxu0 0
    %3776 = vmatpush1.bf16.msra.mxu0 %v3557
    %3777 = vmatprep.mubr.bf16.mxu0 %v3231
    %3778 = vmatmul.mubr.bf16.gmra.mrb[0].mxu0 %v3230
    %v3779 = vpop.f32.mrb[0].mxu0
    %v3780 = vadd.f32 %v3739, %v3779
    %v3781 = vpop.f32.mrb[0].mxu0
    %v3782 = vpop.f32.mrb[0].mxu0
    %v3783 = vadd.f32 %v3742, %v3782
    %v3784 = vpop.f32.mrb[0].mxu0
    %3785 = vdwg.mxu0
    %v3786 = vmul.f32 %v3780, 0.5
    %v3787 = vmul.f32 %v3783, 0.5
    %v3788 = vmul.f32 %v3780, 0.70710677
    %v3789 = vmul.f32 %v3783, 0.70710677
    %v3790 = verf.f32.pop %v3788
    %v3791 = verf.f32.pop %v3789
    %v3792 = vadd.f32 %v3790, 1.0
    %v3793 = vadd.f32 %v3791, 1.0
    %v3794 = vmul.f32 %v3786, %v3792
    %v3795 = vmul.f32 %v3787, %v3793
    %v3796 = vld [vmem:[#allocation11] sm:$0xf]
    %v3797 = vld [vmem:[#allocation11 + $0xc] sm:$0xf]
    %v3798 = vld [vmem:[#allocation11 + $0x18] sm:$0xf]
    %v3799 = vld [vmem:[#allocation11 + $0x24] sm:$0xf]
    %v3800 = vld [vmem:[#allocation11 + $0x30] sm:$0xf]
    %v3801 = vld [vmem:[#allocation11 + $0x3c] sm:$0xf]
    %v3802 = vld [vmem:[#allocation11 + $0x48] sm:$0xf]
    %v3803 = vld [vmem:[#allocation11 + $0x54] sm:$0xf]
    %v3804 = vld [vmem:[#allocation11 + $0x60] sm:$0xf]
    %v3805 = vld [vmem:[#allocation11 + $0x6c] sm:$0xf]
    %v3806 = vld [vmem:[#allocation11 + $0x78] sm:$0xf]
    %v3807 = vld [vmem:[#allocation11 + $0x84] sm:$0xf]
    %v3808 = vld [vmem:[#allocation11 + $0x90] sm:$0xf]
    %v3809 = vld [vmem:[#allocation11 + $0x9c] sm:$0xf]
    %v3810 = vld [vmem:[#allocation11 + $0xa8] sm:$0xf]
    %v3811 = vld [vmem:[#allocation11 + $0xb4] sm:$0xf]
    %v3812 = vld [vmem:[#allocation13] sm:$0x1]
    %v3813 = vpack.c.bf16 %v3795, %v3794
    %v3815 = vlaneseq
    %v3816 = vshrl.u32 %v3815, 7
    %v3817 = vsub.s32 0, %v3816
    %v3818 = vrot.slane %v3812, %v3817
    %v3836 = vunpack.c.l.b16 %v3796
    %v3837 = vunpack.c.l.b16 %v3797
    %v3838 = vunpack.c.l.b16 %v3798
    %v3839 = vunpack.c.l.b16 %v3799
    %v3840 = vunpack.c.l.b16 %v3800
    %v3841 = vunpack.c.l.b16 %v3801
    %v3842 = vunpack.c.l.b16 %v3802
    %v3843 = vunpack.c.l.b16 %v3803
    %v3844 = vunpack.c.l.b16 %v3804
    %v3845 = vunpack.c.l.b16 %v3805
    %v3846 = vunpack.c.l.b16 %v3806
    %v3847 = vunpack.c.l.b16 %v3807
    %v3848 = vunpack.c.l.b16 %v3808
    %v3849 = vunpack.c.l.b16 %v3809
    %v3850 = vunpack.c.l.b16 %v3810
    %v3851 = vunpack.c.l.b16 %v3811
    %v3852 = vpack.c.b16 %v3837, %v3836
    %v3853 = vpack.c.b16 %v3839, %v3838
    %v3854 = vpack.c.b16 %v3841, %v3840
    %v3855 = vpack.c.b16 %v3843, %v3842
    %v3856 = vpack.c.b16 %v3845, %v3844
    %v3857 = vpack.c.b16 %v3847, %v3846
    %v3858 = vpack.c.b16 %v3849, %v3848
    %v3859 = vpack.c.b16 %v3851, %v3850
    %3868 = vmatprep.subr.bf16.mxu0 0
    %3869 = vmatpush1.bf16.msra.mxu0 %v3852
    %3870 = vmatprep.subr.bf16.mxu0 0
    %3871 = vmatpush1.bf16.msra.mxu0 %v3853
    %3872 = vmatprep.subr.bf16.mxu0 0
    %3873 = vmatpush1.bf16.msra.mxu0 %v3854
    %3874 = vmatprep.subr.bf16.mxu0 0
    %3875 = vmatpush1.bf16.msra.mxu0 %v3855
    %3876 = vmatprep.subr.bf16.mxu0 0
    %3877 = vmatpush1.bf16.msra.mxu0 %v3856
    %3878 = vmatprep.subr.bf16.mxu0 0
    %3879 = vmatpush1.bf16.msra.mxu0 %v3857
    %3880 = vmatprep.subr.bf16.mxu0 0
    %3881 = vmatpush1.bf16.msra.mxu0 %v3858
    %3882 = vmatprep.subr.bf16.mxu0 0
    %3883 = vmatpush1.bf16.msra.mxu0 %v3859
    %3884 = vmatprep.subr.bf16.mxu0 0
    %3885 = vmatpush1.bf16.msra.mxu0 0
    %3886 = vmatprep.subr.bf16.mxu0 0
    %3887 = vmatpush1.bf16.msra.mxu0 0
    %3888 = vmatprep.subr.bf16.mxu0 0
    %3889 = vmatpush1.bf16.msra.mxu0 0
    %3890 = vmatprep.subr.bf16.mxu0 0
    %3891 = vmatpush1.bf16.msra.mxu0 0
    %3892 = vmatprep.subr.bf16.mxu0 0
    %3893 = vmatpush1.bf16.msra.mxu0 0
    %3894 = vmatprep.subr.bf16.mxu0 0
    %3895 = vmatpush1.bf16.msra.mxu0 0
    %3896 = vmatprep.subr.bf16.mxu0 0
    %3897 = vmatpush1.bf16.msra.mxu0 0
    %3898 = vmatprep.subr.bf16.mxu0 0
    %3899 = vmatpush1.bf16.msra.mxu0 0
    %3900 = vmatprep.mubr.bf16.mxu0 0
    %3901 = vmatmul.mubr.bf16.gmra.mrb[0].mxu0 %v3813
    %v3902 = vpop.f32.mrb[0].mxu0
    %v3903 = vadd.f32 %v3818, %v3902
    %v3904 = vpop.f32.mrb[0].mxu0
    %v3905 = vpop.f32.mrb[0].mxu0
    %v3906 = vadd.f32 %v3818, %v3905
    %v3907 = vpop.f32.mrb[0].mxu0
    %3908 = vdwg.mxu0
    %v3909 = vmul.f32 %v3903, 0.5
    %v3910 = vmul.f32 %v3906, 0.5
    %v3911 = vmul.f32 %v3903, 0.70710677
    %v3912 = vmul.f32 %v3906, 0.70710677
    %v3913 = verf.f32.pop %v3911
    %v3914 = verf.f32.pop %v3912
    %v3915 = vadd.f32 %v3913, 1.0
    %v3916 = vadd.f32 %v3914, 1.0
    %v3917 = vmul.f32 %v3909, %v3915
    %v3918 = vmul.f32 %v3910, %v3916
    %v3919 = vld [vmem:[#allocation11 + $0x4] sm:$0xf]
    %v3920 = vld [vmem:[#allocation11 + $0x10] sm:$0xf]
    %v3921 = vld [vmem:[#allocation11 + $0x1c] sm:$0xf]
    %v3922 = vld [vmem:[#allocation11 + $0x28] sm:$0xf]
    %v3923 = vld [vmem:[#allocation11 + $0x34] sm:$0xf]
    %v3924 = vld [vmem:[#allocation11 + $0x40] sm:$0xf]
    %v3925 = vld [vmem:[#allocation11 + $0x4c] sm:$0xf]
    %v3926 = vld [vmem:[#allocation11 + $0x58] sm:$0xf]
    %v3927 = vld [vmem:[#allocation11 + $0x64] sm:$0xf]
    %v3928 = vld [vmem:[#allocation11 + $0x70] sm:$0xf]
    %v3929 = vld [vmem:[#allocation11 + $0x7c] sm:$0xf]
    %v3930 = vld [vmem:[#allocation11 + $0x88] sm:$0xf]
    %v3931 = vld [vmem:[#allocation11 + $0x94] sm:$0xf]
    %v3932 = vld [vmem:[#allocation11 + $0xa0] sm:$0xf]
    %v3933 = vld [vmem:[#allocation11 + $0xac] sm:$0xf]
    %v3934 = vld [vmem:[#allocation11 + $0xb8] sm:$0xf]
    %v3935 = vld [vmem:[#allocation13 + $0x1] sm:$0x1]
    %v3936 = vpack.c.bf16 %v3918, %v3917
    %v3938 = vlaneseq
    %v3939 = vshrl.u32 %v3938, 7
    %v3940 = vsub.s32 0, %v3939
    %v3941 = vrot.slane %v3935, %v3940
    %v3959 = vunpack.c.l.b16 %v3919
    %v3960 = vunpack.c.l.b16 %v3920
    %v3961 = vunpack.c.l.b16 %v3921
    %v3962 = vunpack.c.l.b16 %v3922
    %v3963 = vunpack.c.l.b16 %v3923
    %v3964 = vunpack.c.l.b16 %v3924
    %v3965 = vunpack.c.l.b16 %v3925
    %v3966 = vunpack.c.l.b16 %v3926
    %v3967 = vunpack.c.l.b16 %v3927
    %v3968 = vunpack.c.l.b16 %v3928
    %v3969 = vunpack.c.l.b16 %v3929
    %v3970 = vunpack.c.l.b16 %v3930
    %v3971 = vunpack.c.l.b16 %v3931
    %v3972 = vunpack.c.l.b16 %v3932
    %v3973 = vunpack.c.l.b16 %v3933
    %v3974 = vunpack.c.l.b16 %v3934
    %v3975 = vpack.c.b16 %v3960, %v3959
    %v3976 = vpack.c.b16 %v3962, %v3961
    %v3977 = vpack.c.b16 %v3964, %v3963
    %v3978 = vpack.c.b16 %v3966, %v3965
    %v3979 = vpack.c.b16 %v3968, %v3967
    %v3980 = vpack.c.b16 %v3970, %v3969
    %v3981 = vpack.c.b16 %v3972, %v3971
    %v3982 = vpack.c.b16 %v3974, %v3973
    %3991 = vmatprep.subr.bf16.mxu0 0
    %3992 = vmatpush1.bf16.msra.mxu0 %v3975
    %3993 = vmatprep.subr.bf16.mxu0 0
    %3994 = vmatpush1.bf16.msra.mxu0 %v3976
    %3995 = vmatprep.subr.bf16.mxu0 0
    %3996 = vmatpush1.bf16.msra.mxu0 %v3977
    %3997 = vmatprep.subr.bf16.mxu0 0
    %3998 = vmatpush1.bf16.msra.mxu0 %v3978
    %3999 = vmatprep.subr.bf16.mxu0 0
    %4000 = vmatpush1.bf16.msra.mxu0 %v3979
    %4001 = vmatprep.subr.bf16.mxu0 0
    %4002 = vmatpush1.bf16.msra.mxu0 %v3980
    %4003 = vmatprep.subr.bf16.mxu0 0
    %4004 = vmatpush1.bf16.msra.mxu0 %v3981
    %4005 = vmatprep.subr.bf16.mxu0 0
    %4006 = vmatpush1.bf16.msra.mxu0 %v3982
    %4007 = vmatprep.subr.bf16.mxu0 0
    %4008 = vmatpush1.bf16.msra.mxu0 0
    %4009 = vmatprep.subr.bf16.mxu0 0
    %4010 = vmatpush1.bf16.msra.mxu0 0
    %4011 = vmatprep.subr.bf16.mxu0 0
    %4012 = vmatpush1.bf16.msra.mxu0 0
    %4013 = vmatprep.subr.bf16.mxu0 0
    %4014 = vmatpush1.bf16.msra.mxu0 0
    %4015 = vmatprep.subr.bf16.mxu0 0
    %4016 = vmatpush1.bf16.msra.mxu0 0
    %4017 = vmatprep.subr.bf16.mxu0 0
    %4018 = vmatpush1.bf16.msra.mxu0 0
    %4019 = vmatprep.subr.bf16.mxu0 0
    %4020 = vmatpush1.bf16.msra.mxu0 0
    %4021 = vmatprep.subr.bf16.mxu0 0
    %4022 = vmatpush1.bf16.msra.mxu0 0
    %4023 = vmatprep.mubr.bf16.mxu0 0
    %4024 = vmatmul.mubr.bf16.gmra.mrb[0].mxu0 %v3936
    %v4025 = vpop.f32.mrb[0].mxu0
    %v4026 = vadd.f32 %v3941, %v4025
    %v4027 = vpop.f32.mrb[0].mxu0
    %v4028 = vpop.f32.mrb[0].mxu0
    %v4029 = vadd.f32 %v3941, %v4028
    %v4030 = vpop.f32.mrb[0].mxu0
    %4031 = vdwg.mxu0
    %v4032 = vmul.f32 %v4026, 0.5
    %v4033 = vmul.f32 %v4029, 0.5
    %v4034 = vmul.f32 %v4026, 0.70710677
    %v4035 = vmul.f32 %v4029, 0.70710677
    %v4036 = verf.f32.pop %v4034
    %v4037 = verf.f32.pop %v4035
    %v4038 = vadd.f32 %v4036, 1.0
    %v4039 = vadd.f32 %v4037, 1.0
    %v4040 = vmul.f32 %v4032, %v4038
    %v4041 = vmul.f32 %v4033, %v4039
    %v4042 = vld [vmem:[#allocation11 + $0x8] sm:$0xf]
    %v4043 = vld [vmem:[#allocation11 + $0x14] sm:$0xf]
    %v4044 = vld [vmem:[#allocation11 + $0x20] sm:$0xf]
    %v4045 = vld [vmem:[#allocation11 + $0x2c] sm:$0xf]
    %v4046 = vld [vmem:[#allocation11 + $0x38] sm:$0xf]
    %v4047 = vld [vmem:[#allocation11 + $0x44] sm:$0xf]
    %v4048 = vld [vmem:[#allocation11 + $0x50] sm:$0xf]
    %v4049 = vld [vmem:[#allocation11 + $0x5c] sm:$0xf]
    %v4050 = vld [vmem:[#allocation11 + $0x68] sm:$0xf]
    %v4051 = vld [vmem:[#allocation11 + $0x74] sm:$0xf]
    %v4052 = vld [vmem:[#allocation11 + $0x80] sm:$0xf]
    %v4053 = vld [vmem:[#allocation11 + $0x8c] sm:$0xf]
    %v4054 = vld [vmem:[#allocation11 + $0x98] sm:$0xf]
    %v4055 = vld [vmem:[#allocation11 + $0xa4] sm:$0xf]
    %v4056 = vld [vmem:[#allocation11 + $0xb0] sm:$0xf]
    %v4057 = vld [vmem:[#allocation11 + $0xbc] sm:$0xf]
    %v4058 = vld [vmem:[#allocation13 + $0x2] sm:$0x1]
    %v4059 = vpack.c.bf16 %v4041, %v4040
    %v4061 = vlaneseq
    %v4062 = vshrl.u32 %v4061, 7
    %v4063 = vsub.s32 0, %v4062
    %v4064 = vrot.slane %v4058, %v4063
    %v4082 = vunpack.c.l.b16 %v4042
    %v4083 = vunpack.c.l.b16 %v4043
    %v4084 = vunpack.c.l.b16 %v4044
    %v4085 = vunpack.c.l.b16 %v4045
    %v4086 = vunpack.c.l.b16 %v4046
    %v4087 = vunpack.c.l.b16 %v4047
    %v4088 = vunpack.c.l.b16 %v4048
    %v4089 = vunpack.c.l.b16 %v4049
    %v4090 = vunpack.c.l.b16 %v4050
    %v4091 = vunpack.c.l.b16 %v4051
    %v4092 = vunpack.c.l.b16 %v4052
    %v4093 = vunpack.c.l.b16 %v4053
    %v4094 = vunpack.c.l.b16 %v4054
    %v4095 = vunpack.c.l.b16 %v4055
    %v4096 = vunpack.c.l.b16 %v4056
    %v4097 = vunpack.c.l.b16 %v4057
    %v4098 = vpack.c.b16 %v4083, %v4082
    %v4099 = vpack.c.b16 %v4085, %v4084
    %v4100 = vpack.c.b16 %v4087, %v4086
    %v4101 = vpack.c.b16 %v4089, %v4088
    %v4102 = vpack.c.b16 %v4091, %v4090
    %v4103 = vpack.c.b16 %v4093, %v4092
    %v4104 = vpack.c.b16 %v4095, %v4094
    %v4105 = vpack.c.b16 %v4097, %v4096
    %4114 = vmatprep.subr.bf16.mxu0 0
    %4115 = vmatpush1.bf16.msra.mxu0 %v4098
    %4116 = vmatprep.subr.bf16.mxu0 0
    %4117 = vmatpush1.bf16.msra.mxu0 %v4099
    %4118 = vmatprep.subr.bf16.mxu0 0
    %4119 = vmatpush1.bf16.msra.mxu0 %v4100
    %4120 = vmatprep.subr.bf16.mxu0 0
    %4121 = vmatpush1.bf16.msra.mxu0 %v4101
    %4122 = vmatprep.subr.bf16.mxu0 0
    %4123 = vmatpush1.bf16.msra.mxu0 %v4102
    %4124 = vmatprep.subr.bf16.mxu0 0
    %4125 = vmatpush1.bf16.msra.mxu0 %v4103
    %4126 = vmatprep.subr.bf16.mxu0 0
    %4127 = vmatpush1.bf16.msra.mxu0 %v4104
    %4128 = vmatprep.subr.bf16.mxu0 0
    %4129 = vmatpush1.bf16.msra.mxu0 %v4105
    %4130 = vmatprep.subr.bf16.mxu0 0
    %4131 = vmatpush1.bf16.msra.mxu0 0
    %4132 = vmatprep.subr.bf16.mxu0 0
    %4133 = vmatpush1.bf16.msra.mxu0 0
    %4134 = vmatprep.subr.bf16.mxu0 0
    %4135 = vmatpush1.bf16.msra.mxu0 0
    %4136 = vmatprep.subr.bf16.mxu0 0
    %4137 = vmatpush1.bf16.msra.mxu0 0
    %4138 = vmatprep.subr.bf16.mxu0 0
    %4139 = vmatpush1.bf16.msra.mxu0 0
    %4140 = vmatprep.subr.bf16.mxu0 0
    %4141 = vmatpush1.bf16.msra.mxu0 0
    %4142 = vmatprep.subr.bf16.mxu0 0
    %4143 = vmatpush1.bf16.msra.mxu0 0
    %4144 = vmatprep.subr.bf16.mxu0 0
    %4145 = vmatpush1.bf16.msra.mxu0 0
    %4146 = vmatprep.mubr.bf16.mxu0 0
    %4147 = vmatmul.mubr.bf16.gmra.mrb[0].mxu0 %v4059
    %v4148 = vpop.f32.mrb[0].mxu0
    %v4149 = vadd.f32 %v4064, %v4148
    %v4150 = vpop.f32.mrb[0].mxu0
    %v4151 = vpop.f32.mrb[0].mxu0
    %v4152 = vadd.f32 %v4064, %v4151
    %v4153 = vpop.f32.mrb[0].mxu0
    %4154 = vdwg.mxu0
    %4155 = vst [vmem:[#allocation14] sm:$0xff] %v4149
    %4156 = vst [vmem:[#allocation14 + $0x8] sm:$0xff] %v4152
    // Predicated region
    $region58: #{tpu_custom_call.1} parent=1 // pred_check
      _
    $region59: #{tpu_custom_call.1} parent=1 // pred_check_branch
      %4158 = sbr.rel (0) target = $region61
    $region60: #{tpu_custom_call.1} parent=1 // pred_region
      %s4160 = ssub.s32 256, 256
      %4161 = vsyncadd [#allocation4], %s4160
      %s4162 = sshll.u32 [#allocation14], 4
      %s4163 = int_to_ptr.vmem [resolvable:$true] %s4162
      %4168 = dma.vmem_to_hbm [thread:$0]  %s4163, 256, %s7, [#allocation4], 128, 128, 8
    $region61: #{tpu_custom_call.1} parent=1 // pred_fallthru
      _
    // Predicated region
    $region62: #{tpu_custom_call.1} parent=1 // pred_check
      _
    $region63: #{tpu_custom_call.1} parent=1 // pred_check_branch
      %4170 = sbr.rel (0) target = $region65
    $region64: #{tpu_custom_call.1} parent=1 // pred_region
      %4171 = dma.done [#allocation4], 256
    $region65: #{tpu_custom_call.1} parent=1 // pred_fallthru
      _
    %4172 = vsyncpa [#allocation3], 1
    %4173 = vsyncpa [#allocation6], 1
    %4174 = vsyncpa [#allocation9], 1
    %4175 = vsyncpa [#allocation12], 1
    %4176 = vsyncpa [#allocation4], 1

// kernel: tpu_custom_call.1
$region0: #{tpu_custom_call.1}
  #allocation0 [shape = 'u32[]', space=smem, size = 0x4, offset = 0x4, fixed_abs, tag = 'smem constant byte address 0x4 - core index']
  #allocation1 [shape = 'u32[144,128]{1,0:T(1,128)}', space=vmem, size = 0x12000, scoped, tag = 'internal scratch']
  %s0 = inlined_call_operand.hbm [shape: bf16[16,768], index: 0, kind: input, shape index: {}]
  %s1 = inlined_call_operand.hbm [shape: bf16[768,1024], index: 1, kind: input, shape index: {}]
  %s2 = inlined_call_operand.hbm [shape: f32[1,1024], index: 2, kind: input, shape index: {}]
  %s3 = inlined_call_operand.hbm [shape: bf16[1024,128], index: 3, kind: input, shape index: {}]
  %s4 = inlined_call_operand.hbm [shape: f32[1,128], index: 4, kind: input, shape index: {}]
  %s5 = inlined_call_operand.hbm [shape: bf16[128,384], index: 5, kind: input, shape index: {}]
  %s6 = inlined_call_operand.hbm [shape: f32[1,384], index: 6, kind: input, shape index: {}]
  %s7 = inlined_call_operand.hbm [shape: f32[16,128], index: 7, kind: output, shape index: {}]
  %s8 = sld [smem:[#allocation0]]
  $region66: #{tpu_custom_call.1} parent=0
    _
  %s10 = ssub.s32 1, %s8
  %s11 = scalar_select 0, %s10, %s8
  $region1: #{tpu_custom_call.1} parent=0
    #allocation2 [shape = 'u8[24576]{0}', space=vmem, size = 0x6000, scoped, tag = 'input window, operand 0, single buffered']
    #allocation3 [shape = 's32[1]{0}', space=sflag, size = 0x4, scoped, tag = 'scoped memory for tpu_custom_call.1']
    #allocation4 [shape = 's32[1]{0}', space=sflag, size = 0x4, scoped, tag = 'scoped memory for tpu_custom_call.1']
    #allocation5 [shape = 'u8[1572864]{0}', space=vmem, size = 0x180000, scoped, tag = 'input window, operand 1, single buffered']
    #allocation6 [shape = 's32[1]{0}', space=sflag, size = 0x4, scoped, tag = 'scoped memory for tpu_custom_call.1']
    #allocation7 [shape = 'u8[4096]{0}', space=vmem, size = 0x1000, scoped, tag = 'input window, operand 2, single buffered']
    #allocation8 [shape = 'u8[262144]{0}', space=vmem, size = 0x40000, scoped, tag = 'input window, operand 3, single buffered']
    #allocation9 [shape = 's32[1]{0}', space=sflag, size = 0x4, scoped, tag = 'scoped memory for tpu_custom_call.1']
    #allocation10 [shape = 'u8[512]{0}', space=vmem, size = 0x400, scoped, tag = 'input window, operand 4, single buffered']
    #allocation11 [shape = 'u8[98304]{0}', space=vmem, size = 0x18000, scoped, tag = 'input window, operand 5, single buffered']
    #allocation12 [shape = 's32[1]{0}', space=sflag, size = 0x4, scoped, tag = 'scoped memory for tpu_custom_call.1']
    #allocation13 [shape = 'u8[1536]{0}', space=vmem, size = 0x800, scoped, tag = 'input window, operand 6, single buffered']
    #allocation14 [shape = 'u8[8192]{0}', space=vmem, size = 0x2000, scoped, tag = 'output window, operand 0, single buffered']
    %12 = vsyncpa [#allocation3], 0
    %13 = vsyncpa [#allocation6], 0
    %14 = vsyncpa [#allocation9], 0
    %15 = vsyncpa [#allocation12], 0
    %16 = vsyncpa [#allocation4], 0
    // Predicated region
    $region2: #{tpu_custom_call.1} parent=1 // pred_check
      _
    $region3: #{tpu_custom_call.1} parent=1 // pred_check_branch
      %18 = sbr.rel (0) target = $region5
    $region4: #{tpu_custom_call.1} parent=1 // pred_region
      %s20 = ssub.s32 768, 768
      %21 = vsyncadd [#allocation3], %s20
      %s22 = sshll.u32 [#allocation2], 4
      %s23 = int_to_ptr.vmem [resolvable:$true] %s22
      %28 = dma.hbm_to_vmem [thread:$0]  %s0, 768, %s23, [#allocation3], 384, 384, 24
    $region5: #{tpu_custom_call.1} parent=1 // pred_fallthru
      _
    // Predicated region
    $region6: #{tpu_custom_call.1} parent=1 // pred_check
      _
    $region7: #{tpu_custom_call.1} parent=1 // pred_check_branch
      %30 = sbr.rel (0) target = $region9
    $region8: #{tpu_custom_call.1} parent=1 // pred_region
      %s32 = ssub.s32 49152, 49152
      %33 = vsyncadd [#allocation6], %s32
      %s34 = sshll.u32 [#allocation5], 4
      %s35 = int_to_ptr.vmem [resolvable:$true] %s34
      %40 = dma.hbm_to_vmem [thread:$0]  %s1, 49152, %s35, [#allocation6], 512, 512, 32
    $region9: #{tpu_custom_call.1} parent=1 // pred_fallthru
      _
    // Predicated region
    $region10: #{tpu_custom_call.1} parent=1 // pred_check
      _
    $region11: #{tpu_custom_call.1} parent=1 // pred_check_branch
      %42 = sbr.rel (0) target = $region13
    $region12: #{tpu_custom_call.1} parent=1 // pred_region
      %s44 = ssub.s32 128, 128
      %45 = vsyncadd [#allocation6], %s44
      %s47 = sshll.u32 [#allocation7], 4
      %s48 = int_to_ptr.vmem [resolvable:$true] %s47
      %50 = dma.hbm_to_vmem [thread:$0]  %s2, 128, %s48, [#allocation6]
    $region13: #{tpu_custom_call.1} parent=1 // pred_fallthru
      _
    // Predicated region
    $region14: #{tpu_custom_call.1} parent=1 // pred_check
      _
    $region15: #{tpu_custom_call.1} parent=1 // pred_check_branch
      %52 = sbr.rel (0) target = $region17
    $region16: #{tpu_custom_call.1} parent=1 // pred_region
      %s54 = ssub.s32 8192, 8192
      %55 = vsyncadd [#allocation9], %s54
      %s56 = sshll.u32 [#allocation8], 4
      %s57 = int_to_ptr.vmem [resolvable:$true] %s56
      %62 = dma.hbm_to_vmem [thread:$0]  %s3, 8192, %s57, [#allocation9], 64, 64, 4
    $region17: #{tpu_custom_call.1} parent=1 // pred_fallthru
      _
    // Predicated region
    $region18: #{tpu_custom_call.1} parent=1 // pred_check
      _
    $region19: #{tpu_custom_call.1} parent=1 // pred_check_branch
      %64 = sbr.rel (0) target = $region21
    $region20: #{tpu_custom_call.1} parent=1 // pred_region
      %s66 = ssub.s32 16, 16
      %67 = vsyncadd [#allocation9], %s66
      %s69 = sshll.u32 [#allocation10], 4
      %s70 = int_to_ptr.vmem [resolvable:$true] %s69
      %72 = dma.hbm_to_vmem [thread:$0]  %s4, 16, %s70, [#allocation9]
    $region21: #{tpu_custom_call.1} parent=1 // pred_fallthru
      _
    // Predicated region
    $region22: #{tpu_custom_call.1} parent=1 // pred_check
      _
    $region23: #{tpu_custom_call.1} parent=1 // pred_check_branch
      %74 = sbr.rel (0) target = $region25
    $region24: #{tpu_custom_call.1} parent=1 // pred_region
      %s76 = ssub.s32 3072, 3072
      %77 = vsyncadd [#allocation12], %s76
      %s78 = sshll.u32 [#allocation11], 4
      %s79 = int_to_ptr.vmem [resolvable:$true] %s78
      %84 = dma.hbm_to_vmem [thread:$0]  %s5, 3072, %s79, [#allocation12], 192, 192, 12
    $region25: #{tpu_custom_call.1} parent=1 // pred_fallthru
      _
    // Predicated region
    $region26: #{tpu_custom_call.1} parent=1 // pred_check
      _
    $region27: #{tpu_custom_call.1} parent=1 // pred_check_branch
      %86 = sbr.rel (0) target = $region29
    $region28: #{tpu_custom_call.1} parent=1 // pred_region
      %s88 = ssub.s32 48, 48
      %89 = vsyncadd [#allocation12], %s88
      %s91 = sshll.u32 [#allocation13], 4
      %s92 = int_to_ptr.vmem [resolvable:$true] %s91
      %94 = dma.hbm_to_vmem [thread:$0]  %s6, 48, %s92, [#allocation12]
    $region29: #{tpu_custom_call.1} parent=1 // pred_fallthru
      _
    // Predicated region
    $region30: #{tpu_custom_call.1} parent=1 // pred_check
      _
    $region31: #{tpu_custom_call.1} parent=1 // pred_check_branch
      %96 = sbr.rel (0) target = $region33
    $region32: #{tpu_custom_call.1} parent=1 // pred_region
      %97 = dma.done [#allocation3], 768
    $region33: #{tpu_custom_call.1} parent=1 // pred_fallthru
      _
    // Predicated region
    $region34: #{tpu_custom_call.1} parent=1 // pred_check
      _
    $region35: #{tpu_custom_call.1} parent=1 // pred_check_branch
      %99 = sbr.rel (0) target = $region37
    $region36: #{tpu_custom_call.1} parent=1 // pred_region
      %100 = dma.done [#allocation6], 49152
    $region37: #{tpu_custom_call.1} parent=1 // pred_fallthru
      _
    // Predicated region
    $region38: #{tpu_custom_call.1} parent=1 // pred_check
      _
    $region39: #{tpu_custom_call.1} parent=1 // pred_check_branch
      %102 = sbr.rel (0) target = $region41
    $region40: #{tpu_custom_call.1} parent=1 // pred_region
      %103 = dma.done [#allocation6], 128
    $region41: #{tpu_custom_call.1} parent=1 // pred_fallthru
      _
    // Predicated region
    $region42: #{tpu_custom_call.1} parent=1 // pred_check
      _
    $region43: #{tpu_custom_call.1} parent=1 // pred_check_branch
      %105 = sbr.rel (0) target = $region45
    $region44: #{tpu_custom_call.1} parent=1 // pred_region
      %106 = dma.done [#allocation9], 8192
    $region45: #{tpu_custom_call.1} parent=1 // pred_fallthru
      _
    // Predicated region
    $region46: #{tpu_custom_call.1} parent=1 // pred_check
      _
    $region47: #{tpu_custom_call.1} parent=1 // pred_check_branch
      %108 = sbr.rel (0) target = $region49
    $region48: #{tpu_custom_call.1} parent=1 // pred_region
      %109 = dma.done [#allocation9], 16
    $region49: #{tpu_custom_call.1} parent=1 // pred_fallthru
      _
    // Predicated region
    $region50: #{tpu_custom_call.1} parent=1 // pred_check
      _
    $region51: #{tpu_custom_call.1} parent=1 // pred_check_branch
      %111 = sbr.rel (0) target = $region53
    $region52: #{tpu_custom_call.1} parent=1 // pred_region
      %112 = dma.done [#allocation12], 3072
    $region53: #{tpu_custom_call.1} parent=1 // pred_fallthru
      _
    // Predicated region
    $region54: #{tpu_custom_call.1} parent=1 // pred_check
      _
    $region55: #{tpu_custom_call.1} parent=1 // pred_check_branch
      %114 = sbr.rel (0) target = $region57
    $region56: #{tpu_custom_call.1} parent=1 // pred_region
      %115 = dma.done [#allocation12], 48
    $region57: #{tpu_custom_call.1} parent=1 // pred_fallthru
      _
    %v117 = vld [vmem:[#allocation2] sm:$0xff]
    %v118 = vld [vmem:[#allocation2 + $0x8] sm:$0xff]
    %v119 = vld [vmem:[#allocation2 + $0x10] sm:$0xff]
    %v120 = vld [vmem:[#allocation2 + $0x18] sm:$0xff]
    %v121 = vld [vmem:[#allocation2 + $0x20] sm:$0xff]
    %v122 = vld [vmem:[#allocation2 + $0x28] sm:$0xff]
    %v123 = vld [vmem:[#allocation5] sm:$0xff]
    %v124 = vld [vmem:[#allocation5 + $0x8] sm:$0xff]
    %v125 = vld [vmem:[#allocation5 + $0x10] sm:$0xff]
    %v126 = vld [vmem:[#allocation5 + $0x18] sm:$0xff]
    %v127 = vld [vmem:[#allocation5 + $0x20] sm:$0xff]
    %v128 = vld [vmem:[#allocation5 + $0x28] sm:$0xff]
    %v129 = vld [vmem:[#allocation5 + $0x30] sm:$0xff]
    %v130 = vld [vmem:[#allocation5 + $0x38] sm:$0xff]
    %v131 = vld [vmem:[#allocation5 + $0x40] sm:$0xff]
    %v132 = vld [vmem:[#allocation5 + $0x48] sm:$0xff]
    %v133 = vld [vmem:[#allocation5 + $0x50] sm:$0xff]
    %v134 = vld [vmem:[#allocation5 + $0x58] sm:$0xff]
    %v135 = vld [vmem:[#allocation5 + $0x60] sm:$0xff]
    %v136 = vld [vmem:[#allocation5 + $0x68] sm:$0xff]
    %v137 = vld [vmem:[#allocation5 + $0x70] sm:$0xff]
    %v138 = vld [vmem:[#allocation5 + $0x78] sm:$0xff]
    %v139 = vld [vmem:[#allocation5 + $0x80] sm:$0xff]
    %v140 = vld [vmem:[#allocation5 + $0x88] sm:$0xff]
    %v141 = vld [vmem:[#allocation5 + $0x90] sm:$0xff]
    %v142 = vld [vmem:[#allocation5 + $0x98] sm:$0xff]
    %v143 = vld [vmem:[#allocation5 + $0xa0] sm:$0xff]
    %v144 = vld [vmem:[#allocation5 + $0xa8] sm:$0xff]
    %v145 = vld [vmem:[#allocation5 + $0xb0] sm:$0xff]
    %v146 = vld [vmem:[#allocation5 + $0xb8] sm:$0xff]
    %v147 = vld [vmem:[#allocation5 + $0xc0] sm:$0xff]
    %v148 = vld [vmem:[#allocation5 + $0xc8] sm:$0xff]
    %v149 = vld [vmem:[#allocation5 + $0xd0] sm:$0xff]
    %v150 = vld [vmem:[#allocation5 + $0xd8] sm:$0xff]
    %v151 = vld [vmem:[#allocation5 + $0xe0] sm:$0xff]
    %v152 = vld [vmem:[#allocation5 + $0xe8] sm:$0xff]
    %v153 = vld [vmem:[#allocation5 + $0xf0] sm:$0xff]
    %v154 = vld [vmem:[#allocation5 + $0xf8] sm:$0xff]
    %v155 = vld [vmem:[#allocation5 + $0x100] sm:$0xff]
    %v156 = vld [vmem:[#allocation5 + $0x108] sm:$0xff]
    %v157 = vld [vmem:[#allocation5 + $0x110] sm:$0xff]
    %v158 = vld [vmem:[#allocation5 + $0x118] sm:$0xff]
    %v159 = vld [vmem:[#allocation5 + $0x120] sm:$0xff]
    %v160 = vld [vmem:[#allocation5 + $0x128] sm:$0xff]
    %v161 = vld [vmem:[#allocation5 + $0x130] sm:$0xff]
    %v162 = vld [vmem:[#allocation5 + $0x138] sm:$0xff]
    %v163 = vld [vmem:[#allocation5 + $0x140] sm:$0xff]
    %v164 = vld [vmem:[#allocation5 + $0x148] sm:$0xff]
    %v165 = vld [vmem:[#allocation5 + $0x150] sm:$0xff]
    %v166 = vld [vmem:[#allocation5 + $0x158] sm:$0xff]
    %v167 = vld [vmem:[#allocation5 + $0x160] sm:$0xff]
    %v168 = vld [vmem:[#allocation5 + $0x168] sm:$0xff]
    %v169 = vld [vmem:[#allocation5 + $0x170] sm:$0xff]
    %v170 = vld [vmem:[#allocation5 + $0x178] sm:$0xff]
    %v171 = vld [vmem:[#allocation5 + $0x180] sm:$0xff]
    %v172 = vld [vmem:[#allocation5 + $0x188] sm:$0xff]
    %v173 = vld [vmem:[#allocation5 + $0x190] sm:$0xff]
    %v174 = vld [vmem:[#allocation5 + $0x198] sm:$0xff]
    %v175 = vld [vmem:[#allocation5 + $0x1a0] sm:$0xff]
    %v176 = vld [vmem:[#allocation5 + $0x1a8] sm:$0xff]
    %v177 = vld [vmem:[#allocation5 + $0x1b0] sm:$0xff]
    %v178 = vld [vmem:[#allocation5 + $0x1b8] sm:$0xff]
    %v179 = vld [vmem:[#allocation5 + $0x1c0] sm:$0xff]
    %v180 = vld [vmem:[#allocation5 + $0x1c8] sm:$0xff]
    %v181 = vld [vmem:[#allocation5 + $0x1d0] sm:$0xff]
    %v182 = vld [vmem:[#allocation5 + $0x1d8] sm:$0xff]
    %v183 = vld [vmem:[#allocation5 + $0x1e0] sm:$0xff]
    %v184 = vld [vmem:[#allocation5 + $0x1e8] sm:$0xff]
    %v185 = vld [vmem:[#allocation5 + $0x1f0] sm:$0xff]
    %v186 = vld [vmem:[#allocation5 + $0x1f8] sm:$0xff]
    %v187 = vld [vmem:[#allocation5 + $0x200] sm:$0xff]
    %v188 = vld [vmem:[#allocation5 + $0x208] sm:$0xff]
    %v189 = vld [vmem:[#allocation5 + $0x210] sm:$0xff]
    %v190 = vld [vmem:[#allocation5 + $0x218] sm:$0xff]
    %v191 = vld [vmem:[#allocation5 + $0x220] sm:$0xff]
    %v192 = vld [vmem:[#allocation5 + $0x228] sm:$0xff]
    %v193 = vld [vmem:[#allocation5 + $0x230] sm:$0xff]
    %v194 = vld [vmem:[#allocation5 + $0x238] sm:$0xff]
    %v195 = vld [vmem:[#allocation5 + $0x240] sm:$0xff]
    %v196 = vld [vmem:[#allocation5 + $0x248] sm:$0xff]
    %v197 = vld [vmem:[#allocation5 + $0x250] sm:$0xff]
    %v198 = vld [vmem:[#allocation5 + $0x258] sm:$0xff]
    %v199 = vld [vmem:[#allocation5 + $0x260] sm:$0xff]
    %v200 = vld [vmem:[#allocation5 + $0x268] sm:$0xff]
    %v201 = vld [vmem:[#allocation5 + $0x270] sm:$0xff]
    %v202 = vld [vmem:[#allocation5 + $0x278] sm:$0xff]
    %v203 = vld [vmem:[#allocation5 + $0x280] sm:$0xff]
    %v204 = vld [vmem:[#allocation5 + $0x288] sm:$0xff]
    %v205 = vld [vmem:[#allocation5 + $0x290] sm:$0xff]
    %v206 = vld [vmem:[#allocation5 + $0x298] sm:$0xff]
    %v207 = vld [vmem:[#allocation5 + $0x2a0] sm:$0xff]
    %v208 = vld [vmem:[#allocation5 + $0x2a8] sm:$0xff]
    %v209 = vld [vmem:[#allocation5 + $0x2b0] sm:$0xff]
    %v210 = vld [vmem:[#allocation5 + $0x2b8] sm:$0xff]
    %v211 = vld [vmem:[#allocation5 + $0x2c0] sm:$0xff]
    %v212 = vld [vmem:[#allocation5 + $0x2c8] sm:$0xff]
    %v213 = vld [vmem:[#allocation5 + $0x2d0] sm:$0xff]
    %v214 = vld [vmem:[#allocation5 + $0x2d8] sm:$0xff]
    %v215 = vld [vmem:[#allocation5 + $0x2e0] sm:$0xff]
    %v216 = vld [vmem:[#allocation5 + $0x2e8] sm:$0xff]
    %v217 = vld [vmem:[#allocation5 + $0x2f0] sm:$0xff]
    %v218 = vld [vmem:[#allocation5 + $0x2f8] sm:$0xff]
    %v219 = vld [vmem:[#allocation5 + $0x300] sm:$0xff]
    %v220 = vld [vmem:[#allocation5 + $0x308] sm:$0xff]
    %v221 = vld [vmem:[#allocation5 + $0x310] sm:$0xff]
    %v222 = vld [vmem:[#allocation5 + $0x318] sm:$0xff]
    %v223 = vld [vmem:[#allocation5 + $0x320] sm:$0xff]
    %v224 = vld [vmem:[#allocation5 + $0x328] sm:$0xff]
    %v225 = vld [vmem:[#allocation5 + $0x330] sm:$0xff]
    %v226 = vld [vmem:[#allocation5 + $0x338] sm:$0xff]
    %v227 = vld [vmem:[#allocation5 + $0x340] sm:$0xff]
    %v228 = vld [vmem:[#allocation5 + $0x348] sm:$0xff]
    %v229 = vld [vmem:[#allocation5 + $0x350] sm:$0xff]
    %v230 = vld [vmem:[#allocation5 + $0x358] sm:$0xff]
    %v231 = vld [vmem:[#allocation5 + $0x360] sm:$0xff]
    %v232 = vld [vmem:[#allocation5 + $0x368] sm:$0xff]
    %v233 = vld [vmem:[#allocation5 + $0x370] sm:$0xff]
    %v234 = vld [vmem:[#allocation5 + $0x378] sm:$0xff]
    %v235 = vld [vmem:[#allocation5 + $0x380] sm:$0xff]
    %v236 = vld [vmem:[#allocation5 + $0x388] sm:$0xff]
    %v237 = vld [vmem:[#allocation5 + $0x390] sm:$0xff]
    %v238 = vld [vmem:[#allocation5 + $0x398] sm:$0xff]
    %v239 = vld [vmem:[#allocation5 + $0x3a0] sm:$0xff]
    %v240 = vld [vmem:[#allocation5 + $0x3a8] sm:$0xff]
    %v241 = vld [vmem:[#allocation5 + $0x3b0] sm:$0xff]
    %v242 = vld [vmem:[#allocation5 + $0x3b8] sm:$0xff]
    %v243 = vld [vmem:[#allocation5 + $0x3c0] sm:$0xff]
    %v244 = vld [vmem:[#allocation5 + $0x3c8] sm:$0xff]
    %v245 = vld [vmem:[#allocation5 + $0x3d0] sm:$0xff]
    %v246 = vld [vmem:[#allocation5 + $0x3d8] sm:$0xff]
    %v247 = vld [vmem:[#allocation5 + $0x3e0] sm:$0xff]
    %v248 = vld [vmem:[#allocation5 + $0x3e8] sm:$0xff]
    %v249 = vld [vmem:[#allocation5 + $0x3f0] sm:$0xff]
    %v250 = vld [vmem:[#allocation5 + $0x3f8] sm:$0xff]
    %v251 = vld [vmem:[#allocation5 + $0x400] sm:$0xff]
    %v252 = vld [vmem:[#allocation5 + $0x408] sm:$0xff]
    %v253 = vld [vmem:[#allocation5 + $0x410] sm:$0xff]
    %v254 = vld [vmem:[#allocation5 + $0x418] sm:$0xff]
    %v255 = vld [vmem:[#allocation5 + $0x420] sm:$0xff]
    %v256 = vld [vmem:[#allocation5 + $0x428] sm:$0xff]
    %v257 = vld [vmem:[#allocation5 + $0x430] sm:$0xff]
    %v258 = vld [vmem:[#allocation5 + $0x438] sm:$0xff]
    %v259 = vld [vmem:[#allocation5 + $0x440] sm:$0xff]
    %v260 = vld [vmem:[#allocation5 + $0x448] sm:$0xff]
    %v261 = vld [vmem:[#allocation5 + $0x450] sm:$0xff]
    %v262 = vld [vmem:[#allocation5 + $0x458] sm:$0xff]
    %v263 = vld [vmem:[#allocation5 + $0x460] sm:$0xff]
    %v264 = vld [vmem:[#allocation5 + $0x468] sm:$0xff]
    %v265 = vld [vmem:[#allocation5 + $0x470] sm:$0xff]
    %v266 = vld [vmem:[#allocation5 + $0x478] sm:$0xff]
    %v267 = vld [vmem:[#allocation5 + $0x480] sm:$0xff]
    %v268 = vld [vmem:[#allocation5 + $0x488] sm:$0xff]
    %v269 = vld [vmem:[#allocation5 + $0x490] sm:$0xff]
    %v270 = vld [vmem:[#allocation5 + $0x498] sm:$0xff]
    %v271 = vld [vmem:[#allocation5 + $0x4a0] sm:$0xff]
    %v272 = vld [vmem:[#allocation5 + $0x4a8] sm:$0xff]
    %v273 = vld [vmem:[#allocation5 + $0x4b0] sm:$0xff]
    %v274 = vld [vmem:[#allocation5 + $0x4b8] sm:$0xff]
    %v275 = vld [vmem:[#allocation5 + $0x4c0] sm:$0xff]
    %v276 = vld [vmem:[#allocation5 + $0x4c8] sm:$0xff]
    %v277 = vld [vmem:[#allocation5 + $0x4d0] sm:$0xff]
    %v278 = vld [vmem:[#allocation5 + $0x4d8] sm:$0xff]
    %v279 = vld [vmem:[#allocation5 + $0x4e0] sm:$0xff]
    %v280 = vld [vmem:[#allocation5 + $0x4e8] sm:$0xff]
    %v281 = vld [vmem:[#allocation5 + $0x4f0] sm:$0xff]
    %v282 = vld [vmem:[#allocation5 + $0x4f8] sm:$0xff]
    %v283 = vld [vmem:[#allocation5 + $0x500] sm:$0xff]
    %v284 = vld [vmem:[#allocation5 + $0x508] sm:$0xff]
    %v285 = vld [vmem:[#allocation5 + $0x510] sm:$0xff]
    %v286 = vld [vmem:[#allocation5 + $0x518] sm:$0xff]
    %v287 = vld [vmem:[#allocation5 + $0x520] sm:$0xff]
    %v288 = vld [vmem:[#allocation5 + $0x528] sm:$0xff]
    %v289 = vld [vmem:[#allocation5 + $0x530] sm:$0xff]
    %v290 = vld [vmem:[#allocation5 + $0x538] sm:$0xff]
    %v291 = vld [vmem:[#allocation5 + $0x540] sm:$0xff]
    %v292 = vld [vmem:[#allocation5 + $0x548] sm:$0xff]
    %v293 = vld [vmem:[#allocation5 + $0x550] sm:$0xff]
    %v294 = vld [vmem:[#allocation5 + $0x558] sm:$0xff]
    %v295 = vld [vmem:[#allocation5 + $0x560] sm:$0xff]
    %v296 = vld [vmem:[#allocation5 + $0x568] sm:$0xff]
    %v297 = vld [vmem:[#allocation5 + $0x570] sm:$0xff]
    %v298 = vld [vmem:[#allocation5 + $0x578] sm:$0xff]
    %v299 = vld [vmem:[#allocation5 + $0x580] sm:$0xff]
    %v300 = vld [vmem:[#allocation5 + $0x588] sm:$0xff]
    %v301 = vld [vmem:[#allocation5 + $0x590] sm:$0xff]
    %v302 = vld [vmem:[#allocation5 + $0x598] sm:$0xff]
    %v303 = vld [vmem:[#allocation5 + $0x5a0] sm:$0xff]
    %v304 = vld [vmem:[#allocation5 + $0x5a8] sm:$0xff]
    %v305 = vld [vmem:[#allocation5 + $0x5b0] sm:$0xff]
    %v306 = vld [vmem:[#allocation5 + $0x5b8] sm:$0xff]
    %v307 = vld [vmem:[#allocation5 + $0x5c0] sm:$0xff]
    %v308 = vld [vmem:[#allocation5 + $0x5c8] sm:$0xff]
    %v309 = vld [vmem:[#allocation5 + $0x5d0] sm:$0xff]
    %v310 = vld [vmem:[#allocation5 + $0x5d8] sm:$0xff]
    %v311 = vld [vmem:[#allocation5 + $0x5e0] sm:$0xff]
    %v312 = vld [vmem:[#allocation5 + $0x5e8] sm:$0xff]
    %v313 = vld [vmem:[#allocation5 + $0x5f0] sm:$0xff]
    %v314 = vld [vmem:[#allocation5 + $0x5f8] sm:$0xff]
    %v315 = vld [vmem:[#allocation5 + $0x600] sm:$0xff]
    %v316 = vld [vmem:[#allocation5 + $0x608] sm:$0xff]
    %v317 = vld [vmem:[#allocation5 + $0x610] sm:$0xff]
    %v318 = vld [vmem:[#allocation5 + $0x618] sm:$0xff]
    %v319 = vld [vmem:[#allocation5 + $0x620] sm:$0xff]
    %v320 = vld [vmem:[#allocation5 + $0x628] sm:$0xff]
    %v321 = vld [vmem:[#allocation5 + $0x630] sm:$0xff]
    %v322 = vld [vmem:[#allocation5 + $0x638] sm:$0xff]
    %v323 = vld [vmem:[#allocation5 + $0x640] sm:$0xff]
    %v324 = vld [vmem:[#allocation5 + $0x648] sm:$0xff]
    %v325 = vld [vmem:[#allocation5 + $0x650] sm:$0xff]
    %v326 = vld [vmem:[#allocation5 + $0x658] sm:$0xff]
    %v327 = vld [vmem:[#allocation5 + $0x660] sm:$0xff]
    %v328 = vld [vmem:[#allocation5 + $0x668] sm:$0xff]
    %v329 = vld [vmem:[#allocation5 + $0x670] sm:$0xff]
    %v330 = vld [vmem:[#allocation5 + $0x678] sm:$0xff]
    %v331 = vld [vmem:[#allocation5 + $0x680] sm:$0xff]
    %v332 = vld [vmem:[#allocation5 + $0x688] sm:$0xff]
    %v333 = vld [vmem:[#allocation5 + $0x690] sm:$0xff]
    %v334 = vld [vmem:[#allocation5 + $0x698] sm:$0xff]
    %v335 = vld [vmem:[#allocation5 + $0x6a0] sm:$0xff]
    %v336 = vld [vmem:[#allocation5 + $0x6a8] sm:$0xff]
    %v337 = vld [vmem:[#allocation5 + $0x6b0] sm:$0xff]
    %v338 = vld [vmem:[#allocation5 + $0x6b8] sm:$0xff]
    %v339 = vld [vmem:[#allocation5 + $0x6c0] sm:$0xff]
    %v340 = vld [vmem:[#allocation5 + $0x6c8] sm:$0xff]
    %v341 = vld [vmem:[#allocation5 + $0x6d0] sm:$0xff]
    %v342 = vld [vmem:[#allocation5 + $0x6d8] sm:$0xff]
    %v343 = vld [vmem:[#allocation5 + $0x6e0] sm:$0xff]
    %v344 = vld [vmem:[#allocation5 + $0x6e8] sm:$0xff]
    %v345 = vld [vmem:[#allocation5 + $0x6f0] sm:$0xff]
    %v346 = vld [vmem:[#allocation5 + $0x6f8] sm:$0xff]
    %v347 = vld [vmem:[#allocation5 + $0x700] sm:$0xff]
    %v348 = vld [vmem:[#allocation5 + $0x708] sm:$0xff]
    %v349 = vld [vmem:[#allocation5 + $0x710] sm:$0xff]
    %v350 = vld [vmem:[#allocation5 + $0x718] sm:$0xff]
    %v351 = vld [vmem:[#allocation5 + $0x720] sm:$0xff]
    %v352 = vld [vmem:[#allocation5 + $0x728] sm:$0xff]
    %v353 = vld [vmem:[#allocation5 + $0x730] sm:$0xff]
    %v354 = vld [vmem:[#allocation5 + $0x738] sm:$0xff]
    %v355 = vld [vmem:[#allocation5 + $0x740] sm:$0xff]
    %v356 = vld [vmem:[#allocation5 + $0x748] sm:$0xff]
    %v357 = vld [vmem:[#allocation5 + $0x750] sm:$0xff]
    %v358 = vld [vmem:[#allocation5 + $0x758] sm:$0xff]
    %v359 = vld [vmem:[#allocation5 + $0x760] sm:$0xff]
    %v360 = vld [vmem:[#allocation5 + $0x768] sm:$0xff]
    %v361 = vld [vmem:[#allocation5 + $0x770] sm:$0xff]
    %v362 = vld [vmem:[#allocation5 + $0x778] sm:$0xff]
    %v363 = vld [vmem:[#allocation5 + $0x780] sm:$0xff]
    %v364 = vld [vmem:[#allocation5 + $0x788] sm:$0xff]
    %v365 = vld [vmem:[#allocation5 + $0x790] sm:$0xff]
    %v366 = vld [vmem:[#allocation5 + $0x798] sm:$0xff]
    %v367 = vld [vmem:[#allocation5 + $0x7a0] sm:$0xff]
    %v368 = vld [vmem:[#allocation5 + $0x7a8] sm:$0xff]
    %v369 = vld [vmem:[#allocation5 + $0x7b0] sm:$0xff]
    %v370 = vld [vmem:[#allocation5 + $0x7b8] sm:$0xff]
    %v371 = vld [vmem:[#allocation5 + $0x7c0] sm:$0xff]
    %v372 = vld [vmem:[#allocation5 + $0x7c8] sm:$0xff]
    %v373 = vld [vmem:[#allocation5 + $0x7d0] sm:$0xff]
    %v374 = vld [vmem:[#allocation5 + $0x7d8] sm:$0xff]
    %v375 = vld [vmem:[#allocation5 + $0x7e0] sm:$0xff]
    %v376 = vld [vmem:[#allocation5 + $0x7e8] sm:$0xff]
    %v377 = vld [vmem:[#allocation5 + $0x7f0] sm:$0xff]
    %v378 = vld [vmem:[#allocation5 + $0x7f8] sm:$0xff]
    %v379 = vld [vmem:[#allocation5 + $0x800] sm:$0xff]
    %v380 = vld [vmem:[#allocation5 + $0x808] sm:$0xff]
    %v381 = vld [vmem:[#allocation5 + $0x810] sm:$0xff]
    %v382 = vld [vmem:[#allocation5 + $0x818] sm:$0xff]
    %v383 = vld [vmem:[#allocation5 + $0x820] sm:$0xff]
    %v384 = vld [vmem:[#allocation5 + $0x828] sm:$0xff]
    %v385 = vld [vmem:[#allocation5 + $0x830] sm:$0xff]
    %v386 = vld [vmem:[#allocation5 + $0x838] sm:$0xff]
    %v387 = vld [vmem:[#allocation5 + $0x840] sm:$0xff]
    %v388 = vld [vmem:[#allocation5 + $0x848] sm:$0xff]
    %v389 = vld [vmem:[#allocation5 + $0x850] sm:$0xff]
    %v390 = vld [vmem:[#allocation5 + $0x858] sm:$0xff]
    %v391 = vld [vmem:[#allocation5 + $0x860] sm:$0xff]
    %v392 = vld [vmem:[#allocation5 + $0x868] sm:$0xff]
    %v393 = vld [vmem:[#allocation5 + $0x870] sm:$0xff]
    %v394 = vld [vmem:[#allocation5 + $0x878] sm:$0xff]
    %v395 = vld [vmem:[#allocation5 + $0x880] sm:$0xff]
    %v396 = vld [vmem:[#allocation5 + $0x888] sm:$0xff]
    %v397 = vld [vmem:[#allocation5 + $0x890] sm:$0xff]
    %v398 = vld [vmem:[#allocation5 + $0x898] sm:$0xff]
    %v399 = vld [vmem:[#allocation5 + $0x8a0] sm:$0xff]
    %v400 = vld [vmem:[#allocation5 + $0x8a8] sm:$0xff]
    %v401 = vld [vmem:[#allocation5 + $0x8b0] sm:$0xff]
    %v402 = vld [vmem:[#allocation5 + $0x8b8] sm:$0xff]
    %v403 = vld [vmem:[#allocation5 + $0x8c0] sm:$0xff]
    %v404 = vld [vmem:[#allocation5 + $0x8c8] sm:$0xff]
    %v405 = vld [vmem:[#allocation5 + $0x8d0] sm:$0xff]
    %v406 = vld [vmem:[#allocation5 + $0x8d8] sm:$0xff]
    %v407 = vld [vmem:[#allocation5 + $0x8e0] sm:$0xff]
    %v408 = vld [vmem:[#allocation5 + $0x8e8] sm:$0xff]
    %v409 = vld [vmem:[#allocation5 + $0x8f0] sm:$0xff]
    %v410 = vld [vmem:[#allocation5 + $0x8f8] sm:$0xff]
    %v411 = vld [vmem:[#allocation5 + $0x900] sm:$0xff]
    %v412 = vld [vmem:[#allocation5 + $0x908] sm:$0xff]
    %v413 = vld [vmem:[#allocation5 + $0x910] sm:$0xff]
    %v414 = vld [vmem:[#allocation5 + $0x918] sm:$0xff]
    %v415 = vld [vmem:[#allocation5 + $0x920] sm:$0xff]
    %v416 = vld [vmem:[#allocation5 + $0x928] sm:$0xff]
    %v417 = vld [vmem:[#allocation5 + $0x930] sm:$0xff]
    %v418 = vld [vmem:[#allocation5 + $0x938] sm:$0xff]
    %v419 = vld [vmem:[#allocation5 + $0x940] sm:$0xff]
    %v420 = vld [vmem:[#allocation5 + $0x948] sm:$0xff]
    %v421 = vld [vmem:[#allocation5 + $0x950] sm:$0xff]
    %v422 = vld [vmem:[#allocation5 + $0x958] sm:$0xff]
    %v423 = vld [vmem:[#allocation5 + $0x960] sm:$0xff]
    %v424 = vld [vmem:[#allocation5 + $0x968] sm:$0xff]
    %v425 = vld [vmem:[#allocation5 + $0x970] sm:$0xff]
    %v426 = vld [vmem:[#allocation5 + $0x978] sm:$0xff]
    %v427 = vld [vmem:[#allocation5 + $0x980] sm:$0xff]
    %v428 = vld [vmem:[#allocation5 + $0x988] sm:$0xff]
    %v429 = vld [vmem:[#allocation5 + $0x990] sm:$0xff]
    %v430 = vld [vmem:[#allocation5 + $0x998] sm:$0xff]
    %v431 = vld [vmem:[#allocation5 + $0x9a0] sm:$0xff]
    %v432 = vld [vmem:[#allocation5 + $0x9a8] sm:$0xff]
    %v433 = vld [vmem:[#allocation5 + $0x9b0] sm:$0xff]
    %v434 = vld [vmem:[#allocation5 + $0x9b8] sm:$0xff]
    %v435 = vld [vmem:[#allocation5 + $0x9c0] sm:$0xff]
    %v436 = vld [vmem:[#allocation5 + $0x9c8] sm:$0xff]
    %v437 = vld [vmem:[#allocation5 + $0x9d0] sm:$0xff]
    %v438 = vld [vmem:[#allocation5 + $0x9d8] sm:$0xff]
    %v439 = vld [vmem:[#allocation5 + $0x9e0] sm:$0xff]
    %v440 = vld [vmem:[#allocation5 + $0x9e8] sm:$0xff]
    %v441 = vld [vmem:[#allocation5 + $0x9f0] sm:$0xff]
    %v442 = vld [vmem:[#allocation5 + $0x9f8] sm:$0xff]
    %v443 = vld [vmem:[#allocation5 + $0xa00] sm:$0xff]
    %v444 = vld [vmem:[#allocation5 + $0xa08] sm:$0xff]
    %v445 = vld [vmem:[#allocation5 + $0xa10] sm:$0xff]
    %v446 = vld [vmem:[#allocation5 + $0xa18] sm:$0xff]
    %v447 = vld [vmem:[#allocation5 + $0xa20] sm:$0xff]
    %v448 = vld [vmem:[#allocation5 + $0xa28] sm:$0xff]
    %v449 = vld [vmem:[#allocation5 + $0xa30] sm:$0xff]
    %v450 = vld [vmem:[#allocation5 + $0xa38] sm:$0xff]
    %v451 = vld [vmem:[#allocation5 + $0xa40] sm:$0xff]
    %v452 = vld [vmem:[#allocation5 + $0xa48] sm:$0xff]
    %v453 = vld [vmem:[#allocation5 + $0xa50] sm:$0xff]
    %v454 = vld [vmem:[#allocation5 + $0xa58] sm:$0xff]
    %v455 = vld [vmem:[#allocation5 + $0xa60] sm:$0xff]
    %v456 = vld [vmem:[#allocation5 + $0xa68] sm:$0xff]
    %v457 = vld [vmem:[#allocation5 + $0xa70] sm:$0xff]
    %v458 = vld [vmem:[#allocation5 + $0xa78] sm:$0xff]
    %v459 = vld [vmem:[#allocation5 + $0xa80] sm:$0xff]
    %v460 = vld [vmem:[#allocation5 + $0xa88] sm:$0xff]
    %v461 = vld [vmem:[#allocation5 + $0xa90] sm:$0xff]
    %v462 = vld [vmem:[#allocation5 + $0xa98] sm:$0xff]
    %v463 = vld [vmem:[#allocation5 + $0xaa0] sm:$0xff]
    %v464 = vld [vmem:[#allocation5 + $0xaa8] sm:$0xff]
    %v465 = vld [vmem:[#allocation5 + $0xab0] sm:$0xff]
    %v466 = vld [vmem:[#allocation5 + $0xab8] sm:$0xff]
    %v467 = vld [vmem:[#allocation5 + $0xac0] sm:$0xff]
    %v468 = vld [vmem:[#allocation5 + $0xac8] sm:$0xff]
    %v469 = vld [vmem:[#allocation5 + $0xad0] sm:$0xff]
    %v470 = vld [vmem:[#allocation5 + $0xad8] sm:$0xff]
    %v471 = vld [vmem:[#allocation5 + $0xae0] sm:$0xff]
    %v472 = vld [vmem:[#allocation5 + $0xae8] sm:$0xff]
    %v473 = vld [vmem:[#allocation5 + $0xaf0] sm:$0xff]
    %v474 = vld [vmem:[#allocation5 + $0xaf8] sm:$0xff]
    %v475 = vld [vmem:[#allocation5 + $0xb00] sm:$0xff]
    %v476 = vld [vmem:[#allocation5 + $0xb08] sm:$0xff]
    %v477 = vld [vmem:[#allocation5 + $0xb10] sm:$0xff]
    %v478 = vld [vmem:[#allocation5 + $0xb18] sm:$0xff]
    %v479 = vld [vmem:[#allocation5 + $0xb20] sm:$0xff]
    %v480 = vld [vmem:[#allocation5 + $0xb28] sm:$0xff]
    %v481 = vld [vmem:[#allocation5 + $0xb30] sm:$0xff]
    %v482 = vld [vmem:[#allocation5 + $0xb38] sm:$0xff]
    %v483 = vld [vmem:[#allocation5 + $0xb40] sm:$0xff]
    %v484 = vld [vmem:[#allocation5 + $0xb48] sm:$0xff]
    %v485 = vld [vmem:[#allocation5 + $0xb50] sm:$0xff]
    %v486 = vld [vmem:[#allocation5 + $0xb58] sm:$0xff]
    %v487 = vld [vmem:[#allocation5 + $0xb60] sm:$0xff]
    %v488 = vld [vmem:[#allocation5 + $0xb68] sm:$0xff]
    %v489 = vld [vmem:[#allocation5 + $0xb70] sm:$0xff]
    %v490 = vld [vmem:[#allocation5 + $0xb78] sm:$0xff]
    %v491 = vld [vmem:[#allocation5 + $0xb80] sm:$0xff]
    %v492 = vld [vmem:[#allocation5 + $0xb88] sm:$0xff]
    %v493 = vld [vmem:[#allocation5 + $0xb90] sm:$0xff]
    %v494 = vld [vmem:[#allocation5 + $0xb98] sm:$0xff]
    %v495 = vld [vmem:[#allocation5 + $0xba0] sm:$0xff]
    %v496 = vld [vmem:[#allocation5 + $0xba8] sm:$0xff]
    %v497 = vld [vmem:[#allocation5 + $0xbb0] sm:$0xff]
    %v498 = vld [vmem:[#allocation5 + $0xbb8] sm:$0xff]
    %v499 = vld [vmem:[#allocation5 + $0xbc0] sm:$0xff]
    %v500 = vld [vmem:[#allocation5 + $0xbc8] sm:$0xff]
    %v501 = vld [vmem:[#allocation5 + $0xbd0] sm:$0xff]
    %v502 = vld [vmem:[#allocation5 + $0xbd8] sm:$0xff]
    %v503 = vld [vmem:[#allocation5 + $0xbe0] sm:$0xff]
    %v504 = vld [vmem:[#allocation5 + $0xbe8] sm:$0xff]
    %v505 = vld [vmem:[#allocation5 + $0xbf0] sm:$0xff]
    %v506 = vld [vmem:[#allocation5 + $0xbf8] sm:$0xff]
    %v507 = vld [vmem:[#allocation7] sm:$0xff]
    %v509 = vlaneseq
    %v510 = vshrl.u32 %v509, 7
    %v511 = vsub.s32 0, %v510
    %v512 = vrot.slane %v507, %v511
    %v513 = vlaneseq
    %v514 = vshrl.u32 %v513, 7
    %v515 = vsub.s32 1, %v514
    %v516 = vrot.slane %v507, %v515
    %v517 = vlaneseq
    %v518 = vshrl.u32 %v517, 7
    %v519 = vsub.s32 2, %v518
    %v520 = vrot.slane %v507, %v519
    %v521 = vlaneseq
    %v522 = vshrl.u32 %v521, 7
    %v523 = vsub.s32 3, %v522
    %v524 = vrot.slane %v507, %v523
    %v525 = vlaneseq
    %v526 = vshrl.u32 %v525, 7
    %v527 = vsub.s32 4, %v526
    %v528 = vrot.slane %v507, %v527
    %v529 = vlaneseq
    %v530 = vshrl.u32 %v529, 7
    %v531 = vsub.s32 5, %v530
    %v532 = vrot.slane %v507, %v531
    %v533 = vlaneseq
    %v534 = vshrl.u32 %v533, 7
    %v535 = vsub.s32 6, %v534
    %v536 = vrot.slane %v507, %v535
    %v537 = vlaneseq
    %v538 = vshrl.u32 %v537, 7
    %v539 = vsub.s32 7, %v538
    %v540 = vrot.slane %v507, %v539
    %v555 = vunpack.c.l.b16 %v117
    %v556 = vunpack.c.h.b16 %v117
    %v557 = vunpack.c.l.b16 %v118
    %v558 = vunpack.c.h.b16 %v118
    %v559 = vunpack.c.l.b16 %v119
    %v560 = vunpack.c.h.b16 %v119
    %v561 = vunpack.c.l.b16 %v120
    %v562 = vunpack.c.h.b16 %v120
    %v563 = vunpack.c.l.b16 %v121
    %v564 = vunpack.c.h.b16 %v121
    %v565 = vunpack.c.l.b16 %v122
    %v566 = vunpack.c.h.b16 %v122
    %v567 = vpack.c.b16 %v561, %v555
    %v568 = vpack.c.b16 %v562, %v556
    %v569 = vpack.c.b16 %v563, %v557
    %v570 = vpack.c.b16 %v564, %v558
    %v571 = vpack.c.b16 %v565, %v559
    %v572 = vpack.c.b16 %v566, %v560
    %v963 = vunpack.c.l.b16 %v123
    %v964 = vunpack.c.h.b16 %v123
    %v965 = vunpack.c.l.b16 %v124
    %v966 = vunpack.c.h.b16 %v124
    %v967 = vunpack.c.l.b16 %v125
    %v968 = vunpack.c.h.b16 %v125
    %v969 = vunpack.c.l.b16 %v126
    %v970 = vunpack.c.h.b16 %v126
    %v971 = vunpack.c.l.b16 %v127
    %v972 = vunpack.c.h.b16 %v127
    %v973 = vunpack.c.l.b16 %v128
    %v974 = vunpack.c.h.b16 %v128
    %v975 = vunpack.c.l.b16 %v129
    %v976 = vunpack.c.h.b16 %v129
    %v977 = vunpack.c.l.b16 %v130
    %v978 = vunpack.c.h.b16 %v130
    %v979 = vunpack.c.l.b16 %v131
    %v980 = vunpack.c.h.b16 %v131
    %v981 = vunpack.c.l.b16 %v132
    %v982 = vunpack.c.h.b16 %v132
    %v983 = vunpack.c.l.b16 %v133
    %v984 = vunpack.c.h.b16 %v133
    %v985 = vunpack.c.l.b16 %v134
    %v986 = vunpack.c.h.b16 %v134
    %v987 = vunpack.c.l.b16 %v135
    %v988 = vunpack.c.h.b16 %v135
    %v989 = vunpack.c.l.b16 %v136
    %v990 = vunpack.c.h.b16 %v136
    %v991 = vunpack.c.l.b16 %v137
    %v992 = vunpack.c.h.b16 %v137
    %v993 = vunpack.c.l.b16 %v138
    %v994 = vunpack.c.h.b16 %v138
    %v995 = vunpack.c.l.b16 %v139
    %v996 = vunpack.c.h.b16 %v139
    %v997 = vunpack.c.l.b16 %v140
    %v998 = vunpack.c.h.b16 %v140
    %v999 = vunpack.c.l.b16 %v141
    %v1000 = vunpack.c.h.b16 %v141
    %v1001 = vunpack.c.l.b16 %v142
    %v1002 = vunpack.c.h.b16 %v142
    %v1003 = vunpack.c.l.b16 %v143
    %v1004 = vunpack.c.h.b16 %v143
    %v1005 = vunpack.c.l.b16 %v144
    %v1006 = vunpack.c.h.b16 %v144
    %v1007 = vunpack.c.l.b16 %v145
    %v1008 = vunpack.c.h.b16 %v145
    %v1009 = vunpack.c.l.b16 %v146
    %v1010 = vunpack.c.h.b16 %v146
    %v1011 = vunpack.c.l.b16 %v147
    %v1012 = vunpack.c.h.b16 %v147
    %v1013 = vunpack.c.l.b16 %v148
    %v1014 = vunpack.c.h.b16 %v148
    %v1015 = vunpack.c.l.b16 %v149
    %v1016 = vunpack.c.h.b16 %v149
    %v1017 = vunpack.c.l.b16 %v150
    %v1018 = vunpack.c.h.b16 %v150
    %v1019 = vunpack.c.l.b16 %v151
    %v1020 = vunpack.c.h.b16 %v151
    %v1021 = vunpack.c.l.b16 %v152
    %v1022 = vunpack.c.h.b16 %v152
    %v1023 = vunpack.c.l.b16 %v153
    %v1024 = vunpack.c.h.b16 %v153
    %v1025 = vunpack.c.l.b16 %v154
    %v1026 = vunpack.c.h.b16 %v154
    %v1027 = vunpack.c.l.b16 %v155
    %v1028 = vunpack.c.h.b16 %v155
    %v1029 = vunpack.c.l.b16 %v156
    %v1030 = vunpack.c.h.b16 %v156
    %v1031 = vunpack.c.l.b16 %v157
    %v1032 = vunpack.c.h.b16 %v157
    %v1033 = vunpack.c.l.b16 %v158
    %v1034 = vunpack.c.h.b16 %v158
    %v1035 = vunpack.c.l.b16 %v159
    %v1036 = vunpack.c.h.b16 %v159
    %v1037 = vunpack.c.l.b16 %v160
    %v1038 = vunpack.c.h.b16 %v160
    %v1039 = vunpack.c.l.b16 %v161
    %v1040 = vunpack.c.h.b16 %v161
    %v1041 = vunpack.c.l.b16 %v162
    %v1042 = vunpack.c.h.b16 %v162
    %v1043 = vunpack.c.l.b16 %v163
    %v1044 = vunpack.c.h.b16 %v163
    %v1045 = vunpack.c.l.b16 %v164
    %v1046 = vunpack.c.h.b16 %v164
    %v1047 = vunpack.c.l.b16 %v165
    %v1048 = vunpack.c.h.b16 %v165
    %v1049 = vunpack.c.l.b16 %v166
    %v1050 = vunpack.c.h.b16 %v166
    %v1051 = vunpack.c.l.b16 %v167
    %v1052 = vunpack.c.h.b16 %v167
    %v1053 = vunpack.c.l.b16 %v168
    %v1054 = vunpack.c.h.b16 %v168
    %v1055 = vunpack.c.l.b16 %v169
    %v1056 = vunpack.c.h.b16 %v169
    %v1057 = vunpack.c.l.b16 %v170
    %v1058 = vunpack.c.h.b16 %v170
    %v1059 = vunpack.c.l.b16 %v171
    %v1060 = vunpack.c.h.b16 %v171
    %v1061 = vunpack.c.l.b16 %v172
    %v1062 = vunpack.c.h.b16 %v172
    %v1063 = vunpack.c.l.b16 %v173
    %v1064 = vunpack.c.h.b16 %v173
    %v1065 = vunpack.c.l.b16 %v174
    %v1066 = vunpack.c.h.b16 %v174
    %v1067 = vunpack.c.l.b16 %v175
    %v1068 = vunpack.c.h.b16 %v175
    %v1069 = vunpack.c.l.b16 %v176
    %v1070 = vunpack.c.h.b16 %v176
    %v1071 = vunpack.c.l.b16 %v177
    %v1072 = vunpack.c.h.b16 %v177
    %v1073 = vunpack.c.l.b16 %v178
    %v1074 = vunpack.c.h.b16 %v178
    %v1075 = vunpack.c.l.b16 %v179
    %v1076 = vunpack.c.h.b16 %v179
    %v1077 = vunpack.c.l.b16 %v180
    %v1078 = vunpack.c.h.b16 %v180
    %v1079 = vunpack.c.l.b16 %v181
    %v1080 = vunpack.c.h.b16 %v181
    %v1081 = vunpack.c.l.b16 %v182
    %v1082 = vunpack.c.h.b16 %v182
    %v1083 = vunpack.c.l.b16 %v183
    %v1084 = vunpack.c.h.b16 %v183
    %v1085 = vunpack.c.l.b16 %v184
    %v1086 = vunpack.c.h.b16 %v184
    %v1087 = vunpack.c.l.b16 %v185
    %v1088 = vunpack.c.h.b16 %v185
    %v1089 = vunpack.c.l.b16 %v186
    %v1090 = vunpack.c.h.b16 %v186
    %v1091 = vunpack.c.l.b16 %v187
    %v1092 = vunpack.c.h.b16 %v187
    %v1093 = vunpack.c.l.b16 %v188
    %v1094 = vunpack.c.h.b16 %v188
    %v1095 = vunpack.c.l.b16 %v189
    %v1096 = vunpack.c.h.b16 %v189
    %v1097 = vunpack.c.l.b16 %v190
    %v1098 = vunpack.c.h.b16 %v190
    %v1099 = vunpack.c.l.b16 %v191
    %v1100 = vunpack.c.h.b16 %v191
    %v1101 = vunpack.c.l.b16 %v192
    %v1102 = vunpack.c.h.b16 %v192
    %v1103 = vunpack.c.l.b16 %v193
    %v1104 = vunpack.c.h.b16 %v193
    %v1105 = vunpack.c.l.b16 %v194
    %v1106 = vunpack.c.h.b16 %v194
    %v1107 = vunpack.c.l.b16 %v195
    %v1108 = vunpack.c.h.b16 %v195
    %v1109 = vunpack.c.l.b16 %v196
    %v1110 = vunpack.c.h.b16 %v196
    %v1111 = vunpack.c.l.b16 %v197
    %v1112 = vunpack.c.h.b16 %v197
    %v1113 = vunpack.c.l.b16 %v198
    %v1114 = vunpack.c.h.b16 %v198
    %v1115 = vunpack.c.l.b16 %v199
    %v1116 = vunpack.c.h.b16 %v199
    %v1117 = vunpack.c.l.b16 %v200
    %v1118 = vunpack.c.h.b16 %v200
    %v1119 = vunpack.c.l.b16 %v201
    %v1120 = vunpack.c.h.b16 %v201
    %v1121 = vunpack.c.l.b16 %v202
    %v1122 = vunpack.c.h.b16 %v202
    %v1123 = vunpack.c.l.b16 %v203
    %v1124 = vunpack.c.h.b16 %v203
    %v1125 = vunpack.c.l.b16 %v204
    %v1126 = vunpack.c.h.b16 %v204
    %v1127 = vunpack.c.l.b16 %v205
    %v1128 = vunpack.c.h.b16 %v205
    %v1129 = vunpack.c.l.b16 %v206
    %v1130 = vunpack.c.h.b16 %v206
    %v1131 = vunpack.c.l.b16 %v207
    %v1132 = vunpack.c.h.b16 %v207
    %v1133 = vunpack.c.l.b16 %v208
    %v1134 = vunpack.c.h.b16 %v208
    %v1135 = vunpack.c.l.b16 %v209
    %v1136 = vunpack.c.h.b16 %v209
    %v1137 = vunpack.c.l.b16 %v210
    %v1138 = vunpack.c.h.b16 %v210
    %v1139 = vunpack.c.l.b16 %v211
    %v1140 = vunpack.c.h.b16 %v211
    %v1141 = vunpack.c.l.b16 %v212
    %v1142 = vunpack.c.h.b16 %v212
    %v1143 = vunpack.c.l.b16 %v213
    %v1144 = vunpack.c.h.b16 %v213
    %v1145 = vunpack.c.l.b16 %v214
    %v1146 = vunpack.c.h.b16 %v214
    %v1147 = vunpack.c.l.b16 %v215
    %v1148 = vunpack.c.h.b16 %v215
    %v1149 = vunpack.c.l.b16 %v216
    %v1150 = vunpack.c.h.b16 %v216
    %v1151 = vunpack.c.l.b16 %v217
    %v1152 = vunpack.c.h.b16 %v217
    %v1153 = vunpack.c.l.b16 %v218
    %v1154 = vunpack.c.h.b16 %v218
    %v1155 = vunpack.c.l.b16 %v219
    %v1156 = vunpack.c.h.b16 %v219
    %v1157 = vunpack.c.l.b16 %v220
    %v1158 = vunpack.c.h.b16 %v220
    %v1159 = vunpack.c.l.b16 %v221
    %v1160 = vunpack.c.h.b16 %v221
    %v1161 = vunpack.c.l.b16 %v222
    %v1162 = vunpack.c.h.b16 %v222
    %v1163 = vunpack.c.l.b16 %v223
    %v1164 = vunpack.c.h.b16 %v223
    %v1165 = vunpack.c.l.b16 %v224
    %v1166 = vunpack.c.h.b16 %v224
    %v1167 = vunpack.c.l.b16 %v225
    %v1168 = vunpack.c.h.b16 %v225
    %v1169 = vunpack.c.l.b16 %v226
    %v1170 = vunpack.c.h.b16 %v226
    %v1171 = vunpack.c.l.b16 %v227
    %v1172 = vunpack.c.h.b16 %v227
    %v1173 = vunpack.c.l.b16 %v228
    %v1174 = vunpack.c.h.b16 %v228
    %v1175 = vunpack.c.l.b16 %v229
    %v1176 = vunpack.c.h.b16 %v229
    %v1177 = vunpack.c.l.b16 %v230
    %v1178 = vunpack.c.h.b16 %v230
    %v1179 = vunpack.c.l.b16 %v231
    %v1180 = vunpack.c.h.b16 %v231
    %v1181 = vunpack.c.l.b16 %v232
    %v1182 = vunpack.c.h.b16 %v232
    %v1183 = vunpack.c.l.b16 %v233
    %v1184 = vunpack.c.h.b16 %v233
    %v1185 = vunpack.c.l.b16 %v234
    %v1186 = vunpack.c.h.b16 %v234
    %v1187 = vunpack.c.l.b16 %v235
    %v1188 = vunpack.c.h.b16 %v235
    %v1189 = vunpack.c.l.b16 %v236
    %v1190 = vunpack.c.h.b16 %v236
    %v1191 = vunpack.c.l.b16 %v237
    %v1192 = vunpack.c.h.b16 %v237
    %v1193 = vunpack.c.l.b16 %v238
    %v1194 = vunpack.c.h.b16 %v238
    %v1195 = vunpack.c.l.b16 %v239
    %v1196 = vunpack.c.h.b16 %v239
    %v1197 = vunpack.c.l.b16 %v240
    %v1198 = vunpack.c.h.b16 %v240
    %v1199 = vunpack.c.l.b16 %v241
    %v1200 = vunpack.c.h.b16 %v241
    %v1201 = vunpack.c.l.b16 %v242
    %v1202 = vunpack.c.h.b16 %v242
    %v1203 = vunpack.c.l.b16 %v243
    %v1204 = vunpack.c.h.b16 %v243
    %v1205 = vunpack.c.l.b16 %v244
    %v1206 = vunpack.c.h.b16 %v244
    %v1207 = vunpack.c.l.b16 %v245
    %v1208 = vunpack.c.h.b16 %v245
    %v1209 = vunpack.c.l.b16 %v246
    %v1210 = vunpack.c.h.b16 %v246
    %v1211 = vunpack.c.l.b16 %v247
    %v1212 = vunpack.c.h.b16 %v247
    %v1213 = vunpack.c.l.b16 %v248
    %v1214 = vunpack.c.h.b16 %v248
    %v1215 = vunpack.c.l.b16 %v249
    %v1216 = vunpack.c.h.b16 %v249
    %v1217 = vunpack.c.l.b16 %v250
    %v1218 = vunpack.c.h.b16 %v250
    %v1219 = vunpack.c.l.b16 %v251
    %v1220 = vunpack.c.h.b16 %v251
    %v1221 = vunpack.c.l.b16 %v252
    %v1222 = vunpack.c.h.b16 %v252
    %v1223 = vunpack.c.l.b16 %v253
    %v1224 = vunpack.c.h.b16 %v253
    %v1225 = vunpack.c.l.b16 %v254
    %v1226 = vunpack.c.h.b16 %v254
    %v1227 = vunpack.c.l.b16 %v255
    %v1228 = vunpack.c.h.b16 %v255
    %v1229 = vunpack.c.l.b16 %v256
    %v1230 = vunpack.c.h.b16 %v256
    %v1231 = vunpack.c.l.b16 %v257
    %v1232 = vunpack.c.h.b16 %v257
    %v1233 = vunpack.c.l.b16 %v258
    %v1234 = vunpack.c.h.b16 %v258
    %v1235 = vunpack.c.l.b16 %v259
    %v1236 = vunpack.c.h.b16 %v259
    %v1237 = vunpack.c.l.b16 %v260
    %v1238 = vunpack.c.h.b16 %v260
    %v1239 = vunpack.c.l.b16 %v261
    %v1240 = vunpack.c.h.b16 %v261
    %v1241 = vunpack.c.l.b16 %v262
    %v1242 = vunpack.c.h.b16 %v262
    %v1243 = vunpack.c.l.b16 %v263
    %v1244 = vunpack.c.h.b16 %v263
    %v1245 = vunpack.c.l.b16 %v264
    %v1246 = vunpack.c.h.b16 %v264
    %v1247 = vunpack.c.l.b16 %v265
    %v1248 = vunpack.c.h.b16 %v265
    %v1249 = vunpack.c.l.b16 %v266
    %v1250 = vunpack.c.h.b16 %v266
    %v1251 = vunpack.c.l.b16 %v267
    %v1252 = vunpack.c.h.b16 %v267
    %v1253 = vunpack.c.l.b16 %v268
    %v1254 = vunpack.c.h.b16 %v268
    %v1255 = vunpack.c.l.b16 %v269
    %v1256 = vunpack.c.h.b16 %v269
    %v1257 = vunpack.c.l.b16 %v270
    %v1258 = vunpack.c.h.b16 %v270
    %v1259 = vunpack.c.l.b16 %v271
    %v1260 = vunpack.c.h.b16 %v271
    %v1261 = vunpack.c.l.b16 %v272
    %v1262 = vunpack.c.h.b16 %v272
    %v1263 = vunpack.c.l.b16 %v273
    %v1264 = vunpack.c.h.b16 %v273
    %v1265 = vunpack.c.l.b16 %v274
    %v1266 = vunpack.c.h.b16 %v274
    %v1267 = vunpack.c.l.b16 %v275
    %v1268 = vunpack.c.h.b16 %v275
    %v1269 = vunpack.c.l.b16 %v276
    %v1270 = vunpack.c.h.b16 %v276
    %v1271 = vunpack.c.l.b16 %v277
    %v1272 = vunpack.c.h.b16 %v277
    %v1273 = vunpack.c.l.b16 %v278
    %v1274 = vunpack.c.h.b16 %v278
    %v1275 = vunpack.c.l.b16 %v279
    %v1276 = vunpack.c.h.b16 %v279
    %v1277 = vunpack.c.l.b16 %v280
    %v1278 = vunpack.c.h.b16 %v280
    %v1279 = vunpack.c.l.b16 %v281
    %v1280 = vunpack.c.h.b16 %v281
    %v1281 = vunpack.c.l.b16 %v282
    %v1282 = vunpack.c.h.b16 %v282
    %v1283 = vunpack.c.l.b16 %v283
    %v1284 = vunpack.c.h.b16 %v283
    %v1285 = vunpack.c.l.b16 %v284
    %v1286 = vunpack.c.h.b16 %v284
    %v1287 = vunpack.c.l.b16 %v285
    %v1288 = vunpack.c.h.b16 %v285
    %v1289 = vunpack.c.l.b16 %v286
    %v1290 = vunpack.c.h.b16 %v286
    %v1291 = vunpack.c.l.b16 %v287
    %v1292 = vunpack.c.h.b16 %v287
    %v1293 = vunpack.c.l.b16 %v288
    %v1294 = vunpack.c.h.b16 %v288
    %v1295 = vunpack.c.l.b16 %v289
    %v1296 = vunpack.c.h.b16 %v289
    %v1297 = vunpack.c.l.b16 %v290
    %v1298 = vunpack.c.h.b16 %v290
    %v1299 = vunpack.c.l.b16 %v291
    %v1300 = vunpack.c.h.b16 %v291
    %v1301 = vunpack.c.l.b16 %v292
    %v1302 = vunpack.c.h.b16 %v292
    %v1303 = vunpack.c.l.b16 %v293
    %v1304 = vunpack.c.h.b16 %v293
    %v1305 = vunpack.c.l.b16 %v294
    %v1306 = vunpack.c.h.b16 %v294
    %v1307 = vunpack.c.l.b16 %v295
    %v1308 = vunpack.c.h.b16 %v295
    %v1309 = vunpack.c.l.b16 %v296
    %v1310 = vunpack.c.h.b16 %v296
    %v1311 = vunpack.c.l.b16 %v297
    %v1312 = vunpack.c.h.b16 %v297
    %v1313 = vunpack.c.l.b16 %v298
    %v1314 = vunpack.c.h.b16 %v298
    %v1315 = vunpack.c.l.b16 %v299
    %v1316 = vunpack.c.h.b16 %v299
    %v1317 = vunpack.c.l.b16 %v300
    %v1318 = vunpack.c.h.b16 %v300
    %v1319 = vunpack.c.l.b16 %v301
    %v1320 = vunpack.c.h.b16 %v301
    %v1321 = vunpack.c.l.b16 %v302
    %v1322 = vunpack.c.h.b16 %v302
    %v1323 = vunpack.c.l.b16 %v303
    %v1324 = vunpack.c.h.b16 %v303
    %v1325 = vunpack.c.l.b16 %v304
    %v1326 = vunpack.c.h.b16 %v304
    %v1327 = vunpack.c.l.b16 %v305
    %v1328 = vunpack.c.h.b16 %v305
    %v1329 = vunpack.c.l.b16 %v306
    %v1330 = vunpack.c.h.b16 %v306
    %v1331 = vunpack.c.l.b16 %v307
    %v1332 = vunpack.c.h.b16 %v307
    %v1333 = vunpack.c.l.b16 %v308
    %v1334 = vunpack.c.h.b16 %v308
    %v1335 = vunpack.c.l.b16 %v309
    %v1336 = vunpack.c.h.b16 %v309
    %v1337 = vunpack.c.l.b16 %v310
    %v1338 = vunpack.c.h.b16 %v310
    %v1339 = vunpack.c.l.b16 %v311
    %v1340 = vunpack.c.h.b16 %v311
    %v1341 = vunpack.c.l.b16 %v312
    %v1342 = vunpack.c.h.b16 %v312
    %v1343 = vunpack.c.l.b16 %v313
    %v1344 = vunpack.c.h.b16 %v313
    %v1345 = vunpack.c.l.b16 %v314
    %v1346 = vunpack.c.h.b16 %v314
    %v1347 = vunpack.c.l.b16 %v315
    %v1348 = vunpack.c.h.b16 %v315
    %v1349 = vunpack.c.l.b16 %v316
    %v1350 = vunpack.c.h.b16 %v316
    %v1351 = vunpack.c.l.b16 %v317
    %v1352 = vunpack.c.h.b16 %v317
    %v1353 = vunpack.c.l.b16 %v318
    %v1354 = vunpack.c.h.b16 %v318
    %v1355 = vunpack.c.l.b16 %v319
    %v1356 = vunpack.c.h.b16 %v319
    %v1357 = vunpack.c.l.b16 %v320
    %v1358 = vunpack.c.h.b16 %v320
    %v1359 = vunpack.c.l.b16 %v321
    %v1360 = vunpack.c.h.b16 %v321
    %v1361 = vunpack.c.l.b16 %v322
    %v1362 = vunpack.c.h.b16 %v322
    %v1363 = vunpack.c.l.b16 %v323
    %v1364 = vunpack.c.h.b16 %v323
    %v1365 = vunpack.c.l.b16 %v324
    %v1366 = vunpack.c.h.b16 %v324
    %v1367 = vunpack.c.l.b16 %v325
    %v1368 = vunpack.c.h.b16 %v325
    %v1369 = vunpack.c.l.b16 %v326
    %v1370 = vunpack.c.h.b16 %v326
    %v1371 = vunpack.c.l.b16 %v327
    %v1372 = vunpack.c.h.b16 %v327
    %v1373 = vunpack.c.l.b16 %v328
    %v1374 = vunpack.c.h.b16 %v328
    %v1375 = vunpack.c.l.b16 %v329
    %v1376 = vunpack.c.h.b16 %v329
    %v1377 = vunpack.c.l.b16 %v330
    %v1378 = vunpack.c.h.b16 %v330
    %v1379 = vunpack.c.l.b16 %v331
    %v1380 = vunpack.c.h.b16 %v331
    %v1381 = vunpack.c.l.b16 %v332
    %v1382 = vunpack.c.h.b16 %v332
    %v1383 = vunpack.c.l.b16 %v333
    %v1384 = vunpack.c.h.b16 %v333
    %v1385 = vunpack.c.l.b16 %v334
    %v1386 = vunpack.c.h.b16 %v334
    %v1387 = vunpack.c.l.b16 %v335
    %v1388 = vunpack.c.h.b16 %v335
    %v1389 = vunpack.c.l.b16 %v336
    %v1390 = vunpack.c.h.b16 %v336
    %v1391 = vunpack.c.l.b16 %v337
    %v1392 = vunpack.c.h.b16 %v337
    %v1393 = vunpack.c.l.b16 %v338
    %v1394 = vunpack.c.h.b16 %v338
    %v1395 = vunpack.c.l.b16 %v339
    %v1396 = vunpack.c.h.b16 %v339
    %v1397 = vunpack.c.l.b16 %v340
    %v1398 = vunpack.c.h.b16 %v340
    %v1399 = vunpack.c.l.b16 %v341
    %v1400 = vunpack.c.h.b16 %v341
    %v1401 = vunpack.c.l.b16 %v342
    %v1402 = vunpack.c.h.b16 %v342
    %v1403 = vunpack.c.l.b16 %v343
    %v1404 = vunpack.c.h.b16 %v343
    %v1405 = vunpack.c.l.b16 %v344
    %v1406 = vunpack.c.h.b16 %v344
    %v1407 = vunpack.c.l.b16 %v345
    %v1408 = vunpack.c.h.b16 %v345
    %v1409 = vunpack.c.l.b16 %v346
    %v1410 = vunpack.c.h.b16 %v346
    %v1411 = vunpack.c.l.b16 %v347
    %v1412 = vunpack.c.h.b16 %v347
    %v1413 = vunpack.c.l.b16 %v348
    %v1414 = vunpack.c.h.b16 %v348
    %v1415 = vunpack.c.l.b16 %v349
    %v1416 = vunpack.c.h.b16 %v349
    %v1417 = vunpack.c.l.b16 %v350
    %v1418 = vunpack.c.h.b16 %v350
    %v1419 = vunpack.c.l.b16 %v351
    %v1420 = vunpack.c.h.b16 %v351
    %v1421 = vunpack.c.l.b16 %v352
    %v1422 = vunpack.c.h.b16 %v352
    %v1423 = vunpack.c.l.b16 %v353
    %v1424 = vunpack.c.h.b16 %v353
    %v1425 = vunpack.c.l.b16 %v354
    %v1426 = vunpack.c.h.b16 %v354
    %v1427 = vunpack.c.l.b16 %v355
    %v1428 = vunpack.c.h.b16 %v355
    %v1429 = vunpack.c.l.b16 %v356
    %v1430 = vunpack.c.h.b16 %v356
    %v1431 = vunpack.c.l.b16 %v357
    %v1432 = vunpack.c.h.b16 %v357
    %v1433 = vunpack.c.l.b16 %v358
    %v1434 = vunpack.c.h.b16 %v358
    %v1435 = vunpack.c.l.b16 %v359
    %v1436 = vunpack.c.h.b16 %v359
    %v1437 = vunpack.c.l.b16 %v360
    %v1438 = vunpack.c.h.b16 %v360
    %v1439 = vunpack.c.l.b16 %v361
    %v1440 = vunpack.c.h.b16 %v361
    %v1441 = vunpack.c.l.b16 %v362
    %v1442 = vunpack.c.h.b16 %v362
    %v1443 = vunpack.c.l.b16 %v363
    %v1444 = vunpack.c.h.b16 %v363
    %v1445 = vunpack.c.l.b16 %v364
    %v1446 = vunpack.c.h.b16 %v364
    %v1447 = vunpack.c.l.b16 %v365
    %v1448 = vunpack.c.h.b16 %v365
    %v1449 = vunpack.c.l.b16 %v366
    %v1450 = vunpack.c.h.b16 %v366
    %v1451 = vunpack.c.l.b16 %v367
    %v1452 = vunpack.c.h.b16 %v367
    %v1453 = vunpack.c.l.b16 %v368
    %v1454 = vunpack.c.h.b16 %v368
    %v1455 = vunpack.c.l.b16 %v369
    %v1456 = vunpack.c.h.b16 %v369
    %v1457 = vunpack.c.l.b16 %v370
    %v1458 = vunpack.c.h.b16 %v370
    %v1459 = vunpack.c.l.b16 %v371
    %v1460 = vunpack.c.h.b16 %v371
    %v1461 = vunpack.c.l.b16 %v372
    %v1462 = vunpack.c.h.b16 %v372
    %v1463 = vunpack.c.l.b16 %v373
    %v1464 = vunpack.c.h.b16 %v373
    %v1465 = vunpack.c.l.b16 %v374
    %v1466 = vunpack.c.h.b16 %v374
    %v1467 = vunpack.c.l.b16 %v375
    %v1468 = vunpack.c.h.b16 %v375
    %v1469 = vunpack.c.l.b16 %v376
    %v1470 = vunpack.c.h.b16 %v376
    %v1471 = vunpack.c.l.b16 %v377
    %v1472 = vunpack.c.h.b16 %v377
    %v1473 = vunpack.c.l.b16 %v378
    %v1474 = vunpack.c.h.b16 %v378
    %v1475 = vunpack.c.l.b16 %v379
    %v1476 = vunpack.c.h.b16 %v379
    %v1477 = vunpack.c.l.b16 %v380
    %v1478 = vunpack.c.h.b16 %v380
    %v1479 = vunpack.c.l.b16 %v381
    %v1480 = vunpack.c.h.b16 %v381
    %v1481 = vunpack.c.l.b16 %v382
    %v1482 = vunpack.c.h.b16 %v382
    %v1483 = vunpack.c.l.b16 %v383
    %v1484 = vunpack.c.h.b16 %v383
    %v1485 = vunpack.c.l.b16 %v384
    %v1486 = vunpack.c.h.b16 %v384
    %v1487 = vunpack.c.l.b16 %v385
    %v1488 = vunpack.c.h.b16 %v385
    %v1489 = vunpack.c.l.b16 %v386
    %v1490 = vunpack.c.h.b16 %v386
    %v1491 = vunpack.c.l.b16 %v387
    %v1492 = vunpack.c.h.b16 %v387
    %v1493 = vunpack.c.l.b16 %v388
    %v1494 = vunpack.c.h.b16 %v388
    %v1495 = vunpack.c.l.b16 %v389
    %v1496 = vunpack.c.h.b16 %v389
    %v1497 = vunpack.c.l.b16 %v390
    %v1498 = vunpack.c.h.b16 %v390
    %v1499 = vunpack.c.l.b16 %v391
    %v1500 = vunpack.c.h.b16 %v391
    %v1501 = vunpack.c.l.b16 %v392
    %v1502 = vunpack.c.h.b16 %v392
    %v1503 = vunpack.c.l.b16 %v393
    %v1504 = vunpack.c.h.b16 %v393
    %v1505 = vunpack.c.l.b16 %v394
    %v1506 = vunpack.c.h.b16 %v394
    %v1507 = vunpack.c.l.b16 %v395
    %v1508 = vunpack.c.h.b16 %v395
    %v1509 = vunpack.c.l.b16 %v396
    %v1510 = vunpack.c.h.b16 %v396
    %v1511 = vunpack.c.l.b16 %v397
    %v1512 = vunpack.c.h.b16 %v397
    %v1513 = vunpack.c.l.b16 %v398
    %v1514 = vunpack.c.h.b16 %v398
    %v1515 = vunpack.c.l.b16 %v399
    %v1516 = vunpack.c.h.b16 %v399
    %v1517 = vunpack.c.l.b16 %v400
    %v1518 = vunpack.c.h.b16 %v400
    %v1519 = vunpack.c.l.b16 %v401
    %v1520 = vunpack.c.h.b16 %v401
    %v1521 = vunpack.c.l.b16 %v402
    %v1522 = vunpack.c.h.b16 %v402
    %v1523 = vunpack.c.l.b16 %v403
    %v1524 = vunpack.c.h.b16 %v403
    %v1525 = vunpack.c.l.b16 %v404
    %v1526 = vunpack.c.h.b16 %v404
    %v1527 = vunpack.c.l.b16 %v405
    %v1528 = vunpack.c.h.b16 %v405
    %v1529 = vunpack.c.l.b16 %v406
    %v1530 = vunpack.c.h.b16 %v406
    %v1531 = vunpack.c.l.b16 %v407
    %v1532 = vunpack.c.h.b16 %v407
    %v1533 = vunpack.c.l.b16 %v408
    %v1534 = vunpack.c.h.b16 %v408
    %v1535 = vunpack.c.l.b16 %v409
    %v1536 = vunpack.c.h.b16 %v409
    %v1537 = vunpack.c.l.b16 %v410
    %v1538 = vunpack.c.h.b16 %v410
    %v1539 = vunpack.c.l.b16 %v411
    %v1540 = vunpack.c.h.b16 %v411
    %v1541 = vunpack.c.l.b16 %v412
    %v1542 = vunpack.c.h.b16 %v412
    %v1543 = vunpack.c.l.b16 %v413
    %v1544 = vunpack.c.h.b16 %v413
    %v1545 = vunpack.c.l.b16 %v414
    %v1546 = vunpack.c.h.b16 %v414
    %v1547 = vunpack.c.l.b16 %v415
    %v1548 = vunpack.c.h.b16 %v415
    %v1549 = vunpack.c.l.b16 %v416
    %v1550 = vunpack.c.h.b16 %v416
    %v1551 = vunpack.c.l.b16 %v417
    %v1552 = vunpack.c.h.b16 %v417
    %v1553 = vunpack.c.l.b16 %v418
    %v1554 = vunpack.c.h.b16 %v418
    %v1555 = vunpack.c.l.b16 %v419
    %v1556 = vunpack.c.h.b16 %v419
    %v1557 = vunpack.c.l.b16 %v420
    %v1558 = vunpack.c.h.b16 %v420
    %v1559 = vunpack.c.l.b16 %v421
    %v1560 = vunpack.c.h.b16 %v421
    %v1561 = vunpack.c.l.b16 %v422
    %v1562 = vunpack.c.h.b16 %v422
    %v1563 = vunpack.c.l.b16 %v423
    %v1564 = vunpack.c.h.b16 %v423
    %v1565 = vunpack.c.l.b16 %v424
    %v1566 = vunpack.c.h.b16 %v424
    %v1567 = vunpack.c.l.b16 %v425
    %v1568 = vunpack.c.h.b16 %v425
    %v1569 = vunpack.c.l.b16 %v426
    %v1570 = vunpack.c.h.b16 %v426
    %v1571 = vunpack.c.l.b16 %v427
    %v1572 = vunpack.c.h.b16 %v427
    %v1573 = vunpack.c.l.b16 %v428
    %v1574 = vunpack.c.h.b16 %v428
    %v1575 = vunpack.c.l.b16 %v429
    %v1576 = vunpack.c.h.b16 %v429
    %v1577 = vunpack.c.l.b16 %v430
    %v1578 = vunpack.c.h.b16 %v430
    %v1579 = vunpack.c.l.b16 %v431
    %v1580 = vunpack.c.h.b16 %v431
    %v1581 = vunpack.c.l.b16 %v432
    %v1582 = vunpack.c.h.b16 %v432
    %v1583 = vunpack.c.l.b16 %v433
    %v1584 = vunpack.c.h.b16 %v433
    %v1585 = vunpack.c.l.b16 %v434
    %v1586 = vunpack.c.h.b16 %v434
    %v1587 = vunpack.c.l.b16 %v435
    %v1588 = vunpack.c.h.b16 %v435
    %v1589 = vunpack.c.l.b16 %v436
    %v1590 = vunpack.c.h.b16 %v436
    %v1591 = vunpack.c.l.b16 %v437
    %v1592 = vunpack.c.h.b16 %v437
    %v1593 = vunpack.c.l.b16 %v438
    %v1594 = vunpack.c.h.b16 %v438
    %v1595 = vunpack.c.l.b16 %v439
    %v1596 = vunpack.c.h.b16 %v439
    %v1597 = vunpack.c.l.b16 %v440
    %v1598 = vunpack.c.h.b16 %v440
    %v1599 = vunpack.c.l.b16 %v441
    %v1600 = vunpack.c.h.b16 %v441
    %v1601 = vunpack.c.l.b16 %v442
    %v1602 = vunpack.c.h.b16 %v442
    %v1603 = vunpack.c.l.b16 %v443
    %v1604 = vunpack.c.h.b16 %v443
    %v1605 = vunpack.c.l.b16 %v444
    %v1606 = vunpack.c.h.b16 %v444
    %v1607 = vunpack.c.l.b16 %v445
    %v1608 = vunpack.c.h.b16 %v445
    %v1609 = vunpack.c.l.b16 %v446
    %v1610 = vunpack.c.h.b16 %v446
    %v1611 = vunpack.c.l.b16 %v447
    %v1612 = vunpack.c.h.b16 %v447
    %v1613 = vunpack.c.l.b16 %v448
    %v1614 = vunpack.c.h.b16 %v448
    %v1615 = vunpack.c.l.b16 %v449
    %v1616 = vunpack.c.h.b16 %v449
    %v1617 = vunpack.c.l.b16 %v450
    %v1618 = vunpack.c.h.b16 %v450
    %v1619 = vunpack.c.l.b16 %v451
    %v1620 = vunpack.c.h.b16 %v451
    %v1621 = vunpack.c.l.b16 %v452
    %v1622 = vunpack.c.h.b16 %v452
    %v1623 = vunpack.c.l.b16 %v453
    %v1624 = vunpack.c.h.b16 %v453
    %v1625 = vunpack.c.l.b16 %v454
    %v1626 = vunpack.c.h.b16 %v454
    %v1627 = vunpack.c.l.b16 %v455
    %v1628 = vunpack.c.h.b16 %v455
    %v1629 = vunpack.c.l.b16 %v456
    %v1630 = vunpack.c.h.b16 %v456
    %v1631 = vunpack.c.l.b16 %v457
    %v1632 = vunpack.c.h.b16 %v457
    %v1633 = vunpack.c.l.b16 %v458
    %v1634 = vunpack.c.h.b16 %v458
    %v1635 = vunpack.c.l.b16 %v459
    %v1636 = vunpack.c.h.b16 %v459
    %v1637 = vunpack.c.l.b16 %v460
    %v1638 = vunpack.c.h.b16 %v460
    %v1639 = vunpack.c.l.b16 %v461
    %v1640 = vunpack.c.h.b16 %v461
    %v1641 = vunpack.c.l.b16 %v462
    %v1642 = vunpack.c.h.b16 %v462
    %v1643 = vunpack.c.l.b16 %v463
    %v1644 = vunpack.c.h.b16 %v463
    %v1645 = vunpack.c.l.b16 %v464
    %v1646 = vunpack.c.h.b16 %v464
    %v1647 = vunpack.c.l.b16 %v465
    %v1648 = vunpack.c.h.b16 %v465
    %v1649 = vunpack.c.l.b16 %v466
    %v1650 = vunpack.c.h.b16 %v466
    %v1651 = vunpack.c.l.b16 %v467
    %v1652 = vunpack.c.h.b16 %v467
    %v1653 = vunpack.c.l.b16 %v468
    %v1654 = vunpack.c.h.b16 %v468
    %v1655 = vunpack.c.l.b16 %v469
    %v1656 = vunpack.c.h.b16 %v469
    %v1657 = vunpack.c.l.b16 %v470
    %v1658 = vunpack.c.h.b16 %v470
    %v1659 = vunpack.c.l.b16 %v471
    %v1660 = vunpack.c.h.b16 %v471
    %v1661 = vunpack.c.l.b16 %v472
    %v1662 = vunpack.c.h.b16 %v472
    %v1663 = vunpack.c.l.b16 %v473
    %v1664 = vunpack.c.h.b16 %v473
    %v1665 = vunpack.c.l.b16 %v474
    %v1666 = vunpack.c.h.b16 %v474
    %v1667 = vunpack.c.l.b16 %v475
    %v1668 = vunpack.c.h.b16 %v475
    %v1669 = vunpack.c.l.b16 %v476
    %v1670 = vunpack.c.h.b16 %v476
    %v1671 = vunpack.c.l.b16 %v477
    %v1672 = vunpack.c.h.b16 %v477
    %v1673 = vunpack.c.l.b16 %v478
    %v1674 = vunpack.c.h.b16 %v478
    %v1675 = vunpack.c.l.b16 %v479
    %v1676 = vunpack.c.h.b16 %v479
    %v1677 = vunpack.c.l.b16 %v480
    %v1678 = vunpack.c.h.b16 %v480
    %v1679 = vunpack.c.l.b16 %v481
    %v1680 = vunpack.c.h.b16 %v481
    %v1681 = vunpack.c.l.b16 %v482
    %v1682 = vunpack.c.h.b16 %v482
    %v1683 = vunpack.c.l.b16 %v483
    %v1684 = vunpack.c.h.b16 %v483
    %v1685 = vunpack.c.l.b16 %v484
    %v1686 = vunpack.c.h.b16 %v484
    %v1687 = vunpack.c.l.b16 %v485
    %v1688 = vunpack.c.h.b16 %v485
    %v1689 = vunpack.c.l.b16 %v486
    %v1690 = vunpack.c.h.b16 %v486
    %v1691 = vunpack.c.l.b16 %v487
    %v1692 = vunpack.c.h.b16 %v487
    %v1693 = vunpack.c.l.b16 %v488
    %v1694 = vunpack.c.h.b16 %v488
    %v1695 = vunpack.c.l.b16 %v489
    %v1696 = vunpack.c.h.b16 %v489
    %v1697 = vunpack.c.l.b16 %v490
    %v1698 = vunpack.c.h.b16 %v490
    %v1699 = vunpack.c.l.b16 %v491
    %v1700 = vunpack.c.h.b16 %v491
    %v1701 = vunpack.c.l.b16 %v492
    %v1702 = vunpack.c.h.b16 %v492
    %v1703 = vunpack.c.l.b16 %v493
    %v1704 = vunpack.c.h.b16 %v493
    %v1705 = vunpack.c.l.b16 %v494
    %v1706 = vunpack.c.h.b16 %v494
    %v1707 = vunpack.c.l.b16 %v495
    %v1708 = vunpack.c.h.b16 %v495
    %v1709 = vunpack.c.l.b16 %v496
    %v1710 = vunpack.c.h.b16 %v496
    %v1711 = vunpack.c.l.b16 %v497
    %v1712 = vunpack.c.h.b16 %v497
    %v1713 = vunpack.c.l.b16 %v498
    %v1714 = vunpack.c.h.b16 %v498
    %v1715 = vunpack.c.l.b16 %v499
    %v1716 = vunpack.c.h.b16 %v499
    %v1717 = vunpack.c.l.b16 %v500
    %v1718 = vunpack.c.h.b16 %v500
    %v1719 = vunpack.c.l.b16 %v501
    %v1720 = vunpack.c.h.b16 %v501
    %v1721 = vunpack.c.l.b16 %v502
    %v1722 = vunpack.c.h.b16 %v502
    %v1723 = vunpack.c.l.b16 %v503
    %v1724 = vunpack.c.h.b16 %v503
    %v1725 = vunpack.c.l.b16 %v504
    %v1726 = vunpack.c.h.b16 %v504
    %v1727 = vunpack.c.l.b16 %v505
    %v1728 = vunpack.c.h.b16 %v505
    %v1729 = vunpack.c.l.b16 %v506
    %v1730 = vunpack.c.h.b16 %v506
    %v1731 = vpack.c.b16 %v971, %v963
    %v1732 = vpack.c.b16 %v972, %v964
    %v1733 = vpack.c.b16 %v973, %v965
    %v1734 = vpack.c.b16 %v974, %v966
    %v1735 = vpack.c.b16 %v975, %v967
    %v1736 = vpack.c.b16 %v976, %v968
    %v1737 = vpack.c.b16 %v977, %v969
    %v1738 = vpack.c.b16 %v978, %v970
    %v1739 = vpack.c.b16 %v987, %v979
    %v1740 = vpack.c.b16 %v988, %v980
    %v1741 = vpack.c.b16 %v989, %v981
    %v1742 = vpack.c.b16 %v990, %v982
    %v1743 = vpack.c.b16 %v991, %v983
    %v1744 = vpack.c.b16 %v992, %v984
    %v1745 = vpack.c.b16 %v993, %v985
    %v1746 = vpack.c.b16 %v994, %v986
    %v1747 = vpack.c.b16 %v1003, %v995
    %v1748 = vpack.c.b16 %v1004, %v996
    %v1749 = vpack.c.b16 %v1005, %v997
    %v1750 = vpack.c.b16 %v1006, %v998
    %v1751 = vpack.c.b16 %v1007, %v999
    %v1752 = vpack.c.b16 %v1008, %v1000
    %v1753 = vpack.c.b16 %v1009, %v1001
    %v1754 = vpack.c.b16 %v1010, %v1002
    %v1755 = vpack.c.b16 %v1019, %v1011
    %v1756 = vpack.c.b16 %v1020, %v1012
    %v1757 = vpack.c.b16 %v1021, %v1013
    %v1758 = vpack.c.b16 %v1022, %v1014
    %v1759 = vpack.c.b16 %v1023, %v1015
    %v1760 = vpack.c.b16 %v1024, %v1016
    %v1761 = vpack.c.b16 %v1025, %v1017
    %v1762 = vpack.c.b16 %v1026, %v1018
    %v1763 = vpack.c.b16 %v1035, %v1027
    %v1764 = vpack.c.b16 %v1036, %v1028
    %v1765 = vpack.c.b16 %v1037, %v1029
    %v1766 = vpack.c.b16 %v1038, %v1030
    %v1767 = vpack.c.b16 %v1039, %v1031
    %v1768 = vpack.c.b16 %v1040, %v1032
    %v1769 = vpack.c.b16 %v1041, %v1033
    %v1770 = vpack.c.b16 %v1042, %v1034
    %v1771 = vpack.c.b16 %v1051, %v1043
    %v1772 = vpack.c.b16 %v1052, %v1044
    %v1773 = vpack.c.b16 %v1053, %v1045
    %v1774 = vpack.c.b16 %v1054, %v1046
    %v1775 = vpack.c.b16 %v1055, %v1047
    %v1776 = vpack.c.b16 %v1056, %v1048
    %v1777 = vpack.c.b16 %v1057, %v1049
    %v1778 = vpack.c.b16 %v1058, %v1050
    %v1779 = vpack.c.b16 %v1067, %v1059
    %v1780 = vpack.c.b16 %v1068, %v1060
    %v1781 = vpack.c.b16 %v1069, %v1061
    %v1782 = vpack.c.b16 %v1070, %v1062
    %v1783 = vpack.c.b16 %v1071, %v1063
    %v1784 = vpack.c.b16 %v1072, %v1064
    %v1785 = vpack.c.b16 %v1073, %v1065
    %v1786 = vpack.c.b16 %v1074, %v1066
    %v1787 = vpack.c.b16 %v1083, %v1075
    %v1788 = vpack.c.b16 %v1084, %v1076
    %v1789 = vpack.c.b16 %v1085, %v1077
    %v1790 = vpack.c.b16 %v1086, %v1078
    %v1791 = vpack.c.b16 %v1087, %v1079
    %v1792 = vpack.c.b16 %v1088, %v1080
    %v1793 = vpack.c.b16 %v1089, %v1081
    %v1794 = vpack.c.b16 %v1090, %v1082
    %v1795 = vpack.c.b16 %v1099, %v1091
    %v1796 = vpack.c.b16 %v1100, %v1092
    %v1797 = vpack.c.b16 %v1101, %v1093
    %v1798 = vpack.c.b16 %v1102, %v1094
    %v1799 = vpack.c.b16 %v1103, %v1095
    %v1800 = vpack.c.b16 %v1104, %v1096
    %v1801 = vpack.c.b16 %v1105, %v1097
    %v1802 = vpack.c.b16 %v1106, %v1098
    %v1803 = vpack.c.b16 %v1115, %v1107
    %v1804 = vpack.c.b16 %v1116, %v1108
    %v1805 = vpack.c.b16 %v1117, %v1109
    %v1806 = vpack.c.b16 %v1118, %v1110
    %v1807 = vpack.c.b16 %v1119, %v1111
    %v1808 = vpack.c.b16 %v1120, %v1112
    %v1809 = vpack.c.b16 %v1121, %v1113
    %v1810 = vpack.c.b16 %v1122, %v1114
    %v1811 = vpack.c.b16 %v1131, %v1123
    %v1812 = vpack.c.b16 %v1132, %v1124
    %v1813 = vpack.c.b16 %v1133, %v1125
    %v1814 = vpack.c.b16 %v1134, %v1126
    %v1815 = vpack.c.b16 %v1135, %v1127
    %v1816 = vpack.c.b16 %v1136, %v1128
    %v1817 = vpack.c.b16 %v1137, %v1129
    %v1818 = vpack.c.b16 %v1138, %v1130
    %v1819 = vpack.c.b16 %v1147, %v1139
    %v1820 = vpack.c.b16 %v1148, %v1140
    %v1821 = vpack.c.b16 %v1149, %v1141
    %v1822 = vpack.c.b16 %v1150, %v1142
    %v1823 = vpack.c.b16 %v1151, %v1143
    %v1824 = vpack.c.b16 %v1152, %v1144
    %v1825 = vpack.c.b16 %v1153, %v1145
    %v1826 = vpack.c.b16 %v1154, %v1146
    %v1827 = vpack.c.b16 %v1163, %v1155
    %v1828 = vpack.c.b16 %v1164, %v1156
    %v1829 = vpack.c.b16 %v1165, %v1157
    %v1830 = vpack.c.b16 %v1166, %v1158
    %v1831 = vpack.c.b16 %v1167, %v1159
    %v1832 = vpack.c.b16 %v1168, %v1160
    %v1833 = vpack.c.b16 %v1169, %v1161
    %v1834 = vpack.c.b16 %v1170, %v1162
    %v1835 = vpack.c.b16 %v1179, %v1171
    %v1836 = vpack.c.b16 %v1180, %v1172
    %v1837 = vpack.c.b16 %v1181, %v1173
    %v1838 = vpack.c.b16 %v1182, %v1174
    %v1839 = vpack.c.b16 %v1183, %v1175
    %v1840 = vpack.c.b16 %v1184, %v1176
    %v1841 = vpack.c.b16 %v1185, %v1177
    %v1842 = vpack.c.b16 %v1186, %v1178
    %v1843 = vpack.c.b16 %v1195, %v1187
    %v1844 = vpack.c.b16 %v1196, %v1188
    %v1845 = vpack.c.b16 %v1197, %v1189
    %v1846 = vpack.c.b16 %v1198, %v1190
    %v1847 = vpack.c.b16 %v1199, %v1191
    %v1848 = vpack.c.b16 %v1200, %v1192
    %v1849 = vpack.c.b16 %v1201, %v1193
    %v1850 = vpack.c.b16 %v1202, %v1194
    %v1851 = vpack.c.b16 %v1211, %v1203
    %v1852 = vpack.c.b16 %v1212, %v1204
    %v1853 = vpack.c.b16 %v1213, %v1205
    %v1854 = vpack.c.b16 %v1214, %v1206
    %v1855 = vpack.c.b16 %v1215, %v1207
    %v1856 = vpack.c.b16 %v1216, %v1208
    %v1857 = vpack.c.b16 %v1217, %v1209
    %v1858 = vpack.c.b16 %v1218, %v1210
    %v1859 = vpack.c.b16 %v1227, %v1219
    %v1860 = vpack.c.b16 %v1228, %v1220
    %v1861 = vpack.c.b16 %v1229, %v1221
    %v1862 = vpack.c.b16 %v1230, %v1222
    %v1863 = vpack.c.b16 %v1231, %v1223
    %v1864 = vpack.c.b16 %v1232, %v1224
    %v1865 = vpack.c.b16 %v1233, %v1225
    %v1866 = vpack.c.b16 %v1234, %v1226
    %v1867 = vpack.c.b16 %v1243, %v1235
    %v1868 = vpack.c.b16 %v1244, %v1236
    %v1869 = vpack.c.b16 %v1245, %v1237
    %v1870 = vpack.c.b16 %v1246, %v1238
    %v1871 = vpack.c.b16 %v1247, %v1239
    %v1872 = vpack.c.b16 %v1248, %v1240
    %v1873 = vpack.c.b16 %v1249, %v1241
    %v1874 = vpack.c.b16 %v1250, %v1242
    %v1875 = vpack.c.b16 %v1259, %v1251
    %v1876 = vpack.c.b16 %v1260, %v1252
    %v1877 = vpack.c.b16 %v1261, %v1253
    %v1878 = vpack.c.b16 %v1262, %v1254
    %v1879 = vpack.c.b16 %v1263, %v1255
    %v1880 = vpack.c.b16 %v1264, %v1256
    %v1881 = vpack.c.b16 %v1265, %v1257
    %v1882 = vpack.c.b16 %v1266, %v1258
    %v1883 = vpack.c.b16 %v1275, %v1267
    %v1884 = vpack.c.b16 %v1276, %v1268
    %v1885 = vpack.c.b16 %v1277, %v1269
    %v1886 = vpack.c.b16 %v1278, %v1270
    %v1887 = vpack.c.b16 %v1279, %v1271
    %v1888 = vpack.c.b16 %v1280, %v1272
    %v1889 = vpack.c.b16 %v1281, %v1273
    %v1890 = vpack.c.b16 %v1282, %v1274
    %v1891 = vpack.c.b16 %v1291, %v1283
    %v1892 = vpack.c.b16 %v1292, %v1284
    %v1893 = vpack.c.b16 %v1293, %v1285
    %v1894 = vpack.c.b16 %v1294, %v1286
    %v1895 = vpack.c.b16 %v1295, %v1287
    %v1896 = vpack.c.b16 %v1296, %v1288
    %v1897 = vpack.c.b16 %v1297, %v1289
    %v1898 = vpack.c.b16 %v1298, %v1290
    %v1899 = vpack.c.b16 %v1307, %v1299
    %v1900 = vpack.c.b16 %v1308, %v1300
    %v1901 = vpack.c.b16 %v1309, %v1301
    %v1902 = vpack.c.b16 %v1310, %v1302
    %v1903 = vpack.c.b16 %v1311, %v1303
    %v1904 = vpack.c.b16 %v1312, %v1304
    %v1905 = vpack.c.b16 %v1313, %v1305
    %v1906 = vpack.c.b16 %v1314, %v1306
    %v1907 = vpack.c.b16 %v1323, %v1315
    %v1908 = vpack.c.b16 %v1324, %v1316
    %v1909 = vpack.c.b16 %v1325, %v1317
    %v1910 = vpack.c.b16 %v1326, %v1318
    %v1911 = vpack.c.b16 %v1327, %v1319
    %v1912 = vpack.c.b16 %v1328, %v1320
    %v1913 = vpack.c.b16 %v1329, %v1321
    %v1914 = vpack.c.b16 %v1330, %v1322
    %v1915 = vpack.c.b16 %v1339, %v1331
    %v1916 = vpack.c.b16 %v1340, %v1332
    %v1917 = vpack.c.b16 %v1341, %v1333
    %v1918 = vpack.c.b16 %v1342, %v1334
    %v1919 = vpack.c.b16 %v1343, %v1335
    %v1920 = vpack.c.b16 %v1344, %v1336
    %v1921 = vpack.c.b16 %v1345, %v1337
    %v1922 = vpack.c.b16 %v1346, %v1338
    %v1923 = vpack.c.b16 %v1355, %v1347
    %v1924 = vpack.c.b16 %v1356, %v1348
    %v1925 = vpack.c.b16 %v1357, %v1349
    %v1926 = vpack.c.b16 %v1358, %v1350
    %v1927 = vpack.c.b16 %v1359, %v1351
    %v1928 = vpack.c.b16 %v1360, %v1352
    %v1929 = vpack.c.b16 %v1361, %v1353
    %v1930 = vpack.c.b16 %v1362, %v1354
    %v1931 = vpack.c.b16 %v1371, %v1363
    %v1932 = vpack.c.b16 %v1372, %v1364
    %v1933 = vpack.c.b16 %v1373, %v1365
    %v1934 = vpack.c.b16 %v1374, %v1366
    %v1935 = vpack.c.b16 %v1375, %v1367
    %v1936 = vpack.c.b16 %v1376, %v1368
    %v1937 = vpack.c.b16 %v1377, %v1369
    %v1938 = vpack.c.b16 %v1378, %v1370
    %v1939 = vpack.c.b16 %v1387, %v1379
    %v1940 = vpack.c.b16 %v1388, %v1380
    %v1941 = vpack.c.b16 %v1389, %v1381
    %v1942 = vpack.c.b16 %v1390, %v1382
    %v1943 = vpack.c.b16 %v1391, %v1383
    %v1944 = vpack.c.b16 %v1392, %v1384
    %v1945 = vpack.c.b16 %v1393, %v1385
    %v1946 = vpack.c.b16 %v1394, %v1386
    %v1947 = vpack.c.b16 %v1403, %v1395
    %v1948 = vpack.c.b16 %v1404, %v1396
    %v1949 = vpack.c.b16 %v1405, %v1397
    %v1950 = vpack.c.b16 %v1406, %v1398
    %v1951 = vpack.c.b16 %v1407, %v1399
    %v1952 = vpack.c.b16 %v1408, %v1400
    %v1953 = vpack.c.b16 %v1409, %v1401
    %v1954 = vpack.c.b16 %v1410, %v1402
    %v1955 = vpack.c.b16 %v1419, %v1411
    %v1956 = vpack.c.b16 %v1420, %v1412
    %v1957 = vpack.c.b16 %v1421, %v1413
    %v1958 = vpack.c.b16 %v1422, %v1414
    %v1959 = vpack.c.b16 %v1423, %v1415
    %v1960 = vpack.c.b16 %v1424, %v1416
    %v1961 = vpack.c.b16 %v1425, %v1417
    %v1962 = vpack.c.b16 %v1426, %v1418
    %v1963 = vpack.c.b16 %v1435, %v1427
    %v1964 = vpack.c.b16 %v1436, %v1428
    %v1965 = vpack.c.b16 %v1437, %v1429
    %v1966 = vpack.c.b16 %v1438, %v1430
    %v1967 = vpack.c.b16 %v1439, %v1431
    %v1968 = vpack.c.b16 %v1440, %v1432
    %v1969 = vpack.c.b16 %v1441, %v1433
    %v1970 = vpack.c.b16 %v1442, %v1434
    %v1971 = vpack.c.b16 %v1451, %v1443
    %v1972 = vpack.c.b16 %v1452, %v1444
    %v1973 = vpack.c.b16 %v1453, %v1445
    %v1974 = vpack.c.b16 %v1454, %v1446
    %v1975 = vpack.c.b16 %v1455, %v1447
    %v1976 = vpack.c.b16 %v1456, %v1448
    %v1977 = vpack.c.b16 %v1457, %v1449
    %v1978 = vpack.c.b16 %v1458, %v1450
    %v1979 = vpack.c.b16 %v1467, %v1459
    %v1980 = vpack.c.b16 %v1468, %v1460
    %v1981 = vpack.c.b16 %v1469, %v1461
    %v1982 = vpack.c.b16 %v1470, %v1462
    %v1983 = vpack.c.b16 %v1471, %v1463
    %v1984 = vpack.c.b16 %v1472, %v1464
    %v1985 = vpack.c.b16 %v1473, %v1465
    %v1986 = vpack.c.b16 %v1474, %v1466
    %v1987 = vpack.c.b16 %v1483, %v1475
    %v1988 = vpack.c.b16 %v1484, %v1476
    %v1989 = vpack.c.b16 %v1485, %v1477
    %v1990 = vpack.c.b16 %v1486, %v1478
    %v1991 = vpack.c.b16 %v1487, %v1479
    %v1992 = vpack.c.b16 %v1488, %v1480
    %v1993 = vpack.c.b16 %v1489, %v1481
    %v1994 = vpack.c.b16 %v1490, %v1482
    %v1995 = vpack.c.b16 %v1499, %v1491
    %v1996 = vpack.c.b16 %v1500, %v1492
    %v1997 = vpack.c.b16 %v1501, %v1493
    %v1998 = vpack.c.b16 %v1502, %v1494
    %v1999 = vpack.c.b16 %v1503, %v1495
    %v2000 = vpack.c.b16 %v1504, %v1496
    %v2001 = vpack.c.b16 %v1505, %v1497
    %v2002 = vpack.c.b16 %v1506, %v1498
    %v2003 = vpack.c.b16 %v1515, %v1507
    %v2004 = vpack.c.b16 %v1516, %v1508
    %v2005 = vpack.c.b16 %v1517, %v1509
    %v2006 = vpack.c.b16 %v1518, %v1510
    %v2007 = vpack.c.b16 %v1519, %v1511
    %v2008 = vpack.c.b16 %v1520, %v1512
    %v2009 = vpack.c.b16 %v1521, %v1513
    %v2010 = vpack.c.b16 %v1522, %v1514
    %v2011 = vpack.c.b16 %v1531, %v1523
    %v2012 = vpack.c.b16 %v1532, %v1524
    %v2013 = vpack.c.b16 %v1533, %v1525
    %v2014 = vpack.c.b16 %v1534, %v1526
    %v2015 = vpack.c.b16 %v1535, %v1527
    %v2016 = vpack.c.b16 %v1536, %v1528
    %v2017 = vpack.c.b16 %v1537, %v1529
    %v2018 = vpack.c.b16 %v1538, %v1530
    %v2019 = vpack.c.b16 %v1547, %v1539
    %v2020 = vpack.c.b16 %v1548, %v1540
    %v2021 = vpack.c.b16 %v1549, %v1541
    %v2022 = vpack.c.b16 %v1550, %v1542
    %v2023 = vpack.c.b16 %v1551, %v1543
    %v2024 = vpack.c.b16 %v1552, %v1544
    %v2025 = vpack.c.b16 %v1553, %v1545
    %v2026 = vpack.c.b16 %v1554, %v1546
    %v2027 = vpack.c.b16 %v1563, %v1555
    %v2028 = vpack.c.b16 %v1564, %v1556
    %v2029 = vpack.c.b16 %v1565, %v1557
    %v2030 = vpack.c.b16 %v1566, %v1558
    %v2031 = vpack.c.b16 %v1567, %v1559
    %v2032 = vpack.c.b16 %v1568, %v1560
    %v2033 = vpack.c.b16 %v1569, %v1561
    %v2034 = vpack.c.b16 %v1570, %v1562
    %v2035 = vpack.c.b16 %v1579, %v1571
    %v2036 = vpack.c.b16 %v1580, %v1572
    %v2037 = vpack.c.b16 %v1581, %v1573
    %v2038 = vpack.c.b16 %v1582, %v1574
    %v2039 = vpack.c.b16 %v1583, %v1575
    %v2040 = vpack.c.b16 %v1584, %v1576
    %v2041 = vpack.c.b16 %v1585, %v1577
    %v2042 = vpack.c.b16 %v1586, %v1578
    %v2043 = vpack.c.b16 %v1595, %v1587
    %v2044 = vpack.c.b16 %v1596, %v1588
    %v2045 = vpack.c.b16 %v1597, %v1589
    %v2046 = vpack.c.b16 %v1598, %v1590
    %v2047 = vpack.c.b16 %v1599, %v1591
    %v2048 = vpack.c.b16 %v1600, %v1592
    %v2049 = vpack.c.b16 %v1601, %v1593
    %v2050 = vpack.c.b16 %v1602, %v1594
    %v2051 = vpack.c.b16 %v1611, %v1603
    %v2052 = vpack.c.b16 %v1612, %v1604
    %v2053 = vpack.c.b16 %v1613, %v1605
    %v2054 = vpack.c.b16 %v1614, %v1606
    %v2055 = vpack.c.b16 %v1615, %v1607
    %v2056 = vpack.c.b16 %v1616, %v1608
    %v2057 = vpack.c.b16 %v1617, %v1609
    %v2058 = vpack.c.b16 %v1618, %v1610
    %v2059 = vpack.c.b16 %v1627, %v1619
    %v2060 = vpack.c.b16 %v1628, %v1620
    %v2061 = vpack.c.b16 %v1629, %v1621
    %v2062 = vpack.c.b16 %v1630, %v1622
    %v2063 = vpack.c.b16 %v1631, %v1623
    %v2064 = vpack.c.b16 %v1632, %v1624
    %v2065 = vpack.c.b16 %v1633, %v1625
    %v2066 = vpack.c.b16 %v1634, %v1626
    %v2067 = vpack.c.b16 %v1643, %v1635
    %v2068 = vpack.c.b16 %v1644, %v1636
    %v2069 = vpack.c.b16 %v1645, %v1637
    %v2070 = vpack.c.b16 %v1646, %v1638
    %v2071 = vpack.c.b16 %v1647, %v1639
    %v2072 = vpack.c.b16 %v1648, %v1640
    %v2073 = vpack.c.b16 %v1649, %v1641
    %v2074 = vpack.c.b16 %v1650, %v1642
    %v2075 = vpack.c.b16 %v1659, %v1651
    %v2076 = vpack.c.b16 %v1660, %v1652
    %v2077 = vpack.c.b16 %v1661, %v1653
    %v2078 = vpack.c.b16 %v1662, %v1654
    %v2079 = vpack.c.b16 %v1663, %v1655
    %v2080 = vpack.c.b16 %v1664, %v1656
    %v2081 = vpack.c.b16 %v1665, %v1657
    %v2082 = vpack.c.b16 %v1666, %v1658
    %v2083 = vpack.c.b16 %v1675, %v1667
    %v2084 = vpack.c.b16 %v1676, %v1668
    %v2085 = vpack.c.b16 %v1677, %v1669
    %v2086 = vpack.c.b16 %v1678, %v1670
    %v2087 = vpack.c.b16 %v1679, %v1671
    %v2088 = vpack.c.b16 %v1680, %v1672
    %v2089 = vpack.c.b16 %v1681, %v1673
    %v2090 = vpack.c.b16 %v1682, %v1674
    %v2091 = vpack.c.b16 %v1691, %v1683
    %v2092 = vpack.c.b16 %v1692, %v1684
    %v2093 = vpack.c.b16 %v1693, %v1685
    %v2094 = vpack.c.b16 %v1694, %v1686
    %v2095 = vpack.c.b16 %v1695, %v1687
    %v2096 = vpack.c.b16 %v1696, %v1688
    %v2097 = vpack.c.b16 %v1697, %v1689
    %v2098 = vpack.c.b16 %v1698, %v1690
    %v2099 = vpack.c.b16 %v1707, %v1699
    %v2100 = vpack.c.b16 %v1708, %v1700
    %v2101 = vpack.c.b16 %v1709, %v1701
    %v2102 = vpack.c.b16 %v1710, %v1702
    %v2103 = vpack.c.b16 %v1711, %v1703
    %v2104 = vpack.c.b16 %v1712, %v1704
    %v2105 = vpack.c.b16 %v1713, %v1705
    %v2106 = vpack.c.b16 %v1714, %v1706
    %v2107 = vpack.c.b16 %v1723, %v1715
    %v2108 = vpack.c.b16 %v1724, %v1716
    %v2109 = vpack.c.b16 %v1725, %v1717
    %v2110 = vpack.c.b16 %v1726, %v1718
    %v2111 = vpack.c.b16 %v1727, %v1719
    %v2112 = vpack.c.b16 %v1728, %v1720
    %v2113 = vpack.c.b16 %v1729, %v1721
    %v2114 = vpack.c.b16 %v1730, %v1722
    %2499 = vmatprep.subr.bf16.mxu0 %v1732
    %2500 = vmatpush1.bf16.msra.mxu0 %v1731
    %2501 = vmatprep.subr.bf16.mxu0 %v1740
    %2502 = vmatpush1.bf16.msra.mxu0 %v1739
    %2503 = vmatprep.subr.bf16.mxu0 %v1748
    %2504 = vmatpush1.bf16.msra.mxu0 %v1747
    %2505 = vmatprep.subr.bf16.mxu0 %v1756
    %2506 = vmatpush1.bf16.msra.mxu0 %v1755
    %2507 = vmatprep.subr.bf16.mxu0 %v1764
    %2508 = vmatpush1.bf16.msra.mxu0 %v1763
    %2509 = vmatprep.subr.bf16.mxu0 %v1772
    %2510 = vmatpush1.bf16.msra.mxu0 %v1771
    %2511 = vmatprep.subr.bf16.mxu0 %v1780
    %2512 = vmatpush1.bf16.msra.mxu0 %v1779
    %2513 = vmatprep.subr.bf16.mxu0 %v1788
    %2514 = vmatpush1.bf16.msra.mxu0 %v1787
    %2515 = vmatprep.subr.bf16.mxu0 %v1796
    %2516 = vmatpush1.bf16.msra.mxu0 %v1795
    %2517 = vmatprep.subr.bf16.mxu0 %v1804
    %2518 = vmatpush1.bf16.msra.mxu0 %v1803
    %2519 = vmatprep.subr.bf16.mxu0 %v1812
    %2520 = vmatpush1.bf16.msra.mxu0 %v1811
    %2521 = vmatprep.subr.bf16.mxu0 %v1820
    %2522 = vmatpush1.bf16.msra.mxu0 %v1819
    %2523 = vmatprep.subr.bf16.mxu0 %v1828
    %2524 = vmatpush1.bf16.msra.mxu0 %v1827
    %2525 = vmatprep.subr.bf16.mxu0 %v1836
    %2526 = vmatpush1.bf16.msra.mxu0 %v1835
    %2527 = vmatprep.subr.bf16.mxu0 %v1844
    %2528 = vmatpush1.bf16.msra.mxu0 %v1843
    %2529 = vmatprep.subr.bf16.mxu0 %v1852
    %2530 = vmatpush1.bf16.msra.mxu0 %v1851
    %2531 = vmatprep.mubr.bf16.mxu0 %v568
    %2532 = vmatmul.mubr.bf16.gmra.mrb[0].mxu0 %v567
    %v2533 = vpop.f32.mrb[0].mxu0
    %v2534 = vadd.f32 %v512, %v2533
    %v2535 = vpop.f32.mrb[0].mxu0
    %v2536 = vadd.f32 %v516, %v2535
    %v2537 = vpop.f32.mrb[0].mxu0
    %v2538 = vadd.f32 %v512, %v2537
    %v2539 = vpop.f32.mrb[0].mxu0
    %v2540 = vadd.f32 %v516, %v2539
    %2541 = vdwg.mxu0
    %2542 = vmatprep.subr.bf16.mxu0 %v1860
    %2543 = vmatpush1.bf16.msra.mxu0 %v1859
    %2544 = vmatprep.subr.bf16.mxu0 %v1868
    %2545 = vmatpush1.bf16.msra.mxu0 %v1867
    %2546 = vmatprep.subr.bf16.mxu0 %v1876
    %2547 = vmatpush1.bf16.msra.mxu0 %v1875
    %2548 = vmatprep.subr.bf16.mxu0 %v1884
    %2549 = vmatpush1.bf16.msra.mxu0 %v1883
    %2550 = vmatprep.subr.bf16.mxu0 %v1892
    %2551 = vmatpush1.bf16.msra.mxu0 %v1891
    %2552 = vmatprep.subr.bf16.mxu0 %v1900
    %2553 = vmatpush1.bf16.msra.mxu0 %v1899
    %2554 = vmatprep.subr.bf16.mxu0 %v1908
    %2555 = vmatpush1.bf16.msra.mxu0 %v1907
    %2556 = vmatprep.subr.bf16.mxu0 %v1916
    %2557 = vmatpush1.bf16.msra.mxu0 %v1915
    %2558 = vmatprep.subr.bf16.mxu0 %v1924
    %2559 = vmatpush1.bf16.msra.mxu0 %v1923
    %2560 = vmatprep.subr.bf16.mxu0 %v1932
    %2561 = vmatpush1.bf16.msra.mxu0 %v1931
    %2562 = vmatprep.subr.bf16.mxu0 %v1940
    %2563 = vmatpush1.bf16.msra.mxu0 %v1939
    %2564 = vmatprep.subr.bf16.mxu0 %v1948
    %2565 = vmatpush1.bf16.msra.mxu0 %v1947
    %2566 = vmatprep.subr.bf16.mxu0 %v1956
    %2567 = vmatpush1.bf16.msra.mxu0 %v1955
    %2568 = vmatprep.subr.bf16.mxu0 %v1964
    %2569 = vmatpush1.bf16.msra.mxu0 %v1963
    %2570 = vmatprep.subr.bf16.mxu0 %v1972
    %2571 = vmatpush1.bf16.msra.mxu0 %v1971
    %2572 = vmatprep.subr.bf16.mxu0 %v1980
    %2573 = vmatpush1.bf16.msra.mxu0 %v1979
    %2574 = vmatprep.mubr.bf16.mxu0 %v570
    %2575 = vmatmul.mubr.bf16.gmra.mrb[0].mxu0 %v569
    %v2576 = vpop.f32.mrb[0].mxu0
    %v2577 = vadd.f32 %v2534, %v2576
    %v2578 = vpop.f32.mrb[0].mxu0
    %v2579 = vadd.f32 %v2536, %v2578
    %v2580 = vpop.f32.mrb[0].mxu0
    %v2581 = vadd.f32 %v2538, %v2580
    %v2582 = vpop.f32.mrb[0].mxu0
    %v2583 = vadd.f32 %v2540, %v2582
    %2584 = vdwg.mxu0
    %2585 = vmatprep.subr.bf16.mxu0 %v1988
    %2586 = vmatpush1.bf16.msra.mxu0 %v1987
    %2587 = vmatprep.subr.bf16.mxu0 %v1996
    %2588 = vmatpush1.bf16.msra.mxu0 %v1995
    %2589 = vmatprep.subr.bf16.mxu0 %v2004
    %2590 = vmatpush1.bf16.msra.mxu0 %v2003
    %2591 = vmatprep.subr.bf16.mxu0 %v2012
    %2592 = vmatpush1.bf16.msra.mxu0 %v2011
    %2593 = vmatprep.subr.bf16.mxu0 %v2020
    %2594 = vmatpush1.bf16.msra.mxu0 %v2019
    %2595 = vmatprep.subr.bf16.mxu0 %v2028
    %2596 = vmatpush1.bf16.msra.mxu0 %v2027
    %2597 = vmatprep.subr.bf16.mxu0 %v2036
    %2598 = vmatpush1.bf16.msra.mxu0 %v2035
    %2599 = vmatprep.subr.bf16.mxu0 %v2044
    %2600 = vmatpush1.bf16.msra.mxu0 %v2043
    %2601 = vmatprep.subr.bf16.mxu0 %v2052
    %2602 = vmatpush1.bf16.msra.mxu0 %v2051
    %2603 = vmatprep.subr.bf16.mxu0 %v2060
    %2604 = vmatpush1.bf16.msra.mxu0 %v2059
    %2605 = vmatprep.subr.bf16.mxu0 %v2068
    %2606 = vmatpush1.bf16.msra.mxu0 %v2067
    %2607 = vmatprep.subr.bf16.mxu0 %v2076
    %2608 = vmatpush1.bf16.msra.mxu0 %v2075
    %2609 = vmatprep.subr.bf16.mxu0 %v2084
    %2610 = vmatpush1.bf16.msra.mxu0 %v2083
    %2611 = vmatprep.subr.bf16.mxu0 %v2092
    %2612 = vmatpush1.bf16.msra.mxu0 %v2091
    %2613 = vmatprep.subr.bf16.mxu0 %v2100
    %2614 = vmatpush1.bf16.msra.mxu0 %v2099
    %2615 = vmatprep.subr.bf16.mxu0 %v2108
    %2616 = vmatpush1.bf16.msra.mxu0 %v2107
    %2617 = vmatprep.mubr.bf16.mxu0 %v572
    %2618 = vmatmul.mubr.bf16.gmra.mrb[0].mxu0 %v571
    %v2619 = vpop.f32.mrb[0].mxu0
    %v2620 = vadd.f32 %v2577, %v2619
    %v2621 = vpop.f32.mrb[0].mxu0
    %v2622 = vadd.f32 %v2579, %v2621
    %v2623 = vpop.f32.mrb[0].mxu0
    %v2624 = vadd.f32 %v2581, %v2623
    %v2625 = vpop.f32.mrb[0].mxu0
    %v2626 = vadd.f32 %v2583, %v2625
    %2627 = vdwg.mxu0
    %2628 = vmatprep.subr.bf16.mxu0 %v1734
    %2629 = vmatpush1.bf16.msra.mxu0 %v1733
    %2630 = vmatprep.subr.bf16.mxu0 %v1742
    %2631 = vmatpush1.bf16.msra.mxu0 %v1741
    %2632 = vmatprep.subr.bf16.mxu0 %v1750
    %2633 = vmatpush1.bf16.msra.mxu0 %v1749
    %2634 = vmatprep.subr.bf16.mxu0 %v1758
    %2635 = vmatpush1.bf16.msra.mxu0 %v1757
    %2636 = vmatprep.subr.bf16.mxu0 %v1766
    %2637 = vmatpush1.bf16.msra.mxu0 %v1765
    %2638 = vmatprep.subr.bf16.mxu0 %v1774
    %2639 = vmatpush1.bf16.msra.mxu0 %v1773
    %2640 = vmatprep.subr.bf16.mxu0 %v1782
    %2641 = vmatpush1.bf16.msra.mxu0 %v1781
    %2642 = vmatprep.subr.bf16.mxu0 %v1790
    %2643 = vmatpush1.bf16.msra.mxu0 %v1789
    %2644 = vmatprep.subr.bf16.mxu0 %v1798
    %2645 = vmatpush1.bf16.msra.mxu0 %v1797
    %2646 = vmatprep.subr.bf16.mxu0 %v1806
    %2647 = vmatpush1.bf16.msra.mxu0 %v1805
    %2648 = vmatprep.subr.bf16.mxu0 %v1814
    %2649 = vmatpush1.bf16.msra.mxu0 %v1813
    %2650 = vmatprep.subr.bf16.mxu0 %v1822
    %2651 = vmatpush1.bf16.msra.mxu0 %v1821
    %2652 = vmatprep.subr.bf16.mxu0 %v1830
    %2653 = vmatpush1.bf16.msra.mxu0 %v1829
    %2654 = vmatprep.subr.bf16.mxu0 %v1838
    %2655 = vmatpush1.bf16.msra.mxu0 %v1837
    %2656 = vmatprep.subr.bf16.mxu0 %v1846
    %2657 = vmatpush1.bf16.msra.mxu0 %v1845
    %2658 = vmatprep.subr.bf16.mxu0 %v1854
    %2659 = vmatpush1.bf16.msra.mxu0 %v1853
    %2660 = vmatprep.mubr.bf16.mxu0 %v568
    %2661 = vmatmul.mubr.bf16.gmra.mrb[0].mxu0 %v567
    %v2662 = vpop.f32.mrb[0].mxu0
    %v2663 = vadd.f32 %v520, %v2662
    %v2664 = vpop.f32.mrb[0].mxu0
    %v2665 = vadd.f32 %v524, %v2664
    %v2666 = vpop.f32.mrb[0].mxu0
    %v2667 = vadd.f32 %v520, %v2666
    %v2668 = vpop.f32.mrb[0].mxu0
    %v2669 = vadd.f32 %v524, %v2668
    %2670 = vdwg.mxu0
    %2671 = vmatprep.subr.bf16.mxu0 %v1862
    %2672 = vmatpush1.bf16.msra.mxu0 %v1861
    %2673 = vmatprep.subr.bf16.mxu0 %v1870
    %2674 = vmatpush1.bf16.msra.mxu0 %v1869
    %2675 = vmatprep.subr.bf16.mxu0 %v1878
    %2676 = vmatpush1.bf16.msra.mxu0 %v1877
    %2677 = vmatprep.subr.bf16.mxu0 %v1886
    %2678 = vmatpush1.bf16.msra.mxu0 %v1885
    %2679 = vmatprep.subr.bf16.mxu0 %v1894
    %2680 = vmatpush1.bf16.msra.mxu0 %v1893
    %2681 = vmatprep.subr.bf16.mxu0 %v1902
    %2682 = vmatpush1.bf16.msra.mxu0 %v1901
    %2683 = vmatprep.subr.bf16.mxu0 %v1910
    %2684 = vmatpush1.bf16.msra.mxu0 %v1909
    %2685 = vmatprep.subr.bf16.mxu0 %v1918
    %2686 = vmatpush1.bf16.msra.mxu0 %v1917
    %2687 = vmatprep.subr.bf16.mxu0 %v1926
    %2688 = vmatpush1.bf16.msra.mxu0 %v1925
    %2689 = vmatprep.subr.bf16.mxu0 %v1934
    %2690 = vmatpush1.bf16.msra.mxu0 %v1933
    %2691 = vmatprep.subr.bf16.mxu0 %v1942
    %2692 = vmatpush1.bf16.msra.mxu0 %v1941
    %2693 = vmatprep.subr.bf16.mxu0 %v1950
    %2694 = vmatpush1.bf16.msra.mxu0 %v1949
    %2695 = vmatprep.subr.bf16.mxu0 %v1958
    %2696 = vmatpush1.bf16.msra.mxu0 %v1957
    %2697 = vmatprep.subr.bf16.mxu0 %v1966
    %2698 = vmatpush1.bf16.msra.mxu0 %v1965
    %2699 = vmatprep.subr.bf16.mxu0 %v1974
    %2700 = vmatpush1.bf16.msra.mxu0 %v1973
    %2701 = vmatprep.subr.bf16.mxu0 %v1982
    %2702 = vmatpush1.bf16.msra.mxu0 %v1981
    %2703 = vmatprep.mubr.bf16.mxu0 %v570
    %2704 = vmatmul.mubr.bf16.gmra.mrb[0].mxu0 %v569
    %v2705 = vpop.f32.mrb[0].mxu0
    %v2706 = vadd.f32 %v2663, %v2705
    %v2707 = vpop.f32.mrb[0].mxu0
    %v2708 = vadd.f32 %v2665, %v2707
    %v2709 = vpop.f32.mrb[0].mxu0
    %v2710 = vadd.f32 %v2667, %v2709
    %v2711 = vpop.f32.mrb[0].mxu0
    %v2712 = vadd.f32 %v2669, %v2711
    %2713 = vdwg.mxu0
    %2714 = vmatprep.subr.bf16.mxu0 %v1990
    %2715 = vmatpush1.bf16.msra.mxu0 %v1989
    %2716 = vmatprep.subr.bf16.mxu0 %v1998
    %2717 = vmatpush1.bf16.msra.mxu0 %v1997
    %2718 = vmatprep.subr.bf16.mxu0 %v2006
    %2719 = vmatpush1.bf16.msra.mxu0 %v2005
    %2720 = vmatprep.subr.bf16.mxu0 %v2014
    %2721 = vmatpush1.bf16.msra.mxu0 %v2013
    %2722 = vmatprep.subr.bf16.mxu0 %v2022
    %2723 = vmatpush1.bf16.msra.mxu0 %v2021
    %2724 = vmatprep.subr.bf16.mxu0 %v2030
    %2725 = vmatpush1.bf16.msra.mxu0 %v2029
    %2726 = vmatprep.subr.bf16.mxu0 %v2038
    %2727 = vmatpush1.bf16.msra.mxu0 %v2037
    %2728 = vmatprep.subr.bf16.mxu0 %v2046
    %2729 = vmatpush1.bf16.msra.mxu0 %v2045
    %2730 = vmatprep.subr.bf16.mxu0 %v2054
    %2731 = vmatpush1.bf16.msra.mxu0 %v2053
    %2732 = vmatprep.subr.bf16.mxu0 %v2062
    %2733 = vmatpush1.bf16.msra.mxu0 %v2061
    %2734 = vmatprep.subr.bf16.mxu0 %v2070
    %2735 = vmatpush1.bf16.msra.mxu0 %v2069
    %2736 = vmatprep.subr.bf16.mxu0 %v2078
    %2737 = vmatpush1.bf16.msra.mxu0 %v2077
    %2738 = vmatprep.subr.bf16.mxu0 %v2086
    %2739 = vmatpush1.bf16.msra.mxu0 %v2085
    %2740 = vmatprep.subr.bf16.mxu0 %v2094
    %2741 = vmatpush1.bf16.msra.mxu0 %v2093
    %2742 = vmatprep.subr.bf16.mxu0 %v2102
    %2743 = vmatpush1.bf16.msra.mxu0 %v2101
    %2744 = vmatprep.subr.bf16.mxu0 %v2110
    %2745 = vmatpush1.bf16.msra.mxu0 %v2109
    %2746 = vmatprep.mubr.bf16.mxu0 %v572
    %2747 = vmatmul.mubr.bf16.gmra.mrb[0].mxu0 %v571
    %v2748 = vpop.f32.mrb[0].mxu0
    %v2749 = vadd.f32 %v2706, %v2748
    %v2750 = vpop.f32.mrb[0].mxu0
    %v2751 = vadd.f32 %v2708, %v2750
    %v2752 = vpop.f32.mrb[0].mxu0
    %v2753 = vadd.f32 %v2710, %v2752
    %v2754 = vpop.f32.mrb[0].mxu0
    %v2755 = vadd.f32 %v2712, %v2754
    %2756 = vdwg.mxu0
    %2757 = vmatprep.subr.bf16.mxu0 %v1736
    %2758 = vmatpush1.bf16.msra.mxu0 %v1735
    %2759 = vmatprep.subr.bf16.mxu0 %v1744
    %2760 = vmatpush1.bf16.msra.mxu0 %v1743
    %2761 = vmatprep.subr.bf16.mxu0 %v1752
    %2762 = vmatpush1.bf16.msra.mxu0 %v1751
    %2763 = vmatprep.subr.bf16.mxu0 %v1760
    %2764 = vmatpush1.bf16.msra.mxu0 %v1759
    %2765 = vmatprep.subr.bf16.mxu0 %v1768
    %2766 = vmatpush1.bf16.msra.mxu0 %v1767
    %2767 = vmatprep.subr.bf16.mxu0 %v1776
    %2768 = vmatpush1.bf16.msra.mxu0 %v1775
    %2769 = vmatprep.subr.bf16.mxu0 %v1784
    %2770 = vmatpush1.bf16.msra.mxu0 %v1783
    %2771 = vmatprep.subr.bf16.mxu0 %v1792
    %2772 = vmatpush1.bf16.msra.mxu0 %v1791
    %2773 = vmatprep.subr.bf16.mxu0 %v1800
    %2774 = vmatpush1.bf16.msra.mxu0 %v1799
    %2775 = vmatprep.subr.bf16.mxu0 %v1808
    %2776 = vmatpush1.bf16.msra.mxu0 %v1807
    %2777 = vmatprep.subr.bf16.mxu0 %v1816
    %2778 = vmatpush1.bf16.msra.mxu0 %v1815
    %2779 = vmatprep.subr.bf16.mxu0 %v1824
    %2780 = vmatpush1.bf16.msra.mxu0 %v1823
    %2781 = vmatprep.subr.bf16.mxu0 %v1832
    %2782 = vmatpush1.bf16.msra.mxu0 %v1831
    %2783 = vmatprep.subr.bf16.mxu0 %v1840
    %2784 = vmatpush1.bf16.msra.mxu0 %v1839
    %2785 = vmatprep.subr.bf16.mxu0 %v1848
    %2786 = vmatpush1.bf16.msra.mxu0 %v1847
    %2787 = vmatprep.subr.bf16.mxu0 %v1856
    %2788 = vmatpush1.bf16.msra.mxu0 %v1855
    %2789 = vmatprep.mubr.bf16.mxu0 %v568
    %2790 = vmatmul.mubr.bf16.gmra.mrb[0].mxu0 %v567
    %v2791 = vpop.f32.mrb[0].mxu0
    %v2792 = vadd.f32 %v528, %v2791
    %v2793 = vpop.f32.mrb[0].mxu0
    %v2794 = vadd.f32 %v532, %v2793
    %v2795 = vpop.f32.mrb[0].mxu0
    %v2796 = vadd.f32 %v528, %v2795
    %v2797 = vpop.f32.mrb[0].mxu0
    %v2798 = vadd.f32 %v532, %v2797
    %2799 = vdwg.mxu0
    %2800 = vmatprep.subr.bf16.mxu0 %v1864
    %2801 = vmatpush1.bf16.msra.mxu0 %v1863
    %2802 = vmatprep.subr.bf16.mxu0 %v1872
    %2803 = vmatpush1.bf16.msra.mxu0 %v1871
    %2804 = vmatprep.subr.bf16.mxu0 %v1880
    %2805 = vmatpush1.bf16.msra.mxu0 %v1879
    %2806 = vmatprep.subr.bf16.mxu0 %v1888
    %2807 = vmatpush1.bf16.msra.mxu0 %v1887
    %2808 = vmatprep.subr.bf16.mxu0 %v1896
    %2809 = vmatpush1.bf16.msra.mxu0 %v1895
    %2810 = vmatprep.subr.bf16.mxu0 %v1904
    %2811 = vmatpush1.bf16.msra.mxu0 %v1903
    %2812 = vmatprep.subr.bf16.mxu0 %v1912
    %2813 = vmatpush1.bf16.msra.mxu0 %v1911
    %2814 = vmatprep.subr.bf16.mxu0 %v1920
    %2815 = vmatpush1.bf16.msra.mxu0 %v1919
    %2816 = vmatprep.subr.bf16.mxu0 %v1928
    %2817 = vmatpush1.bf16.msra.mxu0 %v1927
    %2818 = vmatprep.subr.bf16.mxu0 %v1936
    %2819 = vmatpush1.bf16.msra.mxu0 %v1935
    %2820 = vmatprep.subr.bf16.mxu0 %v1944
    %2821 = vmatpush1.bf16.msra.mxu0 %v1943
    %2822 = vmatprep.subr.bf16.mxu0 %v1952
    %2823 = vmatpush1.bf16.msra.mxu0 %v1951
    %2824 = vmatprep.subr.bf16.mxu0 %v1960
    %2825 = vmatpush1.bf16.msra.mxu0 %v1959
    %2826 = vmatprep.subr.bf16.mxu0 %v1968
    %2827 = vmatpush1.bf16.msra.mxu0 %v1967
    %2828 = vmatprep.subr.bf16.mxu0 %v1976
    %2829 = vmatpush1.bf16.msra.mxu0 %v1975
    %2830 = vmatprep.subr.bf16.mxu0 %v1984
    %2831 = vmatpush1.bf16.msra.mxu0 %v1983
    %2832 = vmatprep.mubr.bf16.mxu0 %v570
    %2833 = vmatmul.mubr.bf16.gmra.mrb[0].mxu0 %v569
    %v2834 = vpop.f32.mrb[0].mxu0
    %v2835 = vadd.f32 %v2792, %v2834
    %v2836 = vpop.f32.mrb[0].mxu0
    %v2837 = vadd.f32 %v2794, %v2836
    %v2838 = vpop.f32.mrb[0].mxu0
    %v2839 = vadd.f32 %v2796, %v2838
    %v2840 = vpop.f32.mrb[0].mxu0
    %v2841 = vadd.f32 %v2798, %v2840
    %2842 = vdwg.mxu0
    %2843 = vmatprep.subr.bf16.mxu0 %v1992
    %2844 = vmatpush1.bf16.msra.mxu0 %v1991
    %2845 = vmatprep.subr.bf16.mxu0 %v2000
    %2846 = vmatpush1.bf16.msra.mxu0 %v1999
    %2847 = vmatprep.subr.bf16.mxu0 %v2008
    %2848 = vmatpush1.bf16.msra.mxu0 %v2007
    %2849 = vmatprep.subr.bf16.mxu0 %v2016
    %2850 = vmatpush1.bf16.msra.mxu0 %v2015
    %2851 = vmatprep.subr.bf16.mxu0 %v2024
    %2852 = vmatpush1.bf16.msra.mxu0 %v2023
    %2853 = vmatprep.subr.bf16.mxu0 %v2032
    %2854 = vmatpush1.bf16.msra.mxu0 %v2031
    %2855 = vmatprep.subr.bf16.mxu0 %v2040
    %2856 = vmatpush1.bf16.msra.mxu0 %v2039
    %2857 = vmatprep.subr.bf16.mxu0 %v2048
    %2858 = vmatpush1.bf16.msra.mxu0 %v2047
    %2859 = vmatprep.subr.bf16.mxu0 %v2056
    %2860 = vmatpush1.bf16.msra.mxu0 %v2055
    %2861 = vmatprep.subr.bf16.mxu0 %v2064
    %2862 = vmatpush1.bf16.msra.mxu0 %v2063
    %2863 = vmatprep.subr.bf16.mxu0 %v2072
    %2864 = vmatpush1.bf16.msra.mxu0 %v2071
    %2865 = vmatprep.subr.bf16.mxu0 %v2080
    %2866 = vmatpush1.bf16.msra.mxu0 %v2079
    %2867 = vmatprep.subr.bf16.mxu0 %v2088
    %2868 = vmatpush1.bf16.msra.mxu0 %v2087
    %2869 = vmatprep.subr.bf16.mxu0 %v2096
    %2870 = vmatpush1.bf16.msra.mxu0 %v2095
    %2871 = vmatprep.subr.bf16.mxu0 %v2104
    %2872 = vmatpush1.bf16.msra.mxu0 %v2103
    %2873 = vmatprep.subr.bf16.mxu0 %v2112
    %2874 = vmatpush1.bf16.msra.mxu0 %v2111
    %2875 = vmatprep.mubr.bf16.mxu0 %v572
    %2876 = vmatmul.mubr.bf16.gmra.mrb[0].mxu0 %v571
    %v2877 = vpop.f32.mrb[0].mxu0
    %v2878 = vadd.f32 %v2835, %v2877
    %v2879 = vpop.f32.mrb[0].mxu0
    %v2880 = vadd.f32 %v2837, %v2879
    %v2881 = vpop.f32.mrb[0].mxu0
    %v2882 = vadd.f32 %v2839, %v2881
    %v2883 = vpop.f32.mrb[0].mxu0
    %v2884 = vadd.f32 %v2841, %v2883
    %2885 = vdwg.mxu0
    %2886 = vmatprep.subr.bf16.mxu0 %v1738
    %2887 = vmatpush1.bf16.msra.mxu0 %v1737
    %2888 = vmatprep.subr.bf16.mxu0 %v1746
    %2889 = vmatpush1.bf16.msra.mxu0 %v1745
    %2890 = vmatprep.subr.bf16.mxu0 %v1754
    %2891 = vmatpush1.bf16.msra.mxu0 %v1753
    %2892 = vmatprep.subr.bf16.mxu0 %v1762
    %2893 = vmatpush1.bf16.msra.mxu0 %v1761
    %2894 = vmatprep.subr.bf16.mxu0 %v1770
    %2895 = vmatpush1.bf16.msra.mxu0 %v1769
    %2896 = vmatprep.subr.bf16.mxu0 %v1778
    %2897 = vmatpush1.bf16.msra.mxu0 %v1777
    %2898 = vmatprep.subr.bf16.mxu0 %v1786
    %2899 = vmatpush1.bf16.msra.mxu0 %v1785
    %2900 = vmatprep.subr.bf16.mxu0 %v1794
    %2901 = vmatpush1.bf16.msra.mxu0 %v1793
    %2902 = vmatprep.subr.bf16.mxu0 %v1802
    %2903 = vmatpush1.bf16.msra.mxu0 %v1801
    %2904 = vmatprep.subr.bf16.mxu0 %v1810
    %2905 = vmatpush1.bf16.msra.mxu0 %v1809
    %2906 = vmatprep.subr.bf16.mxu0 %v1818
    %2907 = vmatpush1.bf16.msra.mxu0 %v1817
    %2908 = vmatprep.subr.bf16.mxu0 %v1826
    %2909 = vmatpush1.bf16.msra.mxu0 %v1825
    %2910 = vmatprep.subr.bf16.mxu0 %v1834
    %2911 = vmatpush1.bf16.msra.mxu0 %v1833
    %2912 = vmatprep.subr.bf16.mxu0 %v1842
    %2913 = vmatpush1.bf16.msra.mxu0 %v1841
    %2914 = vmatprep.subr.bf16.mxu0 %v1850
    %2915 = vmatpush1.bf16.msra.mxu0 %v1849
    %2916 = vmatprep.subr.bf16.mxu0 %v1858
    %2917 = vmatpush1.bf16.msra.mxu0 %v1857
    %2918 = vmatprep.mubr.bf16.mxu0 %v568
    %2919 = vmatmul.mubr.bf16.gmra.mrb[0].mxu0 %v567
    %v2920 = vpop.f32.mrb[0].mxu0
    %v2921 = vadd.f32 %v536, %v2920
    %v2922 = vpop.f32.mrb[0].mxu0
    %v2923 = vadd.f32 %v540, %v2922
    %v2924 = vpop.f32.mrb[0].mxu0
    %v2925 = vadd.f32 %v536, %v2924
    %v2926 = vpop.f32.mrb[0].mxu0
    %v2927 = vadd.f32 %v540, %v2926
    %2928 = vdwg.mxu0
    %2929 = vmatprep.subr.bf16.mxu0 %v1866
    %2930 = vmatpush1.bf16.msra.mxu0 %v1865
    %2931 = vmatprep.subr.bf16.mxu0 %v1874
    %2932 = vmatpush1.bf16.msra.mxu0 %v1873
    %2933 = vmatprep.subr.bf16.mxu0 %v1882
    %2934 = vmatpush1.bf16.msra.mxu0 %v1881
    %2935 = vmatprep.subr.bf16.mxu0 %v1890
    %2936 = vmatpush1.bf16.msra.mxu0 %v1889
    %2937 = vmatprep.subr.bf16.mxu0 %v1898
    %2938 = vmatpush1.bf16.msra.mxu0 %v1897
    %2939 = vmatprep.subr.bf16.mxu0 %v1906
    %2940 = vmatpush1.bf16.msra.mxu0 %v1905
    %2941 = vmatprep.subr.bf16.mxu0 %v1914
    %2942 = vmatpush1.bf16.msra.mxu0 %v1913
    %2943 = vmatprep.subr.bf16.mxu0 %v1922
    %2944 = vmatpush1.bf16.msra.mxu0 %v1921
    %2945 = vmatprep.subr.bf16.mxu0 %v1930
    %2946 = vmatpush1.bf16.msra.mxu0 %v1929
    %2947 = vmatprep.subr.bf16.mxu0 %v1938
    %2948 = vmatpush1.bf16.msra.mxu0 %v1937
    %2949 = vmatprep.subr.bf16.mxu0 %v1946
    %2950 = vmatpush1.bf16.msra.mxu0 %v1945
    %2951 = vmatprep.subr.bf16.mxu0 %v1954
    %2952 = vmatpush1.bf16.msra.mxu0 %v1953
    %2953 = vmatprep.subr.bf16.mxu0 %v1962
    %2954 = vmatpush1.bf16.msra.mxu0 %v1961
    %2955 = vmatprep.subr.bf16.mxu0 %v1970
    %2956 = vmatpush1.bf16.msra.mxu0 %v1969
    %2957 = vmatprep.subr.bf16.mxu0 %v1978
    %2958 = vmatpush1.bf16.msra.mxu0 %v1977
    %2959 = vmatprep.subr.bf16.mxu0 %v1986
    %2960 = vmatpush1.bf16.msra.mxu0 %v1985
    %2961 = vmatprep.mubr.bf16.mxu0 %v570
    %2962 = vmatmul.mubr.bf16.gmra.mrb[0].mxu0 %v569
    %v2963 = vpop.f32.mrb[0].mxu0
    %v2964 = vadd.f32 %v2921, %v2963
    %v2965 = vpop.f32.mrb[0].mxu0
    %v2966 = vadd.f32 %v2923, %v2965
    %v2967 = vpop.f32.mrb[0].mxu0
    %v2968 = vadd.f32 %v2925, %v2967
    %v2969 = vpop.f32.mrb[0].mxu0
    %v2970 = vadd.f32 %v2927, %v2969
    %2971 = vdwg.mxu0
    %2972 = vmatprep.subr.bf16.mxu0 %v1994
    %2973 = vmatpush1.bf16.msra.mxu0 %v1993
    %2974 = vmatprep.subr.bf16.mxu0 %v2002
    %2975 = vmatpush1.bf16.msra.mxu0 %v2001
    %2976 = vmatprep.subr.bf16.mxu0 %v2010
    %2977 = vmatpush1.bf16.msra.mxu0 %v2009
    %2978 = vmatprep.subr.bf16.mxu0 %v2018
    %2979 = vmatpush1.bf16.msra.mxu0 %v2017
    %2980 = vmatprep.subr.bf16.mxu0 %v2026
    %2981 = vmatpush1.bf16.msra.mxu0 %v2025
    %2982 = vmatprep.subr.bf16.mxu0 %v2034
    %2983 = vmatpush1.bf16.msra.mxu0 %v2033
    %2984 = vmatprep.subr.bf16.mxu0 %v2042
    %2985 = vmatpush1.bf16.msra.mxu0 %v2041
    %2986 = vmatprep.subr.bf16.mxu0 %v2050
    %2987 = vmatpush1.bf16.msra.mxu0 %v2049
    %2988 = vmatprep.subr.bf16.mxu0 %v2058
    %2989 = vmatpush1.bf16.msra.mxu0 %v2057
    %2990 = vmatprep.subr.bf16.mxu0 %v2066
    %2991 = vmatpush1.bf16.msra.mxu0 %v2065
    %2992 = vmatprep.subr.bf16.mxu0 %v2074
    %2993 = vmatpush1.bf16.msra.mxu0 %v2073
    %2994 = vmatprep.subr.bf16.mxu0 %v2082
    %2995 = vmatpush1.bf16.msra.mxu0 %v2081
    %2996 = vmatprep.subr.bf16.mxu0 %v2090
    %2997 = vmatpush1.bf16.msra.mxu0 %v2089
    %2998 = vmatprep.subr.bf16.mxu0 %v2098
    %2999 = vmatpush1.bf16.msra.mxu0 %v2097
    %3000 = vmatprep.subr.bf16.mxu0 %v2106
    %3001 = vmatpush1.bf16.msra.mxu0 %v2105
    %3002 = vmatprep.subr.bf16.mxu0 %v2114
    %3003 = vmatpush1.bf16.msra.mxu0 %v2113
    %3004 = vmatprep.mubr.bf16.mxu0 %v572
    %3005 = vmatmul.mubr.bf16.gmra.mrb[0].mxu0 %v571
    %v3006 = vpop.f32.mrb[0].mxu0
    %v3007 = vadd.f32 %v2964, %v3006
    %v3008 = vpop.f32.mrb[0].mxu0
    %v3009 = vadd.f32 %v2966, %v3008
    %v3010 = vpop.f32.mrb[0].mxu0
    %v3011 = vadd.f32 %v2968, %v3010
    %v3012 = vpop.f32.mrb[0].mxu0
    %v3013 = vadd.f32 %v2970, %v3012
    %3014 = vdwg.mxu0
    %v3015 = vmul.f32 %v2620, 0.5
    %v3016 = vmul.f32 %v2622, 0.5
    %v3017 = vmul.f32 %v2749, 0.5
    %v3018 = vmul.f32 %v2751, 0.5
    %v3019 = vmul.f32 %v2878, 0.5
    %v3020 = vmul.f32 %v2880, 0.5
    %v3021 = vmul.f32 %v3007, 0.5
    %v3022 = vmul.f32 %v3009, 0.5
    %v3023 = vmul.f32 %v2624, 0.5
    %v3024 = vmul.f32 %v2626, 0.5
    %v3025 = vmul.f32 %v2753, 0.5
    %v3026 = vmul.f32 %v2755, 0.5
    %v3027 = vmul.f32 %v2882, 0.5
    %v3028 = vmul.f32 %v2884, 0.5
    %v3029 = vmul.f32 %v3011, 0.5
    %v3030 = vmul.f32 %v3013, 0.5
    %v3031 = vmul.f32 %v2620, 0.70710677
    %v3032 = vmul.f32 %v2622, 0.70710677
    %v3033 = vmul.f32 %v2749, 0.70710677
    %v3034 = vmul.f32 %v2751, 0.70710677
    %v3035 = vmul.f32 %v2878, 0.70710677
    %v3036 = vmul.f32 %v2880, 0.70710677
    %v3037 = vmul.f32 %v3007, 0.70710677
    %v3038 = vmul.f32 %v3009, 0.70710677
    %v3039 = vmul.f32 %v2624, 0.70710677
    %v3040 = vmul.f32 %v2626, 0.70710677
    %v3041 = vmul.f32 %v2753, 0.70710677
    %v3042 = vmul.f32 %v2755, 0.70710677
    %v3043 = vmul.f32 %v2882, 0.70710677
    %v3044 = vmul.f32 %v2884, 0.70710677
    %v3045 = vmul.f32 %v3011, 0.70710677
    %v3046 = vmul.f32 %v3013, 0.70710677
    %v3047 = verf.f32.pop %v3031
    %v3048 = verf.f32.pop %v3032
    %v3049 = verf.f32.pop %v3033
    %v3050 = verf.f32.pop %v3034
    %v3051 = verf.f32.pop %v3035
    %v3052 = verf.f32.pop %v3036
    %v3053 = verf.f32.pop %v3037
    %v3054 = verf.f32.pop %v3038
    %v3055 = verf.f32.pop %v3039
    %v3056 = verf.f32.pop %v3040
    %v3057 = verf.f32.pop %v3041
    %v3058 = verf.f32.pop %v3042
    %v3059 = verf.f32.pop %v3043
    %v3060 = verf.f32.pop %v3044
    %v3061 = verf.f32.pop %v3045
    %v3062 = verf.f32.pop %v3046
    %v3063 = vadd.f32 %v3047, 1.0
    %v3064 = vadd.f32 %v3048, 1.0
    %v3065 = vadd.f32 %v3049, 1.0
    %v3066 = vadd.f32 %v3050, 1.0
    %v3067 = vadd.f32 %v3051, 1.0
    %v3068 = vadd.f32 %v3052, 1.0
    %v3069 = vadd.f32 %v3053, 1.0
    %v3070 = vadd.f32 %v3054, 1.0
    %v3071 = vadd.f32 %v3055, 1.0
    %v3072 = vadd.f32 %v3056, 1.0
    %v3073 = vadd.f32 %v3057, 1.0
    %v3074 = vadd.f32 %v3058, 1.0
    %v3075 = vadd.f32 %v3059, 1.0
    %v3076 = vadd.f32 %v3060, 1.0
    %v3077 = vadd.f32 %v3061, 1.0
    %v3078 = vadd.f32 %v3062, 1.0
    %v3079 = vmul.f32 %v3015, %v3063
    %v3080 = vmul.f32 %v3016, %v3064
    %v3081 = vmul.f32 %v3017, %v3065
    %v3082 = vmul.f32 %v3018, %v3066
    %v3083 = vmul.f32 %v3019, %v3067
    %v3084 = vmul.f32 %v3020, %v3068
    %v3085 = vmul.f32 %v3021, %v3069
    %v3086 = vmul.f32 %v3022, %v3070
    %v3087 = vmul.f32 %v3023, %v3071
    %v3088 = vmul.f32 %v3024, %v3072
    %v3089 = vmul.f32 %v3025, %v3073
    %v3090 = vmul.f32 %v3026, %v3074
    %v3091 = vmul.f32 %v3027, %v3075
    %v3092 = vmul.f32 %v3028, %v3076
    %v3093 = vmul.f32 %v3029, %v3077
    %v3094 = vmul.f32 %v3030, %v3078
    %v3095 = vld [vmem:[#allocation8] sm:$0xf]
    %v3096 = vld [vmem:[#allocation8 + $0x4] sm:$0xf]
    %v3097 = vld [vmem:[#allocation8 + $0x8] sm:$0xf]
    %v3098 = vld [vmem:[#allocation8 + $0xc] sm:$0xf]
    %v3099 = vld [vmem:[#allocation8 + $0x10] sm:$0xf]
    %v3100 = vld [vmem:[#allocation8 + $0x14] sm:$0xf]
    %v3101 = vld [vmem:[#allocation8 + $0x18] sm:$0xf]
    %v3102 = vld [vmem:[#allocation8 + $0x1c] sm:$0xf]
    %v3103 = vld [vmem:[#allocation8 + $0x20] sm:$0xf]
    %v3104 = vld [vmem:[#allocation8 + $0x24] sm:$0xf]
    %v3105 = vld [vmem:[#allocation8 + $0x28] sm:$0xf]
    %v3106 = vld [vmem:[#allocation8 + $0x2c] sm:$0xf]
    %v3107 = vld [vmem:[#allocation8 + $0x30] sm:$0xf]
    %v3108 = vld [vmem:[#allocation8 + $0x34] sm:$0xf]
    %v3109 = vld [vmem:[#allocation8 + $0x38] sm:$0xf]
    %v3110 = vld [vmem:[#allocation8 + $0x3c] sm:$0xf]
    %v3111 = vld [vmem:[#allocation8 + $0x40] sm:$0xf]
    %v3112 = vld [vmem:[#allocation8 + $0x44] sm:$0xf]
    %v3113 = vld [vmem:[#allocation8 + $0x48] sm:$0xf]
    %v3114 = vld [vmem:[#allocation8 + $0x4c] sm:$0xf]
    %v3115 = vld [vmem:[#allocation8 + $0x50] sm:$0xf]
    %v3116 = vld [vmem:[#allocation8 + $0x54] sm:$0xf]
    %v3117 = vld [vmem:[#allocation8 + $0x58] sm:$0xf]
    %v3118 = vld [vmem:[#allocation8 + $0x5c] sm:$0xf]
    %v3119 = vld [vmem:[#allocation8 + $0x60] sm:$0xf]
    %v3120 = vld [vmem:[#allocation8 + $0x64] sm:$0xf]
    %v3121 = vld [vmem:[#allocation8 + $0x68] sm:$0xf]
    %v3122 = vld [vmem:[#allocation8 + $0x6c] sm:$0xf]
    %v3123 = vld [vmem:[#allocation8 + $0x70] sm:$0xf]
    %v3124 = vld [vmem:[#allocation8 + $0x74] sm:$0xf]
    %v3125 = vld [vmem:[#allocation8 + $0x78] sm:$0xf]
    %v3126 = vld [vmem:[#allocation8 + $0x7c] sm:$0xf]
    %v3127 = vld [vmem:[#allocation8 + $0x80] sm:$0xf]
    %v3128 = vld [vmem:[#allocation8 + $0x84] sm:$0xf]
    %v3129 = vld [vmem:[#allocation8 + $0x88] sm:$0xf]
    %v3130 = vld [vmem:[#allocation8 + $0x8c] sm:$0xf]
    %v3131 = vld [vmem:[#allocation8 + $0x90] sm:$0xf]
    %v3132 = vld [vmem:[#allocation8 + $0x94] sm:$0xf]
    %v3133 = vld [vmem:[#allocation8 + $0x98] sm:$0xf]
    %v3134 = vld [vmem:[#allocation8 + $0x9c] sm:$0xf]
    %v3135 = vld [vmem:[#allocation8 + $0xa0] sm:$0xf]
    %v3136 = vld [vmem:[#allocation8 + $0xa4] sm:$0xf]
    %v3137 = vld [vmem:[#allocation8 + $0xa8] sm:$0xf]
    %v3138 = vld [vmem:[#allocation8 + $0xac] sm:$0xf]
    %v3139 = vld [vmem:[#allocation8 + $0xb0] sm:$0xf]
    %v3140 = vld [vmem:[#allocation8 + $0xb4] sm:$0xf]
    %v3141 = vld [vmem:[#allocation8 + $0xb8] sm:$0xf]
    %v3142 = vld [vmem:[#allocation8 + $0xbc] sm:$0xf]
    %v3143 = vld [vmem:[#allocation8 + $0xc0] sm:$0xf]
    %v3144 = vld [vmem:[#allocation8 + $0xc4] sm:$0xf]
    %v3145 = vld [vmem:[#allocation8 + $0xc8] sm:$0xf]
    %v3146 = vld [vmem:[#allocation8 + $0xcc] sm:$0xf]
    %v3147 = vld [vmem:[#allocation8 + $0xd0] sm:$0xf]
    %v3148 = vld [vmem:[#allocation8 + $0xd4] sm:$0xf]
    %v3149 = vld [vmem:[#allocation8 + $0xd8] sm:$0xf]
    %v3150 = vld [vmem:[#allocation8 + $0xdc] sm:$0xf]
    %v3151 = vld [vmem:[#allocation8 + $0xe0] sm:$0xf]
    %v3152 = vld [vmem:[#allocation8 + $0xe4] sm:$0xf]
    %v3153 = vld [vmem:[#allocation8 + $0xe8] sm:$0xf]
    %v3154 = vld [vmem:[#allocation8 + $0xec] sm:$0xf]
    %v3155 = vld [vmem:[#allocation8 + $0xf0] sm:$0xf]
    %v3156 = vld [vmem:[#allocation8 + $0xf4] sm:$0xf]
    %v3157 = vld [vmem:[#allocation8 + $0xf8] sm:$0xf]
    %v3158 = vld [vmem:[#allocation8 + $0xfc] sm:$0xf]
    %v3159 = vld [vmem:[#allocation8 + $0x100] sm:$0xf]
    %v3160 = vld [vmem:[#allocation8 + $0x104] sm:$0xf]
    %v3161 = vld [vmem:[#allocation8 + $0x108] sm:$0xf]
    %v3162 = vld [vmem:[#allocation8 + $0x10c] sm:$0xf]
    %v3163 = vld [vmem:[#allocation8 + $0x110] sm:$0xf]
    %v3164 = vld [vmem:[#allocation8 + $0x114] sm:$0xf]
    %v3165 = vld [vmem:[#allocation8 + $0x118] sm:$0xf]
    %v3166 = vld [vmem:[#allocation8 + $0x11c] sm:$0xf]
    %v3167 = vld [vmem:[#allocation8 + $0x120] sm:$0xf]
    %v3168 = vld [vmem:[#allocation8 + $0x124] sm:$0xf]
    %v3169 = vld [vmem:[#allocation8 + $0x128] sm:$0xf]
    %v3170 = vld [vmem:[#allocation8 + $0x12c] sm:$0xf]
    %v3171 = vld [vmem:[#allocation8 + $0x130] sm:$0xf]
    %v3172 = vld [vmem:[#allocation8 + $0x134] sm:$0xf]
    %v3173 = vld [vmem:[#allocation8 + $0x138] sm:$0xf]
    %v3174 = vld [vmem:[#allocation8 + $0x13c] sm:$0xf]
    %v3175 = vld [vmem:[#allocation8 + $0x140] sm:$0xf]
    %v3176 = vld [vmem:[#allocation8 + $0x144] sm:$0xf]
    %v3177 = vld [vmem:[#allocation8 + $0x148] sm:$0xf]
    %v3178 = vld [vmem:[#allocation8 + $0x14c] sm:$0xf]
    %v3179 = vld [vmem:[#allocation8 + $0x150] sm:$0xf]
    %v3180 = vld [vmem:[#allocation8 + $0x154] sm:$0xf]
    %v3181 = vld [vmem:[#allocation8 + $0x158] sm:$0xf]
    %v3182 = vld [vmem:[#allocation8 + $0x15c] sm:$0xf]
    %v3183 = vld [vmem:[#allocation8 + $0x160] sm:$0xf]
    %v3184 = vld [vmem:[#allocation8 + $0x164] sm:$0xf]
    %v3185 = vld [vmem:[#allocation8 + $0x168] sm:$0xf]
    %v3186 = vld [vmem:[#allocation8 + $0x16c] sm:$0xf]
    %v3187 = vld [vmem:[#allocation8 + $0x170] sm:$0xf]
    %v3188 = vld [vmem:[#allocation8 + $0x174] sm:$0xf]
    %v3189 = vld [vmem:[#allocation8 + $0x178] sm:$0xf]
    %v3190 = vld [vmem:[#allocation8 + $0x17c] sm:$0xf]
    %v3191 = vld [vmem:[#allocation8 + $0x180] sm:$0xf]
    %v3192 = vld [vmem:[#allocation8 + $0x184] sm:$0xf]
    %v3193 = vld [vmem:[#allocation8 + $0x188] sm:$0xf]
    %v3194 = vld [vmem:[#allocation8 + $0x18c] sm:$0xf]
    %v3195 = vld [vmem:[#allocation8 + $0x190] sm:$0xf]
    %v3196 = vld [vmem:[#allocation8 + $0x194] sm:$0xf]
    %v3197 = vld [vmem:[#allocation8 + $0x198] sm:$0xf]
    %v3198 = vld [vmem:[#allocation8 + $0x19c] sm:$0xf]
    %v3199 = vld [vmem:[#allocation8 + $0x1a0] sm:$0xf]
    %v3200 = vld [vmem:[#allocation8 + $0x1a4] sm:$0xf]
    %v3201 = vld [vmem:[#allocation8 + $0x1a8] sm:$0xf]
    %v3202 = vld [vmem:[#allocation8 + $0x1ac] sm:$0xf]
    %v3203 = vld [vmem:[#allocation8 + $0x1b0] sm:$0xf]
    %v3204 = vld [vmem:[#allocation8 + $0x1b4] sm:$0xf]
    %v3205 = vld [vmem:[#allocation8 + $0x1b8] sm:$0xf]
    %v3206 = vld [vmem:[#allocation8 + $0x1bc] sm:$0xf]
    %v3207 = vld [vmem:[#allocation8 + $0x1c0] sm:$0xf]
    %v3208 = vld [vmem:[#allocation8 + $0x1c4] sm:$0xf]
    %v3209 = vld [vmem:[#allocation8 + $0x1c8] sm:$0xf]
    %v3210 = vld [vmem:[#allocation8 + $0x1cc] sm:$0xf]
    %v3211 = vld [vmem:[#allocation8 + $0x1d0] sm:$0xf]
    %v3212 = vld [vmem:[#allocation8 + $0x1d4] sm:$0xf]
    %v3213 = vld [vmem:[#allocation8 + $0x1d8] sm:$0xf]
    %v3214 = vld [vmem:[#allocation8 + $0x1dc] sm:$0xf]
    %v3215 = vld [vmem:[#allocation8 + $0x1e0] sm:$0xf]
    %v3216 = vld [vmem:[#allocation8 + $0x1e4] sm:$0xf]
    %v3217 = vld [vmem:[#allocation8 + $0x1e8] sm:$0xf]
    %v3218 = vld [vmem:[#allocation8 + $0x1ec] sm:$0xf]
    %v3219 = vld [vmem:[#allocation8 + $0x1f0] sm:$0xf]
    %v3220 = vld [vmem:[#allocation8 + $0x1f4] sm:$0xf]
    %v3221 = vld [vmem:[#allocation8 + $0x1f8] sm:$0xf]
    %v3222 = vld [vmem:[#allocation8 + $0x1fc] sm:$0xf]
    %v3223 = vld [vmem:[#allocation10] sm:$0x1]
    %v3224 = vpack.c.bf16 %v3087, %v3079
    %v3225 = vpack.c.bf16 %v3088, %v3080
    %v3226 = vpack.c.bf16 %v3089, %v3081
    %v3227 = vpack.c.bf16 %v3090, %v3082
    %v3228 = vpack.c.bf16 %v3091, %v3083
    %v3229 = vpack.c.bf16 %v3092, %v3084
    %v3230 = vpack.c.bf16 %v3093, %v3085
    %v3231 = vpack.c.bf16 %v3094, %v3086
    %v3233 = vlaneseq
    %v3234 = vshrl.u32 %v3233, 7
    %v3235 = vsub.s32 0, %v3234
    %v3236 = vrot.slane %v3223, %v3235
    %v3366 = vunpack.c.l.b16 %v3095
    %v3367 = vunpack.c.l.b16 %v3096
    %v3368 = vunpack.c.l.b16 %v3097
    %v3369 = vunpack.c.l.b16 %v3098
    %v3370 = vunpack.c.l.b16 %v3099
    %v3371 = vunpack.c.l.b16 %v3100
    %v3372 = vunpack.c.l.b16 %v3101
    %v3373 = vunpack.c.l.b16 %v3102
    %v3374 = vunpack.c.l.b16 %v3103
    %v3375 = vunpack.c.l.b16 %v3104
    %v3376 = vunpack.c.l.b16 %v3105
    %v3377 = vunpack.c.l.b16 %v3106
    %v3378 = vunpack.c.l.b16 %v3107
    %v3379 = vunpack.c.l.b16 %v3108
    %v3380 = vunpack.c.l.b16 %v3109
    %v3381 = vunpack.c.l.b16 %v3110
    %v3382 = vunpack.c.l.b16 %v3111
    %v3383 = vunpack.c.l.b16 %v3112
    %v3384 = vunpack.c.l.b16 %v3113
    %v3385 = vunpack.c.l.b16 %v3114
    %v3386 = vunpack.c.l.b16 %v3115
    %v3387 = vunpack.c.l.b16 %v3116
    %v3388 = vunpack.c.l.b16 %v3117
    %v3389 = vunpack.c.l.b16 %v3118
    %v3390 = vunpack.c.l.b16 %v3119
    %v3391 = vunpack.c.l.b16 %v3120
    %v3392 = vunpack.c.l.b16 %v3121
    %v3393 = vunpack.c.l.b16 %v3122
    %v3394 = vunpack.c.l.b16 %v3123
    %v3395 = vunpack.c.l.b16 %v3124
    %v3396 = vunpack.c.l.b16 %v3125
    %v3397 = vunpack.c.l.b16 %v3126
    %v3398 = vunpack.c.l.b16 %v3127
    %v3399 = vunpack.c.l.b16 %v3128
    %v3400 = vunpack.c.l.b16 %v3129
    %v3401 = vunpack.c.l.b16 %v3130
    %v3402 = vunpack.c.l.b16 %v3131
    %v3403 = vunpack.c.l.b16 %v3132
    %v3404 = vunpack.c.l.b16 %v3133
    %v3405 = vunpack.c.l.b16 %v3134
    %v3406 = vunpack.c.l.b16 %v3135
    %v3407 = vunpack.c.l.b16 %v3136
    %v3408 = vunpack.c.l.b16 %v3137
    %v3409 = vunpack.c.l.b16 %v3138
    %v3410 = vunpack.c.l.b16 %v3139
    %v3411 = vunpack.c.l.b16 %v3140
    %v3412 = vunpack.c.l.b16 %v3141
    %v3413 = vunpack.c.l.b16 %v3142
    %v3414 = vunpack.c.l.b16 %v3143
    %v3415 = vunpack.c.l.b16 %v3144
    %v3416 = vunpack.c.l.b16 %v3145
    %v3417 = vunpack.c.l.b16 %v3146
    %v3418 = vunpack.c.l.b16 %v3147
    %v3419 = vunpack.c.l.b16 %v3148
    %v3420 = vunpack.c.l.b16 %v3149
    %v3421 = vunpack.c.l.b16 %v3150
    %v3422 = vunpack.c.l.b16 %v3151
    %v3423 = vunpack.c.l.b16 %v3152
    %v3424 = vunpack.c.l.b16 %v3153
    %v3425 = vunpack.c.l.b16 %v3154
    %v3426 = vunpack.c.l.b16 %v3155
    %v3427 = vunpack.c.l.b16 %v3156
    %v3428 = vunpack.c.l.b16 %v3157
    %v3429 = vunpack.c.l.b16 %v3158
    %v3430 = vunpack.c.l.b16 %v3159
    %v3431 = vunpack.c.l.b16 %v3160
    %v3432 = vunpack.c.l.b16 %v3161
    %v3433 = vunpack.c.l.b16 %v3162
    %v3434 = vunpack.c.l.b16 %v3163
    %v3435 = vunpack.c.l.b16 %v3164
    %v3436 = vunpack.c.l.b16 %v3165
    %v3437 = vunpack.c.l.b16 %v3166
    %v3438 = vunpack.c.l.b16 %v3167
    %v3439 = vunpack.c.l.b16 %v3168
    %v3440 = vunpack.c.l.b16 %v3169
    %v3441 = vunpack.c.l.b16 %v3170
    %v3442 = vunpack.c.l.b16 %v3171
    %v3443 = vunpack.c.l.b16 %v3172
    %v3444 = vunpack.c.l.b16 %v3173
    %v3445 = vunpack.c.l.b16 %v3174
    %v3446 = vunpack.c.l.b16 %v3175
    %v3447 = vunpack.c.l.b16 %v3176
    %v3448 = vunpack.c.l.b16 %v3177
    %v3449 = vunpack.c.l.b16 %v3178
    %v3450 = vunpack.c.l.b16 %v3179
    %v3451 = vunpack.c.l.b16 %v3180
    %v3452 = vunpack.c.l.b16 %v3181
    %v3453 = vunpack.c.l.b16 %v3182
    %v3454 = vunpack.c.l.b16 %v3183
    %v3455 = vunpack.c.l.b16 %v3184
    %v3456 = vunpack.c.l.b16 %v3185
    %v3457 = vunpack.c.l.b16 %v3186
    %v3458 = vunpack.c.l.b16 %v3187
    %v3459 = vunpack.c.l.b16 %v3188
    %v3460 = vunpack.c.l.b16 %v3189
    %v3461 = vunpack.c.l.b16 %v3190
    %v3462 = vunpack.c.l.b16 %v3191
    %v3463 = vunpack.c.l.b16 %v3192
    %v3464 = vunpack.c.l.b16 %v3193
    %v3465 = vunpack.c.l.b16 %v3194
    %v3466 = vunpack.c.l.b16 %v3195
    %v3467 = vunpack.c.l.b16 %v3196
    %v3468 = vunpack.c.l.b16 %v3197
    %v3469 = vunpack.c.l.b16 %v3198
    %v3470 = vunpack.c.l.b16 %v3199
    %v3471 = vunpack.c.l.b16 %v3200
    %v3472 = vunpack.c.l.b16 %v3201
    %v3473 = vunpack.c.l.b16 %v3202
    %v3474 = vunpack.c.l.b16 %v3203
    %v3475 = vunpack.c.l.b16 %v3204
    %v3476 = vunpack.c.l.b16 %v3205
    %v3477 = vunpack.c.l.b16 %v3206
    %v3478 = vunpack.c.l.b16 %v3207
    %v3479 = vunpack.c.l.b16 %v3208
    %v3480 = vunpack.c.l.b16 %v3209
    %v3481 = vunpack.c.l.b16 %v3210
    %v3482 = vunpack.c.l.b16 %v3211
    %v3483 = vunpack.c.l.b16 %v3212
    %v3484 = vunpack.c.l.b16 %v3213
    %v3485 = vunpack.c.l.b16 %v3214
    %v3486 = vunpack.c.l.b16 %v3215
    %v3487 = vunpack.c.l.b16 %v3216
    %v3488 = vunpack.c.l.b16 %v3217
    %v3489 = vunpack.c.l.b16 %v3218
    %v3490 = vunpack.c.l.b16 %v3219
    %v3491 = vunpack.c.l.b16 %v3220
    %v3492 = vunpack.c.l.b16 %v3221
    %v3493 = vunpack.c.l.b16 %v3222
    %v3494 = vpack.c.b16 %v3367, %v3366
    %v3495 = vpack.c.b16 %v3369, %v3368
    %v3496 = vpack.c.b16 %v3371, %v3370
    %v3497 = vpack.c.b16 %v3373, %v3372
    %v3498 = vpack.c.b16 %v3375, %v3374
    %v3499 = vpack.c.b16 %v3377, %v3376
    %v3500 = vpack.c.b16 %v3379, %v3378
    %v3501 = vpack.c.b16 %v3381, %v3380
    %v3502 = vpack.c.b16 %v3383, %v3382
    %v3503 = vpack.c.b16 %v3385, %v3384
    %v3504 = vpack.c.b16 %v3387, %v3386
    %v3505 = vpack.c.b16 %v3389, %v3388
    %v3506 = vpack.c.b16 %v3391, %v3390
    %v3507 = vpack.c.b16 %v3393, %v3392
    %v3508 = vpack.c.b16 %v3395, %v3394
    %v3509 = vpack.c.b16 %v3397, %v3396
    %v3510 = vpack.c.b16 %v3399, %v3398
    %v3511 = vpack.c.b16 %v3401, %v3400
    %v3512 = vpack.c.b16 %v3403, %v3402
    %v3513 = vpack.c.b16 %v3405, %v3404
    %v3514 = vpack.c.b16 %v3407, %v3406
    %v3515 = vpack.c.b16 %v3409, %v3408
    %v3516 = vpack.c.b16 %v3411, %v3410
    %v3517 = vpack.c.b16 %v3413, %v3412
    %v3518 = vpack.c.b16 %v3415, %v3414
    %v3519 = vpack.c.b16 %v3417, %v3416
    %v3520 = vpack.c.b16 %v3419, %v3418
    %v3521 = vpack.c.b16 %v3421, %v3420
    %v3522 = vpack.c.b16 %v3423, %v3422
    %v3523 = vpack.c.b16 %v3425, %v3424
    %v3524 = vpack.c.b16 %v3427, %v3426
    %v3525 = vpack.c.b16 %v3429, %v3428
    %v3526 = vpack.c.b16 %v3431, %v3430
    %v3527 = vpack.c.b16 %v3433, %v3432
    %v3528 = vpack.c.b16 %v3435, %v3434
    %v3529 = vpack.c.b16 %v3437, %v3436
    %v3530 = vpack.c.b16 %v3439, %v3438
    %v3531 = vpack.c.b16 %v3441, %v3440
    %v3532 = vpack.c.b16 %v3443, %v3442
    %v3533 = vpack.c.b16 %v3445, %v3444
    %v3534 = vpack.c.b16 %v3447, %v3446
    %v3535 = vpack.c.b16 %v3449, %v3448
    %v3536 = vpack.c.b16 %v3451, %v3450
    %v3537 = vpack.c.b16 %v3453, %v3452
    %v3538 = vpack.c.b16 %v3455, %v3454
    %v3539 = vpack.c.b16 %v3457, %v3456
    %v3540 = vpack.c.b16 %v3459, %v3458
    %v3541 = vpack.c.b16 %v3461, %v3460
    %v3542 = vpack.c.b16 %v3463, %v3462
    %v3543 = vpack.c.b16 %v3465, %v3464
    %v3544 = vpack.c.b16 %v3467, %v3466
    %v3545 = vpack.c.b16 %v3469, %v3468
    %v3546 = vpack.c.b16 %v3471, %v3470
    %v3547 = vpack.c.b16 %v3473, %v3472
    %v3548 = vpack.c.b16 %v3475, %v3474
    %v3549 = vpack.c.b16 %v3477, %v3476
    %v3550 = vpack.c.b16 %v3479, %v3478
    %v3551 = vpack.c.b16 %v3481, %v3480
    %v3552 = vpack.c.b16 %v3483, %v3482
    %v3553 = vpack.c.b16 %v3485, %v3484
    %v3554 = vpack.c.b16 %v3487, %v3486
    %v3555 = vpack.c.b16 %v3489, %v3488
    %v3556 = vpack.c.b16 %v3491, %v3490
    %v3557 = vpack.c.b16 %v3493, %v3492
    %3622 = vmatprep.subr.bf16.mxu0 0
    %3623 = vmatpush1.bf16.msra.mxu0 %v3494
    %3624 = vmatprep.subr.bf16.mxu0 0
    %3625 = vmatpush1.bf16.msra.mxu0 %v3495
    %3626 = vmatprep.subr.bf16.mxu0 0
    %3627 = vmatpush1.bf16.msra.mxu0 %v3496
    %3628 = vmatprep.subr.bf16.mxu0 0
    %3629 = vmatpush1.bf16.msra.mxu0 %v3497
    %3630 = vmatprep.subr.bf16.mxu0 0
    %3631 = vmatpush1.bf16.msra.mxu0 %v3498
    %3632 = vmatprep.subr.bf16.mxu0 0
    %3633 = vmatpush1.bf16.msra.mxu0 %v3499
    %3634 = vmatprep.subr.bf16.mxu0 0
    %3635 = vmatpush1.bf16.msra.mxu0 %v3500
    %3636 = vmatprep.subr.bf16.mxu0 0
    %3637 = vmatpush1.bf16.msra.mxu0 %v3501
    %3638 = vmatprep.subr.bf16.mxu0 0
    %3639 = vmatpush1.bf16.msra.mxu0 %v3502
    %3640 = vmatprep.subr.bf16.mxu0 0
    %3641 = vmatpush1.bf16.msra.mxu0 %v3503
    %3642 = vmatprep.subr.bf16.mxu0 0
    %3643 = vmatpush1.bf16.msra.mxu0 %v3504
    %3644 = vmatprep.subr.bf16.mxu0 0
    %3645 = vmatpush1.bf16.msra.mxu0 %v3505
    %3646 = vmatprep.subr.bf16.mxu0 0
    %3647 = vmatpush1.bf16.msra.mxu0 %v3506
    %3648 = vmatprep.subr.bf16.mxu0 0
    %3649 = vmatpush1.bf16.msra.mxu0 %v3507
    %3650 = vmatprep.subr.bf16.mxu0 0
    %3651 = vmatpush1.bf16.msra.mxu0 %v3508
    %3652 = vmatprep.subr.bf16.mxu0 0
    %3653 = vmatpush1.bf16.msra.mxu0 %v3509
    %3654 = vmatprep.mubr.bf16.mxu0 %v3225
    %3655 = vmatmul.mubr.bf16.gmra.mrb[0].mxu0 %v3224
    %v3656 = vpop.f32.mrb[0].mxu0
    %v3657 = vadd.f32 %v3236, %v3656
    %v3658 = vpop.f32.mrb[0].mxu0
    %v3659 = vpop.f32.mrb[0].mxu0
    %v3660 = vadd.f32 %v3236, %v3659
    %v3661 = vpop.f32.mrb[0].mxu0
    %3662 = vdwg.mxu0
    %3663 = vmatprep.subr.bf16.mxu0 0
    %3664 = vmatpush1.bf16.msra.mxu0 %v3510
    %3665 = vmatprep.subr.bf16.mxu0 0
    %3666 = vmatpush1.bf16.msra.mxu0 %v3511
    %3667 = vmatprep.subr.bf16.mxu0 0
    %3668 = vmatpush1.bf16.msra.mxu0 %v3512
    %3669 = vmatprep.subr.bf16.mxu0 0
    %3670 = vmatpush1.bf16.msra.mxu0 %v3513
    %3671 = vmatprep.subr.bf16.mxu0 0
    %3672 = vmatpush1.bf16.msra.mxu0 %v3514
    %3673 = vmatprep.subr.bf16.mxu0 0
    %3674 = vmatpush1.bf16.msra.mxu0 %v3515
    %3675 = vmatprep.subr.bf16.mxu0 0
    %3676 = vmatpush1.bf16.msra.mxu0 %v3516
    %3677 = vmatprep.subr.bf16.mxu0 0
    %3678 = vmatpush1.bf16.msra.mxu0 %v3517
    %3679 = vmatprep.subr.bf16.mxu0 0
    %3680 = vmatpush1.bf16.msra.mxu0 %v3518
    %3681 = vmatprep.subr.bf16.mxu0 0
    %3682 = vmatpush1.bf16.msra.mxu0 %v3519
    %3683 = vmatprep.subr.bf16.mxu0 0
    %3684 = vmatpush1.bf16.msra.mxu0 %v3520
    %3685 = vmatprep.subr.bf16.mxu0 0
    %3686 = vmatpush1.bf16.msra.mxu0 %v3521
    %3687 = vmatprep.subr.bf16.mxu0 0
    %3688 = vmatpush1.bf16.msra.mxu0 %v3522
    %3689 = vmatprep.subr.bf16.mxu0 0
    %3690 = vmatpush1.bf16.msra.mxu0 %v3523
    %3691 = vmatprep.subr.bf16.mxu0 0
    %3692 = vmatpush1.bf16.msra.mxu0 %v3524
    %3693 = vmatprep.subr.bf16.mxu0 0
    %3694 = vmatpush1.bf16.msra.mxu0 %v3525
    %3695 = vmatprep.mubr.bf16.mxu0 %v3227
    %3696 = vmatmul.mubr.bf16.gmra.mrb[0].mxu0 %v3226
    %v3697 = vpop.f32.mrb[0].mxu0
    %v3698 = vadd.f32 %v3657, %v3697
    %v3699 = vpop.f32.mrb[0].mxu0
    %v3700 = vpop.f32.mrb[0].mxu0
    %v3701 = vadd.f32 %v3660, %v3700
    %v3702 = vpop.f32.mrb[0].mxu0
    %3703 = vdwg.mxu0
    %3704 = vmatprep.subr.bf16.mxu0 0
    %3705 = vmatpush1.bf16.msra.mxu0 %v3526
    %3706 = vmatprep.subr.bf16.mxu0 0
    %3707 = vmatpush1.bf16.msra.mxu0 %v3527
    %3708 = vmatprep.subr.bf16.mxu0 0
    %3709 = vmatpush1.bf16.msra.mxu0 %v3528
    %3710 = vmatprep.subr.bf16.mxu0 0
    %3711 = vmatpush1.bf16.msra.mxu0 %v3529
    %3712 = vmatprep.subr.bf16.mxu0 0
    %3713 = vmatpush1.bf16.msra.mxu0 %v3530
    %3714 = vmatprep.subr.bf16.mxu0 0
    %3715 = vmatpush1.bf16.msra.mxu0 %v3531
    %3716 = vmatprep.subr.bf16.mxu0 0
    %3717 = vmatpush1.bf16.msra.mxu0 %v3532
    %3718 = vmatprep.subr.bf16.mxu0 0
    %3719 = vmatpush1.bf16.msra.mxu0 %v3533
    %3720 = vmatprep.subr.bf16.mxu0 0
    %3721 = vmatpush1.bf16.msra.mxu0 %v3534
    %3722 = vmatprep.subr.bf16.mxu0 0
    %3723 = vmatpush1.bf16.msra.mxu0 %v3535
    %3724 = vmatprep.subr.bf16.mxu0 0
    %3725 = vmatpush1.bf16.msra.mxu0 %v3536
    %3726 = vmatprep.subr.bf16.mxu0 0
    %3727 = vmatpush1.bf16.msra.mxu0 %v3537
    %3728 = vmatprep.subr.bf16.mxu0 0
    %3729 = vmatpush1.bf16.msra.mxu0 %v3538
    %3730 = vmatprep.subr.bf16.mxu0 0
    %3731 = vmatpush1.bf16.msra.mxu0 %v3539
    %3732 = vmatprep.subr.bf16.mxu0 0
    %3733 = vmatpush1.bf16.msra.mxu0 %v3540
    %3734 = vmatprep.subr.bf16.mxu0 0
    %3735 = vmatpush1.bf16.msra.mxu0 %v3541
    %3736 = vmatprep.mubr.bf16.mxu0 %v3229
    %3737 = vmatmul.mubr.bf16.gmra.mrb[0].mxu0 %v3228
    %v3738 = vpop.f32.mrb[0].mxu0
    %v3739 = vadd.f32 %v3698, %v3738
    %v3740 = vpop.f32.mrb[0].mxu0
    %v3741 = vpop.f32.mrb[0].mxu0
    %v3742 = vadd.f32 %v3701, %v3741
    %v3743 = vpop.f32.mrb[0].mxu0
    %3744 = vdwg.mxu0
    %3745 = vmatprep.subr.bf16.mxu0 0
    %3746 = vmatpush1.bf16.msra.mxu0 %v3542
    %3747 = vmatprep.subr.bf16.mxu0 0
    %3748 = vmatpush1.bf16.msra.mxu0 %v3543
    %3749 = vmatprep.subr.bf16.mxu0 0
    %3750 = vmatpush1.bf16.msra.mxu0 %v3544
    %3751 = vmatprep.subr.bf16.mxu0 0
    %3752 = vmatpush1.bf16.msra.mxu0 %v3545
    %3753 = vmatprep.subr.bf16.mxu0 0
    %3754 = vmatpush1.bf16.msra.mxu0 %v3546
    %3755 = vmatprep.subr.bf16.mxu0 0
    %3756 = vmatpush1.bf16.msra.mxu0 %v3547
    %3757 = vmatprep.subr.bf16.mxu0 0
    %3758 = vmatpush1.bf16.msra.mxu0 %v3548
    %3759 = vmatprep.subr.bf16.mxu0 0
    %3760 = vmatpush1.bf16.msra.mxu0 %v3549
    %3761 = vmatprep.subr.bf16.mxu0 0
    %3762 = vmatpush1.bf16.msra.mxu0 %v3550
    %3763 = vmatprep.subr.bf16.mxu0 0
    %3764 = vmatpush1.bf16.msra.mxu0 %v3551
    %3765 = vmatprep.subr.bf16.mxu0 0
    %3766 = vmatpush1.bf16.msra.mxu0 %v3552
    %3767 = vmatprep.subr.bf16.mxu0 0
    %3768 = vmatpush1.bf16.msra.mxu0 %v3553
    %3769 = vmatprep.subr.bf16.mxu0 0
    %3770 = vmatpush1.bf16.msra.mxu0 %v3554
    %3771 = vmatprep.subr.bf16.mxu0 0
    %3772 = vmatpush1.bf16.msra.mxu0 %v3555
    %3773 = vmatprep.subr.bf16.mxu0 0
    %3774 = vmatpush1.bf16.msra.mxu0 %v3556
    %3775 = vmatprep.subr.bf16.mxu0 0
    %3776 = vmatpush1.bf16.msra.mxu0 %v3557
    %3777 = vmatprep.mubr.bf16.mxu0 %v3231
    %3778 = vmatmul.mubr.bf16.gmra.mrb[0].mxu0 %v3230
    %v3779 = vpop.f32.mrb[0].mxu0
    %v3780 = vadd.f32 %v3739, %v3779
    %v3781 = vpop.f32.mrb[0].mxu0
    %v3782 = vpop.f32.mrb[0].mxu0
    %v3783 = vadd.f32 %v3742, %v3782
    %v3784 = vpop.f32.mrb[0].mxu0
    %3785 = vdwg.mxu0
    %v3786 = vmul.f32 %v3780, 0.5
    %v3787 = vmul.f32 %v3783, 0.5
    %v3788 = vmul.f32 %v3780, 0.70710677
    %v3789 = vmul.f32 %v3783, 0.70710677
    %v3790 = verf.f32.pop %v3788
    %v3791 = verf.f32.pop %v3789
    %v3792 = vadd.f32 %v3790, 1.0
    %v3793 = vadd.f32 %v3791, 1.0
    %v3794 = vmul.f32 %v3786, %v3792
    %v3795 = vmul.f32 %v3787, %v3793
    %v3796 = vld [vmem:[#allocation11] sm:$0xf]
    %v3797 = vld [vmem:[#allocation11 + $0xc] sm:$0xf]
    %v3798 = vld [vmem:[#allocation11 + $0x18] sm:$0xf]
    %v3799 = vld [vmem:[#allocation11 + $0x24] sm:$0xf]
    %v3800 = vld [vmem:[#allocation11 + $0x30] sm:$0xf]
    %v3801 = vld [vmem:[#allocation11 + $0x3c] sm:$0xf]
    %v3802 = vld [vmem:[#allocation11 + $0x48] sm:$0xf]
    %v3803 = vld [vmem:[#allocation11 + $0x54] sm:$0xf]
    %v3804 = vld [vmem:[#allocation11 + $0x60] sm:$0xf]
    %v3805 = vld [vmem:[#allocation11 + $0x6c] sm:$0xf]
    %v3806 = vld [vmem:[#allocation11 + $0x78] sm:$0xf]
    %v3807 = vld [vmem:[#allocation11 + $0x84] sm:$0xf]
    %v3808 = vld [vmem:[#allocation11 + $0x90] sm:$0xf]
    %v3809 = vld [vmem:[#allocation11 + $0x9c] sm:$0xf]
    %v3810 = vld [vmem:[#allocation11 + $0xa8] sm:$0xf]
    %v3811 = vld [vmem:[#allocation11 + $0xb4] sm:$0xf]
    %v3812 = vld [vmem:[#allocation13] sm:$0x1]
    %v3813 = vpack.c.bf16 %v3795, %v3794
    %v3815 = vlaneseq
    %v3816 = vshrl.u32 %v3815, 7
    %v3817 = vsub.s32 0, %v3816
    %v3818 = vrot.slane %v3812, %v3817
    %v3836 = vunpack.c.l.b16 %v3796
    %v3837 = vunpack.c.l.b16 %v3797
    %v3838 = vunpack.c.l.b16 %v3798
    %v3839 = vunpack.c.l.b16 %v3799
    %v3840 = vunpack.c.l.b16 %v3800
    %v3841 = vunpack.c.l.b16 %v3801
    %v3842 = vunpack.c.l.b16 %v3802
    %v3843 = vunpack.c.l.b16 %v3803
    %v3844 = vunpack.c.l.b16 %v3804
    %v3845 = vunpack.c.l.b16 %v3805
    %v3846 = vunpack.c.l.b16 %v3806
    %v3847 = vunpack.c.l.b16 %v3807
    %v3848 = vunpack.c.l.b16 %v3808
    %v3849 = vunpack.c.l.b16 %v3809
    %v3850 = vunpack.c.l.b16 %v3810
    %v3851 = vunpack.c.l.b16 %v3811
    %v3852 = vpack.c.b16 %v3837, %v3836
    %v3853 = vpack.c.b16 %v3839, %v3838
    %v3854 = vpack.c.b16 %v3841, %v3840
    %v3855 = vpack.c.b16 %v3843, %v3842
    %v3856 = vpack.c.b16 %v3845, %v3844
    %v3857 = vpack.c.b16 %v3847, %v3846
    %v3858 = vpack.c.b16 %v3849, %v3848
    %v3859 = vpack.c.b16 %v3851, %v3850
    %3868 = vmatprep.subr.bf16.mxu0 0
    %3869 = vmatpush1.bf16.msra.mxu0 %v3852
    %3870 = vmatprep.subr.bf16.mxu0 0
    %3871 = vmatpush1.bf16.msra.mxu0 %v3853
    %3872 = vmatprep.subr.bf16.mxu0 0
    %3873 = vmatpush1.bf16.msra.mxu0 %v3854
    %3874 = vmatprep.subr.bf16.mxu0 0
    %3875 = vmatpush1.bf16.msra.mxu0 %v3855
    %3876 = vmatprep.subr.bf16.mxu0 0
    %3877 = vmatpush1.bf16.msra.mxu0 %v3856
    %3878 = vmatprep.subr.bf16.mxu0 0
    %3879 = vmatpush1.bf16.msra.mxu0 %v3857
    %3880 = vmatprep.subr.bf16.mxu0 0
    %3881 = vmatpush1.bf16.msra.mxu0 %v3858
    %3882 = vmatprep.subr.bf16.mxu0 0
    %3883 = vmatpush1.bf16.msra.mxu0 %v3859
    %3884 = vmatprep.subr.bf16.mxu0 0
    %3885 = vmatpush1.bf16.msra.mxu0 0
    %3886 = vmatprep.subr.bf16.mxu0 0
    %3887 = vmatpush1.bf16.msra.mxu0 0
    %3888 = vmatprep.subr.bf16.mxu0 0
    %3889 = vmatpush1.bf16.msra.mxu0 0
    %3890 = vmatprep.subr.bf16.mxu0 0
    %3891 = vmatpush1.bf16.msra.mxu0 0
    %3892 = vmatprep.subr.bf16.mxu0 0
    %3893 = vmatpush1.bf16.msra.mxu0 0
    %3894 = vmatprep.subr.bf16.mxu0 0
    %3895 = vmatpush1.bf16.msra.mxu0 0
    %3896 = vmatprep.subr.bf16.mxu0 0
    %3897 = vmatpush1.bf16.msra.mxu0 0
    %3898 = vmatprep.subr.bf16.mxu0 0
    %3899 = vmatpush1.bf16.msra.mxu0 0
    %3900 = vmatprep.mubr.bf16.mxu0 0
    %3901 = vmatmul.mubr.bf16.gmra.mrb[0].mxu0 %v3813
    %v3902 = vpop.f32.mrb[0].mxu0
    %v3903 = vadd.f32 %v3818, %v3902
    %v3904 = vpop.f32.mrb[0].mxu0
    %v3905 = vpop.f32.mrb[0].mxu0
    %v3906 = vadd.f32 %v3818, %v3905
    %v3907 = vpop.f32.mrb[0].mxu0
    %3908 = vdwg.mxu0
    %v3909 = vmul.f32 %v3903, 0.5
    %v3910 = vmul.f32 %v3906, 0.5
    %v3911 = vmul.f32 %v3903, 0.70710677
    %v3912 = vmul.f32 %v3906, 0.70710677
    %v3913 = verf.f32.pop %v3911
    %v3914 = verf.f32.pop %v3912
    %v3915 = vadd.f32 %v3913, 1.0
    %v3916 = vadd.f32 %v3914, 1.0
    %v3917 = vmul.f32 %v3909, %v3915
    %v3918 = vmul.f32 %v3910, %v3916
    %v3919 = vld [vmem:[#allocation11 + $0x4] sm:$0xf]
    %v3920 = vld [vmem:[#allocation11 + $0x10] sm:$0xf]
    %v3921 = vld [vmem:[#allocation11 + $0x1c] sm:$0xf]
    %v3922 = vld [vmem:[#allocation11 + $0x28] sm:$0xf]
    %v3923 = vld [vmem:[#allocation11 + $0x34] sm:$0xf]
    %v3924 = vld [vmem:[#allocation11 + $0x40] sm:$0xf]
    %v3925 = vld [vmem:[#allocation11 + $0x4c] sm:$0xf]
    %v3926 = vld [vmem:[#allocation11 + $0x58] sm:$0xf]
    %v3927 = vld [vmem:[#allocation11 + $0x64] sm:$0xf]
    %v3928 = vld [vmem:[#allocation11 + $0x70] sm:$0xf]
    %v3929 = vld [vmem:[#allocation11 + $0x7c] sm:$0xf]
    %v3930 = vld [vmem:[#allocation11 + $0x88] sm:$0xf]
    %v3931 = vld [vmem:[#allocation11 + $0x94] sm:$0xf]
    %v3932 = vld [vmem:[#allocation11 + $0xa0] sm:$0xf]
    %v3933 = vld [vmem:[#allocation11 + $0xac] sm:$0xf]
    %v3934 = vld [vmem:[#allocation11 + $0xb8] sm:$0xf]
    %v3935 = vld [vmem:[#allocation13 + $0x1] sm:$0x1]
    %v3936 = vpack.c.bf16 %v3918, %v3917
    %v3938 = vlaneseq
    %v3939 = vshrl.u32 %v3938, 7
    %v3940 = vsub.s32 0, %v3939
    %v3941 = vrot.slane %v3935, %v3940
    %v3959 = vunpack.c.l.b16 %v3919
    %v3960 = vunpack.c.l.b16 %v3920
    %v3961 = vunpack.c.l.b16 %v3921
    %v3962 = vunpack.c.l.b16 %v3922
    %v3963 = vunpack.c.l.b16 %v3923
    %v3964 = vunpack.c.l.b16 %v3924
    %v3965 = vunpack.c.l.b16 %v3925
    %v3966 = vunpack.c.l.b16 %v3926
    %v3967 = vunpack.c.l.b16 %v3927
    %v3968 = vunpack.c.l.b16 %v3928
    %v3969 = vunpack.c.l.b16 %v3929
    %v3970 = vunpack.c.l.b16 %v3930
    %v3971 = vunpack.c.l.b16 %v3931
    %v3972 = vunpack.c.l.b16 %v3932
    %v3973 = vunpack.c.l.b16 %v3933
    %v3974 = vunpack.c.l.b16 %v3934
    %v3975 = vpack.c.b16 %v3960, %v3959
    %v3976 = vpack.c.b16 %v3962, %v3961
    %v3977 = vpack.c.b16 %v3964, %v3963
    %v3978 = vpack.c.b16 %v3966, %v3965
    %v3979 = vpack.c.b16 %v3968, %v3967
    %v3980 = vpack.c.b16 %v3970, %v3969
    %v3981 = vpack.c.b16 %v3972, %v3971
    %v3982 = vpack.c.b16 %v3974, %v3973
    %3991 = vmatprep.subr.bf16.mxu0 0
    %3992 = vmatpush1.bf16.msra.mxu0 %v3975
    %3993 = vmatprep.subr.bf16.mxu0 0
    %3994 = vmatpush1.bf16.msra.mxu0 %v3976
    %3995 = vmatprep.subr.bf16.mxu0 0
    %3996 = vmatpush1.bf16.msra.mxu0 %v3977
    %3997 = vmatprep.subr.bf16.mxu0 0
    %3998 = vmatpush1.bf16.msra.mxu0 %v3978
    %3999 = vmatprep.subr.bf16.mxu0 0
    %4000 = vmatpush1.bf16.msra.mxu0 %v3979
    %4001 = vmatprep.subr.bf16.mxu0 0
    %4002 = vmatpush1.bf16.msra.mxu0 %v3980
    %4003 = vmatprep.subr.bf16.mxu0 0
    %4004 = vmatpush1.bf16.msra.mxu0 %v3981
    %4005 = vmatprep.subr.bf16.mxu0 0
    %4006 = vmatpush1.bf16.msra.mxu0 %v3982
    %4007 = vmatprep.subr.bf16.mxu0 0
    %4008 = vmatpush1.bf16.msra.mxu0 0
    %4009 = vmatprep.subr.bf16.mxu0 0
    %4010 = vmatpush1.bf16.msra.mxu0 0
    %4011 = vmatprep.subr.bf16.mxu0 0
    %4012 = vmatpush1.bf16.msra.mxu0 0
    %4013 = vmatprep.subr.bf16.mxu0 0
    %4014 = vmatpush1.bf16.msra.mxu0 0
    %4015 = vmatprep.subr.bf16.mxu0 0
    %4016 = vmatpush1.bf16.msra.mxu0 0
    %4017 = vmatprep.subr.bf16.mxu0 0
    %4018 = vmatpush1.bf16.msra.mxu0 0
    %4019 = vmatprep.subr.bf16.mxu0 0
    %4020 = vmatpush1.bf16.msra.mxu0 0
    %4021 = vmatprep.subr.bf16.mxu0 0
    %4022 = vmatpush1.bf16.msra.mxu0 0
    %4023 = vmatprep.mubr.bf16.mxu0 0
    %4024 = vmatmul.mubr.bf16.gmra.mrb[0].mxu0 %v3936
    %v4025 = vpop.f32.mrb[0].mxu0
    %v4026 = vadd.f32 %v3941, %v4025
    %v4027 = vpop.f32.mrb[0].mxu0
    %v4028 = vpop.f32.mrb[0].mxu0
    %v4029 = vadd.f32 %v3941, %v4028
    %v4030 = vpop.f32.mrb[0].mxu0
    %4031 = vdwg.mxu0
    %v4032 = vmul.f32 %v4026, 0.5
    %v4033 = vmul.f32 %v4029, 0.5
    %v4034 = vmul.f32 %v4026, 0.70710677
    %v4035 = vmul.f32 %v4029, 0.70710677
    %v4036 = verf.f32.pop %v4034
    %v4037 = verf.f32.pop %v4035
    %v4038 = vadd.f32 %v4036, 1.0
    %v4039 = vadd.f32 %v4037, 1.0
    %v4040 = vmul.f32 %v4032, %v4038
    %v4041 = vmul.f32 %v4033, %v4039
    %v4042 = vld [vmem:[#allocation11 + $0x8] sm:$0xf]
    %v4043 = vld [vmem:[#allocation11 + $0x14] sm:$0xf]
    %v4044 = vld [vmem:[#allocation11 + $0x20] sm:$0xf]
    %v4045 = vld [vmem:[#allocation11 + $0x2c] sm:$0xf]
    %v4046 = vld [vmem:[#allocation11 + $0x38] sm:$0xf]
    %v4047 = vld [vmem:[#allocation11 + $0x44] sm:$0xf]
    %v4048 = vld [vmem:[#allocation11 + $0x50] sm:$0xf]
    %v4049 = vld [vmem:[#allocation11 + $0x5c] sm:$0xf]
    %v4050 = vld [vmem:[#allocation11 + $0x68] sm:$0xf]
    %v4051 = vld [vmem:[#allocation11 + $0x74] sm:$0xf]
    %v4052 = vld [vmem:[#allocation11 + $0x80] sm:$0xf]
    %v4053 = vld [vmem:[#allocation11 + $0x8c] sm:$0xf]
    %v4054 = vld [vmem:[#allocation11 + $0x98] sm:$0xf]
    %v4055 = vld [vmem:[#allocation11 + $0xa4] sm:$0xf]
    %v4056 = vld [vmem:[#allocation11 + $0xb0] sm:$0xf]
    %v4057 = vld [vmem:[#allocation11 + $0xbc] sm:$0xf]
    %v4058 = vld [vmem:[#allocation13 + $0x2] sm:$0x1]
    %v4059 = vpack.c.bf16 %v4041, %v4040
    %v4061 = vlaneseq
    %v4062 = vshrl.u32 %v4061, 7
    %v4063 = vsub.s32 0, %v4062
    %v4064 = vrot.slane %v4058, %v4063
    %v4082 = vunpack.c.l.b16 %v4042
    %v4083 = vunpack.c.l.b16 %v4043
    %v4084 = vunpack.c.l.b16 %v4044
    %v4085 = vunpack.c.l.b16 %v4045
    %v4086 = vunpack.c.l.b16 %v4046
    %v4087 = vunpack.c.l.b16 %v4047
    %v4088 = vunpack.c.l.b16 %v4048
    %v4089 = vunpack.c.l.b16 %v4049
    %v4090 = vunpack.c.l.b16 %v4050
    %v4091 = vunpack.c.l.b16 %v4051
    %v4092 = vunpack.c.l.b16 %v4052
    %v4093 = vunpack.c.l.b16 %v4053
    %v4094 = vunpack.c.l.b16 %v4054
    %v4095 = vunpack.c.l.b16 %v4055
    %v4096 = vunpack.c.l.b16 %v4056
    %v4097 = vunpack.c.l.b16 %v4057
    %v4098 = vpack.c.b16 %v4083, %v4082
    %v4099 = vpack.c.b16 %v4085, %v4084
    %v4100 = vpack.c.b16 %v4087, %v4086
    %v4101 = vpack.c.b16 %v4089, %v4088
    %v4102 = vpack.c.b16 %v4091, %v4090
    %v4103 = vpack.c.b16 %v4093, %v4092
    %v4104 = vpack.c.b16 %v4095, %v4094
    %v4105 = vpack.c.b16 %v4097, %v4096
    %4114 = vmatprep.subr.bf16.mxu0 0
    %4115 = vmatpush1.bf16.msra.mxu0 %v4098
    %4116 = vmatprep.subr.bf16.mxu0 0
    %4117 = vmatpush1.bf16.msra.mxu0 %v4099
    %4118 = vmatprep.subr.bf16.mxu0 0
    %4119 = vmatpush1.bf16.msra.mxu0 %v4100
    %4120 = vmatprep.subr.bf16.mxu0 0
    %4121 = vmatpush1.bf16.msra.mxu0 %v4101
    %4122 = vmatprep.subr.bf16.mxu0 0
    %4123 = vmatpush1.bf16.msra.mxu0 %v4102
    %4124 = vmatprep.subr.bf16.mxu0 0
    %4125 = vmatpush1.bf16.msra.mxu0 %v4103
    %4126 = vmatprep.subr.bf16.mxu0 0
    %4127 = vmatpush1.bf16.msra.mxu0 %v4104
    %4128 = vmatprep.subr.bf16.mxu0 0
    %4129 = vmatpush1.bf16.msra.mxu0 %v4105
    %4130 = vmatprep.subr.bf16.mxu0 0
    %4131 = vmatpush1.bf16.msra.mxu0 0
    %4132 = vmatprep.subr.bf16.mxu0 0
    %4133 = vmatpush1.bf16.msra.mxu0 0
    %4134 = vmatprep.subr.bf16.mxu0 0
    %4135 = vmatpush1.bf16.msra.mxu0 0
    %4136 = vmatprep.subr.bf16.mxu0 0
    %4137 = vmatpush1.bf16.msra.mxu0 0
    %4138 = vmatprep.subr.bf16.mxu0 0
    %4139 = vmatpush1.bf16.msra.mxu0 0
    %4140 = vmatprep.subr.bf16.mxu0 0
    %4141 = vmatpush1.bf16.msra.mxu0 0
    %4142 = vmatprep.subr.bf16.mxu0 0
    %4143 = vmatpush1.bf16.msra.mxu0 0
    %4144 = vmatprep.subr.bf16.mxu0 0
    %4145 = vmatpush1.bf16.msra.mxu0 0
    %4146 = vmatprep.mubr.bf16.mxu0 0
    %4147 = vmatmul.mubr.bf16.gmra.mrb[0].mxu0 %v4059
    %v4148 = vpop.f32.mrb[0].mxu0
    %v4149 = vadd.f32 %v4064, %v4148
    %v4150 = vpop.f32.mrb[0].mxu0
    %v4151 = vpop.f32.mrb[0].mxu0
    %v4152 = vadd.f32 %v4064, %v4151
    %v4153 = vpop.f32.mrb[0].mxu0
    %4154 = vdwg.mxu0
    %4155 = vst [vmem:[#allocation14] sm:$0xff] %v4149
    %4156 = vst [vmem:[#allocation14 + $0x8] sm:$0xff] %v4152
    // Predicated region
    $region58: #{tpu_custom_call.1} parent=1 // pred_check
      _
    $region59: #{tpu_custom_call.1} parent=1 // pred_check_branch
      %4158 = sbr.rel (0) target = $region61
    $region60: #{tpu_custom_call.1} parent=1 // pred_region
      %s4160 = ssub.s32 256, 256
      %4161 = vsyncadd [#allocation4], %s4160
      %s4162 = sshll.u32 [#allocation14], 4
      %s4163 = int_to_ptr.vmem [resolvable:$true] %s4162
      %4168 = dma.vmem_to_hbm [thread:$0]  %s4163, 256, %s7, [#allocation4], 128, 128, 8
    $region61: #{tpu_custom_call.1} parent=1 // pred_fallthru
      _
    // Predicated region
    $region62: #{tpu_custom_call.1} parent=1 // pred_check
      _
    $region63: #{tpu_custom_call.1} parent=1 // pred_check_branch
      %4170 = sbr.rel (0) target = $region65
    $region64: #{tpu_custom_call.1} parent=1 // pred_region
      %4171 = dma.done [#allocation4], 256
    $region65: #{tpu_custom_call.1} parent=1 // pred_fallthru
      _
    %4172 = vsyncpa [#allocation3], 1
    %4173 = vsyncpa [#allocation6], 1
    %4174 = vsyncpa [#allocation9], 1
    %4175 = vsyncpa [#allocation12], 1
    %4176 = vsyncpa [#allocation4], 1

</llo_original>
